<compile_context>
chip_gen: v5e
topology: v5e:2x2
jax: 0.10.0
libtpu: 0.0.40
codegen_flags: <defaults>
</compile_context>

<pallas_src>
import functools

import jax
import jax.numpy as jnp
from jax import lax
from jax.experimental import pallas as pl
from jax.experimental.pallas import tpu as pltpu


# ---------------------------------------------------------------------------
# Fused Pallas kernel: (conv1x1+BN+SiLU -> avgpool -> linear) x 2 branches
# ---------------------------------------------------------------------------
def custom_head_kernel(x_ref,
                       w1_ref, s1_ref, b1_ref, wl1_ref, bl1_ref,
                       w2_ref, s2_ref, b2_ref, wl2_ref, bl2_ref,
                       pose_ref, cls_ref,
                       acc1_ref, acc2_ref,
                       *, hw_total, tile):
    """One (batch b, spatial tile t) grid step.

    x_ref  : (1, tile, c1)   channels-last spatial tile of the input
    w*_ref : (c1, c_)        1x1 conv weight (branch 1 / 2)
    s*_ref : (1, c_)         folded BN scale  gamma / sqrt(var + eps)
    b*_ref : (1, c_)         folded BN bias   beta  - mean * scale
    wl*_ref: (c_, out)       linear weight (pose_num / nc)
    bl*_ref: (1, out)        linear bias
    pose_ref: (1, 1, pose_num)   cls_ref: (1, 1, nc)
    acc*_ref: (1, c_) f32 VMEM accumulators for the global average pool.
    """
    t = pl.program_id(1)
    nt = pl.num_programs(1)

    @pl.when(t == 0)
    def _init():
        acc1_ref[...] = jnp.zeros_like(acc1_ref)
        acc2_ref[...] = jnp.zeros_like(acc2_ref)

    x = x_ref[0]                                   # (tile, c1)

    # Valid-pixel mask only needed when the last tile is partial (static check).
    need_mask = (hw_total % tile) != 0
    if need_mask:
        row = t * tile + lax.broadcasted_iota(jnp.int32, (tile, 1), 0)
        valid = row < hw_total

    def branch(w_ref, s_ref, b_ref, acc_ref):
        # 1x1 conv == matmul with lane-dense N = c_ (1280); f32 MXU accumulate.
        y = jnp.dot(x, w_ref[...], preferred_element_type=jnp.float32)
        y = y * s_ref[...] + b_ref[...]            # folded BatchNorm
        y = y * jax.nn.sigmoid(y)                  # SiLU (EUP)
        if need_mask:
            y = jnp.where(valid, y, 0.0)
        acc_ref[...] += jnp.sum(y, axis=0, keepdims=True)   # partial avg-pool sum

    branch(w1_ref, s1_ref, b1_ref, acc1_ref)
    branch(w2_ref, s2_ref, b2_ref, acc2_ref)

    @pl.when(t == nt - 1)
    def _finalize():
        inv_hw = 1.0 / float(hw_total)
        avg1 = acc1_ref[...] * inv_hw              # (1, c_)  AdaptiveAvgPool2d(1)
        avg2 = acc2_ref[...] * inv_hw
        # Dropout(p=0.0) is the identity.
        pose = jnp.dot(avg1, wl1_ref[...], preferred_element_type=jnp.float32) + bl1_ref[...]
        logits = jnp.dot(avg2, wl2_ref[...], preferred_element_type=jnp.float32) + bl2_ref[...]
        # softmax over classes (eval-mode output)
        m = jnp.max(logits, axis=-1, keepdims=True)
        e = jnp.exp(logits - m)
        prob = e / jnp.sum(e, axis=-1, keepdims=True)
        pose_ref[0] = pose.astype(pose_ref.dtype)
        cls_ref[0] = prob.astype(cls_ref.dtype)


# ---------------------------------------------------------------------------
# pallas_call wrapper
# ---------------------------------------------------------------------------
def custom_forward(params, x, *, tile=128):
    """Eval-mode forward of Custom. x: (B, c1, H, W) NCHW, or a list (cat on C)."""
    if isinstance(x, (list, tuple)):
        x = jnp.concatenate(x, axis=1)             # torch.cat(x, 1)
    B, c1, H, W = x.shape
    hw = H * W
    # NCHW -> channels-last flattened (B, H*W, c1): lane axis = channels.
    xf = jnp.transpose(x, (0, 2, 3, 1)).reshape(B, hw, c1)

    c_ = params["w1"].shape[1]
    pose_num = params["wl1"].shape[1]
    nc = params["wl2"].shape[1]

    tile = min(tile, max(8, ((hw + 7) // 8) * 8))
    nt = pl.cdiv(hw, tile)

    kernel = functools.partial(custom_head_kernel, hw_total=hw, tile=tile)
    const = lambda b, t: (0, 0)

    pose3, cls3 = pl.pallas_call(
        kernel,
        out_shape=(jax.ShapeDtypeStruct((B, 1, pose_num), jnp.float32),
                   jax.ShapeDtypeStruct((B, 1, nc), jnp.float32)),
        grid=(B, nt),
        in_specs=[
            pl.BlockSpec((1, tile, c1), lambda b, t: (b, t, 0)),
            pl.BlockSpec((c1, c_), const),
            pl.BlockSpec((1, c_), const),
            pl.BlockSpec((1, c_), const),
            pl.BlockSpec((c_, pose_num), const),
            pl.BlockSpec((1, pose_num), const),
            pl.BlockSpec((c1, c_), const),
            pl.BlockSpec((1, c_), const),
            pl.BlockSpec((1, c_), const),
            pl.BlockSpec((c_, nc), const),
            pl.BlockSpec((1, nc), const),
        ],
        out_specs=(pl.BlockSpec((1, 1, pose_num), lambda b, t: (b, 0, 0)),
                   pl.BlockSpec((1, 1, nc), lambda b, t: (b, 0, 0))),
        scratch_shapes=[pltpu.VMEM((1, c_), jnp.float32),
                        pltpu.VMEM((1, c_), jnp.float32)],
        compiler_params=pltpu.CompilerParams(
            dimension_semantics=("parallel", "arbitrary")),
    )(xf,
      params["w1"], params["s1"], params["b1"], params["wl1"], params["bl1"],
      params["w2"], params["s2"], params["b2"], params["wl2"], params["bl2"])

    return pose3[:, 0, :], cls3[:, 0, :]
    # TODO(synk): training-mode `pred = torch.cat((pose, cls_logits), 1)` branch
    # and k>1 / groups>1 Conv variants are not emitted (module defaults k=1, g=1;
    # eval path implemented per spec).


# ---------------------------------------------------------------------------
# Pure-JAX reference (for correctness check)
# ---------------------------------------------------------------------------
def custom_forward_ref(params, x):
    if isinstance(x, (list, tuple)):
        x = jnp.concatenate(x, axis=1)
    B, c1, H, W = x.shape
    xf = jnp.transpose(x, (0, 2, 3, 1)).reshape(B, H * W, c1)

    def branch(w, s, b, wl, bl):
        y = jnp.einsum("bpc,cd->bpd", xf, w, precision=lax.Precision.HIGHEST)
        y = y * s + b
        y = y * jax.nn.sigmoid(y)
        avg = jnp.mean(y, axis=1)                  # (B, c_)
        return jnp.einsum("bc,cd->bd", avg, wl, precision=lax.Precision.HIGHEST) + bl

    pose = branch(params["w1"], params["s1"], params["b1"], params["wl1"], params["bl1"])
    logits = branch(params["w2"], params["s2"], params["b2"], params["wl2"], params["bl2"])
    return pose, jax.nn.softmax(logits, axis=-1)


# ---------------------------------------------------------------------------
# Parameter construction (Conv1x1 no-bias + folded BN, Linear with bias)
# ---------------------------------------------------------------------------
def _init_conv_bn(key, cin, cout):
    k1, k2, k3, k4, k5 = jax.random.split(key, 5)
    w = jax.random.normal(k1, (cin, cout), jnp.float32) / (cin ** 0.5)
    gamma = 1.0 + 0.1 * jax.random.normal(k2, (cout,), jnp.float32)
    beta = 0.05 * jax.random.normal(k3, (cout,), jnp.float32)
    mean = 0.05 * jax.random.normal(k4, (cout,), jnp.float32)
    var = 1.0 + 0.1 * jax.random.uniform(k5, (cout,), jnp.float32)
    eps = 1e-5                                     # nn.BatchNorm2d default
    scale = gamma / jnp.sqrt(var + eps)
    bias = beta - mean * scale
    return w, scale.reshape(1, cout), bias.reshape(1, cout)


def _init_linear(key, cin, cout):
    k1, k2 = jax.random.split(key)
    w = 0.02 * jax.random.normal(k1, (cin, cout), jnp.float32)
    b = 0.02 * jax.random.normal(k2, (1, cout), jnp.float32)
    return w, b


def init_custom_params(key, c1, c2, c_=1280, pose_num=6):
    k1, k2, k3, k4 = jax.random.split(key, 4)
    w1, s1, b1 = _init_conv_bn(k1, c1, c_)
    wl1, bl1 = _init_linear(k2, c_, pose_num)
    w2, s2, b2 = _init_conv_bn(k3, c1, c_)
    wl2, bl2 = _init_linear(k4, c_, c2)
    return dict(w1=w1, s1=s1, b1=b1, wl1=wl1, bl1=bl1,
                w2=w2, s2=s2, b2=b2, wl2=wl2, bl2=bl2)


# ---------------------------------------------------------------------------
if __name__ == "__main__":
    key = jax.random.PRNGKey(0)
    B, c1, c2 = 2, 32, 16          # c2 = nc (class count)
    H = W = 16
    pose_num = 6

    k_p, k_x = jax.random.split(key)
    params = init_custom_params(k_p, c1, c2)
    x = jax.random.normal(k_x, (B, c1, H, W), jnp.float32)

    pose, cls_prob = custom_forward(params, x)
    pose = jax.block_until_ready(pose)
    cls_prob = jax.block_until_ready(cls_prob)

    assert pose.shape == (B, pose_num), pose.shape
    assert cls_prob.shape == (B, c2), cls_prob.shape
    assert bool(jnp.all(jnp.isfinite(pose)))
    assert bool(jnp.all(jnp.isfinite(cls_prob)))
    assert bool(jnp.allclose(jnp.sum(cls_prob, axis=-1), 1.0, atol=1e-4))

    pose_ref, cls_ref = custom_forward_ref(params, x)
    assert bool(jnp.allclose(pose, pose_ref, rtol=1e-3, atol=1e-3)), \
        float(jnp.max(jnp.abs(pose - pose_ref)))
    assert bool(jnp.allclose(cls_prob, cls_ref, rtol=1e-3, atol=1e-3)), \
        float(jnp.max(jnp.abs(cls_prob - cls_ref)))

    print("KERNEL_OK")
</pallas_src>

<mosaic_0001>
module attributes {stable_mosaic.version = 11 : i64} {
  func.func @custom_head_kernel(%arg0: i32, %arg1: i32, %arg2: memref<1x128x32xf32, #tpu.memory_space<vmem>>, %arg3: memref<32x1280xf32, #tpu.memory_space<vmem>>, %arg4: memref<1x1280xf32, #tpu.memory_space<vmem>>, %arg5: memref<1x1280xf32, #tpu.memory_space<vmem>>, %arg6: memref<1280x6xf32, #tpu.memory_space<vmem>>, %arg7: memref<1x6xf32, #tpu.memory_space<vmem>>, %arg8: memref<32x1280xf32, #tpu.memory_space<vmem>>, %arg9: memref<1x1280xf32, #tpu.memory_space<vmem>>, %arg10: memref<1x1280xf32, #tpu.memory_space<vmem>>, %arg11: memref<1280x16xf32, #tpu.memory_space<vmem>>, %arg12: memref<1x16xf32, #tpu.memory_space<vmem>>, %arg13: memref<1x1x6xf32, #tpu.memory_space<vmem>>, %arg14: memref<1x1x16xf32, #tpu.memory_space<vmem>>, %arg15: memref<1x1280xf32, #tpu.memory_space<vmem>>, %arg16: memref<1x1280xf32, #tpu.memory_space<vmem>>) attributes {dimension_semantics = [#tpu.dimension_semantics<parallel>, #tpu.dimension_semantics<arbitrary>], iteration_bounds = array<i64: 2, 2>, scalar_prefetch = 0 : i64, scratch_operands = 2 : i64, tpu.core_type = #tpu.core_type<tc>, window_params = [{transform_indices = @transform_0, window_bounds = array<i64: 1, 128, 32>}, {pipeline_mode = #tpu.pipeline_mode<synchronous>, transform_indices = @transform_1, window_bounds = array<i64: 32, 1280>}, {pipeline_mode = #tpu.pipeline_mode<synchronous>, transform_indices = @transform_2, window_bounds = array<i64: 1, 1280>}, {pipeline_mode = #tpu.pipeline_mode<synchronous>, transform_indices = @transform_3, window_bounds = array<i64: 1, 1280>}, {pipeline_mode = #tpu.pipeline_mode<synchronous>, transform_indices = @transform_4, window_bounds = array<i64: 1280, 6>}, {pipeline_mode = #tpu.pipeline_mode<synchronous>, transform_indices = @transform_5, window_bounds = array<i64: 1, 6>}, {pipeline_mode = #tpu.pipeline_mode<synchronous>, transform_indices = @transform_6, window_bounds = array<i64: 32, 1280>}, {pipeline_mode = #tpu.pipeline_mode<synchronous>, transform_indices = @transform_7, window_bounds = array<i64: 1, 1280>}, {pipeline_mode = #tpu.pipeline_mode<synchronous>, transform_indices = @transform_8, window_bounds = array<i64: 1, 1280>}, {pipeline_mode = #tpu.pipeline_mode<synchronous>, transform_indices = @transform_9, window_bounds = array<i64: 1280, 16>}, {pipeline_mode = #tpu.pipeline_mode<synchronous>, transform_indices = @transform_10, window_bounds = array<i64: 1, 16>}, {transform_indices = @transform_11, window_bounds = array<i64: 1, 1, 6>}, {transform_indices = @transform_12, window_bounds = array<i64: 1, 1, 16>}]} {
    %c0_i32 = arith.constant 0 : i32
    %0 = arith.cmpi eq, %arg1, %c0_i32 : i32
    %1 = arith.extui %0 : i1 to i32
    %c0_i32_0 = arith.constant 0 : i32
    %2 = arith.cmpi ne, %1, %c0_i32_0 : i32
    scf.if %2 {
      %cst_29 = arith.constant 0.000000e+00 : f32
      %46 = vector.broadcast %cst_29 : f32 to vector<1x1280xf32>
      %c0_30 = arith.constant 0 : index
      %c0_31 = arith.constant 0 : index
      %47 = vector.load %arg15[%c0_30, %c0_31] : memref<1x1280xf32, #tpu.memory_space<vmem>>, vector<1x1280xf32>
      tpu.vector_store %arg15[%c0_30, %c0_31], %46 {strides = array<i32>} : memref<1x1280xf32, #tpu.memory_space<vmem>>, vector<1x1280xf32>,
      %cst_32 = arith.constant 0.000000e+00 : f32
      %48 = vector.broadcast %cst_32 : f32 to vector<1x1280xf32>
      %c0_33 = arith.constant 0 : index
      %c0_34 = arith.constant 0 : index
      %49 = vector.load %arg16[%c0_33, %c0_34] : memref<1x1280xf32, #tpu.memory_space<vmem>>, vector<1x1280xf32>
      tpu.vector_store %arg16[%c0_33, %c0_34], %48 {strides = array<i32>} : memref<1x1280xf32, #tpu.memory_space<vmem>>, vector<1x1280xf32>,
    } else {
    }
    %c0 = arith.constant 0 : index
    %c0_1 = arith.constant 0 : index
    %c0_2 = arith.constant 0 : index
    %3 = vector.load %arg2[%c0, %c0_1, %c0_2] : memref<1x128x32xf32, #tpu.memory_space<vmem>>, vector<1x128x32xf32>
    %4 = vector.shape_cast %3 : vector<1x128x32xf32> to vector<128x32xf32>
    %c0_3 = arith.constant 0 : index
    %c0_4 = arith.constant 0 : index
    %5 = vector.load %arg3[%c0_3, %c0_4] : memref<32x1280xf32, #tpu.memory_space<vmem>>, vector<32x1280xf32>
    %cst = arith.constant dense<0.000000e+00> : vector<128x1280xf32>
    %6 = tpu.matmul %4, %5, %cst {dimension_numbers = #tpu.dot_dimension_numbers<[1], [0], [0], [1], [0, 0, 1, 1], [], []>} : vector<128x32xf32>, vector<32x1280xf32>, vector<128x1280xf32> -> vector<128x1280xf32>
    %c0_5 = arith.constant 0 : index
    %c0_6 = arith.constant 0 : index
    %7 = vector.load %arg4[%c0_5, %c0_6] : memref<1x1280xf32, #tpu.memory_space<vmem>>, vector<1x1280xf32>
    %8 = vector.broadcast %7 : vector<1x1280xf32> to vector<128x1280xf32>
    %9 = arith.mulf %6, %8 : vector<128x1280xf32>
    %c0_7 = arith.constant 0 : index
    %c0_8 = arith.constant 0 : index
    %10 = vector.load %arg5[%c0_7, %c0_8] : memref<1x1280xf32, #tpu.memory_space<vmem>>, vector<1x1280xf32>
    %11 = vector.broadcast %10 : vector<1x1280xf32> to vector<128x1280xf32>
    %12 = arith.addf %9, %11 : vector<128x1280xf32>
    %13 = arith.negf %12 : vector<128x1280xf32>
    %14 = math.exp %13 : vector<128x1280xf32>
    %cst_9 = arith.constant 1.000000e+00 : f32
    %15 = vector.broadcast %cst_9 : f32 to vector<128x1280xf32>
    %16 = arith.addf %15, %14 : vector<128x1280xf32>
    %17 = arith.divf %15, %16 : vector<128x1280xf32>
    %18 = arith.mulf %12, %17 : vector<128x1280xf32>
    %c0_10 = arith.constant 0 : index
    %c0_11 = arith.constant 0 : index
    %19 = vector.load %arg15[%c0_10, %c0_11] : memref<1x1280xf32, #tpu.memory_space<vmem>>, vector<1x1280xf32>
    %cst_12 = arith.constant dense<0.000000e+00> : vector<1280xf32>
    %20 = vector.multi_reduction <add>, %18, %cst_12 [0] : vector<128x1280xf32> to vector<1280xf32>
    %21 = vector.shape_cast %20 : vector<1280xf32> to vector<1x1280xf32>
    %22 = arith.addf %19, %21 : vector<1x1280xf32>
    %c0_13 = arith.constant 0 : index
    %c0_14 = arith.constant 0 : index
    %23 = vector.load %arg15[%c0_13, %c0_14] : memref<1x1280xf32, #tpu.memory_space<vmem>>, vector<1x1280xf32>
    tpu.vector_store %arg15[%c0_13, %c0_14], %22 {strides = array<i32>} : memref<1x1280xf32, #tpu.memory_space<vmem>>, vector<1x1280xf32>,
    %c0_15 = arith.constant 0 : index
    %c0_16 = arith.constant 0 : index
    %24 = vector.load %arg8[%c0_15, %c0_16] : memref<32x1280xf32, #tpu.memory_space<vmem>>, vector<32x1280xf32>
    %cst_17 = arith.constant dense<0.000000e+00> : vector<128x1280xf32>
    %25 = tpu.matmul %4, %24, %cst_17 {dimension_numbers = #tpu.dot_dimension_numbers<[1], [0], [0], [1], [0, 0, 1, 1], [], []>} : vector<128x32xf32>, vector<32x1280xf32>, vector<128x1280xf32> -> vector<128x1280xf32>
    %c0_18 = arith.constant 0 : index
    %c0_19 = arith.constant 0 : index
    %26 = vector.load %arg9[%c0_18, %c0_19] : memref<1x1280xf32, #tpu.memory_space<vmem>>, vector<1x1280xf32>
    %27 = vector.broadcast %26 : vector<1x1280xf32> to vector<128x1280xf32>
    %28 = arith.mulf %25, %27 : vector<128x1280xf32>
    %c0_20 = arith.constant 0 : index
    %c0_21 = arith.constant 0 : index
    %29 = vector.load %arg10[%c0_20, %c0_21] : memref<1x1280xf32, #tpu.memory_space<vmem>>, vector<1x1280xf32>
    %30 = vector.broadcast %29 : vector<1x1280xf32> to vector<128x1280xf32>
    %31 = arith.addf %28, %30 : vector<128x1280xf32>
    %32 = arith.negf %31 : vector<128x1280xf32>
    %33 = math.exp %32 : vector<128x1280xf32>
    %cst_22 = arith.constant 1.000000e+00 : f32
    %34 = vector.broadcast %cst_22 : f32 to vector<128x1280xf32>
    %35 = arith.addf %34, %33 : vector<128x1280xf32>
    %36 = arith.divf %34, %35 : vector<128x1280xf32>
    %37 = arith.mulf %31, %36 : vector<128x1280xf32>
    %c0_23 = arith.constant 0 : index
    %c0_24 = arith.constant 0 : index
    %38 = vector.load %arg16[%c0_23, %c0_24] : memref<1x1280xf32, #tpu.memory_space<vmem>>, vector<1x1280xf32>
    %cst_25 = arith.constant dense<0.000000e+00> : vector<1280xf32>
    %39 = vector.multi_reduction <add>, %37, %cst_25 [0] : vector<128x1280xf32> to vector<1280xf32>
    %40 = vector.shape_cast %39 : vector<1280xf32> to vector<1x1280xf32>
    %41 = arith.addf %38, %40 : vector<1x1280xf32>
    %c0_26 = arith.constant 0 : index
    %c0_27 = arith.constant 0 : index
    %42 = vector.load %arg16[%c0_26, %c0_27] : memref<1x1280xf32, #tpu.memory_space<vmem>>, vector<1x1280xf32>
    tpu.vector_store %arg16[%c0_26, %c0_27], %41 {strides = array<i32>} : memref<1x1280xf32, #tpu.memory_space<vmem>>, vector<1x1280xf32>,
    %c1_i32 = arith.constant 1 : i32
    %43 = arith.cmpi eq, %arg1, %c1_i32 : i32
    %44 = arith.extui %43 : i1 to i32
    %c0_i32_28 = arith.constant 0 : i32
    %45 = arith.cmpi ne, %44, %c0_i32_28 : i32
    scf.if %45 {
      %c0_29 = arith.constant 0 : index
      %c0_30 = arith.constant 0 : index
      %46 = vector.load %arg15[%c0_29, %c0_30] : memref<1x1280xf32, #tpu.memory_space<vmem>>, vector<1x1280xf32>
      %cst_31 = arith.constant 3.906250e-03 : f32
      %47 = vector.broadcast %cst_31 : f32 to vector<1x1280xf32>
      %48 = arith.mulf %46, %47 : vector<1x1280xf32>
      %c0_32 = arith.constant 0 : index
      %c0_33 = arith.constant 0 : index
      %49 = vector.load %arg16[%c0_32, %c0_33] : memref<1x1280xf32, #tpu.memory_space<vmem>>, vector<1x1280xf32>
      %cst_34 = arith.constant 3.906250e-03 : f32
      %50 = vector.broadcast %cst_34 : f32 to vector<1x1280xf32>
      %51 = arith.mulf %49, %50 : vector<1x1280xf32>
      %c0_35 = arith.constant 0 : index
      %c0_36 = arith.constant 0 : index
      %52 = vector.load %arg6[%c0_35, %c0_36] : memref<1280x6xf32, #tpu.memory_space<vmem>>, vector<1280x6xf32>
      %cst_37 = arith.constant dense<0.000000e+00> : vector<1x6xf32>
      %53 = tpu.matmul %48, %52, %cst_37 {dimension_numbers = #tpu.dot_dimension_numbers<[1], [0], [0], [1], [0, 0, 1, 1], [], []>} : vector<1x1280xf32>, vector<1280x6xf32>, vector<1x6xf32> -> vector<1x6xf32>
      %c0_38 = arith.constant 0 : index
      %c0_39 = arith.constant 0 : index
      %54 = vector.load %arg7[%c0_38, %c0_39] : memref<1x6xf32, #tpu.memory_space<vmem>>, vector<1x6xf32>
      %55 = arith.addf %53, %54 : vector<1x6xf32>
      %c0_40 = arith.constant 0 : index
      %c0_41 = arith.constant 0 : index
      %56 = vector.load %arg11[%c0_40, %c0_41] : memref<1280x16xf32, #tpu.memory_space<vmem>>, vector<1280x16xf32>
      %cst_42 = arith.constant dense<0.000000e+00> : vector<1x16xf32>
      %57 = tpu.matmul %51, %56, %cst_42 {dimension_numbers = #tpu.dot_dimension_numbers<[1], [0], [0], [1], [0, 0, 1, 1], [], []>} : vector<1x1280xf32>, vector<1280x16xf32>, vector<1x16xf32> -> vector<1x16xf32>
      %c0_43 = arith.constant 0 : index
      %c0_44 = arith.constant 0 : index
      %58 = vector.load %arg12[%c0_43, %c0_44] : memref<1x16xf32, #tpu.memory_space<vmem>>, vector<1x16xf32>
      %59 = arith.addf %57, %58 : vector<1x16xf32>
      %cst_45 = arith.constant dense<0xFF800000> : vector<1xf32>
      %60 = vector.multi_reduction <maximumf>, %59, %cst_45 [1] : vector<1x16xf32> to vector<1xf32>
      %61 = vector.shape_cast %60 : vector<1xf32> to vector<1x1xf32>
      %62 = vector.broadcast %61 : vector<1x1xf32> to vector<1x16xf32>
      %63 = arith.subf %59, %62 : vector<1x16xf32>
      %64 = math.exp %63 : vector<1x16xf32>
      %cst_46 = arith.constant dense<0.000000e+00> : vector<1xf32>
      %65 = vector.multi_reduction <add>, %64, %cst_46 [1] : vector<1x16xf32> to vector<1xf32>
      %66 = vector.shape_cast %65 : vector<1xf32> to vector<1x1xf32>
      %67 = vector.broadcast %66 : vector<1x1xf32> to vector<1x16xf32>
      %68 = arith.divf %64, %67 : vector<1x16xf32>
      %c0_47 = arith.constant 0 : index
      %c0_48 = arith.constant 0 : index
      %c0_49 = arith.constant 0 : index
      %69 = vector.load %arg13[%c0_47, %c0_48, %c0_49] : memref<1x1x6xf32, #tpu.memory_space<vmem>>, vector<1x1x6xf32>
      %70 = vector.shape_cast %69 : vector<1x1x6xf32> to vector<1x6xf32>
      %71 = vector.shape_cast %55 : vector<1x6xf32> to vector<1x1x6xf32>
      tpu.vector_store %arg13[%c0_47, %c0_48, %c0_49], %71 {strides = array<i32>} : memref<1x1x6xf32, #tpu.memory_space<vmem>>, vector<1x1x6xf32>,
      %c0_50 = arith.constant 0 : index
      %c0_51 = arith.constant 0 : index
      %c0_52 = arith.constant 0 : index
      %72 = vector.load %arg14[%c0_50, %c0_51, %c0_52] : memref<1x1x16xf32, #tpu.memory_space<vmem>>, vector<1x1x16xf32>
      %73 = vector.shape_cast %72 : vector<1x1x16xf32> to vector<1x16xf32>
      %74 = vector.shape_cast %68 : vector<1x16xf32> to vector<1x1x16xf32>
      tpu.vector_store %arg14[%c0_50, %c0_51, %c0_52], %74 {strides = array<i32>} : memref<1x1x16xf32, #tpu.memory_space<vmem>>, vector<1x1x16xf32>,
    } else {
    }
    return
  }
  func.func @transform_0(%arg0: i32, %arg1: i32) -> (i32, i32, i32) {
    %c0_i32 = arith.constant 0 : i32
    %c0_i32_0 = arith.constant 0 : i32
    return %arg0, %arg1, %c0_i32 : i32, i32, i32
  }
  func.func @transform_1(%arg0: i32, %arg1: i32) -> (i32, i32) {
    %c0_i32 = arith.constant 0 : i32
    %c0_i32_0 = arith.constant 0 : i32
    %c0_i32_1 = arith.constant 0 : i32
    return %c0_i32, %c0_i32_0 : i32, i32
  }
  func.func @transform_2(%arg0: i32, %arg1: i32) -> (i32, i32) {
    %c0_i32 = arith.constant 0 : i32
    %c0_i32_0 = arith.constant 0 : i32
    %c0_i32_1 = arith.constant 0 : i32
    return %c0_i32, %c0_i32_0 : i32, i32
  }
  func.func @transform_3(%arg0: i32, %arg1: i32) -> (i32, i32) {
    %c0_i32 = arith.constant 0 : i32
    %c0_i32_0 = arith.constant 0 : i32
    %c0_i32_1 = arith.constant 0 : i32
    return %c0_i32, %c0_i32_0 : i32, i32
  }
  func.func @transform_4(%arg0: i32, %arg1: i32) -> (i32, i32) {
    %c0_i32 = arith.constant 0 : i32
    %c0_i32_0 = arith.constant 0 : i32
    %c0_i32_1 = arith.constant 0 : i32
    return %c0_i32, %c0_i32_0 : i32, i32
  }
  func.func @transform_5(%arg0: i32, %arg1: i32) -> (i32, i32) {
    %c0_i32 = arith.constant 0 : i32
    %c0_i32_0 = arith.constant 0 : i32
    %c0_i32_1 = arith.constant 0 : i32
    return %c0_i32, %c0_i32_0 : i32, i32
  }
  func.func @transform_6(%arg0: i32, %arg1: i32) -> (i32, i32) {
    %c0_i32 = arith.constant 0 : i32
    %c0_i32_0 = arith.constant 0 : i32
    %c0_i32_1 = arith.constant 0 : i32
    return %c0_i32, %c0_i32_0 : i32, i32
  }
  func.func @transform_7(%arg0: i32, %arg1: i32) -> (i32, i32) {
    %c0_i32 = arith.constant 0 : i32
    %c0_i32_0 = arith.constant 0 : i32
    %c0_i32_1 = arith.constant 0 : i32
    return %c0_i32, %c0_i32_0 : i32, i32
  }
  func.func @transform_8(%arg0: i32, %arg1: i32) -> (i32, i32) {
    %c0_i32 = arith.constant 0 : i32
    %c0_i32_0 = arith.constant 0 : i32
    %c0_i32_1 = arith.constant 0 : i32
    return %c0_i32, %c0_i32_0 : i32, i32
  }
  func.func @transform_9(%arg0: i32, %arg1: i32) -> (i32, i32) {
    %c0_i32 = arith.constant 0 : i32
    %c0_i32_0 = arith.constant 0 : i32
    %c0_i32_1 = arith.constant 0 : i32
    return %c0_i32, %c0_i32_0 : i32, i32
  }
  func.func @transform_10(%arg0: i32, %arg1: i32) -> (i32, i32) {
    %c0_i32 = arith.constant 0 : i32
    %c0_i32_0 = arith.constant 0 : i32
    %c0_i32_1 = arith.constant 0 : i32
    return %c0_i32, %c0_i32_0 : i32, i32
  }
  func.func @transform_11(%arg0: i32, %arg1: i32) -> (i32, i32, i32) {
    %c0_i32 = arith.constant 0 : i32
    %c0_i32_0 = arith.constant 0 : i32
    %c0_i32_1 = arith.constant 0 : i32
    return %arg0, %c0_i32, %c0_i32_0 : i32, i32, i32
  }
  func.func @transform_12(%arg0: i32, %arg1: i32) -> (i32, i32, i32) {
    %c0_i32 = arith.constant 0 : i32
    %c0_i32_0 = arith.constant 0 : i32
    %c0_i32_1 = arith.constant 0 : i32
    return %arg0, %c0_i32, %c0_i32_0 : i32, i32, i32
  }
}

</mosaic_0001>

<llo_original>
// kernel: tpu_custom_call.1
$region0: #{tpu_custom_call.1}
  #allocation0 [shape = 'u32[]', space=smem, size = 0x4, offset = 0x4, fixed_abs, tag = 'smem constant byte address 0x4 - core index']
  #allocation1 [shape = 'u32[72,128]{1,0:T(1,128)}', space=vmem, size = 0x9000, scoped, tag = 'internal scratch']
  #allocation2 [shape = 'f32[1,1280]{1,0:T(1,128)}', space=vmem, size = 0x1400, scoped, tag = 'scratch operand']
  #allocation3 [shape = 'f32[1,1280]{1,0:T(1,128)}', space=vmem, size = 0x1400, scoped, tag = 'scratch operand']
  %s0 = inlined_call_operand.vmem [shape: f32[2,256,32], index: 0, kind: input, shape index: {}]
  %s1 = inlined_call_operand.vmem [shape: f32[32,1280], index: 1, kind: input, shape index: {}]
  %s2 = inlined_call_operand.vmem [shape: f32[1,1280], index: 2, kind: input, shape index: {}]
  %s3 = inlined_call_operand.vmem [shape: f32[1,1280], index: 3, kind: input, shape index: {}]
  %s4 = inlined_call_operand.vmem [shape: f32[1280,6], index: 4, kind: input, shape index: {}]
  %s5 = inlined_call_operand.vmem [shape: f32[1,6], index: 5, kind: input, shape index: {}]
  %s6 = inlined_call_operand.vmem [shape: f32[32,1280], index: 6, kind: input, shape index: {}]
  %s7 = inlined_call_operand.vmem [shape: f32[1,1280], index: 7, kind: input, shape index: {}]
  %s8 = inlined_call_operand.vmem [shape: f32[1,1280], index: 8, kind: input, shape index: {}]
  %s9 = inlined_call_operand.vmem [shape: f32[1280,16], index: 9, kind: input, shape index: {}]
  %s10 = inlined_call_operand.vmem [shape: f32[1,16], index: 10, kind: input, shape index: {}]
  %s11 = inlined_call_operand.hbm [shape: f32[2,1,6], index: 11, kind: output, shape index: {0}]
  %s12 = inlined_call_operand.hbm [shape: f32[2,1,16], index: 12, kind: output, shape index: {1}]
  %13 = xla_tuple %s11, %s12
  %s14 = sld [smem:[#allocation0]]
  $region93: #{tpu_custom_call.1} parent=0
    _
  %s16 = ssub.s32 1, %s14
  %s17 = scalar_select 0, %s16, %s14
  $region1: #{tpu_custom_call.1} parent=0
    #allocation4 [shape = 'u8[1024]{0}', space=vmem, size = 0x400, scoped, tag = 'output window, operand 0']
    #allocation5 [shape = 's32[2]{0}', space=sflag, size = 0x8, scoped, tag = 'scoped memory for tpu_custom_call.1']
    #allocation6 [shape = 'u8[1024]{0}', space=vmem, size = 0x400, scoped, tag = 'output window, operand 1']
    #allocation7 [shape = 's32[2]{0}', space=sflag, size = 0x8, scoped, tag = 'scoped memory for tpu_custom_call.1']
    %18 = vsyncpa [#allocation5], 0
    %s19 = scalar_lea.sflag [#allocation5], 1
    %20 = vsyncpa %s19, 0
    %21 = vsyncpa [#allocation7], 0
    %s22 = scalar_lea.sflag [#allocation7], 1
    %23 = vsyncpa %s22, 0
    loop: start=0, step=1, limit=6
    $region2: #{tpu_custom_call.1} parent=1 // loop_pre_header
      _
    $region3: #{tpu_custom_call.1} parent=1 // loop_header
      %s25 = sphi 0, %s29
      %p26 = scmp.ge.s32.totalorder %s25, 6
      %s32 = sphi 0, %s44
      %s33 = sphi 0, %s40
      %s34 = sphi 0, %s32
      %s35 = sphi 0, %s33
      %s36 = sphi 0, %s34
      %s37 = sphi 0, %s35
      %s49 = sphi 0, %s51
      %s52 = sphi 0, %s49
      %s53 = sphi 0, %s52
      %s69 = sphi 0, %s53
      %s73 = sphi 0, %s73
      %s75 = sphi 0, %s73
      %s76 = sphi 0, %s75
      %s90 = sphi 0, %s76
      %s94 = sphi 0, %s94
      %s96 = sphi 0, %s94
      %s97 = sphi 0, %s96
      %s111 = sphi 0, %s97
      %s115 = sphi 0, %s115
      %s117 = sphi 0, %s115
      %s118 = sphi 0, %s117
      %s132 = sphi 0, %s118
      %s136 = sphi 0, %s136
      %s138 = sphi 0, %s136
      %s139 = sphi 0, %s138
      %s153 = sphi 0, %s139
      %s157 = sphi 0, %s157
      %s159 = sphi 0, %s157
      %s160 = sphi 0, %s159
      %s174 = sphi 0, %s160
      %s178 = sphi 0, %s178
      %s180 = sphi 0, %s178
      %s181 = sphi 0, %s180
      %s195 = sphi 0, %s181
      %s199 = sphi 0, %s199
      %s201 = sphi 0, %s199
      %s202 = sphi 0, %s201
      %s216 = sphi 0, %s202
      %s220 = sphi 0, %s220
      %s222 = sphi 0, %s220
      %s223 = sphi 0, %s222
      %s237 = sphi 0, %s223
      %s241 = sphi 0, %s241
      %s243 = sphi 0, %s241
      %s244 = sphi 0, %s243
      %s258 = sphi 0, %s244
      %s262 = sphi 0, %s262
      %s264 = sphi 0, %s262
      %s265 = sphi 0, %s264
      %s279 = sphi 0, %s265
      %s285 = sphi 0, %s287
      %s288 = sphi 0, %s285
      %s289 = sphi 0, %s288
      %s305 = sphi 0, %s289
      %s311 = sphi 0, %s313
      %s314 = sphi 0, %s311
      %s315 = sphi 0, %s314
      %s331 = sphi 0, %s315
    $region4: #{tpu_custom_call.1} parent=1 // loop_header_branch
      %28 = sbr.rel (%p26) target = $region8
    $region5: #{tpu_custom_call.1} parent=1 // loop_body
      %s30 = ssub.s32 %s25, 1
      %s31 = ssub.s32 %s25, 2
      %s38 = sadd.s32 1, %s33
      %p39 = scmp.ge.s32.totalorder %s38, 2
      %s40 = scalar_select %p39, 0, %s38
      %s41 = sadd.s32 1, %s32
      %s42 = scalar_select %p39, %s41, %s32
      %p43 = scmp.ge.s32.totalorder %s42, 2
      %s44 = scalar_select %p43, 0, %s42
      %s45 = ssub.s32 %s32, %s44
      %s46 = ssub.s32 %s33, %s40
      %s47 = sor.u32 %s45, %s46
      %p48 = scmp.eq.s32.totalorder %s47, 0
      %s50 = sadd.s32 %s49, 1
      %s51 = scalar_select %p48, %s49, %s50
      %p54 = pneg %p48
      %p55 = scmp.eq.s32.totalorder %s25, 3
      %p56 = por %p54, %p55
      %p57 = scmp.ne.s32.totalorder %s49, %s52
      %p58 = scmp.eq.s32.totalorder %s25, 0
      %p59 = por %p57, %p58
      %p60 = scmp.ne.s32.totalorder %s49, %s52
      %p61 = scmp.eq.s32.totalorder %s30, 3
      %p62 = por %p60, %p61
      %p63 = scmp.ne.s32.totalorder %s52, %s53
      %p64 = scmp.eq.s32.totalorder %s30, 0
      %p65 = por %p63, %p64
      %p66 = scmp.ne.s32.totalorder %s52, %s53
      %p67 = scmp.eq.s32.totalorder %s31, 3
      %p68 = por %p66, %p67
      %p70 = scmp.ne.s32.totalorder %s53, %s69
      %p71 = scmp.eq.s32.totalorder %s31, 0
      %p72 = por %p70, %p71
      %s74 = sadd.s32 %s73, 1
      %p77 = scmp.eq.s32.totalorder %s25, 3
      %p78 = scmp.ne.s32.totalorder %s73, %s75
      %p79 = scmp.eq.s32.totalorder %s25, 0
      %p80 = por %p78, %p79
      %p81 = scmp.ne.s32.totalorder %s73, %s75
      %p82 = scmp.eq.s32.totalorder %s30, 3
      %p83 = por %p81, %p82
      %p84 = scmp.ne.s32.totalorder %s75, %s76
      %p85 = scmp.eq.s32.totalorder %s30, 0
      %p86 = por %p84, %p85
      %p87 = scmp.ne.s32.totalorder %s75, %s76
      %p88 = scmp.eq.s32.totalorder %s31, 3
      %p89 = por %p87, %p88
      %p91 = scmp.ne.s32.totalorder %s76, %s90
      %p92 = scmp.eq.s32.totalorder %s31, 0
      %p93 = por %p91, %p92
      %s95 = sadd.s32 %s94, 1
      %p98 = scmp.eq.s32.totalorder %s25, 3
      %p99 = scmp.ne.s32.totalorder %s94, %s96
      %p100 = scmp.eq.s32.totalorder %s25, 0
      %p101 = por %p99, %p100
      %p102 = scmp.ne.s32.totalorder %s94, %s96
      %p103 = scmp.eq.s32.totalorder %s30, 3
      %p104 = por %p102, %p103
      %p105 = scmp.ne.s32.totalorder %s96, %s97
      %p106 = scmp.eq.s32.totalorder %s30, 0
      %p107 = por %p105, %p106
      %p108 = scmp.ne.s32.totalorder %s96, %s97
      %p109 = scmp.eq.s32.totalorder %s31, 3
      %p110 = por %p108, %p109
      %p112 = scmp.ne.s32.totalorder %s97, %s111
      %p113 = scmp.eq.s32.totalorder %s31, 0
      %p114 = por %p112, %p113
      %s116 = sadd.s32 %s115, 1
      %p119 = scmp.eq.s32.totalorder %s25, 3
      %p120 = scmp.ne.s32.totalorder %s115, %s117
      %p121 = scmp.eq.s32.totalorder %s25, 0
      %p122 = por %p120, %p121
      %p123 = scmp.ne.s32.totalorder %s115, %s117
      %p124 = scmp.eq.s32.totalorder %s30, 3
      %p125 = por %p123, %p124
      %p126 = scmp.ne.s32.totalorder %s117, %s118
      %p127 = scmp.eq.s32.totalorder %s30, 0
      %p128 = por %p126, %p127
      %p129 = scmp.ne.s32.totalorder %s117, %s118
      %p130 = scmp.eq.s32.totalorder %s31, 3
      %p131 = por %p129, %p130
      %p133 = scmp.ne.s32.totalorder %s118, %s132
      %p134 = scmp.eq.s32.totalorder %s31, 0
      %p135 = por %p133, %p134
      %s137 = sadd.s32 %s136, 1
      %p140 = scmp.eq.s32.totalorder %s25, 3
      %p141 = scmp.ne.s32.totalorder %s136, %s138
      %p142 = scmp.eq.s32.totalorder %s25, 0
      %p143 = por %p141, %p142
      %p144 = scmp.ne.s32.totalorder %s136, %s138
      %p145 = scmp.eq.s32.totalorder %s30, 3
      %p146 = por %p144, %p145
      %p147 = scmp.ne.s32.totalorder %s138, %s139
      %p148 = scmp.eq.s32.totalorder %s30, 0
      %p149 = por %p147, %p148
      %p150 = scmp.ne.s32.totalorder %s138, %s139
      %p151 = scmp.eq.s32.totalorder %s31, 3
      %p152 = por %p150, %p151
      %p154 = scmp.ne.s32.totalorder %s139, %s153
      %p155 = scmp.eq.s32.totalorder %s31, 0
      %p156 = por %p154, %p155
      %s158 = sadd.s32 %s157, 1
      %p161 = scmp.eq.s32.totalorder %s25, 3
      %p162 = scmp.ne.s32.totalorder %s157, %s159
      %p163 = scmp.eq.s32.totalorder %s25, 0
      %p164 = por %p162, %p163
      %p165 = scmp.ne.s32.totalorder %s157, %s159
      %p166 = scmp.eq.s32.totalorder %s30, 3
      %p167 = por %p165, %p166
      %p168 = scmp.ne.s32.totalorder %s159, %s160
      %p169 = scmp.eq.s32.totalorder %s30, 0
      %p170 = por %p168, %p169
      %p171 = scmp.ne.s32.totalorder %s159, %s160
      %p172 = scmp.eq.s32.totalorder %s31, 3
      %p173 = por %p171, %p172
      %p175 = scmp.ne.s32.totalorder %s160, %s174
      %p176 = scmp.eq.s32.totalorder %s31, 0
      %p177 = por %p175, %p176
      %s179 = sadd.s32 %s178, 1
      %p182 = scmp.eq.s32.totalorder %s25, 3
      %p183 = scmp.ne.s32.totalorder %s178, %s180
      %p184 = scmp.eq.s32.totalorder %s25, 0
      %p185 = por %p183, %p184
      %p186 = scmp.ne.s32.totalorder %s178, %s180
      %p187 = scmp.eq.s32.totalorder %s30, 3
      %p188 = por %p186, %p187
      %p189 = scmp.ne.s32.totalorder %s180, %s181
      %p190 = scmp.eq.s32.totalorder %s30, 0
      %p191 = por %p189, %p190
      %p192 = scmp.ne.s32.totalorder %s180, %s181
      %p193 = scmp.eq.s32.totalorder %s31, 3
      %p194 = por %p192, %p193
      %p196 = scmp.ne.s32.totalorder %s181, %s195
      %p197 = scmp.eq.s32.totalorder %s31, 0
      %p198 = por %p196, %p197
      %s200 = sadd.s32 %s199, 1
      %p203 = scmp.eq.s32.totalorder %s25, 3
      %p204 = scmp.ne.s32.totalorder %s199, %s201
      %p205 = scmp.eq.s32.totalorder %s25, 0
      %p206 = por %p204, %p205
      %p207 = scmp.ne.s32.totalorder %s199, %s201
      %p208 = scmp.eq.s32.totalorder %s30, 3
      %p209 = por %p207, %p208
      %p210 = scmp.ne.s32.totalorder %s201, %s202
      %p211 = scmp.eq.s32.totalorder %s30, 0
      %p212 = por %p210, %p211
      %p213 = scmp.ne.s32.totalorder %s201, %s202
      %p214 = scmp.eq.s32.totalorder %s31, 3
      %p215 = por %p213, %p214
      %p217 = scmp.ne.s32.totalorder %s202, %s216
      %p218 = scmp.eq.s32.totalorder %s31, 0
      %p219 = por %p217, %p218
      %s221 = sadd.s32 %s220, 1
      %p224 = scmp.eq.s32.totalorder %s25, 3
      %p225 = scmp.ne.s32.totalorder %s220, %s222
      %p226 = scmp.eq.s32.totalorder %s25, 0
      %p227 = por %p225, %p226
      %p228 = scmp.ne.s32.totalorder %s220, %s222
      %p229 = scmp.eq.s32.totalorder %s30, 3
      %p230 = por %p228, %p229
      %p231 = scmp.ne.s32.totalorder %s222, %s223
      %p232 = scmp.eq.s32.totalorder %s30, 0
      %p233 = por %p231, %p232
      %p234 = scmp.ne.s32.totalorder %s222, %s223
      %p235 = scmp.eq.s32.totalorder %s31, 3
      %p236 = por %p234, %p235
      %p238 = scmp.ne.s32.totalorder %s223, %s237
      %p239 = scmp.eq.s32.totalorder %s31, 0
      %p240 = por %p238, %p239
      %s242 = sadd.s32 %s241, 1
      %p245 = scmp.eq.s32.totalorder %s25, 3
      %p246 = scmp.ne.s32.totalorder %s241, %s243
      %p247 = scmp.eq.s32.totalorder %s25, 0
      %p248 = por %p246, %p247
      %p249 = scmp.ne.s32.totalorder %s241, %s243
      %p250 = scmp.eq.s32.totalorder %s30, 3
      %p251 = por %p249, %p250
      %p252 = scmp.ne.s32.totalorder %s243, %s244
      %p253 = scmp.eq.s32.totalorder %s30, 0
      %p254 = por %p252, %p253
      %p255 = scmp.ne.s32.totalorder %s243, %s244
      %p256 = scmp.eq.s32.totalorder %s31, 3
      %p257 = por %p255, %p256
      %p259 = scmp.ne.s32.totalorder %s244, %s258
      %p260 = scmp.eq.s32.totalorder %s31, 0
      %p261 = por %p259, %p260
      %s263 = sadd.s32 %s262, 1
      %p266 = scmp.eq.s32.totalorder %s25, 3
      %p267 = scmp.ne.s32.totalorder %s262, %s264
      %p268 = scmp.eq.s32.totalorder %s25, 0
      %p269 = por %p267, %p268
      %p270 = scmp.ne.s32.totalorder %s262, %s264
      %p271 = scmp.eq.s32.totalorder %s30, 3
      %p272 = por %p270, %p271
      %p273 = scmp.ne.s32.totalorder %s264, %s265
      %p274 = scmp.eq.s32.totalorder %s30, 0
      %p275 = por %p273, %p274
      %p276 = scmp.ne.s32.totalorder %s264, %s265
      %p277 = scmp.eq.s32.totalorder %s31, 3
      %p278 = por %p276, %p277
      %p280 = scmp.ne.s32.totalorder %s265, %s279
      %p281 = scmp.eq.s32.totalorder %s31, 0
      %p282 = por %p280, %p281
      %s283 = ssub.s32 %s32, %s44
      %p284 = scmp.eq.s32.totalorder %s283, 0
      %s286 = sadd.s32 %s285, 1
      %s287 = scalar_select %p284, %s285, %s286
      %p290 = pneg %p284
      %p291 = scmp.eq.s32.totalorder %s25, 3
      %p292 = por %p290, %p291
      %p293 = scmp.ne.s32.totalorder %s285, %s288
      %p294 = scmp.eq.s32.totalorder %s25, 0
      %p295 = por %p293, %p294
      %p296 = scmp.ne.s32.totalorder %s285, %s288
      %p297 = scmp.eq.s32.totalorder %s30, 3
      %p298 = por %p296, %p297
      %p299 = scmp.ne.s32.totalorder %s288, %s289
      %p300 = scmp.eq.s32.totalorder %s30, 0
      %p301 = por %p299, %p300
      %p302 = scmp.ne.s32.totalorder %s288, %s289
      %p303 = scmp.eq.s32.totalorder %s31, 3
      %p304 = por %p302, %p303
      %p306 = scmp.ne.s32.totalorder %s289, %s305
      %p307 = scmp.eq.s32.totalorder %s31, 0
      %p308 = por %p306, %p307
      %s309 = ssub.s32 %s32, %s44
      %p310 = scmp.eq.s32.totalorder %s309, 0
      %s312 = sadd.s32 %s311, 1
      %s313 = scalar_select %p310, %s311, %s312
      %p316 = pneg %p310
      %p317 = scmp.eq.s32.totalorder %s25, 3
      %p318 = por %p316, %p317
      %p319 = scmp.ne.s32.totalorder %s311, %s314
      %p320 = scmp.eq.s32.totalorder %s25, 0
      %p321 = por %p319, %p320
      %p322 = scmp.ne.s32.totalorder %s311, %s314
      %p323 = scmp.eq.s32.totalorder %s30, 3
      %p324 = por %p322, %p323
      %p325 = scmp.ne.s32.totalorder %s314, %s315
      %p326 = scmp.eq.s32.totalorder %s30, 0
      %p327 = por %p325, %p326
      %p328 = scmp.ne.s32.totalorder %s314, %s315
      %p329 = scmp.eq.s32.totalorder %s31, 3
      %p330 = por %p328, %p329
      %p332 = scmp.ne.s32.totalorder %s315, %s331
      %p333 = scmp.eq.s32.totalorder %s31, 0
      %p334 = por %p332, %p333
      %p335 = scmp.le.s32.totalorder 1, %s25
      %p336 = scmp.lt.s32.totalorder %s25, 5
      %p337 = pnand %p335, %p336
      %p338 = pneg %p337
      // Predicated region
      $region9: #{tpu_custom_call.1} parent=5 // pred_check
        _
      $region10: #{tpu_custom_call.1} parent=5 // pred_check_branch
        %340 = sbr.rel (%p337) target = $region12
      $region11: #{tpu_custom_call.1} parent=5 // pred_region
        %s341 = ssub.s32 %s25, 1
        // Predicated region
        $region13: #{tpu_custom_call.1} parent=11 // pred_check
          %p342 = pneg %p86
        $region14: #{tpu_custom_call.1} parent=11 // pred_check_branch
          %344 = sbr.rel (%p342) target = $region16
        $region15: #{tpu_custom_call.1} parent=11 // pred_region
          _
        $region16: #{tpu_custom_call.1} parent=11 // pred_fallthru
          _
        // Predicated region
        $region17: #{tpu_custom_call.1} parent=11 // pred_check
          %p345 = pneg %p107
        $region18: #{tpu_custom_call.1} parent=11 // pred_check_branch
          %347 = sbr.rel (%p345) target = $region20
        $region19: #{tpu_custom_call.1} parent=11 // pred_region
          _
        $region20: #{tpu_custom_call.1} parent=11 // pred_fallthru
          _
        // Predicated region
        $region21: #{tpu_custom_call.1} parent=11 // pred_check
          %p348 = pneg %p128
        $region22: #{tpu_custom_call.1} parent=11 // pred_check_branch
          %350 = sbr.rel (%p348) target = $region24
        $region23: #{tpu_custom_call.1} parent=11 // pred_region
          _
        $region24: #{tpu_custom_call.1} parent=11 // pred_fallthru
          _
        // Predicated region
        $region25: #{tpu_custom_call.1} parent=11 // pred_check
          %p351 = pneg %p149
        $region26: #{tpu_custom_call.1} parent=11 // pred_check_branch
          %353 = sbr.rel (%p351) target = $region28
        $region27: #{tpu_custom_call.1} parent=11 // pred_region
          _
        $region28: #{tpu_custom_call.1} parent=11 // pred_fallthru
          _
        // Predicated region
        $region29: #{tpu_custom_call.1} parent=11 // pred_check
          %p354 = pneg %p170
        $region30: #{tpu_custom_call.1} parent=11 // pred_check_branch
          %356 = sbr.rel (%p354) target = $region32
        $region31: #{tpu_custom_call.1} parent=11 // pred_region
          _
        $region32: #{tpu_custom_call.1} parent=11 // pred_fallthru
          _
        // Predicated region
        $region33: #{tpu_custom_call.1} parent=11 // pred_check
          %p357 = pneg %p191
        $region34: #{tpu_custom_call.1} parent=11 // pred_check_branch
          %359 = sbr.rel (%p357) target = $region36
        $region35: #{tpu_custom_call.1} parent=11 // pred_region
          _
        $region36: #{tpu_custom_call.1} parent=11 // pred_fallthru
          _
        // Predicated region
        $region37: #{tpu_custom_call.1} parent=11 // pred_check
          %p360 = pneg %p212
        $region38: #{tpu_custom_call.1} parent=11 // pred_check_branch
          %362 = sbr.rel (%p360) target = $region40
        $region39: #{tpu_custom_call.1} parent=11 // pred_region
          _
        $region40: #{tpu_custom_call.1} parent=11 // pred_fallthru
          _
        // Predicated region
        $region41: #{tpu_custom_call.1} parent=11 // pred_check
          %p363 = pneg %p233
        $region42: #{tpu_custom_call.1} parent=11 // pred_check_branch
          %365 = sbr.rel (%p363) target = $region44
        $region43: #{tpu_custom_call.1} parent=11 // pred_region
          _
        $region44: #{tpu_custom_call.1} parent=11 // pred_fallthru
          _
        // Predicated region
        $region45: #{tpu_custom_call.1} parent=11 // pred_check
          %p366 = pneg %p254
        $region46: #{tpu_custom_call.1} parent=11 // pred_check_branch
          %368 = sbr.rel (%p366) target = $region48
        $region47: #{tpu_custom_call.1} parent=11 // pred_region
          _
        $region48: #{tpu_custom_call.1} parent=11 // pred_fallthru
          _
        // Predicated region
        $region49: #{tpu_custom_call.1} parent=11 // pred_check
          %p369 = pneg %p275
        $region50: #{tpu_custom_call.1} parent=11 // pred_check_branch
          %371 = sbr.rel (%p369) target = $region52
        $region51: #{tpu_custom_call.1} parent=11 // pred_region
          _
        $region52: #{tpu_custom_call.1} parent=11 // pred_fallthru
          _
      $region12: #{tpu_custom_call.1} parent=5 // pred_fallthru
        _
      %p372 = scmp.lt.s32.totalorder %s25, 4
      // Predicated region
      $region53: #{tpu_custom_call.1} parent=5 // pred_check
        %p373 = pneg %p372
      $region54: #{tpu_custom_call.1} parent=5 // pred_check_branch
        %375 = sbr.rel (%p373) target = $region56
      $region55: #{tpu_custom_call.1} parent=5 // pred_region
        // Predicated region
        $region57: #{tpu_custom_call.1} parent=55 // pred_check
          %p376 = pneg %p59
        $region58: #{tpu_custom_call.1} parent=55 // pred_check_branch
          %378 = sbr.rel (%p376) target = $region60
        $region59: #{tpu_custom_call.1} parent=55 // pred_region
          %s379 = smul.u32 16, %s33
          %p380 = scmp.lt.s32.totalorder %s32, 1
          %s381 = scalar_select %p380, %s32, 1
          %p382 = scmp.lt.s32.totalorder %s379, 31
          %s383 = scalar_select %p382, %s379, 31
          %s384 = smul.addr %s381, 32
          %s385 = sadd.s32 %s383, %s384
          %s386 = smul.addr %s385, 8
          %s387 = scalar_lea.vmem %s0, %s386
          %s388 = smul.u32 16, %s33
        $region60: #{tpu_custom_call.1} parent=55 // pred_fallthru
          _
      $region56: #{tpu_custom_call.1} parent=5 // pred_fallthru
        _
      %p389 = scmp.le.s32.totalorder 1, %s25
      %p390 = scmp.lt.s32.totalorder %s25, 5
      %p391 = pnand %p389, %p390
      %p392 = pneg %p391
      // Predicated region
      $region61: #{tpu_custom_call.1} parent=5 // pred_check
        _
      $region62: #{tpu_custom_call.1} parent=5 // pred_check_branch
        %394 = sbr.rel (%p391) target = $region64
      $region63: #{tpu_custom_call.1} parent=5 // pred_region
        %s395 = ssub.s32 %s25, 1
        %s396 = smul.u32 16, %s35
        %p397 = scmp.lt.s32.totalorder %s34, 1
        %s398 = scalar_select %p397, %s34, 1
        %p399 = scmp.lt.s32.totalorder %s396, 31
        %s400 = scalar_select %p399, %s396, 31
        %s401 = smul.addr %s398, 32
        %s402 = sadd.s32 %s400, %s401
        %s403 = smul.addr %s402, 8
        %s404 = scalar_lea.vmem %s0, %s403
        %p405 = pneg %p65
        %p406 = pneg %p62
        %p407 = pneg %p86
        %p408 = pneg %p83
        %p409 = pneg %p107
        %p410 = pneg %p104
        %p411 = pneg %p128
        %p412 = pneg %p125
        %p413 = pneg %p149
        %p414 = pneg %p146
        %p415 = pneg %p170
        %p416 = pneg %p167
        %p417 = pneg %p191
        %p418 = pneg %p188
        %p419 = pneg %p212
        %p420 = pneg %p209
        %p421 = pneg %p233
        %p422 = pneg %p230
        %p423 = pneg %p254
        %p424 = pneg %p251
        %p425 = pneg %p275
        %p426 = pneg %p272
        %p427 = pneg %p301
        %p428 = pneg %p298
        %s429 = sand.u32 %s288, 1
        %s430 = scalar_lea.sflag [#allocation5], %s429
        %s431 = sand.u32 %s288, 1
        %s432 = scalar_lea.vmem [#allocation4], %s431
        %p433 = pneg %p327
        %p434 = pneg %p324
        %s435 = sand.u32 %s314, 1
        %s436 = scalar_lea.sflag [#allocation7], %s435
        %s437 = sand.u32 %s314, 1
        %s438 = scalar_lea.vmem [#allocation6], %s437
        %s439 = smul.u32 16, %s35
        %p440 = scmp.lt.s32.totalorder %s34, 1
        %s441 = scalar_select %p440, %s34, 1
        %p442 = scmp.lt.s32.totalorder %s439, 31
        %s443 = scalar_select %p442, %s439, 31
        %s444 = smul.addr %s441, 32
        %s445 = sadd.s32 %s443, %s444
        %s446 = smul.addr %s445, 8
        %s447 = scalar_lea.vmem %s0, %s446
        %s448 = smul.u32 16, %s35
        %p449 = scmp.eq.s32.totalorder %s35, 0
        // Predicated region
        $region65: #{tpu_custom_call.1} parent=63 // pred_check
          %p450 = pneg %p449
        $region66: #{tpu_custom_call.1} parent=63 // pred_check_branch
          %452 = sbr.rel (%p450) target = $region68
        $region67: #{tpu_custom_call.1} parent=63 // pred_region
          %453 = vst [vmem:[#allocation2] sm:$0xff] 0.0
          %v454 = vlaneseq
          %vm455 = vcmp.ge.s32.totalorder %v454, 0
          %vm456 = vcmp.lt.s32.totalorder %v454, 256
          %vm457 = vmand %vm455, %vm456
          %458 = vst.msk [vmem:[#allocation2 + $0x8] sm:$0x3] %vm457, 0.0
          %459 = vst [vmem:[#allocation3] sm:$0xff] 0.0
          %460 = vst.msk [vmem:[#allocation3 + $0x8] sm:$0x3] %vm457, 0.0
        $region68: #{tpu_custom_call.1} parent=63 // pred_fallthru
          _
        %v461 = vld [vmem:[%s447] sm:$0xff]
        %v462 = vld [vmem:[%s447 + $0x8] sm:$0xff]
        %v463 = vld [vmem:[%s447 + $0x10] sm:$0xff]
        %v464 = vld [vmem:[%s447 + $0x18] sm:$0xff]
        %v465 = vld [vmem:[%s447 + $0x20] sm:$0xff]
        %v466 = vld [vmem:[%s447 + $0x28] sm:$0xff]
        %v467 = vld [vmem:[%s447 + $0x30] sm:$0xff]
        %v468 = vld [vmem:[%s447 + $0x38] sm:$0xff]
        %v469 = vld [vmem:[%s447 + $0x40] sm:$0xff]
        %v470 = vld [vmem:[%s447 + $0x48] sm:$0xff]
        %v471 = vld [vmem:[%s447 + $0x50] sm:$0xff]
        %v472 = vld [vmem:[%s447 + $0x58] sm:$0xff]
        %v473 = vld [vmem:[%s447 + $0x60] sm:$0xff]
        %v474 = vld [vmem:[%s447 + $0x68] sm:$0xff]
        %v475 = vld [vmem:[%s447 + $0x70] sm:$0xff]
        %v476 = vld [vmem:[%s447 + $0x78] sm:$0xff]
        %v477 = vld [vmem:[%s1] sm:$0xff]
        %v478 = vld [vmem:[%s1 + $0x8] sm:$0xff]
        %v479 = vld [vmem:[%s1 + $0x10] sm:$0xff]
        %v480 = vld [vmem:[%s1 + $0x18] sm:$0xff]
        %v481 = vld [vmem:[%s1 + $0x20] sm:$0xff]
        %v482 = vld [vmem:[%s1 + $0x28] sm:$0xff]
        %v483 = vld [vmem:[%s1 + $0x30] sm:$0xff]
        %v484 = vld [vmem:[%s1 + $0x38] sm:$0xff]
        %v485 = vld [vmem:[%s1 + $0x40] sm:$0xff]
        %v486 = vld [vmem:[%s1 + $0x48] sm:$0xff]
        %v487 = vld [vmem:[%s1 + $0x50] sm:$0xff]
        %v488 = vld [vmem:[%s1 + $0x58] sm:$0xff]
        %v489 = vld [vmem:[%s1 + $0x60] sm:$0xff]
        %v490 = vld [vmem:[%s1 + $0x68] sm:$0xff]
        %v491 = vld [vmem:[%s1 + $0x70] sm:$0xff]
        %v492 = vld [vmem:[%s1 + $0x78] sm:$0xff]
        %v493 = vld [vmem:[%s1 + $0x80] sm:$0xff]
        %v494 = vld [vmem:[%s1 + $0x88] sm:$0xff]
        %v495 = vld [vmem:[%s1 + $0x90] sm:$0xff]
        %v496 = vld [vmem:[%s1 + $0x98] sm:$0xff]
        %v497 = vld [vmem:[%s1 + $0xa0] sm:$0xff]
        %v498 = vld [vmem:[%s1 + $0xa8] sm:$0xff]
        %v499 = vld [vmem:[%s1 + $0xb0] sm:$0xff]
        %v500 = vld [vmem:[%s1 + $0xb8] sm:$0xff]
        %v501 = vld [vmem:[%s1 + $0xc0] sm:$0xff]
        %v502 = vld [vmem:[%s1 + $0xc8] sm:$0xff]
        %v503 = vld [vmem:[%s1 + $0xd0] sm:$0xff]
        %v504 = vld [vmem:[%s1 + $0xd8] sm:$0xff]
        %v505 = vld [vmem:[%s1 + $0xe0] sm:$0xff]
        %v506 = vld [vmem:[%s1 + $0xe8] sm:$0xff]
        %v507 = vld [vmem:[%s1 + $0xf0] sm:$0xff]
        %v508 = vld [vmem:[%s1 + $0xf8] sm:$0xff]
        %v509 = vld [vmem:[%s1 + $0x100] sm:$0xff]
        %v510 = vld [vmem:[%s1 + $0x108] sm:$0xff]
        %v511 = vld [vmem:[%s1 + $0x110] sm:$0xff]
        %v512 = vld [vmem:[%s1 + $0x118] sm:$0xff]
        %v513 = vld [vmem:[%s1 + $0x120] sm:$0xff]
        %v514 = vld [vmem:[%s1 + $0x128] sm:$0xff]
        %v515 = vld [vmem:[%s1 + $0x130] sm:$0xff]
        %v516 = vld [vmem:[%s1 + $0x138] sm:$0xff]
        %vm517 = vcmask 261120
        %v519 = vsel %vm517, %v461, 0
        %v522 = vsel %vm517, %v462, 0
        %v525 = vsel %vm517, %v463, 0
        %v528 = vsel %vm517, %v464, 0
        %v531 = vsel %vm517, %v465, 0
        %v534 = vsel %vm517, %v466, 0
        %v537 = vsel %vm517, %v467, 0
        %v540 = vsel %vm517, %v468, 0
        %v543 = vsel %vm517, %v469, 0
        %v546 = vsel %vm517, %v470, 0
        %v549 = vsel %vm517, %v471, 0
        %v552 = vsel %vm517, %v472, 0
        %v555 = vsel %vm517, %v473, 0
        %v558 = vsel %vm517, %v474, 0
        %v561 = vsel %vm517, %v475, 0
        %v564 = vsel %vm517, %v476, 0
        %566 = vmatpush.msra.mxu0 0.0
        %567 = vmatpush.msra.mxu0 0.0
        %568 = vmatpush.msra.mxu0 0.0
        %569 = vmatpush.msra.mxu0 0.0
        %570 = vmatpush.msra.mxu0 0.0
        %571 = vmatpush.msra.mxu0 0.0
        %572 = vmatpush.msra.mxu0 0.0
        %573 = vmatpush.msra.mxu0 0.0
        %574 = vmatpush.msra.mxu0 0.0
        %575 = vmatpush.msra.mxu0 0.0
        %576 = vmatpush.msra.mxu0 0.0
        %577 = vmatpush.msra.mxu0 0.0
        %578 = vmatpush.msra.mxu0 %v507
        %579 = vmatpush.msra.mxu0 %v497
        %580 = vmatpush.msra.mxu0 %v487
        %581 = vmatpush.msra.mxu0 %v477
        %582 = vmatmul.f32.gmra.mxu0 %v519
        %v583 = vpop.f32.mrf.mxu0
        %v584 = vadd.f32 0.0, %v583
        %585 = vmatmul.f32.gmra.mxu0 %v522
        %v586 = vpop.f32.mrf.mxu0
        %v587 = vadd.f32 0.0, %v586
        %588 = vmatmul.f32.gmra.mxu0 %v525
        %v589 = vpop.f32.mrf.mxu0
        %v590 = vadd.f32 0.0, %v589
        %591 = vmatmul.f32.gmra.mxu0 %v528
        %v592 = vpop.f32.mrf.mxu0
        %v593 = vadd.f32 0.0, %v592
        %594 = vmatmul.f32.gmra.mxu0 %v531
        %v595 = vpop.f32.mrf.mxu0
        %v596 = vadd.f32 0.0, %v595
        %597 = vmatmul.f32.gmra.mxu0 %v534
        %v598 = vpop.f32.mrf.mxu0
        %v599 = vadd.f32 0.0, %v598
        %600 = vmatmul.f32.gmra.mxu0 %v537
        %v601 = vpop.f32.mrf.mxu0
        %v602 = vadd.f32 0.0, %v601
        %603 = vmatmul.f32.gmra.mxu0 %v540
        %v604 = vpop.f32.mrf.mxu0
        %v605 = vadd.f32 0.0, %v604
        %606 = vmatmul.f32.gmra.mxu0 %v543
        %v607 = vpop.f32.mrf.mxu0
        %v608 = vadd.f32 0.0, %v607
        %609 = vmatmul.f32.gmra.mxu0 %v546
        %v610 = vpop.f32.mrf.mxu0
        %v611 = vadd.f32 0.0, %v610
        %612 = vmatmul.f32.gmra.mxu0 %v549
        %v613 = vpop.f32.mrf.mxu0
        %v614 = vadd.f32 0.0, %v613
        %615 = vmatmul.f32.gmra.mxu0 %v552
        %v616 = vpop.f32.mrf.mxu0
        %v617 = vadd.f32 0.0, %v616
        %618 = vmatmul.f32.gmra.mxu0 %v555
        %v619 = vpop.f32.mrf.mxu0
        %v620 = vadd.f32 0.0, %v619
        %621 = vmatmul.f32.gmra.mxu0 %v558
        %v622 = vpop.f32.mrf.mxu0
        %v623 = vadd.f32 0.0, %v622
        %624 = vmatmul.f32.gmra.mxu0 %v561
        %v625 = vpop.f32.mrf.mxu0
        %v626 = vadd.f32 0.0, %v625
        %627 = vmatmul.f32.gmra.mxu0 %v564
        %v628 = vpop.f32.mrf.mxu0
        %v629 = vadd.f32 0.0, %v628
        %630 = vdwg.mxu0
        %631 = vmatpush.msra.mxu0 0.0
        %632 = vmatpush.msra.mxu0 0.0
        %633 = vmatpush.msra.mxu0 0.0
        %634 = vmatpush.msra.mxu0 0.0
        %635 = vmatpush.msra.mxu0 0.0
        %636 = vmatpush.msra.mxu0 0.0
        %637 = vmatpush.msra.mxu0 0.0
        %638 = vmatpush.msra.mxu0 0.0
        %639 = vmatpush.msra.mxu0 0.0
        %640 = vmatpush.msra.mxu0 0.0
        %641 = vmatpush.msra.mxu0 0.0
        %642 = vmatpush.msra.mxu0 0.0
        %643 = vmatpush.msra.mxu0 %v508
        %644 = vmatpush.msra.mxu0 %v498
        %645 = vmatpush.msra.mxu0 %v488
        %646 = vmatpush.msra.mxu0 %v478
        %647 = vmatmul.f32.gmra.mxu0 %v519
        %v648 = vpop.f32.mrf.mxu0
        %v649 = vadd.f32 0.0, %v648
        %650 = vmatmul.f32.gmra.mxu0 %v522
        %v651 = vpop.f32.mrf.mxu0
        %v652 = vadd.f32 0.0, %v651
        %653 = vmatmul.f32.gmra.mxu0 %v525
        %v654 = vpop.f32.mrf.mxu0
        %v655 = vadd.f32 0.0, %v654
        %656 = vmatmul.f32.gmra.mxu0 %v528
        %v657 = vpop.f32.mrf.mxu0
        %v658 = vadd.f32 0.0, %v657
        %659 = vmatmul.f32.gmra.mxu0 %v531
        %v660 = vpop.f32.mrf.mxu0
        %v661 = vadd.f32 0.0, %v660
        %662 = vmatmul.f32.gmra.mxu0 %v534
        %v663 = vpop.f32.mrf.mxu0
        %v664 = vadd.f32 0.0, %v663
        %665 = vmatmul.f32.gmra.mxu0 %v537
        %v666 = vpop.f32.mrf.mxu0
        %v667 = vadd.f32 0.0, %v666
        %668 = vmatmul.f32.gmra.mxu0 %v540
        %v669 = vpop.f32.mrf.mxu0
        %v670 = vadd.f32 0.0, %v669
        %671 = vmatmul.f32.gmra.mxu0 %v543
        %v672 = vpop.f32.mrf.mxu0
        %v673 = vadd.f32 0.0, %v672
        %674 = vmatmul.f32.gmra.mxu0 %v546
        %v675 = vpop.f32.mrf.mxu0
        %v676 = vadd.f32 0.0, %v675
        %677 = vmatmul.f32.gmra.mxu0 %v549
        %v678 = vpop.f32.mrf.mxu0
        %v679 = vadd.f32 0.0, %v678
        %680 = vmatmul.f32.gmra.mxu0 %v552
        %v681 = vpop.f32.mrf.mxu0
        %v682 = vadd.f32 0.0, %v681
        %683 = vmatmul.f32.gmra.mxu0 %v555
        %v684 = vpop.f32.mrf.mxu0
        %v685 = vadd.f32 0.0, %v684
        %686 = vmatmul.f32.gmra.mxu0 %v558
        %v687 = vpop.f32.mrf.mxu0
        %v688 = vadd.f32 0.0, %v687
        %689 = vmatmul.f32.gmra.mxu0 %v561
        %v690 = vpop.f32.mrf.mxu0
        %v691 = vadd.f32 0.0, %v690
        %692 = vmatmul.f32.gmra.mxu0 %v564
        %v693 = vpop.f32.mrf.mxu0
        %v694 = vadd.f32 0.0, %v693
        %695 = vdwg.mxu0
        %696 = vmatpush.msra.mxu0 0.0
        %697 = vmatpush.msra.mxu0 0.0
        %698 = vmatpush.msra.mxu0 0.0
        %699 = vmatpush.msra.mxu0 0.0
        %700 = vmatpush.msra.mxu0 0.0
        %701 = vmatpush.msra.mxu0 0.0
        %702 = vmatpush.msra.mxu0 0.0
        %703 = vmatpush.msra.mxu0 0.0
        %704 = vmatpush.msra.mxu0 0.0
        %705 = vmatpush.msra.mxu0 0.0
        %706 = vmatpush.msra.mxu0 0.0
        %707 = vmatpush.msra.mxu0 0.0
        %708 = vmatpush.msra.mxu0 %v509
        %709 = vmatpush.msra.mxu0 %v499
        %710 = vmatpush.msra.mxu0 %v489
        %711 = vmatpush.msra.mxu0 %v479
        %712 = vmatmul.f32.gmra.mxu0 %v519
        %v713 = vpop.f32.mrf.mxu0
        %v714 = vadd.f32 0.0, %v713
        %715 = vmatmul.f32.gmra.mxu0 %v522
        %v716 = vpop.f32.mrf.mxu0
        %v717 = vadd.f32 0.0, %v716
        %718 = vmatmul.f32.gmra.mxu0 %v525
        %v719 = vpop.f32.mrf.mxu0
        %v720 = vadd.f32 0.0, %v719
        %721 = vmatmul.f32.gmra.mxu0 %v528
        %v722 = vpop.f32.mrf.mxu0
        %v723 = vadd.f32 0.0, %v722
        %724 = vmatmul.f32.gmra.mxu0 %v531
        %v725 = vpop.f32.mrf.mxu0
        %v726 = vadd.f32 0.0, %v725
        %727 = vmatmul.f32.gmra.mxu0 %v534
        %v728 = vpop.f32.mrf.mxu0
        %v729 = vadd.f32 0.0, %v728
        %730 = vmatmul.f32.gmra.mxu0 %v537
        %v731 = vpop.f32.mrf.mxu0
        %v732 = vadd.f32 0.0, %v731
        %733 = vmatmul.f32.gmra.mxu0 %v540
        %v734 = vpop.f32.mrf.mxu0
        %v735 = vadd.f32 0.0, %v734
        %736 = vmatmul.f32.gmra.mxu0 %v543
        %v737 = vpop.f32.mrf.mxu0
        %v738 = vadd.f32 0.0, %v737
        %739 = vmatmul.f32.gmra.mxu0 %v546
        %v740 = vpop.f32.mrf.mxu0
        %v741 = vadd.f32 0.0, %v740
        %742 = vmatmul.f32.gmra.mxu0 %v549
        %v743 = vpop.f32.mrf.mxu0
        %v744 = vadd.f32 0.0, %v743
        %745 = vmatmul.f32.gmra.mxu0 %v552
        %v746 = vpop.f32.mrf.mxu0
        %v747 = vadd.f32 0.0, %v746
        %748 = vmatmul.f32.gmra.mxu0 %v555
        %v749 = vpop.f32.mrf.mxu0
        %v750 = vadd.f32 0.0, %v749
        %751 = vmatmul.f32.gmra.mxu0 %v558
        %v752 = vpop.f32.mrf.mxu0
        %v753 = vadd.f32 0.0, %v752
        %754 = vmatmul.f32.gmra.mxu0 %v561
        %v755 = vpop.f32.mrf.mxu0
        %v756 = vadd.f32 0.0, %v755
        %757 = vmatmul.f32.gmra.mxu0 %v564
        %v758 = vpop.f32.mrf.mxu0
        %v759 = vadd.f32 0.0, %v758
        %760 = vdwg.mxu0
        %761 = vmatpush.msra.mxu0 0.0
        %762 = vmatpush.msra.mxu0 0.0
        %763 = vmatpush.msra.mxu0 0.0
        %764 = vmatpush.msra.mxu0 0.0
        %765 = vmatpush.msra.mxu0 0.0
        %766 = vmatpush.msra.mxu0 0.0
        %767 = vmatpush.msra.mxu0 0.0
        %768 = vmatpush.msra.mxu0 0.0
        %769 = vmatpush.msra.mxu0 0.0
        %770 = vmatpush.msra.mxu0 0.0
        %771 = vmatpush.msra.mxu0 0.0
        %772 = vmatpush.msra.mxu0 0.0
        %773 = vmatpush.msra.mxu0 %v510
        %774 = vmatpush.msra.mxu0 %v500
        %775 = vmatpush.msra.mxu0 %v490
        %776 = vmatpush.msra.mxu0 %v480
        %777 = vmatmul.f32.gmra.mxu0 %v519
        %v778 = vpop.f32.mrf.mxu0
        %v779 = vadd.f32 0.0, %v778
        %780 = vmatmul.f32.gmra.mxu0 %v522
        %v781 = vpop.f32.mrf.mxu0
        %v782 = vadd.f32 0.0, %v781
        %783 = vmatmul.f32.gmra.mxu0 %v525
        %v784 = vpop.f32.mrf.mxu0
        %v785 = vadd.f32 0.0, %v784
        %786 = vmatmul.f32.gmra.mxu0 %v528
        %v787 = vpop.f32.mrf.mxu0
        %v788 = vadd.f32 0.0, %v787
        %789 = vmatmul.f32.gmra.mxu0 %v531
        %v790 = vpop.f32.mrf.mxu0
        %v791 = vadd.f32 0.0, %v790
        %792 = vmatmul.f32.gmra.mxu0 %v534
        %v793 = vpop.f32.mrf.mxu0
        %v794 = vadd.f32 0.0, %v793
        %795 = vmatmul.f32.gmra.mxu0 %v537
        %v796 = vpop.f32.mrf.mxu0
        %v797 = vadd.f32 0.0, %v796
        %798 = vmatmul.f32.gmra.mxu0 %v540
        %v799 = vpop.f32.mrf.mxu0
        %v800 = vadd.f32 0.0, %v799
        %801 = vmatmul.f32.gmra.mxu0 %v543
        %v802 = vpop.f32.mrf.mxu0
        %v803 = vadd.f32 0.0, %v802
        %804 = vmatmul.f32.gmra.mxu0 %v546
        %v805 = vpop.f32.mrf.mxu0
        %v806 = vadd.f32 0.0, %v805
        %807 = vmatmul.f32.gmra.mxu0 %v549
        %v808 = vpop.f32.mrf.mxu0
        %v809 = vadd.f32 0.0, %v808
        %810 = vmatmul.f32.gmra.mxu0 %v552
        %v811 = vpop.f32.mrf.mxu0
        %v812 = vadd.f32 0.0, %v811
        %813 = vmatmul.f32.gmra.mxu0 %v555
        %v814 = vpop.f32.mrf.mxu0
        %v815 = vadd.f32 0.0, %v814
        %816 = vmatmul.f32.gmra.mxu0 %v558
        %v817 = vpop.f32.mrf.mxu0
        %v818 = vadd.f32 0.0, %v817
        %819 = vmatmul.f32.gmra.mxu0 %v561
        %v820 = vpop.f32.mrf.mxu0
        %v821 = vadd.f32 0.0, %v820
        %822 = vmatmul.f32.gmra.mxu0 %v564
        %v823 = vpop.f32.mrf.mxu0
        %v824 = vadd.f32 0.0, %v823
        %825 = vdwg.mxu0
        %826 = vmatpush.msra.mxu0 0.0
        %827 = vmatpush.msra.mxu0 0.0
        %828 = vmatpush.msra.mxu0 0.0
        %829 = vmatpush.msra.mxu0 0.0
        %830 = vmatpush.msra.mxu0 0.0
        %831 = vmatpush.msra.mxu0 0.0
        %832 = vmatpush.msra.mxu0 0.0
        %833 = vmatpush.msra.mxu0 0.0
        %834 = vmatpush.msra.mxu0 0.0
        %835 = vmatpush.msra.mxu0 0.0
        %836 = vmatpush.msra.mxu0 0.0
        %837 = vmatpush.msra.mxu0 0.0
        %838 = vmatpush.msra.mxu0 %v511
        %839 = vmatpush.msra.mxu0 %v501
        %840 = vmatpush.msra.mxu0 %v491
        %841 = vmatpush.msra.mxu0 %v481
        %842 = vmatmul.f32.gmra.mxu0 %v519
        %v843 = vpop.f32.mrf.mxu0
        %v844 = vadd.f32 0.0, %v843
        %845 = vmatmul.f32.gmra.mxu0 %v522
        %v846 = vpop.f32.mrf.mxu0
        %v847 = vadd.f32 0.0, %v846
        %848 = vmatmul.f32.gmra.mxu0 %v525
        %v849 = vpop.f32.mrf.mxu0
        %v850 = vadd.f32 0.0, %v849
        %851 = vmatmul.f32.gmra.mxu0 %v528
        %v852 = vpop.f32.mrf.mxu0
        %v853 = vadd.f32 0.0, %v852
        %854 = vmatmul.f32.gmra.mxu0 %v531
        %v855 = vpop.f32.mrf.mxu0
        %v856 = vadd.f32 0.0, %v855
        %857 = vmatmul.f32.gmra.mxu0 %v534
        %v858 = vpop.f32.mrf.mxu0
        %v859 = vadd.f32 0.0, %v858
        %860 = vmatmul.f32.gmra.mxu0 %v537
        %v861 = vpop.f32.mrf.mxu0
        %v862 = vadd.f32 0.0, %v861
        %863 = vmatmul.f32.gmra.mxu0 %v540
        %v864 = vpop.f32.mrf.mxu0
        %v865 = vadd.f32 0.0, %v864
        %866 = vmatmul.f32.gmra.mxu0 %v543
        %v867 = vpop.f32.mrf.mxu0
        %v868 = vadd.f32 0.0, %v867
        %869 = vmatmul.f32.gmra.mxu0 %v546
        %v870 = vpop.f32.mrf.mxu0
        %v871 = vadd.f32 0.0, %v870
        %872 = vmatmul.f32.gmra.mxu0 %v549
        %v873 = vpop.f32.mrf.mxu0
        %v874 = vadd.f32 0.0, %v873
        %875 = vmatmul.f32.gmra.mxu0 %v552
        %v876 = vpop.f32.mrf.mxu0
        %v877 = vadd.f32 0.0, %v876
        %878 = vmatmul.f32.gmra.mxu0 %v555
        %v879 = vpop.f32.mrf.mxu0
        %v880 = vadd.f32 0.0, %v879
        %881 = vmatmul.f32.gmra.mxu0 %v558
        %v882 = vpop.f32.mrf.mxu0
        %v883 = vadd.f32 0.0, %v882
        %884 = vmatmul.f32.gmra.mxu0 %v561
        %v885 = vpop.f32.mrf.mxu0
        %v886 = vadd.f32 0.0, %v885
        %887 = vmatmul.f32.gmra.mxu0 %v564
        %v888 = vpop.f32.mrf.mxu0
        %v889 = vadd.f32 0.0, %v888
        %890 = vdwg.mxu0
        %891 = vmatpush.msra.mxu0 0.0
        %892 = vmatpush.msra.mxu0 0.0
        %893 = vmatpush.msra.mxu0 0.0
        %894 = vmatpush.msra.mxu0 0.0
        %895 = vmatpush.msra.mxu0 0.0
        %896 = vmatpush.msra.mxu0 0.0
        %897 = vmatpush.msra.mxu0 0.0
        %898 = vmatpush.msra.mxu0 0.0
        %899 = vmatpush.msra.mxu0 0.0
        %900 = vmatpush.msra.mxu0 0.0
        %901 = vmatpush.msra.mxu0 0.0
        %902 = vmatpush.msra.mxu0 0.0
        %903 = vmatpush.msra.mxu0 %v512
        %904 = vmatpush.msra.mxu0 %v502
        %905 = vmatpush.msra.mxu0 %v492
        %906 = vmatpush.msra.mxu0 %v482
        %907 = vmatmul.f32.gmra.mxu0 %v519
        %v908 = vpop.f32.mrf.mxu0
        %v909 = vadd.f32 0.0, %v908
        %910 = vmatmul.f32.gmra.mxu0 %v522
        %v911 = vpop.f32.mrf.mxu0
        %v912 = vadd.f32 0.0, %v911
        %913 = vmatmul.f32.gmra.mxu0 %v525
        %v914 = vpop.f32.mrf.mxu0
        %v915 = vadd.f32 0.0, %v914
        %916 = vmatmul.f32.gmra.mxu0 %v528
        %v917 = vpop.f32.mrf.mxu0
        %v918 = vadd.f32 0.0, %v917
        %919 = vmatmul.f32.gmra.mxu0 %v531
        %v920 = vpop.f32.mrf.mxu0
        %v921 = vadd.f32 0.0, %v920
        %922 = vmatmul.f32.gmra.mxu0 %v534
        %v923 = vpop.f32.mrf.mxu0
        %v924 = vadd.f32 0.0, %v923
        %925 = vmatmul.f32.gmra.mxu0 %v537
        %v926 = vpop.f32.mrf.mxu0
        %v927 = vadd.f32 0.0, %v926
        %928 = vmatmul.f32.gmra.mxu0 %v540
        %v929 = vpop.f32.mrf.mxu0
        %v930 = vadd.f32 0.0, %v929
        %931 = vmatmul.f32.gmra.mxu0 %v543
        %v932 = vpop.f32.mrf.mxu0
        %v933 = vadd.f32 0.0, %v932
        %934 = vmatmul.f32.gmra.mxu0 %v546
        %v935 = vpop.f32.mrf.mxu0
        %v936 = vadd.f32 0.0, %v935
        %937 = vmatmul.f32.gmra.mxu0 %v549
        %v938 = vpop.f32.mrf.mxu0
        %v939 = vadd.f32 0.0, %v938
        %940 = vmatmul.f32.gmra.mxu0 %v552
        %v941 = vpop.f32.mrf.mxu0
        %v942 = vadd.f32 0.0, %v941
        %943 = vmatmul.f32.gmra.mxu0 %v555
        %v944 = vpop.f32.mrf.mxu0
        %v945 = vadd.f32 0.0, %v944
        %946 = vmatmul.f32.gmra.mxu0 %v558
        %v947 = vpop.f32.mrf.mxu0
        %v948 = vadd.f32 0.0, %v947
        %949 = vmatmul.f32.gmra.mxu0 %v561
        %v950 = vpop.f32.mrf.mxu0
        %v951 = vadd.f32 0.0, %v950
        %952 = vmatmul.f32.gmra.mxu0 %v564
        %v953 = vpop.f32.mrf.mxu0
        %v954 = vadd.f32 0.0, %v953
        %955 = vdwg.mxu0
        %956 = vmatpush.msra.mxu0 0.0
        %957 = vmatpush.msra.mxu0 0.0
        %958 = vmatpush.msra.mxu0 0.0
        %959 = vmatpush.msra.mxu0 0.0
        %960 = vmatpush.msra.mxu0 0.0
        %961 = vmatpush.msra.mxu0 0.0
        %962 = vmatpush.msra.mxu0 0.0
        %963 = vmatpush.msra.mxu0 0.0
        %964 = vmatpush.msra.mxu0 0.0
        %965 = vmatpush.msra.mxu0 0.0
        %966 = vmatpush.msra.mxu0 0.0
        %967 = vmatpush.msra.mxu0 0.0
        %968 = vmatpush.msra.mxu0 %v513
        %969 = vmatpush.msra.mxu0 %v503
        %970 = vmatpush.msra.mxu0 %v493
        %971 = vmatpush.msra.mxu0 %v483
        %972 = vmatmul.f32.gmra.mxu0 %v519
        %v973 = vpop.f32.mrf.mxu0
        %v974 = vadd.f32 0.0, %v973
        %975 = vmatmul.f32.gmra.mxu0 %v522
        %v976 = vpop.f32.mrf.mxu0
        %v977 = vadd.f32 0.0, %v976
        %978 = vmatmul.f32.gmra.mxu0 %v525
        %v979 = vpop.f32.mrf.mxu0
        %v980 = vadd.f32 0.0, %v979
        %981 = vmatmul.f32.gmra.mxu0 %v528
        %v982 = vpop.f32.mrf.mxu0
        %v983 = vadd.f32 0.0, %v982
        %984 = vmatmul.f32.gmra.mxu0 %v531
        %v985 = vpop.f32.mrf.mxu0
        %v986 = vadd.f32 0.0, %v985
        %987 = vmatmul.f32.gmra.mxu0 %v534
        %v988 = vpop.f32.mrf.mxu0
        %v989 = vadd.f32 0.0, %v988
        %990 = vmatmul.f32.gmra.mxu0 %v537
        %v991 = vpop.f32.mrf.mxu0
        %v992 = vadd.f32 0.0, %v991
        %993 = vmatmul.f32.gmra.mxu0 %v540
        %v994 = vpop.f32.mrf.mxu0
        %v995 = vadd.f32 0.0, %v994
        %996 = vmatmul.f32.gmra.mxu0 %v543
        %v997 = vpop.f32.mrf.mxu0
        %v998 = vadd.f32 0.0, %v997
        %999 = vmatmul.f32.gmra.mxu0 %v546
        %v1000 = vpop.f32.mrf.mxu0
        %v1001 = vadd.f32 0.0, %v1000
        %1002 = vmatmul.f32.gmra.mxu0 %v549
        %v1003 = vpop.f32.mrf.mxu0
        %v1004 = vadd.f32 0.0, %v1003
        %1005 = vmatmul.f32.gmra.mxu0 %v552
        %v1006 = vpop.f32.mrf.mxu0
        %v1007 = vadd.f32 0.0, %v1006
        %1008 = vmatmul.f32.gmra.mxu0 %v555
        %v1009 = vpop.f32.mrf.mxu0
        %v1010 = vadd.f32 0.0, %v1009
        %1011 = vmatmul.f32.gmra.mxu0 %v558
        %v1012 = vpop.f32.mrf.mxu0
        %v1013 = vadd.f32 0.0, %v1012
        %1014 = vmatmul.f32.gmra.mxu0 %v561
        %v1015 = vpop.f32.mrf.mxu0
        %v1016 = vadd.f32 0.0, %v1015
        %1017 = vmatmul.f32.gmra.mxu0 %v564
        %v1018 = vpop.f32.mrf.mxu0
        %v1019 = vadd.f32 0.0, %v1018
        %1020 = vdwg.mxu0
        %1021 = vmatpush.msra.mxu0 0.0
        %1022 = vmatpush.msra.mxu0 0.0
        %1023 = vmatpush.msra.mxu0 0.0
        %1024 = vmatpush.msra.mxu0 0.0
        %1025 = vmatpush.msra.mxu0 0.0
        %1026 = vmatpush.msra.mxu0 0.0
        %1027 = vmatpush.msra.mxu0 0.0
        %1028 = vmatpush.msra.mxu0 0.0
        %1029 = vmatpush.msra.mxu0 0.0
        %1030 = vmatpush.msra.mxu0 0.0
        %1031 = vmatpush.msra.mxu0 0.0
        %1032 = vmatpush.msra.mxu0 0.0
        %1033 = vmatpush.msra.mxu0 %v514
        %1034 = vmatpush.msra.mxu0 %v504
        %1035 = vmatpush.msra.mxu0 %v494
        %1036 = vmatpush.msra.mxu0 %v484
        %1037 = vmatmul.f32.gmra.mxu0 %v519
        %v1038 = vpop.f32.mrf.mxu0
        %v1039 = vadd.f32 0.0, %v1038
        %1040 = vmatmul.f32.gmra.mxu0 %v522
        %v1041 = vpop.f32.mrf.mxu0
        %v1042 = vadd.f32 0.0, %v1041
        %1043 = vmatmul.f32.gmra.mxu0 %v525
        %v1044 = vpop.f32.mrf.mxu0
        %v1045 = vadd.f32 0.0, %v1044
        %1046 = vmatmul.f32.gmra.mxu0 %v528
        %v1047 = vpop.f32.mrf.mxu0
        %v1048 = vadd.f32 0.0, %v1047
        %1049 = vmatmul.f32.gmra.mxu0 %v531
        %v1050 = vpop.f32.mrf.mxu0
        %v1051 = vadd.f32 0.0, %v1050
        %1052 = vmatmul.f32.gmra.mxu0 %v534
        %v1053 = vpop.f32.mrf.mxu0
        %v1054 = vadd.f32 0.0, %v1053
        %1055 = vmatmul.f32.gmra.mxu0 %v537
        %v1056 = vpop.f32.mrf.mxu0
        %v1057 = vadd.f32 0.0, %v1056
        %1058 = vmatmul.f32.gmra.mxu0 %v540
        %v1059 = vpop.f32.mrf.mxu0
        %v1060 = vadd.f32 0.0, %v1059
        %1061 = vmatmul.f32.gmra.mxu0 %v543
        %v1062 = vpop.f32.mrf.mxu0
        %v1063 = vadd.f32 0.0, %v1062
        %1064 = vmatmul.f32.gmra.mxu0 %v546
        %v1065 = vpop.f32.mrf.mxu0
        %v1066 = vadd.f32 0.0, %v1065
        %1067 = vmatmul.f32.gmra.mxu0 %v549
        %v1068 = vpop.f32.mrf.mxu0
        %v1069 = vadd.f32 0.0, %v1068
        %1070 = vmatmul.f32.gmra.mxu0 %v552
        %v1071 = vpop.f32.mrf.mxu0
        %v1072 = vadd.f32 0.0, %v1071
        %1073 = vmatmul.f32.gmra.mxu0 %v555
        %v1074 = vpop.f32.mrf.mxu0
        %v1075 = vadd.f32 0.0, %v1074
        %1076 = vmatmul.f32.gmra.mxu0 %v558
        %v1077 = vpop.f32.mrf.mxu0
        %v1078 = vadd.f32 0.0, %v1077
        %1079 = vmatmul.f32.gmra.mxu0 %v561
        %v1080 = vpop.f32.mrf.mxu0
        %v1081 = vadd.f32 0.0, %v1080
        %1082 = vmatmul.f32.gmra.mxu0 %v564
        %v1083 = vpop.f32.mrf.mxu0
        %v1084 = vadd.f32 0.0, %v1083
        %1085 = vdwg.mxu0
        %1086 = vmatpush.msra.mxu0 0.0
        %1087 = vmatpush.msra.mxu0 0.0
        %1088 = vmatpush.msra.mxu0 0.0
        %1089 = vmatpush.msra.mxu0 0.0
        %1090 = vmatpush.msra.mxu0 0.0
        %1091 = vmatpush.msra.mxu0 0.0
        %1092 = vmatpush.msra.mxu0 0.0
        %1093 = vmatpush.msra.mxu0 0.0
        %1094 = vmatpush.msra.mxu0 0.0
        %1095 = vmatpush.msra.mxu0 0.0
        %1096 = vmatpush.msra.mxu0 0.0
        %1097 = vmatpush.msra.mxu0 0.0
        %1098 = vmatpush.msra.mxu0 %v515
        %1099 = vmatpush.msra.mxu0 %v505
        %1100 = vmatpush.msra.mxu0 %v495
        %1101 = vmatpush.msra.mxu0 %v485
        %1102 = vmatmul.f32.gmra.mxu0 %v519
        %v1103 = vpop.f32.mrf.mxu0
        %v1104 = vadd.f32 0.0, %v1103
        %1105 = vmatmul.f32.gmra.mxu0 %v522
        %v1106 = vpop.f32.mrf.mxu0
        %v1107 = vadd.f32 0.0, %v1106
        %1108 = vmatmul.f32.gmra.mxu0 %v525
        %v1109 = vpop.f32.mrf.mxu0
        %v1110 = vadd.f32 0.0, %v1109
        %1111 = vmatmul.f32.gmra.mxu0 %v528
        %v1112 = vpop.f32.mrf.mxu0
        %v1113 = vadd.f32 0.0, %v1112
        %1114 = vmatmul.f32.gmra.mxu0 %v531
        %v1115 = vpop.f32.mrf.mxu0
        %v1116 = vadd.f32 0.0, %v1115
        %1117 = vmatmul.f32.gmra.mxu0 %v534
        %v1118 = vpop.f32.mrf.mxu0
        %v1119 = vadd.f32 0.0, %v1118
        %1120 = vmatmul.f32.gmra.mxu0 %v537
        %v1121 = vpop.f32.mrf.mxu0
        %v1122 = vadd.f32 0.0, %v1121
        %1123 = vmatmul.f32.gmra.mxu0 %v540
        %v1124 = vpop.f32.mrf.mxu0
        %v1125 = vadd.f32 0.0, %v1124
        %1126 = vmatmul.f32.gmra.mxu0 %v543
        %v1127 = vpop.f32.mrf.mxu0
        %v1128 = vadd.f32 0.0, %v1127
        %1129 = vmatmul.f32.gmra.mxu0 %v546
        %v1130 = vpop.f32.mrf.mxu0
        %v1131 = vadd.f32 0.0, %v1130
        %1132 = vmatmul.f32.gmra.mxu0 %v549
        %v1133 = vpop.f32.mrf.mxu0
        %v1134 = vadd.f32 0.0, %v1133
        %1135 = vmatmul.f32.gmra.mxu0 %v552
        %v1136 = vpop.f32.mrf.mxu0
        %v1137 = vadd.f32 0.0, %v1136
        %1138 = vmatmul.f32.gmra.mxu0 %v555
        %v1139 = vpop.f32.mrf.mxu0
        %v1140 = vadd.f32 0.0, %v1139
        %1141 = vmatmul.f32.gmra.mxu0 %v558
        %v1142 = vpop.f32.mrf.mxu0
        %v1143 = vadd.f32 0.0, %v1142
        %1144 = vmatmul.f32.gmra.mxu0 %v561
        %v1145 = vpop.f32.mrf.mxu0
        %v1146 = vadd.f32 0.0, %v1145
        %1147 = vmatmul.f32.gmra.mxu0 %v564
        %v1148 = vpop.f32.mrf.mxu0
        %v1149 = vadd.f32 0.0, %v1148
        %1150 = vdwg.mxu0
        %1151 = vmatpush.msra.mxu0 0.0
        %1152 = vmatpush.msra.mxu0 0.0
        %1153 = vmatpush.msra.mxu0 0.0
        %1154 = vmatpush.msra.mxu0 0.0
        %1155 = vmatpush.msra.mxu0 0.0
        %1156 = vmatpush.msra.mxu0 0.0
        %1157 = vmatpush.msra.mxu0 0.0
        %1158 = vmatpush.msra.mxu0 0.0
        %1159 = vmatpush.msra.mxu0 0.0
        %1160 = vmatpush.msra.mxu0 0.0
        %1161 = vmatpush.msra.mxu0 0.0
        %1162 = vmatpush.msra.mxu0 0.0
        %1163 = vmatpush.msra.mxu0 %v516
        %1164 = vmatpush.msra.mxu0 %v506
        %1165 = vmatpush.msra.mxu0 %v496
        %1166 = vmatpush.msra.mxu0 %v486
        %1167 = vmatmul.f32.gmra.mxu0 %v519
        %v1168 = vpop.f32.mrf.mxu0
        %v1169 = vadd.f32 0.0, %v1168
        %1170 = vmatmul.f32.gmra.mxu0 %v522
        %v1171 = vpop.f32.mrf.mxu0
        %v1172 = vadd.f32 0.0, %v1171
        %1173 = vmatmul.f32.gmra.mxu0 %v525
        %v1174 = vpop.f32.mrf.mxu0
        %v1175 = vadd.f32 0.0, %v1174
        %1176 = vmatmul.f32.gmra.mxu0 %v528
        %v1177 = vpop.f32.mrf.mxu0
        %v1178 = vadd.f32 0.0, %v1177
        %1179 = vmatmul.f32.gmra.mxu0 %v531
        %v1180 = vpop.f32.mrf.mxu0
        %v1181 = vadd.f32 0.0, %v1180
        %1182 = vmatmul.f32.gmra.mxu0 %v534
        %v1183 = vpop.f32.mrf.mxu0
        %v1184 = vadd.f32 0.0, %v1183
        %1185 = vmatmul.f32.gmra.mxu0 %v537
        %v1186 = vpop.f32.mrf.mxu0
        %v1187 = vadd.f32 0.0, %v1186
        %1188 = vmatmul.f32.gmra.mxu0 %v540
        %v1189 = vpop.f32.mrf.mxu0
        %v1190 = vadd.f32 0.0, %v1189
        %1191 = vmatmul.f32.gmra.mxu0 %v543
        %v1192 = vpop.f32.mrf.mxu0
        %v1193 = vadd.f32 0.0, %v1192
        %1194 = vmatmul.f32.gmra.mxu0 %v546
        %v1195 = vpop.f32.mrf.mxu0
        %v1196 = vadd.f32 0.0, %v1195
        %1197 = vmatmul.f32.gmra.mxu0 %v549
        %v1198 = vpop.f32.mrf.mxu0
        %v1199 = vadd.f32 0.0, %v1198
        %1200 = vmatmul.f32.gmra.mxu0 %v552
        %v1201 = vpop.f32.mrf.mxu0
        %v1202 = vadd.f32 0.0, %v1201
        %1203 = vmatmul.f32.gmra.mxu0 %v555
        %v1204 = vpop.f32.mrf.mxu0
        %v1205 = vadd.f32 0.0, %v1204
        %1206 = vmatmul.f32.gmra.mxu0 %v558
        %v1207 = vpop.f32.mrf.mxu0
        %v1208 = vadd.f32 0.0, %v1207
        %1209 = vmatmul.f32.gmra.mxu0 %v561
        %v1210 = vpop.f32.mrf.mxu0
        %v1211 = vadd.f32 0.0, %v1210
        %1212 = vmatmul.f32.gmra.mxu0 %v564
        %v1213 = vpop.f32.mrf.mxu0
        %v1214 = vadd.f32 0.0, %v1213
        %1215 = vdwg.mxu0
        %v1216 = vld [vmem:[%s2] sm:$0xff]
        %v1217 = vld [vmem:[%s2 + $0x8] sm:$0x3]
        %v1220 = vperm.slane %v1216, 0
        %v1221 = vperm.slane %v1216, 1
        %v1222 = vperm.slane %v1216, 2
        %v1223 = vperm.slane %v1216, 3
        %v1224 = vperm.slane %v1216, 4
        %v1225 = vperm.slane %v1216, 5
        %v1226 = vperm.slane %v1216, 6
        %v1227 = vperm.slane %v1216, 7
        %v1228 = vperm.slane %v1217, 0
        %v1229 = vperm.slane %v1217, 1
        %v1240 = vmul.f32 %v584, %v1220
        %v1241 = vmul.f32 %v649, %v1221
        %v1242 = vmul.f32 %v714, %v1222
        %v1243 = vmul.f32 %v779, %v1223
        %v1244 = vmul.f32 %v844, %v1224
        %v1245 = vmul.f32 %v909, %v1225
        %v1246 = vmul.f32 %v974, %v1226
        %v1247 = vmul.f32 %v1039, %v1227
        %v1248 = vmul.f32 %v1104, %v1228
        %v1249 = vmul.f32 %v1169, %v1229
        %v1250 = vmul.f32 %v587, %v1220
        %v1251 = vmul.f32 %v652, %v1221
        %v1252 = vmul.f32 %v717, %v1222
        %v1253 = vmul.f32 %v782, %v1223
        %v1254 = vmul.f32 %v847, %v1224
        %v1255 = vmul.f32 %v912, %v1225
        %v1256 = vmul.f32 %v977, %v1226
        %v1257 = vmul.f32 %v1042, %v1227
        %v1258 = vmul.f32 %v1107, %v1228
        %v1259 = vmul.f32 %v1172, %v1229
        %v1260 = vmul.f32 %v590, %v1220
        %v1261 = vmul.f32 %v655, %v1221
        %v1262 = vmul.f32 %v720, %v1222
        %v1263 = vmul.f32 %v785, %v1223
        %v1264 = vmul.f32 %v850, %v1224
        %v1265 = vmul.f32 %v915, %v1225
        %v1266 = vmul.f32 %v980, %v1226
        %v1267 = vmul.f32 %v1045, %v1227
        %v1268 = vmul.f32 %v1110, %v1228
        %v1269 = vmul.f32 %v1175, %v1229
        %v1270 = vmul.f32 %v593, %v1220
        %v1271 = vmul.f32 %v658, %v1221
        %v1272 = vmul.f32 %v723, %v1222
        %v1273 = vmul.f32 %v788, %v1223
        %v1274 = vmul.f32 %v853, %v1224
        %v1275 = vmul.f32 %v918, %v1225
        %v1276 = vmul.f32 %v983, %v1226
        %v1277 = vmul.f32 %v1048, %v1227
        %v1278 = vmul.f32 %v1113, %v1228
        %v1279 = vmul.f32 %v1178, %v1229
        %v1280 = vmul.f32 %v596, %v1220
        %v1281 = vmul.f32 %v661, %v1221
        %v1282 = vmul.f32 %v726, %v1222
        %v1283 = vmul.f32 %v791, %v1223
        %v1284 = vmul.f32 %v856, %v1224
        %v1285 = vmul.f32 %v921, %v1225
        %v1286 = vmul.f32 %v986, %v1226
        %v1287 = vmul.f32 %v1051, %v1227
        %v1288 = vmul.f32 %v1116, %v1228
        %v1289 = vmul.f32 %v1181, %v1229
        %v1290 = vmul.f32 %v599, %v1220
        %v1291 = vmul.f32 %v664, %v1221
        %v1292 = vmul.f32 %v729, %v1222
        %v1293 = vmul.f32 %v794, %v1223
        %v1294 = vmul.f32 %v859, %v1224
        %v1295 = vmul.f32 %v924, %v1225
        %v1296 = vmul.f32 %v989, %v1226
        %v1297 = vmul.f32 %v1054, %v1227
        %v1298 = vmul.f32 %v1119, %v1228
        %v1299 = vmul.f32 %v1184, %v1229
        %v1300 = vmul.f32 %v602, %v1220
        %v1301 = vmul.f32 %v667, %v1221
        %v1302 = vmul.f32 %v732, %v1222
        %v1303 = vmul.f32 %v797, %v1223
        %v1304 = vmul.f32 %v862, %v1224
        %v1305 = vmul.f32 %v927, %v1225
        %v1306 = vmul.f32 %v992, %v1226
        %v1307 = vmul.f32 %v1057, %v1227
        %v1308 = vmul.f32 %v1122, %v1228
        %v1309 = vmul.f32 %v1187, %v1229
        %v1310 = vmul.f32 %v605, %v1220
        %v1311 = vmul.f32 %v670, %v1221
        %v1312 = vmul.f32 %v735, %v1222
        %v1313 = vmul.f32 %v800, %v1223
        %v1314 = vmul.f32 %v865, %v1224
        %v1315 = vmul.f32 %v930, %v1225
        %v1316 = vmul.f32 %v995, %v1226
        %v1317 = vmul.f32 %v1060, %v1227
        %v1318 = vmul.f32 %v1125, %v1228
        %v1319 = vmul.f32 %v1190, %v1229
        %v1320 = vmul.f32 %v608, %v1220
        %v1321 = vmul.f32 %v673, %v1221
        %v1322 = vmul.f32 %v738, %v1222
        %v1323 = vmul.f32 %v803, %v1223
        %v1324 = vmul.f32 %v868, %v1224
        %v1325 = vmul.f32 %v933, %v1225
        %v1326 = vmul.f32 %v998, %v1226
        %v1327 = vmul.f32 %v1063, %v1227
        %v1328 = vmul.f32 %v1128, %v1228
        %v1329 = vmul.f32 %v1193, %v1229
        %v1330 = vmul.f32 %v611, %v1220
        %v1331 = vmul.f32 %v676, %v1221
        %v1332 = vmul.f32 %v741, %v1222
        %v1333 = vmul.f32 %v806, %v1223
        %v1334 = vmul.f32 %v871, %v1224
        %v1335 = vmul.f32 %v936, %v1225
        %v1336 = vmul.f32 %v1001, %v1226
        %v1337 = vmul.f32 %v1066, %v1227
        %v1338 = vmul.f32 %v1131, %v1228
        %v1339 = vmul.f32 %v1196, %v1229
        %v1340 = vmul.f32 %v614, %v1220
        %v1341 = vmul.f32 %v679, %v1221
        %v1342 = vmul.f32 %v744, %v1222
        %v1343 = vmul.f32 %v809, %v1223
        %v1344 = vmul.f32 %v874, %v1224
        %v1345 = vmul.f32 %v939, %v1225
        %v1346 = vmul.f32 %v1004, %v1226
        %v1347 = vmul.f32 %v1069, %v1227
        %v1348 = vmul.f32 %v1134, %v1228
        %v1349 = vmul.f32 %v1199, %v1229
        %v1350 = vmul.f32 %v617, %v1220
        %v1351 = vmul.f32 %v682, %v1221
        %v1352 = vmul.f32 %v747, %v1222
        %v1353 = vmul.f32 %v812, %v1223
        %v1354 = vmul.f32 %v877, %v1224
        %v1355 = vmul.f32 %v942, %v1225
        %v1356 = vmul.f32 %v1007, %v1226
        %v1357 = vmul.f32 %v1072, %v1227
        %v1358 = vmul.f32 %v1137, %v1228
        %v1359 = vmul.f32 %v1202, %v1229
        %v1360 = vmul.f32 %v620, %v1220
        %v1361 = vmul.f32 %v685, %v1221
        %v1362 = vmul.f32 %v750, %v1222
        %v1363 = vmul.f32 %v815, %v1223
        %v1364 = vmul.f32 %v880, %v1224
        %v1365 = vmul.f32 %v945, %v1225
        %v1366 = vmul.f32 %v1010, %v1226
        %v1367 = vmul.f32 %v1075, %v1227
        %v1368 = vmul.f32 %v1140, %v1228
        %v1369 = vmul.f32 %v1205, %v1229
        %v1370 = vmul.f32 %v623, %v1220
        %v1371 = vmul.f32 %v688, %v1221
        %v1372 = vmul.f32 %v753, %v1222
        %v1373 = vmul.f32 %v818, %v1223
        %v1374 = vmul.f32 %v883, %v1224
        %v1375 = vmul.f32 %v948, %v1225
        %v1376 = vmul.f32 %v1013, %v1226
        %v1377 = vmul.f32 %v1078, %v1227
        %v1378 = vmul.f32 %v1143, %v1228
        %v1379 = vmul.f32 %v1208, %v1229
        %v1380 = vmul.f32 %v626, %v1220
        %v1381 = vmul.f32 %v691, %v1221
        %v1382 = vmul.f32 %v756, %v1222
        %v1383 = vmul.f32 %v821, %v1223
        %v1384 = vmul.f32 %v886, %v1224
        %v1385 = vmul.f32 %v951, %v1225
        %v1386 = vmul.f32 %v1016, %v1226
        %v1387 = vmul.f32 %v1081, %v1227
        %v1388 = vmul.f32 %v1146, %v1228
        %v1389 = vmul.f32 %v1211, %v1229
        %v1390 = vmul.f32 %v629, %v1220
        %v1391 = vmul.f32 %v694, %v1221
        %v1392 = vmul.f32 %v759, %v1222
        %v1393 = vmul.f32 %v824, %v1223
        %v1394 = vmul.f32 %v889, %v1224
        %v1395 = vmul.f32 %v954, %v1225
        %v1396 = vmul.f32 %v1019, %v1226
        %v1397 = vmul.f32 %v1084, %v1227
        %v1398 = vmul.f32 %v1149, %v1228
        %v1399 = vmul.f32 %v1214, %v1229
        %v1400 = vld [vmem:[%s3] sm:$0xff]
        %v1401 = vld [vmem:[%s3 + $0x8] sm:$0x3]
        %v1404 = vperm.slane %v1400, 0
        %v1405 = vperm.slane %v1400, 1
        %v1406 = vperm.slane %v1400, 2
        %v1407 = vperm.slane %v1400, 3
        %v1408 = vperm.slane %v1400, 4
        %v1409 = vperm.slane %v1400, 5
        %v1410 = vperm.slane %v1400, 6
        %v1411 = vperm.slane %v1400, 7
        %v1412 = vperm.slane %v1401, 0
        %v1413 = vperm.slane %v1401, 1
        %v1424 = vadd.f32 %v1240, %v1404
        %v1425 = vadd.f32 %v1241, %v1405
        %v1426 = vadd.f32 %v1242, %v1406
        %v1427 = vadd.f32 %v1243, %v1407
        %v1428 = vadd.f32 %v1244, %v1408
        %v1429 = vadd.f32 %v1245, %v1409
        %v1430 = vadd.f32 %v1246, %v1410
        %v1431 = vadd.f32 %v1247, %v1411
        %v1432 = vadd.f32 %v1248, %v1412
        %v1433 = vadd.f32 %v1249, %v1413
        %v1434 = vadd.f32 %v1250, %v1404
        %v1435 = vadd.f32 %v1251, %v1405
        %v1436 = vadd.f32 %v1252, %v1406
        %v1437 = vadd.f32 %v1253, %v1407
        %v1438 = vadd.f32 %v1254, %v1408
        %v1439 = vadd.f32 %v1255, %v1409
        %v1440 = vadd.f32 %v1256, %v1410
        %v1441 = vadd.f32 %v1257, %v1411
        %v1442 = vadd.f32 %v1258, %v1412
        %v1443 = vadd.f32 %v1259, %v1413
        %v1444 = vadd.f32 %v1260, %v1404
        %v1445 = vadd.f32 %v1261, %v1405
        %v1446 = vadd.f32 %v1262, %v1406
        %v1447 = vadd.f32 %v1263, %v1407
        %v1448 = vadd.f32 %v1264, %v1408
        %v1449 = vadd.f32 %v1265, %v1409
        %v1450 = vadd.f32 %v1266, %v1410
        %v1451 = vadd.f32 %v1267, %v1411
        %v1452 = vadd.f32 %v1268, %v1412
        %v1453 = vadd.f32 %v1269, %v1413
        %v1454 = vadd.f32 %v1270, %v1404
        %v1455 = vadd.f32 %v1271, %v1405
        %v1456 = vadd.f32 %v1272, %v1406
        %v1457 = vadd.f32 %v1273, %v1407
        %v1458 = vadd.f32 %v1274, %v1408
        %v1459 = vadd.f32 %v1275, %v1409
        %v1460 = vadd.f32 %v1276, %v1410
        %v1461 = vadd.f32 %v1277, %v1411
        %v1462 = vadd.f32 %v1278, %v1412
        %v1463 = vadd.f32 %v1279, %v1413
        %v1464 = vadd.f32 %v1280, %v1404
        %v1465 = vadd.f32 %v1281, %v1405
        %v1466 = vadd.f32 %v1282, %v1406
        %v1467 = vadd.f32 %v1283, %v1407
        %v1468 = vadd.f32 %v1284, %v1408
        %v1469 = vadd.f32 %v1285, %v1409
        %v1470 = vadd.f32 %v1286, %v1410
        %v1471 = vadd.f32 %v1287, %v1411
        %v1472 = vadd.f32 %v1288, %v1412
        %v1473 = vadd.f32 %v1289, %v1413
        %v1474 = vadd.f32 %v1290, %v1404
        %v1475 = vadd.f32 %v1291, %v1405
        %v1476 = vadd.f32 %v1292, %v1406
        %v1477 = vadd.f32 %v1293, %v1407
        %v1478 = vadd.f32 %v1294, %v1408
        %v1479 = vadd.f32 %v1295, %v1409
        %v1480 = vadd.f32 %v1296, %v1410
        %v1481 = vadd.f32 %v1297, %v1411
        %v1482 = vadd.f32 %v1298, %v1412
        %v1483 = vadd.f32 %v1299, %v1413
        %v1484 = vadd.f32 %v1300, %v1404
        %v1485 = vadd.f32 %v1301, %v1405
        %v1486 = vadd.f32 %v1302, %v1406
        %v1487 = vadd.f32 %v1303, %v1407
        %v1488 = vadd.f32 %v1304, %v1408
        %v1489 = vadd.f32 %v1305, %v1409
        %v1490 = vadd.f32 %v1306, %v1410
        %v1491 = vadd.f32 %v1307, %v1411
        %v1492 = vadd.f32 %v1308, %v1412
        %v1493 = vadd.f32 %v1309, %v1413
        %v1494 = vadd.f32 %v1310, %v1404
        %v1495 = vadd.f32 %v1311, %v1405
        %v1496 = vadd.f32 %v1312, %v1406
        %v1497 = vadd.f32 %v1313, %v1407
        %v1498 = vadd.f32 %v1314, %v1408
        %v1499 = vadd.f32 %v1315, %v1409
        %v1500 = vadd.f32 %v1316, %v1410
        %v1501 = vadd.f32 %v1317, %v1411
        %v1502 = vadd.f32 %v1318, %v1412
        %v1503 = vadd.f32 %v1319, %v1413
        %v1504 = vadd.f32 %v1320, %v1404
        %v1505 = vadd.f32 %v1321, %v1405
        %v1506 = vadd.f32 %v1322, %v1406
        %v1507 = vadd.f32 %v1323, %v1407
        %v1508 = vadd.f32 %v1324, %v1408
        %v1509 = vadd.f32 %v1325, %v1409
        %v1510 = vadd.f32 %v1326, %v1410
        %v1511 = vadd.f32 %v1327, %v1411
        %v1512 = vadd.f32 %v1328, %v1412
        %v1513 = vadd.f32 %v1329, %v1413
        %v1514 = vadd.f32 %v1330, %v1404
        %v1515 = vadd.f32 %v1331, %v1405
        %v1516 = vadd.f32 %v1332, %v1406
        %v1517 = vadd.f32 %v1333, %v1407
        %v1518 = vadd.f32 %v1334, %v1408
        %v1519 = vadd.f32 %v1335, %v1409
        %v1520 = vadd.f32 %v1336, %v1410
        %v1521 = vadd.f32 %v1337, %v1411
        %v1522 = vadd.f32 %v1338, %v1412
        %v1523 = vadd.f32 %v1339, %v1413
        %v1524 = vadd.f32 %v1340, %v1404
        %v1525 = vadd.f32 %v1341, %v1405
        %v1526 = vadd.f32 %v1342, %v1406
        %v1527 = vadd.f32 %v1343, %v1407
        %v1528 = vadd.f32 %v1344, %v1408
        %v1529 = vadd.f32 %v1345, %v1409
        %v1530 = vadd.f32 %v1346, %v1410
        %v1531 = vadd.f32 %v1347, %v1411
        %v1532 = vadd.f32 %v1348, %v1412
        %v1533 = vadd.f32 %v1349, %v1413
        %v1534 = vadd.f32 %v1350, %v1404
        %v1535 = vadd.f32 %v1351, %v1405
        %v1536 = vadd.f32 %v1352, %v1406
        %v1537 = vadd.f32 %v1353, %v1407
        %v1538 = vadd.f32 %v1354, %v1408
        %v1539 = vadd.f32 %v1355, %v1409
        %v1540 = vadd.f32 %v1356, %v1410
        %v1541 = vadd.f32 %v1357, %v1411
        %v1542 = vadd.f32 %v1358, %v1412
        %v1543 = vadd.f32 %v1359, %v1413
        %v1544 = vadd.f32 %v1360, %v1404
        %v1545 = vadd.f32 %v1361, %v1405
        %v1546 = vadd.f32 %v1362, %v1406
        %v1547 = vadd.f32 %v1363, %v1407
        %v1548 = vadd.f32 %v1364, %v1408
        %v1549 = vadd.f32 %v1365, %v1409
        %v1550 = vadd.f32 %v1366, %v1410
        %v1551 = vadd.f32 %v1367, %v1411
        %v1552 = vadd.f32 %v1368, %v1412
        %v1553 = vadd.f32 %v1369, %v1413
        %v1554 = vadd.f32 %v1370, %v1404
        %v1555 = vadd.f32 %v1371, %v1405
        %v1556 = vadd.f32 %v1372, %v1406
        %v1557 = vadd.f32 %v1373, %v1407
        %v1558 = vadd.f32 %v1374, %v1408
        %v1559 = vadd.f32 %v1375, %v1409
        %v1560 = vadd.f32 %v1376, %v1410
        %v1561 = vadd.f32 %v1377, %v1411
        %v1562 = vadd.f32 %v1378, %v1412
        %v1563 = vadd.f32 %v1379, %v1413
        %v1564 = vadd.f32 %v1380, %v1404
        %v1565 = vadd.f32 %v1381, %v1405
        %v1566 = vadd.f32 %v1382, %v1406
        %v1567 = vadd.f32 %v1383, %v1407
        %v1568 = vadd.f32 %v1384, %v1408
        %v1569 = vadd.f32 %v1385, %v1409
        %v1570 = vadd.f32 %v1386, %v1410
        %v1571 = vadd.f32 %v1387, %v1411
        %v1572 = vadd.f32 %v1388, %v1412
        %v1573 = vadd.f32 %v1389, %v1413
        %v1574 = vadd.f32 %v1390, %v1404
        %v1575 = vadd.f32 %v1391, %v1405
        %v1576 = vadd.f32 %v1392, %v1406
        %v1577 = vadd.f32 %v1393, %v1407
        %v1578 = vadd.f32 %v1394, %v1408
        %v1579 = vadd.f32 %v1395, %v1409
        %v1580 = vadd.f32 %v1396, %v1410
        %v1581 = vadd.f32 %v1397, %v1411
        %v1582 = vadd.f32 %v1398, %v1412
        %v1583 = vadd.f32 %v1399, %v1413
        %v1584 = vxor.u32 %v1424, 2147483648
        %v1585 = vxor.u32 %v1425, 2147483648
        %v1586 = vxor.u32 %v1426, 2147483648
        %v1587 = vxor.u32 %v1427, 2147483648
        %v1588 = vxor.u32 %v1428, 2147483648
        %v1589 = vxor.u32 %v1429, 2147483648
        %v1590 = vxor.u32 %v1430, 2147483648
        %v1591 = vxor.u32 %v1431, 2147483648
        %v1592 = vxor.u32 %v1432, 2147483648
        %v1593 = vxor.u32 %v1433, 2147483648
        %v1594 = vxor.u32 %v1434, 2147483648
        %v1595 = vxor.u32 %v1435, 2147483648
        %v1596 = vxor.u32 %v1436, 2147483648
        %v1597 = vxor.u32 %v1437, 2147483648
        %v1598 = vxor.u32 %v1438, 2147483648
        %v1599 = vxor.u32 %v1439, 2147483648
        %v1600 = vxor.u32 %v1440, 2147483648
        %v1601 = vxor.u32 %v1441, 2147483648
        %v1602 = vxor.u32 %v1442, 2147483648
        %v1603 = vxor.u32 %v1443, 2147483648
        %v1604 = vxor.u32 %v1444, 2147483648
        %v1605 = vxor.u32 %v1445, 2147483648
        %v1606 = vxor.u32 %v1446, 2147483648
        %v1607 = vxor.u32 %v1447, 2147483648
        %v1608 = vxor.u32 %v1448, 2147483648
        %v1609 = vxor.u32 %v1449, 2147483648
        %v1610 = vxor.u32 %v1450, 2147483648
        %v1611 = vxor.u32 %v1451, 2147483648
        %v1612 = vxor.u32 %v1452, 2147483648
        %v1613 = vxor.u32 %v1453, 2147483648
        %v1614 = vxor.u32 %v1454, 2147483648
        %v1615 = vxor.u32 %v1455, 2147483648
        %v1616 = vxor.u32 %v1456, 2147483648
        %v1617 = vxor.u32 %v1457, 2147483648
        %v1618 = vxor.u32 %v1458, 2147483648
        %v1619 = vxor.u32 %v1459, 2147483648
        %v1620 = vxor.u32 %v1460, 2147483648
        %v1621 = vxor.u32 %v1461, 2147483648
        %v1622 = vxor.u32 %v1462, 2147483648
        %v1623 = vxor.u32 %v1463, 2147483648
        %v1624 = vxor.u32 %v1464, 2147483648
        %v1625 = vxor.u32 %v1465, 2147483648
        %v1626 = vxor.u32 %v1466, 2147483648
        %v1627 = vxor.u32 %v1467, 2147483648
        %v1628 = vxor.u32 %v1468, 2147483648
        %v1629 = vxor.u32 %v1469, 2147483648
        %v1630 = vxor.u32 %v1470, 2147483648
        %v1631 = vxor.u32 %v1471, 2147483648
        %v1632 = vxor.u32 %v1472, 2147483648
        %v1633 = vxor.u32 %v1473, 2147483648
        %v1634 = vxor.u32 %v1474, 2147483648
        %v1635 = vxor.u32 %v1475, 2147483648
        %v1636 = vxor.u32 %v1476, 2147483648
        %v1637 = vxor.u32 %v1477, 2147483648
        %v1638 = vxor.u32 %v1478, 2147483648
        %v1639 = vxor.u32 %v1479, 2147483648
        %v1640 = vxor.u32 %v1480, 2147483648
        %v1641 = vxor.u32 %v1481, 2147483648
        %v1642 = vxor.u32 %v1482, 2147483648
        %v1643 = vxor.u32 %v1483, 2147483648
        %v1644 = vxor.u32 %v1484, 2147483648
        %v1645 = vxor.u32 %v1485, 2147483648
        %v1646 = vxor.u32 %v1486, 2147483648
        %v1647 = vxor.u32 %v1487, 2147483648
        %v1648 = vxor.u32 %v1488, 2147483648
        %v1649 = vxor.u32 %v1489, 2147483648
        %v1650 = vxor.u32 %v1490, 2147483648
        %v1651 = vxor.u32 %v1491, 2147483648
        %v1652 = vxor.u32 %v1492, 2147483648
        %v1653 = vxor.u32 %v1493, 2147483648
        %v1654 = vxor.u32 %v1494, 2147483648
        %v1655 = vxor.u32 %v1495, 2147483648
        %v1656 = vxor.u32 %v1496, 2147483648
        %v1657 = vxor.u32 %v1497, 2147483648
        %v1658 = vxor.u32 %v1498, 2147483648
        %v1659 = vxor.u32 %v1499, 2147483648
        %v1660 = vxor.u32 %v1500, 2147483648
        %v1661 = vxor.u32 %v1501, 2147483648
        %v1662 = vxor.u32 %v1502, 2147483648
        %v1663 = vxor.u32 %v1503, 2147483648
        %v1664 = vxor.u32 %v1504, 2147483648
        %v1665 = vxor.u32 %v1505, 2147483648
        %v1666 = vxor.u32 %v1506, 2147483648
        %v1667 = vxor.u32 %v1507, 2147483648
        %v1668 = vxor.u32 %v1508, 2147483648
        %v1669 = vxor.u32 %v1509, 2147483648
        %v1670 = vxor.u32 %v1510, 2147483648
        %v1671 = vxor.u32 %v1511, 2147483648
        %v1672 = vxor.u32 %v1512, 2147483648
        %v1673 = vxor.u32 %v1513, 2147483648
        %v1674 = vxor.u32 %v1514, 2147483648
        %v1675 = vxor.u32 %v1515, 2147483648
        %v1676 = vxor.u32 %v1516, 2147483648
        %v1677 = vxor.u32 %v1517, 2147483648
        %v1678 = vxor.u32 %v1518, 2147483648
        %v1679 = vxor.u32 %v1519, 2147483648
        %v1680 = vxor.u32 %v1520, 2147483648
        %v1681 = vxor.u32 %v1521, 2147483648
        %v1682 = vxor.u32 %v1522, 2147483648
        %v1683 = vxor.u32 %v1523, 2147483648
        %v1684 = vxor.u32 %v1524, 2147483648
        %v1685 = vxor.u32 %v1525, 2147483648
        %v1686 = vxor.u32 %v1526, 2147483648
        %v1687 = vxor.u32 %v1527, 2147483648
        %v1688 = vxor.u32 %v1528, 2147483648
        %v1689 = vxor.u32 %v1529, 2147483648
        %v1690 = vxor.u32 %v1530, 2147483648
        %v1691 = vxor.u32 %v1531, 2147483648
        %v1692 = vxor.u32 %v1532, 2147483648
        %v1693 = vxor.u32 %v1533, 2147483648
        %v1694 = vxor.u32 %v1534, 2147483648
        %v1695 = vxor.u32 %v1535, 2147483648
        %v1696 = vxor.u32 %v1536, 2147483648
        %v1697 = vxor.u32 %v1537, 2147483648
        %v1698 = vxor.u32 %v1538, 2147483648
        %v1699 = vxor.u32 %v1539, 2147483648
        %v1700 = vxor.u32 %v1540, 2147483648
        %v1701 = vxor.u32 %v1541, 2147483648
        %v1702 = vxor.u32 %v1542, 2147483648
        %v1703 = vxor.u32 %v1543, 2147483648
        %v1704 = vxor.u32 %v1544, 2147483648
        %v1705 = vxor.u32 %v1545, 2147483648
        %v1706 = vxor.u32 %v1546, 2147483648
        %v1707 = vxor.u32 %v1547, 2147483648
        %v1708 = vxor.u32 %v1548, 2147483648
        %v1709 = vxor.u32 %v1549, 2147483648
        %v1710 = vxor.u32 %v1550, 2147483648
        %v1711 = vxor.u32 %v1551, 2147483648
        %v1712 = vxor.u32 %v1552, 2147483648
        %v1713 = vxor.u32 %v1553, 2147483648
        %v1714 = vxor.u32 %v1554, 2147483648
        %v1715 = vxor.u32 %v1555, 2147483648
        %v1716 = vxor.u32 %v1556, 2147483648
        %v1717 = vxor.u32 %v1557, 2147483648
        %v1718 = vxor.u32 %v1558, 2147483648
        %v1719 = vxor.u32 %v1559, 2147483648
        %v1720 = vxor.u32 %v1560, 2147483648
        %v1721 = vxor.u32 %v1561, 2147483648
        %v1722 = vxor.u32 %v1562, 2147483648
        %v1723 = vxor.u32 %v1563, 2147483648
        %v1724 = vxor.u32 %v1564, 2147483648
        %v1725 = vxor.u32 %v1565, 2147483648
        %v1726 = vxor.u32 %v1566, 2147483648
        %v1727 = vxor.u32 %v1567, 2147483648
        %v1728 = vxor.u32 %v1568, 2147483648
        %v1729 = vxor.u32 %v1569, 2147483648
        %v1730 = vxor.u32 %v1570, 2147483648
        %v1731 = vxor.u32 %v1571, 2147483648
        %v1732 = vxor.u32 %v1572, 2147483648
        %v1733 = vxor.u32 %v1573, 2147483648
        %v1734 = vxor.u32 %v1574, 2147483648
        %v1735 = vxor.u32 %v1575, 2147483648
        %v1736 = vxor.u32 %v1576, 2147483648
        %v1737 = vxor.u32 %v1577, 2147483648
        %v1738 = vxor.u32 %v1578, 2147483648
        %v1739 = vxor.u32 %v1579, 2147483648
        %v1740 = vxor.u32 %v1580, 2147483648
        %v1741 = vxor.u32 %v1581, 2147483648
        %v1742 = vxor.u32 %v1582, 2147483648
        %v1743 = vxor.u32 %v1583, 2147483648
        %v1744 = vmul.f32 %v1584, 1.442695
        %v1745 = vpow.pop %v1744
        %v1746 = vmul.f32 %v1585, 1.442695
        %v1747 = vpow.pop %v1746
        %v1748 = vmul.f32 %v1586, 1.442695
        %v1749 = vpow.pop %v1748
        %v1750 = vmul.f32 %v1587, 1.442695
        %v1751 = vpow.pop %v1750
        %v1752 = vmul.f32 %v1588, 1.442695
        %v1753 = vpow.pop %v1752
        %v1754 = vmul.f32 %v1589, 1.442695
        %v1755 = vpow.pop %v1754
        %v1756 = vmul.f32 %v1590, 1.442695
        %v1757 = vpow.pop %v1756
        %v1758 = vmul.f32 %v1591, 1.442695
        %v1759 = vpow.pop %v1758
        %v1760 = vmul.f32 %v1592, 1.442695
        %v1761 = vpow.pop %v1760
        %v1762 = vmul.f32 %v1593, 1.442695
        %v1763 = vpow.pop %v1762
        %v1764 = vmul.f32 %v1594, 1.442695
        %v1765 = vpow.pop %v1764
        %v1766 = vmul.f32 %v1595, 1.442695
        %v1767 = vpow.pop %v1766
        %v1768 = vmul.f32 %v1596, 1.442695
        %v1769 = vpow.pop %v1768
        %v1770 = vmul.f32 %v1597, 1.442695
        %v1771 = vpow.pop %v1770
        %v1772 = vmul.f32 %v1598, 1.442695
        %v1773 = vpow.pop %v1772
        %v1774 = vmul.f32 %v1599, 1.442695
        %v1775 = vpow.pop %v1774
        %v1776 = vmul.f32 %v1600, 1.442695
        %v1777 = vpow.pop %v1776
        %v1778 = vmul.f32 %v1601, 1.442695
        %v1779 = vpow.pop %v1778
        %v1780 = vmul.f32 %v1602, 1.442695
        %v1781 = vpow.pop %v1780
        %v1782 = vmul.f32 %v1603, 1.442695
        %v1783 = vpow.pop %v1782
        %v1784 = vmul.f32 %v1604, 1.442695
        %v1785 = vpow.pop %v1784
        %v1786 = vmul.f32 %v1605, 1.442695
        %v1787 = vpow.pop %v1786
        %v1788 = vmul.f32 %v1606, 1.442695
        %v1789 = vpow.pop %v1788
        %v1790 = vmul.f32 %v1607, 1.442695
        %v1791 = vpow.pop %v1790
        %v1792 = vmul.f32 %v1608, 1.442695
        %v1793 = vpow.pop %v1792
        %v1794 = vmul.f32 %v1609, 1.442695
        %v1795 = vpow.pop %v1794
        %v1796 = vmul.f32 %v1610, 1.442695
        %v1797 = vpow.pop %v1796
        %v1798 = vmul.f32 %v1611, 1.442695
        %v1799 = vpow.pop %v1798
        %v1800 = vmul.f32 %v1612, 1.442695
        %v1801 = vpow.pop %v1800
        %v1802 = vmul.f32 %v1613, 1.442695
        %v1803 = vpow.pop %v1802
        %v1804 = vmul.f32 %v1614, 1.442695
        %v1805 = vpow.pop %v1804
        %v1806 = vmul.f32 %v1615, 1.442695
        %v1807 = vpow.pop %v1806
        %v1808 = vmul.f32 %v1616, 1.442695
        %v1809 = vpow.pop %v1808
        %v1810 = vmul.f32 %v1617, 1.442695
        %v1811 = vpow.pop %v1810
        %v1812 = vmul.f32 %v1618, 1.442695
        %v1813 = vpow.pop %v1812
        %v1814 = vmul.f32 %v1619, 1.442695
        %v1815 = vpow.pop %v1814
        %v1816 = vmul.f32 %v1620, 1.442695
        %v1817 = vpow.pop %v1816
        %v1818 = vmul.f32 %v1621, 1.442695
        %v1819 = vpow.pop %v1818
        %v1820 = vmul.f32 %v1622, 1.442695
        %v1821 = vpow.pop %v1820
        %v1822 = vmul.f32 %v1623, 1.442695
        %v1823 = vpow.pop %v1822
        %v1824 = vmul.f32 %v1624, 1.442695
        %v1825 = vpow.pop %v1824
        %v1826 = vmul.f32 %v1625, 1.442695
        %v1827 = vpow.pop %v1826
        %v1828 = vmul.f32 %v1626, 1.442695
        %v1829 = vpow.pop %v1828
        %v1830 = vmul.f32 %v1627, 1.442695
        %v1831 = vpow.pop %v1830
        %v1832 = vmul.f32 %v1628, 1.442695
        %v1833 = vpow.pop %v1832
        %v1834 = vmul.f32 %v1629, 1.442695
        %v1835 = vpow.pop %v1834
        %v1836 = vmul.f32 %v1630, 1.442695
        %v1837 = vpow.pop %v1836
        %v1838 = vmul.f32 %v1631, 1.442695
        %v1839 = vpow.pop %v1838
        %v1840 = vmul.f32 %v1632, 1.442695
        %v1841 = vpow.pop %v1840
        %v1842 = vmul.f32 %v1633, 1.442695
        %v1843 = vpow.pop %v1842
        %v1844 = vmul.f32 %v1634, 1.442695
        %v1845 = vpow.pop %v1844
        %v1846 = vmul.f32 %v1635, 1.442695
        %v1847 = vpow.pop %v1846
        %v1848 = vmul.f32 %v1636, 1.442695
        %v1849 = vpow.pop %v1848
        %v1850 = vmul.f32 %v1637, 1.442695
        %v1851 = vpow.pop %v1850
        %v1852 = vmul.f32 %v1638, 1.442695
        %v1853 = vpow.pop %v1852
        %v1854 = vmul.f32 %v1639, 1.442695
        %v1855 = vpow.pop %v1854
        %v1856 = vmul.f32 %v1640, 1.442695
        %v1857 = vpow.pop %v1856
        %v1858 = vmul.f32 %v1641, 1.442695
        %v1859 = vpow.pop %v1858
        %v1860 = vmul.f32 %v1642, 1.442695
        %v1861 = vpow.pop %v1860
        %v1862 = vmul.f32 %v1643, 1.442695
        %v1863 = vpow.pop %v1862
        %v1864 = vmul.f32 %v1644, 1.442695
        %v1865 = vpow.pop %v1864
        %v1866 = vmul.f32 %v1645, 1.442695
        %v1867 = vpow.pop %v1866
        %v1868 = vmul.f32 %v1646, 1.442695
        %v1869 = vpow.pop %v1868
        %v1870 = vmul.f32 %v1647, 1.442695
        %v1871 = vpow.pop %v1870
        %v1872 = vmul.f32 %v1648, 1.442695
        %v1873 = vpow.pop %v1872
        %v1874 = vmul.f32 %v1649, 1.442695
        %v1875 = vpow.pop %v1874
        %v1876 = vmul.f32 %v1650, 1.442695
        %v1877 = vpow.pop %v1876
        %v1878 = vmul.f32 %v1651, 1.442695
        %v1879 = vpow.pop %v1878
        %v1880 = vmul.f32 %v1652, 1.442695
        %v1881 = vpow.pop %v1880
        %v1882 = vmul.f32 %v1653, 1.442695
        %v1883 = vpow.pop %v1882
        %v1884 = vmul.f32 %v1654, 1.442695
        %v1885 = vpow.pop %v1884
        %v1886 = vmul.f32 %v1655, 1.442695
        %v1887 = vpow.pop %v1886
        %v1888 = vmul.f32 %v1656, 1.442695
        %v1889 = vpow.pop %v1888
        %v1890 = vmul.f32 %v1657, 1.442695
        %v1891 = vpow.pop %v1890
        %v1892 = vmul.f32 %v1658, 1.442695
        %v1893 = vpow.pop %v1892
        %v1894 = vmul.f32 %v1659, 1.442695
        %v1895 = vpow.pop %v1894
        %v1896 = vmul.f32 %v1660, 1.442695
        %v1897 = vpow.pop %v1896
        %v1898 = vmul.f32 %v1661, 1.442695
        %v1899 = vpow.pop %v1898
        %v1900 = vmul.f32 %v1662, 1.442695
        %v1901 = vpow.pop %v1900
        %v1902 = vmul.f32 %v1663, 1.442695
        %v1903 = vpow.pop %v1902
        %v1904 = vmul.f32 %v1664, 1.442695
        %v1905 = vpow.pop %v1904
        %v1906 = vmul.f32 %v1665, 1.442695
        %v1907 = vpow.pop %v1906
        %v1908 = vmul.f32 %v1666, 1.442695
        %v1909 = vpow.pop %v1908
        %v1910 = vmul.f32 %v1667, 1.442695
        %v1911 = vpow.pop %v1910
        %v1912 = vmul.f32 %v1668, 1.442695
        %v1913 = vpow.pop %v1912
        %v1914 = vmul.f32 %v1669, 1.442695
        %v1915 = vpow.pop %v1914
        %v1916 = vmul.f32 %v1670, 1.442695
        %v1917 = vpow.pop %v1916
        %v1918 = vmul.f32 %v1671, 1.442695
        %v1919 = vpow.pop %v1918
        %v1920 = vmul.f32 %v1672, 1.442695
        %v1921 = vpow.pop %v1920
        %v1922 = vmul.f32 %v1673, 1.442695
        %v1923 = vpow.pop %v1922
        %v1924 = vmul.f32 %v1674, 1.442695
        %v1925 = vpow.pop %v1924
        %v1926 = vmul.f32 %v1675, 1.442695
        %v1927 = vpow.pop %v1926
        %v1928 = vmul.f32 %v1676, 1.442695
        %v1929 = vpow.pop %v1928
        %v1930 = vmul.f32 %v1677, 1.442695
        %v1931 = vpow.pop %v1930
        %v1932 = vmul.f32 %v1678, 1.442695
        %v1933 = vpow.pop %v1932
        %v1934 = vmul.f32 %v1679, 1.442695
        %v1935 = vpow.pop %v1934
        %v1936 = vmul.f32 %v1680, 1.442695
        %v1937 = vpow.pop %v1936
        %v1938 = vmul.f32 %v1681, 1.442695
        %v1939 = vpow.pop %v1938
        %v1940 = vmul.f32 %v1682, 1.442695
        %v1941 = vpow.pop %v1940
        %v1942 = vmul.f32 %v1683, 1.442695
        %v1943 = vpow.pop %v1942
        %v1944 = vmul.f32 %v1684, 1.442695
        %v1945 = vpow.pop %v1944
        %v1946 = vmul.f32 %v1685, 1.442695
        %v1947 = vpow.pop %v1946
        %v1948 = vmul.f32 %v1686, 1.442695
        %v1949 = vpow.pop %v1948
        %v1950 = vmul.f32 %v1687, 1.442695
        %v1951 = vpow.pop %v1950
        %v1952 = vmul.f32 %v1688, 1.442695
        %v1953 = vpow.pop %v1952
        %v1954 = vmul.f32 %v1689, 1.442695
        %v1955 = vpow.pop %v1954
        %v1956 = vmul.f32 %v1690, 1.442695
        %v1957 = vpow.pop %v1956
        %v1958 = vmul.f32 %v1691, 1.442695
        %v1959 = vpow.pop %v1958
        %v1960 = vmul.f32 %v1692, 1.442695
        %v1961 = vpow.pop %v1960
        %v1962 = vmul.f32 %v1693, 1.442695
        %v1963 = vpow.pop %v1962
        %v1964 = vmul.f32 %v1694, 1.442695
        %v1965 = vpow.pop %v1964
        %v1966 = vmul.f32 %v1695, 1.442695
        %v1967 = vpow.pop %v1966
        %v1968 = vmul.f32 %v1696, 1.442695
        %v1969 = vpow.pop %v1968
        %v1970 = vmul.f32 %v1697, 1.442695
        %v1971 = vpow.pop %v1970
        %v1972 = vmul.f32 %v1698, 1.442695
        %v1973 = vpow.pop %v1972
        %v1974 = vmul.f32 %v1699, 1.442695
        %v1975 = vpow.pop %v1974
        %v1976 = vmul.f32 %v1700, 1.442695
        %v1977 = vpow.pop %v1976
        %v1978 = vmul.f32 %v1701, 1.442695
        %v1979 = vpow.pop %v1978
        %v1980 = vmul.f32 %v1702, 1.442695
        %v1981 = vpow.pop %v1980
        %v1982 = vmul.f32 %v1703, 1.442695
        %v1983 = vpow.pop %v1982
        %v1984 = vmul.f32 %v1704, 1.442695
        %v1985 = vpow.pop %v1984
        %v1986 = vmul.f32 %v1705, 1.442695
        %v1987 = vpow.pop %v1986
        %v1988 = vmul.f32 %v1706, 1.442695
        %v1989 = vpow.pop %v1988
        %v1990 = vmul.f32 %v1707, 1.442695
        %v1991 = vpow.pop %v1990
        %v1992 = vmul.f32 %v1708, 1.442695
        %v1993 = vpow.pop %v1992
        %v1994 = vmul.f32 %v1709, 1.442695
        %v1995 = vpow.pop %v1994
        %v1996 = vmul.f32 %v1710, 1.442695
        %v1997 = vpow.pop %v1996
        %v1998 = vmul.f32 %v1711, 1.442695
        %v1999 = vpow.pop %v1998
        %v2000 = vmul.f32 %v1712, 1.442695
        %v2001 = vpow.pop %v2000
        %v2002 = vmul.f32 %v1713, 1.442695
        %v2003 = vpow.pop %v2002
        %v2004 = vmul.f32 %v1714, 1.442695
        %v2005 = vpow.pop %v2004
        %v2006 = vmul.f32 %v1715, 1.442695
        %v2007 = vpow.pop %v2006
        %v2008 = vmul.f32 %v1716, 1.442695
        %v2009 = vpow.pop %v2008
        %v2010 = vmul.f32 %v1717, 1.442695
        %v2011 = vpow.pop %v2010
        %v2012 = vmul.f32 %v1718, 1.442695
        %v2013 = vpow.pop %v2012
        %v2014 = vmul.f32 %v1719, 1.442695
        %v2015 = vpow.pop %v2014
        %v2016 = vmul.f32 %v1720, 1.442695
        %v2017 = vpow.pop %v2016
        %v2018 = vmul.f32 %v1721, 1.442695
        %v2019 = vpow.pop %v2018
        %v2020 = vmul.f32 %v1722, 1.442695
        %v2021 = vpow.pop %v2020
        %v2022 = vmul.f32 %v1723, 1.442695
        %v2023 = vpow.pop %v2022
        %v2024 = vmul.f32 %v1724, 1.442695
        %v2025 = vpow.pop %v2024
        %v2026 = vmul.f32 %v1725, 1.442695
        %v2027 = vpow.pop %v2026
        %v2028 = vmul.f32 %v1726, 1.442695
        %v2029 = vpow.pop %v2028
        %v2030 = vmul.f32 %v1727, 1.442695
        %v2031 = vpow.pop %v2030
        %v2032 = vmul.f32 %v1728, 1.442695
        %v2033 = vpow.pop %v2032
        %v2034 = vmul.f32 %v1729, 1.442695
        %v2035 = vpow.pop %v2034
        %v2036 = vmul.f32 %v1730, 1.442695
        %v2037 = vpow.pop %v2036
        %v2038 = vmul.f32 %v1731, 1.442695
        %v2039 = vpow.pop %v2038
        %v2040 = vmul.f32 %v1732, 1.442695
        %v2041 = vpow.pop %v2040
        %v2042 = vmul.f32 %v1733, 1.442695
        %v2043 = vpow.pop %v2042
        %v2044 = vmul.f32 %v1734, 1.442695
        %v2045 = vpow.pop %v2044
        %v2046 = vmul.f32 %v1735, 1.442695
        %v2047 = vpow.pop %v2046
        %v2048 = vmul.f32 %v1736, 1.442695
        %v2049 = vpow.pop %v2048
        %v2050 = vmul.f32 %v1737, 1.442695
        %v2051 = vpow.pop %v2050
        %v2052 = vmul.f32 %v1738, 1.442695
        %v2053 = vpow.pop %v2052
        %v2054 = vmul.f32 %v1739, 1.442695
        %v2055 = vpow.pop %v2054
        %v2056 = vmul.f32 %v1740, 1.442695
        %v2057 = vpow.pop %v2056
        %v2058 = vmul.f32 %v1741, 1.442695
        %v2059 = vpow.pop %v2058
        %v2060 = vmul.f32 %v1742, 1.442695
        %v2061 = vpow.pop %v2060
        %v2062 = vmul.f32 %v1743, 1.442695
        %v2063 = vpow.pop %v2062
        %v2064 = vadd.f32 %v1745, 1.0
        %v2065 = vadd.f32 %v1747, 1.0
        %v2066 = vadd.f32 %v1749, 1.0
        %v2067 = vadd.f32 %v1751, 1.0
        %v2068 = vadd.f32 %v1753, 1.0
        %v2069 = vadd.f32 %v1755, 1.0
        %v2070 = vadd.f32 %v1757, 1.0
        %v2071 = vadd.f32 %v1759, 1.0
        %v2072 = vadd.f32 %v1761, 1.0
        %v2073 = vadd.f32 %v1763, 1.0
        %v2074 = vadd.f32 %v1765, 1.0
        %v2075 = vadd.f32 %v1767, 1.0
        %v2076 = vadd.f32 %v1769, 1.0
        %v2077 = vadd.f32 %v1771, 1.0
        %v2078 = vadd.f32 %v1773, 1.0
        %v2079 = vadd.f32 %v1775, 1.0
        %v2080 = vadd.f32 %v1777, 1.0
        %v2081 = vadd.f32 %v1779, 1.0
        %v2082 = vadd.f32 %v1781, 1.0
        %v2083 = vadd.f32 %v1783, 1.0
        %v2084 = vadd.f32 %v1785, 1.0
        %v2085 = vadd.f32 %v1787, 1.0
        %v2086 = vadd.f32 %v1789, 1.0
        %v2087 = vadd.f32 %v1791, 1.0
        %v2088 = vadd.f32 %v1793, 1.0
        %v2089 = vadd.f32 %v1795, 1.0
        %v2090 = vadd.f32 %v1797, 1.0
        %v2091 = vadd.f32 %v1799, 1.0
        %v2092 = vadd.f32 %v1801, 1.0
        %v2093 = vadd.f32 %v1803, 1.0
        %v2094 = vadd.f32 %v1805, 1.0
        %v2095 = vadd.f32 %v1807, 1.0
        %v2096 = vadd.f32 %v1809, 1.0
        %v2097 = vadd.f32 %v1811, 1.0
        %v2098 = vadd.f32 %v1813, 1.0
        %v2099 = vadd.f32 %v1815, 1.0
        %v2100 = vadd.f32 %v1817, 1.0
        %v2101 = vadd.f32 %v1819, 1.0
        %v2102 = vadd.f32 %v1821, 1.0
        %v2103 = vadd.f32 %v1823, 1.0
        %v2104 = vadd.f32 %v1825, 1.0
        %v2105 = vadd.f32 %v1827, 1.0
        %v2106 = vadd.f32 %v1829, 1.0
        %v2107 = vadd.f32 %v1831, 1.0
        %v2108 = vadd.f32 %v1833, 1.0
        %v2109 = vadd.f32 %v1835, 1.0
        %v2110 = vadd.f32 %v1837, 1.0
        %v2111 = vadd.f32 %v1839, 1.0
        %v2112 = vadd.f32 %v1841, 1.0
        %v2113 = vadd.f32 %v1843, 1.0
        %v2114 = vadd.f32 %v1845, 1.0
        %v2115 = vadd.f32 %v1847, 1.0
        %v2116 = vadd.f32 %v1849, 1.0
        %v2117 = vadd.f32 %v1851, 1.0
        %v2118 = vadd.f32 %v1853, 1.0
        %v2119 = vadd.f32 %v1855, 1.0
        %v2120 = vadd.f32 %v1857, 1.0
        %v2121 = vadd.f32 %v1859, 1.0
        %v2122 = vadd.f32 %v1861, 1.0
        %v2123 = vadd.f32 %v1863, 1.0
        %v2124 = vadd.f32 %v1865, 1.0
        %v2125 = vadd.f32 %v1867, 1.0
        %v2126 = vadd.f32 %v1869, 1.0
        %v2127 = vadd.f32 %v1871, 1.0
        %v2128 = vadd.f32 %v1873, 1.0
        %v2129 = vadd.f32 %v1875, 1.0
        %v2130 = vadd.f32 %v1877, 1.0
        %v2131 = vadd.f32 %v1879, 1.0
        %v2132 = vadd.f32 %v1881, 1.0
        %v2133 = vadd.f32 %v1883, 1.0
        %v2134 = vadd.f32 %v1885, 1.0
        %v2135 = vadd.f32 %v1887, 1.0
        %v2136 = vadd.f32 %v1889, 1.0
        %v2137 = vadd.f32 %v1891, 1.0
        %v2138 = vadd.f32 %v1893, 1.0
        %v2139 = vadd.f32 %v1895, 1.0
        %v2140 = vadd.f32 %v1897, 1.0
        %v2141 = vadd.f32 %v1899, 1.0
        %v2142 = vadd.f32 %v1901, 1.0
        %v2143 = vadd.f32 %v1903, 1.0
        %v2144 = vadd.f32 %v1905, 1.0
        %v2145 = vadd.f32 %v1907, 1.0
        %v2146 = vadd.f32 %v1909, 1.0
        %v2147 = vadd.f32 %v1911, 1.0
        %v2148 = vadd.f32 %v1913, 1.0
        %v2149 = vadd.f32 %v1915, 1.0
        %v2150 = vadd.f32 %v1917, 1.0
        %v2151 = vadd.f32 %v1919, 1.0
        %v2152 = vadd.f32 %v1921, 1.0
        %v2153 = vadd.f32 %v1923, 1.0
        %v2154 = vadd.f32 %v1925, 1.0
        %v2155 = vadd.f32 %v1927, 1.0
        %v2156 = vadd.f32 %v1929, 1.0
        %v2157 = vadd.f32 %v1931, 1.0
        %v2158 = vadd.f32 %v1933, 1.0
        %v2159 = vadd.f32 %v1935, 1.0
        %v2160 = vadd.f32 %v1937, 1.0
        %v2161 = vadd.f32 %v1939, 1.0
        %v2162 = vadd.f32 %v1941, 1.0
        %v2163 = vadd.f32 %v1943, 1.0
        %v2164 = vadd.f32 %v1945, 1.0
        %v2165 = vadd.f32 %v1947, 1.0
        %v2166 = vadd.f32 %v1949, 1.0
        %v2167 = vadd.f32 %v1951, 1.0
        %v2168 = vadd.f32 %v1953, 1.0
        %v2169 = vadd.f32 %v1955, 1.0
        %v2170 = vadd.f32 %v1957, 1.0
        %v2171 = vadd.f32 %v1959, 1.0
        %v2172 = vadd.f32 %v1961, 1.0
        %v2173 = vadd.f32 %v1963, 1.0
        %v2174 = vadd.f32 %v1965, 1.0
        %v2175 = vadd.f32 %v1967, 1.0
        %v2176 = vadd.f32 %v1969, 1.0
        %v2177 = vadd.f32 %v1971, 1.0
        %v2178 = vadd.f32 %v1973, 1.0
        %v2179 = vadd.f32 %v1975, 1.0
        %v2180 = vadd.f32 %v1977, 1.0
        %v2181 = vadd.f32 %v1979, 1.0
        %v2182 = vadd.f32 %v1981, 1.0
        %v2183 = vadd.f32 %v1983, 1.0
        %v2184 = vadd.f32 %v1985, 1.0
        %v2185 = vadd.f32 %v1987, 1.0
        %v2186 = vadd.f32 %v1989, 1.0
        %v2187 = vadd.f32 %v1991, 1.0
        %v2188 = vadd.f32 %v1993, 1.0
        %v2189 = vadd.f32 %v1995, 1.0
        %v2190 = vadd.f32 %v1997, 1.0
        %v2191 = vadd.f32 %v1999, 1.0
        %v2192 = vadd.f32 %v2001, 1.0
        %v2193 = vadd.f32 %v2003, 1.0
        %v2194 = vadd.f32 %v2005, 1.0
        %v2195 = vadd.f32 %v2007, 1.0
        %v2196 = vadd.f32 %v2009, 1.0
        %v2197 = vadd.f32 %v2011, 1.0
        %v2198 = vadd.f32 %v2013, 1.0
        %v2199 = vadd.f32 %v2015, 1.0
        %v2200 = vadd.f32 %v2017, 1.0
        %v2201 = vadd.f32 %v2019, 1.0
        %v2202 = vadd.f32 %v2021, 1.0
        %v2203 = vadd.f32 %v2023, 1.0
        %v2204 = vadd.f32 %v2025, 1.0
        %v2205 = vadd.f32 %v2027, 1.0
        %v2206 = vadd.f32 %v2029, 1.0
        %v2207 = vadd.f32 %v2031, 1.0
        %v2208 = vadd.f32 %v2033, 1.0
        %v2209 = vadd.f32 %v2035, 1.0
        %v2210 = vadd.f32 %v2037, 1.0
        %v2211 = vadd.f32 %v2039, 1.0
        %v2212 = vadd.f32 %v2041, 1.0
        %v2213 = vadd.f32 %v2043, 1.0
        %v2214 = vadd.f32 %v2045, 1.0
        %v2215 = vadd.f32 %v2047, 1.0
        %v2216 = vadd.f32 %v2049, 1.0
        %v2217 = vadd.f32 %v2051, 1.0
        %v2218 = vadd.f32 %v2053, 1.0
        %v2219 = vadd.f32 %v2055, 1.0
        %v2220 = vadd.f32 %v2057, 1.0
        %v2221 = vadd.f32 %v2059, 1.0
        %v2222 = vadd.f32 %v2061, 1.0
        %v2223 = vadd.f32 %v2063, 1.0
        %v2224 = vrcp.pop %v2064
        %v2225 = vmul.f32 %v2064, %v2224
        %v2226 = vsub.f32 1.0, %v2225
        %v2227 = vmul.f32 %v2224, %v2226
        %v2228 = vadd.f32 %v2224, %v2227
        %vm2229 = vweird.f32 %v2064
        %vm2230 = vweird.f32 %v2224
        %vm2231 = vmor %vm2229, %vm2230
        %v2232 = vsel %vm2231, %v2224, %v2228
        %v2233 = vand.u32 2147483647, %v2064
        %vm2234 = vcmp.eq.f32.partialorder %v2233, 8.507059e+37
        %v2235 = vand.u32 %v2064, 2147483648
        %v2236 = vor.u32 1.1754944e-38, %v2235
        %v2237 = vsel %vm2234, %v2236, %v2232
        %v2238 = vmul.f32 1.0, %v2237
        %v2239 = vrcp.pop %v2065
        %v2240 = vmul.f32 %v2065, %v2239
        %v2241 = vsub.f32 1.0, %v2240
        %v2242 = vmul.f32 %v2239, %v2241
        %v2243 = vadd.f32 %v2239, %v2242
        %vm2244 = vweird.f32 %v2065
        %vm2245 = vweird.f32 %v2239
        %vm2246 = vmor %vm2244, %vm2245
        %v2247 = vsel %vm2246, %v2239, %v2243
        %v2248 = vand.u32 2147483647, %v2065
        %vm2249 = vcmp.eq.f32.partialorder %v2248, 8.507059e+37
        %v2250 = vand.u32 %v2065, 2147483648
        %v2251 = vor.u32 1.1754944e-38, %v2250
        %v2252 = vsel %vm2249, %v2251, %v2247
        %v2253 = vmul.f32 1.0, %v2252
        %v2254 = vrcp.pop %v2066
        %v2255 = vmul.f32 %v2066, %v2254
        %v2256 = vsub.f32 1.0, %v2255
        %v2257 = vmul.f32 %v2254, %v2256
        %v2258 = vadd.f32 %v2254, %v2257
        %vm2259 = vweird.f32 %v2066
        %vm2260 = vweird.f32 %v2254
        %vm2261 = vmor %vm2259, %vm2260
        %v2262 = vsel %vm2261, %v2254, %v2258
        %v2263 = vand.u32 2147483647, %v2066
        %vm2264 = vcmp.eq.f32.partialorder %v2263, 8.507059e+37
        %v2265 = vand.u32 %v2066, 2147483648
        %v2266 = vor.u32 1.1754944e-38, %v2265
        %v2267 = vsel %vm2264, %v2266, %v2262
        %v2268 = vmul.f32 1.0, %v2267
        %v2269 = vrcp.pop %v2067
        %v2270 = vmul.f32 %v2067, %v2269
        %v2271 = vsub.f32 1.0, %v2270
        %v2272 = vmul.f32 %v2269, %v2271
        %v2273 = vadd.f32 %v2269, %v2272
        %vm2274 = vweird.f32 %v2067
        %vm2275 = vweird.f32 %v2269
        %vm2276 = vmor %vm2274, %vm2275
        %v2277 = vsel %vm2276, %v2269, %v2273
        %v2278 = vand.u32 2147483647, %v2067
        %vm2279 = vcmp.eq.f32.partialorder %v2278, 8.507059e+37
        %v2280 = vand.u32 %v2067, 2147483648
        %v2281 = vor.u32 1.1754944e-38, %v2280
        %v2282 = vsel %vm2279, %v2281, %v2277
        %v2283 = vmul.f32 1.0, %v2282
        %v2284 = vrcp.pop %v2068
        %v2285 = vmul.f32 %v2068, %v2284
        %v2286 = vsub.f32 1.0, %v2285
        %v2287 = vmul.f32 %v2284, %v2286
        %v2288 = vadd.f32 %v2284, %v2287
        %vm2289 = vweird.f32 %v2068
        %vm2290 = vweird.f32 %v2284
        %vm2291 = vmor %vm2289, %vm2290
        %v2292 = vsel %vm2291, %v2284, %v2288
        %v2293 = vand.u32 2147483647, %v2068
        %vm2294 = vcmp.eq.f32.partialorder %v2293, 8.507059e+37
        %v2295 = vand.u32 %v2068, 2147483648
        %v2296 = vor.u32 1.1754944e-38, %v2295
        %v2297 = vsel %vm2294, %v2296, %v2292
        %v2298 = vmul.f32 1.0, %v2297
        %v2299 = vrcp.pop %v2069
        %v2300 = vmul.f32 %v2069, %v2299
        %v2301 = vsub.f32 1.0, %v2300
        %v2302 = vmul.f32 %v2299, %v2301
        %v2303 = vadd.f32 %v2299, %v2302
        %vm2304 = vweird.f32 %v2069
        %vm2305 = vweird.f32 %v2299
        %vm2306 = vmor %vm2304, %vm2305
        %v2307 = vsel %vm2306, %v2299, %v2303
        %v2308 = vand.u32 2147483647, %v2069
        %vm2309 = vcmp.eq.f32.partialorder %v2308, 8.507059e+37
        %v2310 = vand.u32 %v2069, 2147483648
        %v2311 = vor.u32 1.1754944e-38, %v2310
        %v2312 = vsel %vm2309, %v2311, %v2307
        %v2313 = vmul.f32 1.0, %v2312
        %v2314 = vrcp.pop %v2070
        %v2315 = vmul.f32 %v2070, %v2314
        %v2316 = vsub.f32 1.0, %v2315
        %v2317 = vmul.f32 %v2314, %v2316
        %v2318 = vadd.f32 %v2314, %v2317
        %vm2319 = vweird.f32 %v2070
        %vm2320 = vweird.f32 %v2314
        %vm2321 = vmor %vm2319, %vm2320
        %v2322 = vsel %vm2321, %v2314, %v2318
        %v2323 = vand.u32 2147483647, %v2070
        %vm2324 = vcmp.eq.f32.partialorder %v2323, 8.507059e+37
        %v2325 = vand.u32 %v2070, 2147483648
        %v2326 = vor.u32 1.1754944e-38, %v2325
        %v2327 = vsel %vm2324, %v2326, %v2322
        %v2328 = vmul.f32 1.0, %v2327
        %v2329 = vrcp.pop %v2071
        %v2330 = vmul.f32 %v2071, %v2329
        %v2331 = vsub.f32 1.0, %v2330
        %v2332 = vmul.f32 %v2329, %v2331
        %v2333 = vadd.f32 %v2329, %v2332
        %vm2334 = vweird.f32 %v2071
        %vm2335 = vweird.f32 %v2329
        %vm2336 = vmor %vm2334, %vm2335
        %v2337 = vsel %vm2336, %v2329, %v2333
        %v2338 = vand.u32 2147483647, %v2071
        %vm2339 = vcmp.eq.f32.partialorder %v2338, 8.507059e+37
        %v2340 = vand.u32 %v2071, 2147483648
        %v2341 = vor.u32 1.1754944e-38, %v2340
        %v2342 = vsel %vm2339, %v2341, %v2337
        %v2343 = vmul.f32 1.0, %v2342
        %v2344 = vrcp.pop %v2072
        %v2345 = vmul.f32 %v2072, %v2344
        %v2346 = vsub.f32 1.0, %v2345
        %v2347 = vmul.f32 %v2344, %v2346
        %v2348 = vadd.f32 %v2344, %v2347
        %vm2349 = vweird.f32 %v2072
        %vm2350 = vweird.f32 %v2344
        %vm2351 = vmor %vm2349, %vm2350
        %v2352 = vsel %vm2351, %v2344, %v2348
        %v2353 = vand.u32 2147483647, %v2072
        %vm2354 = vcmp.eq.f32.partialorder %v2353, 8.507059e+37
        %v2355 = vand.u32 %v2072, 2147483648
        %v2356 = vor.u32 1.1754944e-38, %v2355
        %v2357 = vsel %vm2354, %v2356, %v2352
        %v2358 = vmul.f32 1.0, %v2357
        %v2359 = vrcp.pop %v2073
        %v2360 = vmul.f32 %v2073, %v2359
        %v2361 = vsub.f32 1.0, %v2360
        %v2362 = vmul.f32 %v2359, %v2361
        %v2363 = vadd.f32 %v2359, %v2362
        %vm2364 = vweird.f32 %v2073
        %vm2365 = vweird.f32 %v2359
        %vm2366 = vmor %vm2364, %vm2365
        %v2367 = vsel %vm2366, %v2359, %v2363
        %v2368 = vand.u32 2147483647, %v2073
        %vm2369 = vcmp.eq.f32.partialorder %v2368, 8.507059e+37
        %v2370 = vand.u32 %v2073, 2147483648
        %v2371 = vor.u32 1.1754944e-38, %v2370
        %v2372 = vsel %vm2369, %v2371, %v2367
        %v2373 = vmul.f32 1.0, %v2372
        %v2374 = vrcp.pop %v2074
        %v2375 = vmul.f32 %v2074, %v2374
        %v2376 = vsub.f32 1.0, %v2375
        %v2377 = vmul.f32 %v2374, %v2376
        %v2378 = vadd.f32 %v2374, %v2377
        %vm2379 = vweird.f32 %v2074
        %vm2380 = vweird.f32 %v2374
        %vm2381 = vmor %vm2379, %vm2380
        %v2382 = vsel %vm2381, %v2374, %v2378
        %v2383 = vand.u32 2147483647, %v2074
        %vm2384 = vcmp.eq.f32.partialorder %v2383, 8.507059e+37
        %v2385 = vand.u32 %v2074, 2147483648
        %v2386 = vor.u32 1.1754944e-38, %v2385
        %v2387 = vsel %vm2384, %v2386, %v2382
        %v2388 = vmul.f32 1.0, %v2387
        %v2389 = vrcp.pop %v2075
        %v2390 = vmul.f32 %v2075, %v2389
        %v2391 = vsub.f32 1.0, %v2390
        %v2392 = vmul.f32 %v2389, %v2391
        %v2393 = vadd.f32 %v2389, %v2392
        %vm2394 = vweird.f32 %v2075
        %vm2395 = vweird.f32 %v2389
        %vm2396 = vmor %vm2394, %vm2395
        %v2397 = vsel %vm2396, %v2389, %v2393
        %v2398 = vand.u32 2147483647, %v2075
        %vm2399 = vcmp.eq.f32.partialorder %v2398, 8.507059e+37
        %v2400 = vand.u32 %v2075, 2147483648
        %v2401 = vor.u32 1.1754944e-38, %v2400
        %v2402 = vsel %vm2399, %v2401, %v2397
        %v2403 = vmul.f32 1.0, %v2402
        %v2404 = vrcp.pop %v2076
        %v2405 = vmul.f32 %v2076, %v2404
        %v2406 = vsub.f32 1.0, %v2405
        %v2407 = vmul.f32 %v2404, %v2406
        %v2408 = vadd.f32 %v2404, %v2407
        %vm2409 = vweird.f32 %v2076
        %vm2410 = vweird.f32 %v2404
        %vm2411 = vmor %vm2409, %vm2410
        %v2412 = vsel %vm2411, %v2404, %v2408
        %v2413 = vand.u32 2147483647, %v2076
        %vm2414 = vcmp.eq.f32.partialorder %v2413, 8.507059e+37
        %v2415 = vand.u32 %v2076, 2147483648
        %v2416 = vor.u32 1.1754944e-38, %v2415
        %v2417 = vsel %vm2414, %v2416, %v2412
        %v2418 = vmul.f32 1.0, %v2417
        %v2419 = vrcp.pop %v2077
        %v2420 = vmul.f32 %v2077, %v2419
        %v2421 = vsub.f32 1.0, %v2420
        %v2422 = vmul.f32 %v2419, %v2421
        %v2423 = vadd.f32 %v2419, %v2422
        %vm2424 = vweird.f32 %v2077
        %vm2425 = vweird.f32 %v2419
        %vm2426 = vmor %vm2424, %vm2425
        %v2427 = vsel %vm2426, %v2419, %v2423
        %v2428 = vand.u32 2147483647, %v2077
        %vm2429 = vcmp.eq.f32.partialorder %v2428, 8.507059e+37
        %v2430 = vand.u32 %v2077, 2147483648
        %v2431 = vor.u32 1.1754944e-38, %v2430
        %v2432 = vsel %vm2429, %v2431, %v2427
        %v2433 = vmul.f32 1.0, %v2432
        %v2434 = vrcp.pop %v2078
        %v2435 = vmul.f32 %v2078, %v2434
        %v2436 = vsub.f32 1.0, %v2435
        %v2437 = vmul.f32 %v2434, %v2436
        %v2438 = vadd.f32 %v2434, %v2437
        %vm2439 = vweird.f32 %v2078
        %vm2440 = vweird.f32 %v2434
        %vm2441 = vmor %vm2439, %vm2440
        %v2442 = vsel %vm2441, %v2434, %v2438
        %v2443 = vand.u32 2147483647, %v2078
        %vm2444 = vcmp.eq.f32.partialorder %v2443, 8.507059e+37
        %v2445 = vand.u32 %v2078, 2147483648
        %v2446 = vor.u32 1.1754944e-38, %v2445
        %v2447 = vsel %vm2444, %v2446, %v2442
        %v2448 = vmul.f32 1.0, %v2447
        %v2449 = vrcp.pop %v2079
        %v2450 = vmul.f32 %v2079, %v2449
        %v2451 = vsub.f32 1.0, %v2450
        %v2452 = vmul.f32 %v2449, %v2451
        %v2453 = vadd.f32 %v2449, %v2452
        %vm2454 = vweird.f32 %v2079
        %vm2455 = vweird.f32 %v2449
        %vm2456 = vmor %vm2454, %vm2455
        %v2457 = vsel %vm2456, %v2449, %v2453
        %v2458 = vand.u32 2147483647, %v2079
        %vm2459 = vcmp.eq.f32.partialorder %v2458, 8.507059e+37
        %v2460 = vand.u32 %v2079, 2147483648
        %v2461 = vor.u32 1.1754944e-38, %v2460
        %v2462 = vsel %vm2459, %v2461, %v2457
        %v2463 = vmul.f32 1.0, %v2462
        %v2464 = vrcp.pop %v2080
        %v2465 = vmul.f32 %v2080, %v2464
        %v2466 = vsub.f32 1.0, %v2465
        %v2467 = vmul.f32 %v2464, %v2466
        %v2468 = vadd.f32 %v2464, %v2467
        %vm2469 = vweird.f32 %v2080
        %vm2470 = vweird.f32 %v2464
        %vm2471 = vmor %vm2469, %vm2470
        %v2472 = vsel %vm2471, %v2464, %v2468
        %v2473 = vand.u32 2147483647, %v2080
        %vm2474 = vcmp.eq.f32.partialorder %v2473, 8.507059e+37
        %v2475 = vand.u32 %v2080, 2147483648
        %v2476 = vor.u32 1.1754944e-38, %v2475
        %v2477 = vsel %vm2474, %v2476, %v2472
        %v2478 = vmul.f32 1.0, %v2477
        %v2479 = vrcp.pop %v2081
        %v2480 = vmul.f32 %v2081, %v2479
        %v2481 = vsub.f32 1.0, %v2480
        %v2482 = vmul.f32 %v2479, %v2481
        %v2483 = vadd.f32 %v2479, %v2482
        %vm2484 = vweird.f32 %v2081
        %vm2485 = vweird.f32 %v2479
        %vm2486 = vmor %vm2484, %vm2485
        %v2487 = vsel %vm2486, %v2479, %v2483
        %v2488 = vand.u32 2147483647, %v2081
        %vm2489 = vcmp.eq.f32.partialorder %v2488, 8.507059e+37
        %v2490 = vand.u32 %v2081, 2147483648
        %v2491 = vor.u32 1.1754944e-38, %v2490
        %v2492 = vsel %vm2489, %v2491, %v2487
        %v2493 = vmul.f32 1.0, %v2492
        %v2494 = vrcp.pop %v2082
        %v2495 = vmul.f32 %v2082, %v2494
        %v2496 = vsub.f32 1.0, %v2495
        %v2497 = vmul.f32 %v2494, %v2496
        %v2498 = vadd.f32 %v2494, %v2497
        %vm2499 = vweird.f32 %v2082
        %vm2500 = vweird.f32 %v2494
        %vm2501 = vmor %vm2499, %vm2500
        %v2502 = vsel %vm2501, %v2494, %v2498
        %v2503 = vand.u32 2147483647, %v2082
        %vm2504 = vcmp.eq.f32.partialorder %v2503, 8.507059e+37
        %v2505 = vand.u32 %v2082, 2147483648
        %v2506 = vor.u32 1.1754944e-38, %v2505
        %v2507 = vsel %vm2504, %v2506, %v2502
        %v2508 = vmul.f32 1.0, %v2507
        %v2509 = vrcp.pop %v2083
        %v2510 = vmul.f32 %v2083, %v2509
        %v2511 = vsub.f32 1.0, %v2510
        %v2512 = vmul.f32 %v2509, %v2511
        %v2513 = vadd.f32 %v2509, %v2512
        %vm2514 = vweird.f32 %v2083
        %vm2515 = vweird.f32 %v2509
        %vm2516 = vmor %vm2514, %vm2515
        %v2517 = vsel %vm2516, %v2509, %v2513
        %v2518 = vand.u32 2147483647, %v2083
        %vm2519 = vcmp.eq.f32.partialorder %v2518, 8.507059e+37
        %v2520 = vand.u32 %v2083, 2147483648
        %v2521 = vor.u32 1.1754944e-38, %v2520
        %v2522 = vsel %vm2519, %v2521, %v2517
        %v2523 = vmul.f32 1.0, %v2522
        %v2524 = vrcp.pop %v2084
        %v2525 = vmul.f32 %v2084, %v2524
        %v2526 = vsub.f32 1.0, %v2525
        %v2527 = vmul.f32 %v2524, %v2526
        %v2528 = vadd.f32 %v2524, %v2527
        %vm2529 = vweird.f32 %v2084
        %vm2530 = vweird.f32 %v2524
        %vm2531 = vmor %vm2529, %vm2530
        %v2532 = vsel %vm2531, %v2524, %v2528
        %v2533 = vand.u32 2147483647, %v2084
        %vm2534 = vcmp.eq.f32.partialorder %v2533, 8.507059e+37
        %v2535 = vand.u32 %v2084, 2147483648
        %v2536 = vor.u32 1.1754944e-38, %v2535
        %v2537 = vsel %vm2534, %v2536, %v2532
        %v2538 = vmul.f32 1.0, %v2537
        %v2539 = vrcp.pop %v2085
        %v2540 = vmul.f32 %v2085, %v2539
        %v2541 = vsub.f32 1.0, %v2540
        %v2542 = vmul.f32 %v2539, %v2541
        %v2543 = vadd.f32 %v2539, %v2542
        %vm2544 = vweird.f32 %v2085
        %vm2545 = vweird.f32 %v2539
        %vm2546 = vmor %vm2544, %vm2545
        %v2547 = vsel %vm2546, %v2539, %v2543
        %v2548 = vand.u32 2147483647, %v2085
        %vm2549 = vcmp.eq.f32.partialorder %v2548, 8.507059e+37
        %v2550 = vand.u32 %v2085, 2147483648
        %v2551 = vor.u32 1.1754944e-38, %v2550
        %v2552 = vsel %vm2549, %v2551, %v2547
        %v2553 = vmul.f32 1.0, %v2552
        %v2554 = vrcp.pop %v2086
        %v2555 = vmul.f32 %v2086, %v2554
        %v2556 = vsub.f32 1.0, %v2555
        %v2557 = vmul.f32 %v2554, %v2556
        %v2558 = vadd.f32 %v2554, %v2557
        %vm2559 = vweird.f32 %v2086
        %vm2560 = vweird.f32 %v2554
        %vm2561 = vmor %vm2559, %vm2560
        %v2562 = vsel %vm2561, %v2554, %v2558
        %v2563 = vand.u32 2147483647, %v2086
        %vm2564 = vcmp.eq.f32.partialorder %v2563, 8.507059e+37
        %v2565 = vand.u32 %v2086, 2147483648
        %v2566 = vor.u32 1.1754944e-38, %v2565
        %v2567 = vsel %vm2564, %v2566, %v2562
        %v2568 = vmul.f32 1.0, %v2567
        %v2569 = vrcp.pop %v2087
        %v2570 = vmul.f32 %v2087, %v2569
        %v2571 = vsub.f32 1.0, %v2570
        %v2572 = vmul.f32 %v2569, %v2571
        %v2573 = vadd.f32 %v2569, %v2572
        %vm2574 = vweird.f32 %v2087
        %vm2575 = vweird.f32 %v2569
        %vm2576 = vmor %vm2574, %vm2575
        %v2577 = vsel %vm2576, %v2569, %v2573
        %v2578 = vand.u32 2147483647, %v2087
        %vm2579 = vcmp.eq.f32.partialorder %v2578, 8.507059e+37
        %v2580 = vand.u32 %v2087, 2147483648
        %v2581 = vor.u32 1.1754944e-38, %v2580
        %v2582 = vsel %vm2579, %v2581, %v2577
        %v2583 = vmul.f32 1.0, %v2582
        %v2584 = vrcp.pop %v2088
        %v2585 = vmul.f32 %v2088, %v2584
        %v2586 = vsub.f32 1.0, %v2585
        %v2587 = vmul.f32 %v2584, %v2586
        %v2588 = vadd.f32 %v2584, %v2587
        %vm2589 = vweird.f32 %v2088
        %vm2590 = vweird.f32 %v2584
        %vm2591 = vmor %vm2589, %vm2590
        %v2592 = vsel %vm2591, %v2584, %v2588
        %v2593 = vand.u32 2147483647, %v2088
        %vm2594 = vcmp.eq.f32.partialorder %v2593, 8.507059e+37
        %v2595 = vand.u32 %v2088, 2147483648
        %v2596 = vor.u32 1.1754944e-38, %v2595
        %v2597 = vsel %vm2594, %v2596, %v2592
        %v2598 = vmul.f32 1.0, %v2597
        %v2599 = vrcp.pop %v2089
        %v2600 = vmul.f32 %v2089, %v2599
        %v2601 = vsub.f32 1.0, %v2600
        %v2602 = vmul.f32 %v2599, %v2601
        %v2603 = vadd.f32 %v2599, %v2602
        %vm2604 = vweird.f32 %v2089
        %vm2605 = vweird.f32 %v2599
        %vm2606 = vmor %vm2604, %vm2605
        %v2607 = vsel %vm2606, %v2599, %v2603
        %v2608 = vand.u32 2147483647, %v2089
        %vm2609 = vcmp.eq.f32.partialorder %v2608, 8.507059e+37
        %v2610 = vand.u32 %v2089, 2147483648
        %v2611 = vor.u32 1.1754944e-38, %v2610
        %v2612 = vsel %vm2609, %v2611, %v2607
        %v2613 = vmul.f32 1.0, %v2612
        %v2614 = vrcp.pop %v2090
        %v2615 = vmul.f32 %v2090, %v2614
        %v2616 = vsub.f32 1.0, %v2615
        %v2617 = vmul.f32 %v2614, %v2616
        %v2618 = vadd.f32 %v2614, %v2617
        %vm2619 = vweird.f32 %v2090
        %vm2620 = vweird.f32 %v2614
        %vm2621 = vmor %vm2619, %vm2620
        %v2622 = vsel %vm2621, %v2614, %v2618
        %v2623 = vand.u32 2147483647, %v2090
        %vm2624 = vcmp.eq.f32.partialorder %v2623, 8.507059e+37
        %v2625 = vand.u32 %v2090, 2147483648
        %v2626 = vor.u32 1.1754944e-38, %v2625
        %v2627 = vsel %vm2624, %v2626, %v2622
        %v2628 = vmul.f32 1.0, %v2627
        %v2629 = vrcp.pop %v2091
        %v2630 = vmul.f32 %v2091, %v2629
        %v2631 = vsub.f32 1.0, %v2630
        %v2632 = vmul.f32 %v2629, %v2631
        %v2633 = vadd.f32 %v2629, %v2632
        %vm2634 = vweird.f32 %v2091
        %vm2635 = vweird.f32 %v2629
        %vm2636 = vmor %vm2634, %vm2635
        %v2637 = vsel %vm2636, %v2629, %v2633
        %v2638 = vand.u32 2147483647, %v2091
        %vm2639 = vcmp.eq.f32.partialorder %v2638, 8.507059e+37
        %v2640 = vand.u32 %v2091, 2147483648
        %v2641 = vor.u32 1.1754944e-38, %v2640
        %v2642 = vsel %vm2639, %v2641, %v2637
        %v2643 = vmul.f32 1.0, %v2642
        %v2644 = vrcp.pop %v2092
        %v2645 = vmul.f32 %v2092, %v2644
        %v2646 = vsub.f32 1.0, %v2645
        %v2647 = vmul.f32 %v2644, %v2646
        %v2648 = vadd.f32 %v2644, %v2647
        %vm2649 = vweird.f32 %v2092
        %vm2650 = vweird.f32 %v2644
        %vm2651 = vmor %vm2649, %vm2650
        %v2652 = vsel %vm2651, %v2644, %v2648
        %v2653 = vand.u32 2147483647, %v2092
        %vm2654 = vcmp.eq.f32.partialorder %v2653, 8.507059e+37
        %v2655 = vand.u32 %v2092, 2147483648
        %v2656 = vor.u32 1.1754944e-38, %v2655
        %v2657 = vsel %vm2654, %v2656, %v2652
        %v2658 = vmul.f32 1.0, %v2657
        %v2659 = vrcp.pop %v2093
        %v2660 = vmul.f32 %v2093, %v2659
        %v2661 = vsub.f32 1.0, %v2660
        %v2662 = vmul.f32 %v2659, %v2661
        %v2663 = vadd.f32 %v2659, %v2662
        %vm2664 = vweird.f32 %v2093
        %vm2665 = vweird.f32 %v2659
        %vm2666 = vmor %vm2664, %vm2665
        %v2667 = vsel %vm2666, %v2659, %v2663
        %v2668 = vand.u32 2147483647, %v2093
        %vm2669 = vcmp.eq.f32.partialorder %v2668, 8.507059e+37
        %v2670 = vand.u32 %v2093, 2147483648
        %v2671 = vor.u32 1.1754944e-38, %v2670
        %v2672 = vsel %vm2669, %v2671, %v2667
        %v2673 = vmul.f32 1.0, %v2672
        %v2674 = vrcp.pop %v2094
        %v2675 = vmul.f32 %v2094, %v2674
        %v2676 = vsub.f32 1.0, %v2675
        %v2677 = vmul.f32 %v2674, %v2676
        %v2678 = vadd.f32 %v2674, %v2677
        %vm2679 = vweird.f32 %v2094
        %vm2680 = vweird.f32 %v2674
        %vm2681 = vmor %vm2679, %vm2680
        %v2682 = vsel %vm2681, %v2674, %v2678
        %v2683 = vand.u32 2147483647, %v2094
        %vm2684 = vcmp.eq.f32.partialorder %v2683, 8.507059e+37
        %v2685 = vand.u32 %v2094, 2147483648
        %v2686 = vor.u32 1.1754944e-38, %v2685
        %v2687 = vsel %vm2684, %v2686, %v2682
        %v2688 = vmul.f32 1.0, %v2687
        %v2689 = vrcp.pop %v2095
        %v2690 = vmul.f32 %v2095, %v2689
        %v2691 = vsub.f32 1.0, %v2690
        %v2692 = vmul.f32 %v2689, %v2691
        %v2693 = vadd.f32 %v2689, %v2692
        %vm2694 = vweird.f32 %v2095
        %vm2695 = vweird.f32 %v2689
        %vm2696 = vmor %vm2694, %vm2695
        %v2697 = vsel %vm2696, %v2689, %v2693
        %v2698 = vand.u32 2147483647, %v2095
        %vm2699 = vcmp.eq.f32.partialorder %v2698, 8.507059e+37
        %v2700 = vand.u32 %v2095, 2147483648
        %v2701 = vor.u32 1.1754944e-38, %v2700
        %v2702 = vsel %vm2699, %v2701, %v2697
        %v2703 = vmul.f32 1.0, %v2702
        %v2704 = vrcp.pop %v2096
        %v2705 = vmul.f32 %v2096, %v2704
        %v2706 = vsub.f32 1.0, %v2705
        %v2707 = vmul.f32 %v2704, %v2706
        %v2708 = vadd.f32 %v2704, %v2707
        %vm2709 = vweird.f32 %v2096
        %vm2710 = vweird.f32 %v2704
        %vm2711 = vmor %vm2709, %vm2710
        %v2712 = vsel %vm2711, %v2704, %v2708
        %v2713 = vand.u32 2147483647, %v2096
        %vm2714 = vcmp.eq.f32.partialorder %v2713, 8.507059e+37
        %v2715 = vand.u32 %v2096, 2147483648
        %v2716 = vor.u32 1.1754944e-38, %v2715
        %v2717 = vsel %vm2714, %v2716, %v2712
        %v2718 = vmul.f32 1.0, %v2717
        %v2719 = vrcp.pop %v2097
        %v2720 = vmul.f32 %v2097, %v2719
        %v2721 = vsub.f32 1.0, %v2720
        %v2722 = vmul.f32 %v2719, %v2721
        %v2723 = vadd.f32 %v2719, %v2722
        %vm2724 = vweird.f32 %v2097
        %vm2725 = vweird.f32 %v2719
        %vm2726 = vmor %vm2724, %vm2725
        %v2727 = vsel %vm2726, %v2719, %v2723
        %v2728 = vand.u32 2147483647, %v2097
        %vm2729 = vcmp.eq.f32.partialorder %v2728, 8.507059e+37
        %v2730 = vand.u32 %v2097, 2147483648
        %v2731 = vor.u32 1.1754944e-38, %v2730
        %v2732 = vsel %vm2729, %v2731, %v2727
        %v2733 = vmul.f32 1.0, %v2732
        %v2734 = vrcp.pop %v2098
        %v2735 = vmul.f32 %v2098, %v2734
        %v2736 = vsub.f32 1.0, %v2735
        %v2737 = vmul.f32 %v2734, %v2736
        %v2738 = vadd.f32 %v2734, %v2737
        %vm2739 = vweird.f32 %v2098
        %vm2740 = vweird.f32 %v2734
        %vm2741 = vmor %vm2739, %vm2740
        %v2742 = vsel %vm2741, %v2734, %v2738
        %v2743 = vand.u32 2147483647, %v2098
        %vm2744 = vcmp.eq.f32.partialorder %v2743, 8.507059e+37
        %v2745 = vand.u32 %v2098, 2147483648
        %v2746 = vor.u32 1.1754944e-38, %v2745
        %v2747 = vsel %vm2744, %v2746, %v2742
        %v2748 = vmul.f32 1.0, %v2747
        %v2749 = vrcp.pop %v2099
        %v2750 = vmul.f32 %v2099, %v2749
        %v2751 = vsub.f32 1.0, %v2750
        %v2752 = vmul.f32 %v2749, %v2751
        %v2753 = vadd.f32 %v2749, %v2752
        %vm2754 = vweird.f32 %v2099
        %vm2755 = vweird.f32 %v2749
        %vm2756 = vmor %vm2754, %vm2755
        %v2757 = vsel %vm2756, %v2749, %v2753
        %v2758 = vand.u32 2147483647, %v2099
        %vm2759 = vcmp.eq.f32.partialorder %v2758, 8.507059e+37
        %v2760 = vand.u32 %v2099, 2147483648
        %v2761 = vor.u32 1.1754944e-38, %v2760
        %v2762 = vsel %vm2759, %v2761, %v2757
        %v2763 = vmul.f32 1.0, %v2762
        %v2764 = vrcp.pop %v2100
        %v2765 = vmul.f32 %v2100, %v2764
        %v2766 = vsub.f32 1.0, %v2765
        %v2767 = vmul.f32 %v2764, %v2766
        %v2768 = vadd.f32 %v2764, %v2767
        %vm2769 = vweird.f32 %v2100
        %vm2770 = vweird.f32 %v2764
        %vm2771 = vmor %vm2769, %vm2770
        %v2772 = vsel %vm2771, %v2764, %v2768
        %v2773 = vand.u32 2147483647, %v2100
        %vm2774 = vcmp.eq.f32.partialorder %v2773, 8.507059e+37
        %v2775 = vand.u32 %v2100, 2147483648
        %v2776 = vor.u32 1.1754944e-38, %v2775
        %v2777 = vsel %vm2774, %v2776, %v2772
        %v2778 = vmul.f32 1.0, %v2777
        %v2779 = vrcp.pop %v2101
        %v2780 = vmul.f32 %v2101, %v2779
        %v2781 = vsub.f32 1.0, %v2780
        %v2782 = vmul.f32 %v2779, %v2781
        %v2783 = vadd.f32 %v2779, %v2782
        %vm2784 = vweird.f32 %v2101
        %vm2785 = vweird.f32 %v2779
        %vm2786 = vmor %vm2784, %vm2785
        %v2787 = vsel %vm2786, %v2779, %v2783
        %v2788 = vand.u32 2147483647, %v2101
        %vm2789 = vcmp.eq.f32.partialorder %v2788, 8.507059e+37
        %v2790 = vand.u32 %v2101, 2147483648
        %v2791 = vor.u32 1.1754944e-38, %v2790
        %v2792 = vsel %vm2789, %v2791, %v2787
        %v2793 = vmul.f32 1.0, %v2792
        %v2794 = vrcp.pop %v2102
        %v2795 = vmul.f32 %v2102, %v2794
        %v2796 = vsub.f32 1.0, %v2795
        %v2797 = vmul.f32 %v2794, %v2796
        %v2798 = vadd.f32 %v2794, %v2797
        %vm2799 = vweird.f32 %v2102
        %vm2800 = vweird.f32 %v2794
        %vm2801 = vmor %vm2799, %vm2800
        %v2802 = vsel %vm2801, %v2794, %v2798
        %v2803 = vand.u32 2147483647, %v2102
        %vm2804 = vcmp.eq.f32.partialorder %v2803, 8.507059e+37
        %v2805 = vand.u32 %v2102, 2147483648
        %v2806 = vor.u32 1.1754944e-38, %v2805
        %v2807 = vsel %vm2804, %v2806, %v2802
        %v2808 = vmul.f32 1.0, %v2807
        %v2809 = vrcp.pop %v2103
        %v2810 = vmul.f32 %v2103, %v2809
        %v2811 = vsub.f32 1.0, %v2810
        %v2812 = vmul.f32 %v2809, %v2811
        %v2813 = vadd.f32 %v2809, %v2812
        %vm2814 = vweird.f32 %v2103
        %vm2815 = vweird.f32 %v2809
        %vm2816 = vmor %vm2814, %vm2815
        %v2817 = vsel %vm2816, %v2809, %v2813
        %v2818 = vand.u32 2147483647, %v2103
        %vm2819 = vcmp.eq.f32.partialorder %v2818, 8.507059e+37
        %v2820 = vand.u32 %v2103, 2147483648
        %v2821 = vor.u32 1.1754944e-38, %v2820
        %v2822 = vsel %vm2819, %v2821, %v2817
        %v2823 = vmul.f32 1.0, %v2822
        %v2824 = vrcp.pop %v2104
        %v2825 = vmul.f32 %v2104, %v2824
        %v2826 = vsub.f32 1.0, %v2825
        %v2827 = vmul.f32 %v2824, %v2826
        %v2828 = vadd.f32 %v2824, %v2827
        %vm2829 = vweird.f32 %v2104
        %vm2830 = vweird.f32 %v2824
        %vm2831 = vmor %vm2829, %vm2830
        %v2832 = vsel %vm2831, %v2824, %v2828
        %v2833 = vand.u32 2147483647, %v2104
        %vm2834 = vcmp.eq.f32.partialorder %v2833, 8.507059e+37
        %v2835 = vand.u32 %v2104, 2147483648
        %v2836 = vor.u32 1.1754944e-38, %v2835
        %v2837 = vsel %vm2834, %v2836, %v2832
        %v2838 = vmul.f32 1.0, %v2837
        %v2839 = vrcp.pop %v2105
        %v2840 = vmul.f32 %v2105, %v2839
        %v2841 = vsub.f32 1.0, %v2840
        %v2842 = vmul.f32 %v2839, %v2841
        %v2843 = vadd.f32 %v2839, %v2842
        %vm2844 = vweird.f32 %v2105
        %vm2845 = vweird.f32 %v2839
        %vm2846 = vmor %vm2844, %vm2845
        %v2847 = vsel %vm2846, %v2839, %v2843
        %v2848 = vand.u32 2147483647, %v2105
        %vm2849 = vcmp.eq.f32.partialorder %v2848, 8.507059e+37
        %v2850 = vand.u32 %v2105, 2147483648
        %v2851 = vor.u32 1.1754944e-38, %v2850
        %v2852 = vsel %vm2849, %v2851, %v2847
        %v2853 = vmul.f32 1.0, %v2852
        %v2854 = vrcp.pop %v2106
        %v2855 = vmul.f32 %v2106, %v2854
        %v2856 = vsub.f32 1.0, %v2855
        %v2857 = vmul.f32 %v2854, %v2856
        %v2858 = vadd.f32 %v2854, %v2857
        %vm2859 = vweird.f32 %v2106
        %vm2860 = vweird.f32 %v2854
        %vm2861 = vmor %vm2859, %vm2860
        %v2862 = vsel %vm2861, %v2854, %v2858
        %v2863 = vand.u32 2147483647, %v2106
        %vm2864 = vcmp.eq.f32.partialorder %v2863, 8.507059e+37
        %v2865 = vand.u32 %v2106, 2147483648
        %v2866 = vor.u32 1.1754944e-38, %v2865
        %v2867 = vsel %vm2864, %v2866, %v2862
        %v2868 = vmul.f32 1.0, %v2867
        %v2869 = vrcp.pop %v2107
        %v2870 = vmul.f32 %v2107, %v2869
        %v2871 = vsub.f32 1.0, %v2870
        %v2872 = vmul.f32 %v2869, %v2871
        %v2873 = vadd.f32 %v2869, %v2872
        %vm2874 = vweird.f32 %v2107
        %vm2875 = vweird.f32 %v2869
        %vm2876 = vmor %vm2874, %vm2875
        %v2877 = vsel %vm2876, %v2869, %v2873
        %v2878 = vand.u32 2147483647, %v2107
        %vm2879 = vcmp.eq.f32.partialorder %v2878, 8.507059e+37
        %v2880 = vand.u32 %v2107, 2147483648
        %v2881 = vor.u32 1.1754944e-38, %v2880
        %v2882 = vsel %vm2879, %v2881, %v2877
        %v2883 = vmul.f32 1.0, %v2882
        %v2884 = vrcp.pop %v2108
        %v2885 = vmul.f32 %v2108, %v2884
        %v2886 = vsub.f32 1.0, %v2885
        %v2887 = vmul.f32 %v2884, %v2886
        %v2888 = vadd.f32 %v2884, %v2887
        %vm2889 = vweird.f32 %v2108
        %vm2890 = vweird.f32 %v2884
        %vm2891 = vmor %vm2889, %vm2890
        %v2892 = vsel %vm2891, %v2884, %v2888
        %v2893 = vand.u32 2147483647, %v2108
        %vm2894 = vcmp.eq.f32.partialorder %v2893, 8.507059e+37
        %v2895 = vand.u32 %v2108, 2147483648
        %v2896 = vor.u32 1.1754944e-38, %v2895
        %v2897 = vsel %vm2894, %v2896, %v2892
        %v2898 = vmul.f32 1.0, %v2897
        %v2899 = vrcp.pop %v2109
        %v2900 = vmul.f32 %v2109, %v2899
        %v2901 = vsub.f32 1.0, %v2900
        %v2902 = vmul.f32 %v2899, %v2901
        %v2903 = vadd.f32 %v2899, %v2902
        %vm2904 = vweird.f32 %v2109
        %vm2905 = vweird.f32 %v2899
        %vm2906 = vmor %vm2904, %vm2905
        %v2907 = vsel %vm2906, %v2899, %v2903
        %v2908 = vand.u32 2147483647, %v2109
        %vm2909 = vcmp.eq.f32.partialorder %v2908, 8.507059e+37
        %v2910 = vand.u32 %v2109, 2147483648
        %v2911 = vor.u32 1.1754944e-38, %v2910
        %v2912 = vsel %vm2909, %v2911, %v2907
        %v2913 = vmul.f32 1.0, %v2912
        %v2914 = vrcp.pop %v2110
        %v2915 = vmul.f32 %v2110, %v2914
        %v2916 = vsub.f32 1.0, %v2915
        %v2917 = vmul.f32 %v2914, %v2916
        %v2918 = vadd.f32 %v2914, %v2917
        %vm2919 = vweird.f32 %v2110
        %vm2920 = vweird.f32 %v2914
        %vm2921 = vmor %vm2919, %vm2920
        %v2922 = vsel %vm2921, %v2914, %v2918
        %v2923 = vand.u32 2147483647, %v2110
        %vm2924 = vcmp.eq.f32.partialorder %v2923, 8.507059e+37
        %v2925 = vand.u32 %v2110, 2147483648
        %v2926 = vor.u32 1.1754944e-38, %v2925
        %v2927 = vsel %vm2924, %v2926, %v2922
        %v2928 = vmul.f32 1.0, %v2927
        %v2929 = vrcp.pop %v2111
        %v2930 = vmul.f32 %v2111, %v2929
        %v2931 = vsub.f32 1.0, %v2930
        %v2932 = vmul.f32 %v2929, %v2931
        %v2933 = vadd.f32 %v2929, %v2932
        %vm2934 = vweird.f32 %v2111
        %vm2935 = vweird.f32 %v2929
        %vm2936 = vmor %vm2934, %vm2935
        %v2937 = vsel %vm2936, %v2929, %v2933
        %v2938 = vand.u32 2147483647, %v2111
        %vm2939 = vcmp.eq.f32.partialorder %v2938, 8.507059e+37
        %v2940 = vand.u32 %v2111, 2147483648
        %v2941 = vor.u32 1.1754944e-38, %v2940
        %v2942 = vsel %vm2939, %v2941, %v2937
        %v2943 = vmul.f32 1.0, %v2942
        %v2944 = vrcp.pop %v2112
        %v2945 = vmul.f32 %v2112, %v2944
        %v2946 = vsub.f32 1.0, %v2945
        %v2947 = vmul.f32 %v2944, %v2946
        %v2948 = vadd.f32 %v2944, %v2947
        %vm2949 = vweird.f32 %v2112
        %vm2950 = vweird.f32 %v2944
        %vm2951 = vmor %vm2949, %vm2950
        %v2952 = vsel %vm2951, %v2944, %v2948
        %v2953 = vand.u32 2147483647, %v2112
        %vm2954 = vcmp.eq.f32.partialorder %v2953, 8.507059e+37
        %v2955 = vand.u32 %v2112, 2147483648
        %v2956 = vor.u32 1.1754944e-38, %v2955
        %v2957 = vsel %vm2954, %v2956, %v2952
        %v2958 = vmul.f32 1.0, %v2957
        %v2959 = vrcp.pop %v2113
        %v2960 = vmul.f32 %v2113, %v2959
        %v2961 = vsub.f32 1.0, %v2960
        %v2962 = vmul.f32 %v2959, %v2961
        %v2963 = vadd.f32 %v2959, %v2962
        %vm2964 = vweird.f32 %v2113
        %vm2965 = vweird.f32 %v2959
        %vm2966 = vmor %vm2964, %vm2965
        %v2967 = vsel %vm2966, %v2959, %v2963
        %v2968 = vand.u32 2147483647, %v2113
        %vm2969 = vcmp.eq.f32.partialorder %v2968, 8.507059e+37
        %v2970 = vand.u32 %v2113, 2147483648
        %v2971 = vor.u32 1.1754944e-38, %v2970
        %v2972 = vsel %vm2969, %v2971, %v2967
        %v2973 = vmul.f32 1.0, %v2972
        %v2974 = vrcp.pop %v2114
        %v2975 = vmul.f32 %v2114, %v2974
        %v2976 = vsub.f32 1.0, %v2975
        %v2977 = vmul.f32 %v2974, %v2976
        %v2978 = vadd.f32 %v2974, %v2977
        %vm2979 = vweird.f32 %v2114
        %vm2980 = vweird.f32 %v2974
        %vm2981 = vmor %vm2979, %vm2980
        %v2982 = vsel %vm2981, %v2974, %v2978
        %v2983 = vand.u32 2147483647, %v2114
        %vm2984 = vcmp.eq.f32.partialorder %v2983, 8.507059e+37
        %v2985 = vand.u32 %v2114, 2147483648
        %v2986 = vor.u32 1.1754944e-38, %v2985
        %v2987 = vsel %vm2984, %v2986, %v2982
        %v2988 = vmul.f32 1.0, %v2987
        %v2989 = vrcp.pop %v2115
        %v2990 = vmul.f32 %v2115, %v2989
        %v2991 = vsub.f32 1.0, %v2990
        %v2992 = vmul.f32 %v2989, %v2991
        %v2993 = vadd.f32 %v2989, %v2992
        %vm2994 = vweird.f32 %v2115
        %vm2995 = vweird.f32 %v2989
        %vm2996 = vmor %vm2994, %vm2995
        %v2997 = vsel %vm2996, %v2989, %v2993
        %v2998 = vand.u32 2147483647, %v2115
        %vm2999 = vcmp.eq.f32.partialorder %v2998, 8.507059e+37
        %v3000 = vand.u32 %v2115, 2147483648
        %v3001 = vor.u32 1.1754944e-38, %v3000
        %v3002 = vsel %vm2999, %v3001, %v2997
        %v3003 = vmul.f32 1.0, %v3002
        %v3004 = vrcp.pop %v2116
        %v3005 = vmul.f32 %v2116, %v3004
        %v3006 = vsub.f32 1.0, %v3005
        %v3007 = vmul.f32 %v3004, %v3006
        %v3008 = vadd.f32 %v3004, %v3007
        %vm3009 = vweird.f32 %v2116
        %vm3010 = vweird.f32 %v3004
        %vm3011 = vmor %vm3009, %vm3010
        %v3012 = vsel %vm3011, %v3004, %v3008
        %v3013 = vand.u32 2147483647, %v2116
        %vm3014 = vcmp.eq.f32.partialorder %v3013, 8.507059e+37
        %v3015 = vand.u32 %v2116, 2147483648
        %v3016 = vor.u32 1.1754944e-38, %v3015
        %v3017 = vsel %vm3014, %v3016, %v3012
        %v3018 = vmul.f32 1.0, %v3017
        %v3019 = vrcp.pop %v2117
        %v3020 = vmul.f32 %v2117, %v3019
        %v3021 = vsub.f32 1.0, %v3020
        %v3022 = vmul.f32 %v3019, %v3021
        %v3023 = vadd.f32 %v3019, %v3022
        %vm3024 = vweird.f32 %v2117
        %vm3025 = vweird.f32 %v3019
        %vm3026 = vmor %vm3024, %vm3025
        %v3027 = vsel %vm3026, %v3019, %v3023
        %v3028 = vand.u32 2147483647, %v2117
        %vm3029 = vcmp.eq.f32.partialorder %v3028, 8.507059e+37
        %v3030 = vand.u32 %v2117, 2147483648
        %v3031 = vor.u32 1.1754944e-38, %v3030
        %v3032 = vsel %vm3029, %v3031, %v3027
        %v3033 = vmul.f32 1.0, %v3032
        %v3034 = vrcp.pop %v2118
        %v3035 = vmul.f32 %v2118, %v3034
        %v3036 = vsub.f32 1.0, %v3035
        %v3037 = vmul.f32 %v3034, %v3036
        %v3038 = vadd.f32 %v3034, %v3037
        %vm3039 = vweird.f32 %v2118
        %vm3040 = vweird.f32 %v3034
        %vm3041 = vmor %vm3039, %vm3040
        %v3042 = vsel %vm3041, %v3034, %v3038
        %v3043 = vand.u32 2147483647, %v2118
        %vm3044 = vcmp.eq.f32.partialorder %v3043, 8.507059e+37
        %v3045 = vand.u32 %v2118, 2147483648
        %v3046 = vor.u32 1.1754944e-38, %v3045
        %v3047 = vsel %vm3044, %v3046, %v3042
        %v3048 = vmul.f32 1.0, %v3047
        %v3049 = vrcp.pop %v2119
        %v3050 = vmul.f32 %v2119, %v3049
        %v3051 = vsub.f32 1.0, %v3050
        %v3052 = vmul.f32 %v3049, %v3051
        %v3053 = vadd.f32 %v3049, %v3052
        %vm3054 = vweird.f32 %v2119
        %vm3055 = vweird.f32 %v3049
        %vm3056 = vmor %vm3054, %vm3055
        %v3057 = vsel %vm3056, %v3049, %v3053
        %v3058 = vand.u32 2147483647, %v2119
        %vm3059 = vcmp.eq.f32.partialorder %v3058, 8.507059e+37
        %v3060 = vand.u32 %v2119, 2147483648
        %v3061 = vor.u32 1.1754944e-38, %v3060
        %v3062 = vsel %vm3059, %v3061, %v3057
        %v3063 = vmul.f32 1.0, %v3062
        %v3064 = vrcp.pop %v2120
        %v3065 = vmul.f32 %v2120, %v3064
        %v3066 = vsub.f32 1.0, %v3065
        %v3067 = vmul.f32 %v3064, %v3066
        %v3068 = vadd.f32 %v3064, %v3067
        %vm3069 = vweird.f32 %v2120
        %vm3070 = vweird.f32 %v3064
        %vm3071 = vmor %vm3069, %vm3070
        %v3072 = vsel %vm3071, %v3064, %v3068
        %v3073 = vand.u32 2147483647, %v2120
        %vm3074 = vcmp.eq.f32.partialorder %v3073, 8.507059e+37
        %v3075 = vand.u32 %v2120, 2147483648
        %v3076 = vor.u32 1.1754944e-38, %v3075
        %v3077 = vsel %vm3074, %v3076, %v3072
        %v3078 = vmul.f32 1.0, %v3077
        %v3079 = vrcp.pop %v2121
        %v3080 = vmul.f32 %v2121, %v3079
        %v3081 = vsub.f32 1.0, %v3080
        %v3082 = vmul.f32 %v3079, %v3081
        %v3083 = vadd.f32 %v3079, %v3082
        %vm3084 = vweird.f32 %v2121
        %vm3085 = vweird.f32 %v3079
        %vm3086 = vmor %vm3084, %vm3085
        %v3087 = vsel %vm3086, %v3079, %v3083
        %v3088 = vand.u32 2147483647, %v2121
        %vm3089 = vcmp.eq.f32.partialorder %v3088, 8.507059e+37
        %v3090 = vand.u32 %v2121, 2147483648
        %v3091 = vor.u32 1.1754944e-38, %v3090
        %v3092 = vsel %vm3089, %v3091, %v3087
        %v3093 = vmul.f32 1.0, %v3092
        %v3094 = vrcp.pop %v2122
        %v3095 = vmul.f32 %v2122, %v3094
        %v3096 = vsub.f32 1.0, %v3095
        %v3097 = vmul.f32 %v3094, %v3096
        %v3098 = vadd.f32 %v3094, %v3097
        %vm3099 = vweird.f32 %v2122
        %vm3100 = vweird.f32 %v3094
        %vm3101 = vmor %vm3099, %vm3100
        %v3102 = vsel %vm3101, %v3094, %v3098
        %v3103 = vand.u32 2147483647, %v2122
        %vm3104 = vcmp.eq.f32.partialorder %v3103, 8.507059e+37
        %v3105 = vand.u32 %v2122, 2147483648
        %v3106 = vor.u32 1.1754944e-38, %v3105
        %v3107 = vsel %vm3104, %v3106, %v3102
        %v3108 = vmul.f32 1.0, %v3107
        %v3109 = vrcp.pop %v2123
        %v3110 = vmul.f32 %v2123, %v3109
        %v3111 = vsub.f32 1.0, %v3110
        %v3112 = vmul.f32 %v3109, %v3111
        %v3113 = vadd.f32 %v3109, %v3112
        %vm3114 = vweird.f32 %v2123
        %vm3115 = vweird.f32 %v3109
        %vm3116 = vmor %vm3114, %vm3115
        %v3117 = vsel %vm3116, %v3109, %v3113
        %v3118 = vand.u32 2147483647, %v2123
        %vm3119 = vcmp.eq.f32.partialorder %v3118, 8.507059e+37
        %v3120 = vand.u32 %v2123, 2147483648
        %v3121 = vor.u32 1.1754944e-38, %v3120
        %v3122 = vsel %vm3119, %v3121, %v3117
        %v3123 = vmul.f32 1.0, %v3122
        %v3124 = vrcp.pop %v2124
        %v3125 = vmul.f32 %v2124, %v3124
        %v3126 = vsub.f32 1.0, %v3125
        %v3127 = vmul.f32 %v3124, %v3126
        %v3128 = vadd.f32 %v3124, %v3127
        %vm3129 = vweird.f32 %v2124
        %vm3130 = vweird.f32 %v3124
        %vm3131 = vmor %vm3129, %vm3130
        %v3132 = vsel %vm3131, %v3124, %v3128
        %v3133 = vand.u32 2147483647, %v2124
        %vm3134 = vcmp.eq.f32.partialorder %v3133, 8.507059e+37
        %v3135 = vand.u32 %v2124, 2147483648
        %v3136 = vor.u32 1.1754944e-38, %v3135
        %v3137 = vsel %vm3134, %v3136, %v3132
        %v3138 = vmul.f32 1.0, %v3137
        %v3139 = vrcp.pop %v2125
        %v3140 = vmul.f32 %v2125, %v3139
        %v3141 = vsub.f32 1.0, %v3140
        %v3142 = vmul.f32 %v3139, %v3141
        %v3143 = vadd.f32 %v3139, %v3142
        %vm3144 = vweird.f32 %v2125
        %vm3145 = vweird.f32 %v3139
        %vm3146 = vmor %vm3144, %vm3145
        %v3147 = vsel %vm3146, %v3139, %v3143
        %v3148 = vand.u32 2147483647, %v2125
        %vm3149 = vcmp.eq.f32.partialorder %v3148, 8.507059e+37
        %v3150 = vand.u32 %v2125, 2147483648
        %v3151 = vor.u32 1.1754944e-38, %v3150
        %v3152 = vsel %vm3149, %v3151, %v3147
        %v3153 = vmul.f32 1.0, %v3152
        %v3154 = vrcp.pop %v2126
        %v3155 = vmul.f32 %v2126, %v3154
        %v3156 = vsub.f32 1.0, %v3155
        %v3157 = vmul.f32 %v3154, %v3156
        %v3158 = vadd.f32 %v3154, %v3157
        %vm3159 = vweird.f32 %v2126
        %vm3160 = vweird.f32 %v3154
        %vm3161 = vmor %vm3159, %vm3160
        %v3162 = vsel %vm3161, %v3154, %v3158
        %v3163 = vand.u32 2147483647, %v2126
        %vm3164 = vcmp.eq.f32.partialorder %v3163, 8.507059e+37
        %v3165 = vand.u32 %v2126, 2147483648
        %v3166 = vor.u32 1.1754944e-38, %v3165
        %v3167 = vsel %vm3164, %v3166, %v3162
        %v3168 = vmul.f32 1.0, %v3167
        %v3169 = vrcp.pop %v2127
        %v3170 = vmul.f32 %v2127, %v3169
        %v3171 = vsub.f32 1.0, %v3170
        %v3172 = vmul.f32 %v3169, %v3171
        %v3173 = vadd.f32 %v3169, %v3172
        %vm3174 = vweird.f32 %v2127
        %vm3175 = vweird.f32 %v3169
        %vm3176 = vmor %vm3174, %vm3175
        %v3177 = vsel %vm3176, %v3169, %v3173
        %v3178 = vand.u32 2147483647, %v2127
        %vm3179 = vcmp.eq.f32.partialorder %v3178, 8.507059e+37
        %v3180 = vand.u32 %v2127, 2147483648
        %v3181 = vor.u32 1.1754944e-38, %v3180
        %v3182 = vsel %vm3179, %v3181, %v3177
        %v3183 = vmul.f32 1.0, %v3182
        %v3184 = vrcp.pop %v2128
        %v3185 = vmul.f32 %v2128, %v3184
        %v3186 = vsub.f32 1.0, %v3185
        %v3187 = vmul.f32 %v3184, %v3186
        %v3188 = vadd.f32 %v3184, %v3187
        %vm3189 = vweird.f32 %v2128
        %vm3190 = vweird.f32 %v3184
        %vm3191 = vmor %vm3189, %vm3190
        %v3192 = vsel %vm3191, %v3184, %v3188
        %v3193 = vand.u32 2147483647, %v2128
        %vm3194 = vcmp.eq.f32.partialorder %v3193, 8.507059e+37
        %v3195 = vand.u32 %v2128, 2147483648
        %v3196 = vor.u32 1.1754944e-38, %v3195
        %v3197 = vsel %vm3194, %v3196, %v3192
        %v3198 = vmul.f32 1.0, %v3197
        %v3199 = vrcp.pop %v2129
        %v3200 = vmul.f32 %v2129, %v3199
        %v3201 = vsub.f32 1.0, %v3200
        %v3202 = vmul.f32 %v3199, %v3201
        %v3203 = vadd.f32 %v3199, %v3202
        %vm3204 = vweird.f32 %v2129
        %vm3205 = vweird.f32 %v3199
        %vm3206 = vmor %vm3204, %vm3205
        %v3207 = vsel %vm3206, %v3199, %v3203
        %v3208 = vand.u32 2147483647, %v2129
        %vm3209 = vcmp.eq.f32.partialorder %v3208, 8.507059e+37
        %v3210 = vand.u32 %v2129, 2147483648
        %v3211 = vor.u32 1.1754944e-38, %v3210
        %v3212 = vsel %vm3209, %v3211, %v3207
        %v3213 = vmul.f32 1.0, %v3212
        %v3214 = vrcp.pop %v2130
        %v3215 = vmul.f32 %v2130, %v3214
        %v3216 = vsub.f32 1.0, %v3215
        %v3217 = vmul.f32 %v3214, %v3216
        %v3218 = vadd.f32 %v3214, %v3217
        %vm3219 = vweird.f32 %v2130
        %vm3220 = vweird.f32 %v3214
        %vm3221 = vmor %vm3219, %vm3220
        %v3222 = vsel %vm3221, %v3214, %v3218
        %v3223 = vand.u32 2147483647, %v2130
        %vm3224 = vcmp.eq.f32.partialorder %v3223, 8.507059e+37
        %v3225 = vand.u32 %v2130, 2147483648
        %v3226 = vor.u32 1.1754944e-38, %v3225
        %v3227 = vsel %vm3224, %v3226, %v3222
        %v3228 = vmul.f32 1.0, %v3227
        %v3229 = vrcp.pop %v2131
        %v3230 = vmul.f32 %v2131, %v3229
        %v3231 = vsub.f32 1.0, %v3230
        %v3232 = vmul.f32 %v3229, %v3231
        %v3233 = vadd.f32 %v3229, %v3232
        %vm3234 = vweird.f32 %v2131
        %vm3235 = vweird.f32 %v3229
        %vm3236 = vmor %vm3234, %vm3235
        %v3237 = vsel %vm3236, %v3229, %v3233
        %v3238 = vand.u32 2147483647, %v2131
        %vm3239 = vcmp.eq.f32.partialorder %v3238, 8.507059e+37
        %v3240 = vand.u32 %v2131, 2147483648
        %v3241 = vor.u32 1.1754944e-38, %v3240
        %v3242 = vsel %vm3239, %v3241, %v3237
        %v3243 = vmul.f32 1.0, %v3242
        %v3244 = vrcp.pop %v2132
        %v3245 = vmul.f32 %v2132, %v3244
        %v3246 = vsub.f32 1.0, %v3245
        %v3247 = vmul.f32 %v3244, %v3246
        %v3248 = vadd.f32 %v3244, %v3247
        %vm3249 = vweird.f32 %v2132
        %vm3250 = vweird.f32 %v3244
        %vm3251 = vmor %vm3249, %vm3250
        %v3252 = vsel %vm3251, %v3244, %v3248
        %v3253 = vand.u32 2147483647, %v2132
        %vm3254 = vcmp.eq.f32.partialorder %v3253, 8.507059e+37
        %v3255 = vand.u32 %v2132, 2147483648
        %v3256 = vor.u32 1.1754944e-38, %v3255
        %v3257 = vsel %vm3254, %v3256, %v3252
        %v3258 = vmul.f32 1.0, %v3257
        %v3259 = vrcp.pop %v2133
        %v3260 = vmul.f32 %v2133, %v3259
        %v3261 = vsub.f32 1.0, %v3260
        %v3262 = vmul.f32 %v3259, %v3261
        %v3263 = vadd.f32 %v3259, %v3262
        %vm3264 = vweird.f32 %v2133
        %vm3265 = vweird.f32 %v3259
        %vm3266 = vmor %vm3264, %vm3265
        %v3267 = vsel %vm3266, %v3259, %v3263
        %v3268 = vand.u32 2147483647, %v2133
        %vm3269 = vcmp.eq.f32.partialorder %v3268, 8.507059e+37
        %v3270 = vand.u32 %v2133, 2147483648
        %v3271 = vor.u32 1.1754944e-38, %v3270
        %v3272 = vsel %vm3269, %v3271, %v3267
        %v3273 = vmul.f32 1.0, %v3272
        %v3274 = vrcp.pop %v2134
        %v3275 = vmul.f32 %v2134, %v3274
        %v3276 = vsub.f32 1.0, %v3275
        %v3277 = vmul.f32 %v3274, %v3276
        %v3278 = vadd.f32 %v3274, %v3277
        %vm3279 = vweird.f32 %v2134
        %vm3280 = vweird.f32 %v3274
        %vm3281 = vmor %vm3279, %vm3280
        %v3282 = vsel %vm3281, %v3274, %v3278
        %v3283 = vand.u32 2147483647, %v2134
        %vm3284 = vcmp.eq.f32.partialorder %v3283, 8.507059e+37
        %v3285 = vand.u32 %v2134, 2147483648
        %v3286 = vor.u32 1.1754944e-38, %v3285
        %v3287 = vsel %vm3284, %v3286, %v3282
        %v3288 = vmul.f32 1.0, %v3287
        %v3289 = vrcp.pop %v2135
        %v3290 = vmul.f32 %v2135, %v3289
        %v3291 = vsub.f32 1.0, %v3290
        %v3292 = vmul.f32 %v3289, %v3291
        %v3293 = vadd.f32 %v3289, %v3292
        %vm3294 = vweird.f32 %v2135
        %vm3295 = vweird.f32 %v3289
        %vm3296 = vmor %vm3294, %vm3295
        %v3297 = vsel %vm3296, %v3289, %v3293
        %v3298 = vand.u32 2147483647, %v2135
        %vm3299 = vcmp.eq.f32.partialorder %v3298, 8.507059e+37
        %v3300 = vand.u32 %v2135, 2147483648
        %v3301 = vor.u32 1.1754944e-38, %v3300
        %v3302 = vsel %vm3299, %v3301, %v3297
        %v3303 = vmul.f32 1.0, %v3302
        %v3304 = vrcp.pop %v2136
        %v3305 = vmul.f32 %v2136, %v3304
        %v3306 = vsub.f32 1.0, %v3305
        %v3307 = vmul.f32 %v3304, %v3306
        %v3308 = vadd.f32 %v3304, %v3307
        %vm3309 = vweird.f32 %v2136
        %vm3310 = vweird.f32 %v3304
        %vm3311 = vmor %vm3309, %vm3310
        %v3312 = vsel %vm3311, %v3304, %v3308
        %v3313 = vand.u32 2147483647, %v2136
        %vm3314 = vcmp.eq.f32.partialorder %v3313, 8.507059e+37
        %v3315 = vand.u32 %v2136, 2147483648
        %v3316 = vor.u32 1.1754944e-38, %v3315
        %v3317 = vsel %vm3314, %v3316, %v3312
        %v3318 = vmul.f32 1.0, %v3317
        %v3319 = vrcp.pop %v2137
        %v3320 = vmul.f32 %v2137, %v3319
        %v3321 = vsub.f32 1.0, %v3320
        %v3322 = vmul.f32 %v3319, %v3321
        %v3323 = vadd.f32 %v3319, %v3322
        %vm3324 = vweird.f32 %v2137
        %vm3325 = vweird.f32 %v3319
        %vm3326 = vmor %vm3324, %vm3325
        %v3327 = vsel %vm3326, %v3319, %v3323
        %v3328 = vand.u32 2147483647, %v2137
        %vm3329 = vcmp.eq.f32.partialorder %v3328, 8.507059e+37
        %v3330 = vand.u32 %v2137, 2147483648
        %v3331 = vor.u32 1.1754944e-38, %v3330
        %v3332 = vsel %vm3329, %v3331, %v3327
        %v3333 = vmul.f32 1.0, %v3332
        %v3334 = vrcp.pop %v2138
        %v3335 = vmul.f32 %v2138, %v3334
        %v3336 = vsub.f32 1.0, %v3335
        %v3337 = vmul.f32 %v3334, %v3336
        %v3338 = vadd.f32 %v3334, %v3337
        %vm3339 = vweird.f32 %v2138
        %vm3340 = vweird.f32 %v3334
        %vm3341 = vmor %vm3339, %vm3340
        %v3342 = vsel %vm3341, %v3334, %v3338
        %v3343 = vand.u32 2147483647, %v2138
        %vm3344 = vcmp.eq.f32.partialorder %v3343, 8.507059e+37
        %v3345 = vand.u32 %v2138, 2147483648
        %v3346 = vor.u32 1.1754944e-38, %v3345
        %v3347 = vsel %vm3344, %v3346, %v3342
        %v3348 = vmul.f32 1.0, %v3347
        %v3349 = vrcp.pop %v2139
        %v3350 = vmul.f32 %v2139, %v3349
        %v3351 = vsub.f32 1.0, %v3350
        %v3352 = vmul.f32 %v3349, %v3351
        %v3353 = vadd.f32 %v3349, %v3352
        %vm3354 = vweird.f32 %v2139
        %vm3355 = vweird.f32 %v3349
        %vm3356 = vmor %vm3354, %vm3355
        %v3357 = vsel %vm3356, %v3349, %v3353
        %v3358 = vand.u32 2147483647, %v2139
        %vm3359 = vcmp.eq.f32.partialorder %v3358, 8.507059e+37
        %v3360 = vand.u32 %v2139, 2147483648
        %v3361 = vor.u32 1.1754944e-38, %v3360
        %v3362 = vsel %vm3359, %v3361, %v3357
        %v3363 = vmul.f32 1.0, %v3362
        %v3364 = vrcp.pop %v2140
        %v3365 = vmul.f32 %v2140, %v3364
        %v3366 = vsub.f32 1.0, %v3365
        %v3367 = vmul.f32 %v3364, %v3366
        %v3368 = vadd.f32 %v3364, %v3367
        %vm3369 = vweird.f32 %v2140
        %vm3370 = vweird.f32 %v3364
        %vm3371 = vmor %vm3369, %vm3370
        %v3372 = vsel %vm3371, %v3364, %v3368
        %v3373 = vand.u32 2147483647, %v2140
        %vm3374 = vcmp.eq.f32.partialorder %v3373, 8.507059e+37
        %v3375 = vand.u32 %v2140, 2147483648
        %v3376 = vor.u32 1.1754944e-38, %v3375
        %v3377 = vsel %vm3374, %v3376, %v3372
        %v3378 = vmul.f32 1.0, %v3377
        %v3379 = vrcp.pop %v2141
        %v3380 = vmul.f32 %v2141, %v3379
        %v3381 = vsub.f32 1.0, %v3380
        %v3382 = vmul.f32 %v3379, %v3381
        %v3383 = vadd.f32 %v3379, %v3382
        %vm3384 = vweird.f32 %v2141
        %vm3385 = vweird.f32 %v3379
        %vm3386 = vmor %vm3384, %vm3385
        %v3387 = vsel %vm3386, %v3379, %v3383
        %v3388 = vand.u32 2147483647, %v2141
        %vm3389 = vcmp.eq.f32.partialorder %v3388, 8.507059e+37
        %v3390 = vand.u32 %v2141, 2147483648
        %v3391 = vor.u32 1.1754944e-38, %v3390
        %v3392 = vsel %vm3389, %v3391, %v3387
        %v3393 = vmul.f32 1.0, %v3392
        %v3394 = vrcp.pop %v2142
        %v3395 = vmul.f32 %v2142, %v3394
        %v3396 = vsub.f32 1.0, %v3395
        %v3397 = vmul.f32 %v3394, %v3396
        %v3398 = vadd.f32 %v3394, %v3397
        %vm3399 = vweird.f32 %v2142
        %vm3400 = vweird.f32 %v3394
        %vm3401 = vmor %vm3399, %vm3400
        %v3402 = vsel %vm3401, %v3394, %v3398
        %v3403 = vand.u32 2147483647, %v2142
        %vm3404 = vcmp.eq.f32.partialorder %v3403, 8.507059e+37
        %v3405 = vand.u32 %v2142, 2147483648
        %v3406 = vor.u32 1.1754944e-38, %v3405
        %v3407 = vsel %vm3404, %v3406, %v3402
        %v3408 = vmul.f32 1.0, %v3407
        %v3409 = vrcp.pop %v2143
        %v3410 = vmul.f32 %v2143, %v3409
        %v3411 = vsub.f32 1.0, %v3410
        %v3412 = vmul.f32 %v3409, %v3411
        %v3413 = vadd.f32 %v3409, %v3412
        %vm3414 = vweird.f32 %v2143
        %vm3415 = vweird.f32 %v3409
        %vm3416 = vmor %vm3414, %vm3415
        %v3417 = vsel %vm3416, %v3409, %v3413
        %v3418 = vand.u32 2147483647, %v2143
        %vm3419 = vcmp.eq.f32.partialorder %v3418, 8.507059e+37
        %v3420 = vand.u32 %v2143, 2147483648
        %v3421 = vor.u32 1.1754944e-38, %v3420
        %v3422 = vsel %vm3419, %v3421, %v3417
        %v3423 = vmul.f32 1.0, %v3422
        %v3424 = vrcp.pop %v2144
        %v3425 = vmul.f32 %v2144, %v3424
        %v3426 = vsub.f32 1.0, %v3425
        %v3427 = vmul.f32 %v3424, %v3426
        %v3428 = vadd.f32 %v3424, %v3427
        %vm3429 = vweird.f32 %v2144
        %vm3430 = vweird.f32 %v3424
        %vm3431 = vmor %vm3429, %vm3430
        %v3432 = vsel %vm3431, %v3424, %v3428
        %v3433 = vand.u32 2147483647, %v2144
        %vm3434 = vcmp.eq.f32.partialorder %v3433, 8.507059e+37
        %v3435 = vand.u32 %v2144, 2147483648
        %v3436 = vor.u32 1.1754944e-38, %v3435
        %v3437 = vsel %vm3434, %v3436, %v3432
        %v3438 = vmul.f32 1.0, %v3437
        %v3439 = vrcp.pop %v2145
        %v3440 = vmul.f32 %v2145, %v3439
        %v3441 = vsub.f32 1.0, %v3440
        %v3442 = vmul.f32 %v3439, %v3441
        %v3443 = vadd.f32 %v3439, %v3442
        %vm3444 = vweird.f32 %v2145
        %vm3445 = vweird.f32 %v3439
        %vm3446 = vmor %vm3444, %vm3445
        %v3447 = vsel %vm3446, %v3439, %v3443
        %v3448 = vand.u32 2147483647, %v2145
        %vm3449 = vcmp.eq.f32.partialorder %v3448, 8.507059e+37
        %v3450 = vand.u32 %v2145, 2147483648
        %v3451 = vor.u32 1.1754944e-38, %v3450
        %v3452 = vsel %vm3449, %v3451, %v3447
        %v3453 = vmul.f32 1.0, %v3452
        %v3454 = vrcp.pop %v2146
        %v3455 = vmul.f32 %v2146, %v3454
        %v3456 = vsub.f32 1.0, %v3455
        %v3457 = vmul.f32 %v3454, %v3456
        %v3458 = vadd.f32 %v3454, %v3457
        %vm3459 = vweird.f32 %v2146
        %vm3460 = vweird.f32 %v3454
        %vm3461 = vmor %vm3459, %vm3460
        %v3462 = vsel %vm3461, %v3454, %v3458
        %v3463 = vand.u32 2147483647, %v2146
        %vm3464 = vcmp.eq.f32.partialorder %v3463, 8.507059e+37
        %v3465 = vand.u32 %v2146, 2147483648
        %v3466 = vor.u32 1.1754944e-38, %v3465
        %v3467 = vsel %vm3464, %v3466, %v3462
        %v3468 = vmul.f32 1.0, %v3467
        %v3469 = vrcp.pop %v2147
        %v3470 = vmul.f32 %v2147, %v3469
        %v3471 = vsub.f32 1.0, %v3470
        %v3472 = vmul.f32 %v3469, %v3471
        %v3473 = vadd.f32 %v3469, %v3472
        %vm3474 = vweird.f32 %v2147
        %vm3475 = vweird.f32 %v3469
        %vm3476 = vmor %vm3474, %vm3475
        %v3477 = vsel %vm3476, %v3469, %v3473
        %v3478 = vand.u32 2147483647, %v2147
        %vm3479 = vcmp.eq.f32.partialorder %v3478, 8.507059e+37
        %v3480 = vand.u32 %v2147, 2147483648
        %v3481 = vor.u32 1.1754944e-38, %v3480
        %v3482 = vsel %vm3479, %v3481, %v3477
        %v3483 = vmul.f32 1.0, %v3482
        %v3484 = vrcp.pop %v2148
        %v3485 = vmul.f32 %v2148, %v3484
        %v3486 = vsub.f32 1.0, %v3485
        %v3487 = vmul.f32 %v3484, %v3486
        %v3488 = vadd.f32 %v3484, %v3487
        %vm3489 = vweird.f32 %v2148
        %vm3490 = vweird.f32 %v3484
        %vm3491 = vmor %vm3489, %vm3490
        %v3492 = vsel %vm3491, %v3484, %v3488
        %v3493 = vand.u32 2147483647, %v2148
        %vm3494 = vcmp.eq.f32.partialorder %v3493, 8.507059e+37
        %v3495 = vand.u32 %v2148, 2147483648
        %v3496 = vor.u32 1.1754944e-38, %v3495
        %v3497 = vsel %vm3494, %v3496, %v3492
        %v3498 = vmul.f32 1.0, %v3497
        %v3499 = vrcp.pop %v2149
        %v3500 = vmul.f32 %v2149, %v3499
        %v3501 = vsub.f32 1.0, %v3500
        %v3502 = vmul.f32 %v3499, %v3501
        %v3503 = vadd.f32 %v3499, %v3502
        %vm3504 = vweird.f32 %v2149
        %vm3505 = vweird.f32 %v3499
        %vm3506 = vmor %vm3504, %vm3505
        %v3507 = vsel %vm3506, %v3499, %v3503
        %v3508 = vand.u32 2147483647, %v2149
        %vm3509 = vcmp.eq.f32.partialorder %v3508, 8.507059e+37
        %v3510 = vand.u32 %v2149, 2147483648
        %v3511 = vor.u32 1.1754944e-38, %v3510
        %v3512 = vsel %vm3509, %v3511, %v3507
        %v3513 = vmul.f32 1.0, %v3512
        %v3514 = vrcp.pop %v2150
        %v3515 = vmul.f32 %v2150, %v3514
        %v3516 = vsub.f32 1.0, %v3515
        %v3517 = vmul.f32 %v3514, %v3516
        %v3518 = vadd.f32 %v3514, %v3517
        %vm3519 = vweird.f32 %v2150
        %vm3520 = vweird.f32 %v3514
        %vm3521 = vmor %vm3519, %vm3520
        %v3522 = vsel %vm3521, %v3514, %v3518
        %v3523 = vand.u32 2147483647, %v2150
        %vm3524 = vcmp.eq.f32.partialorder %v3523, 8.507059e+37
        %v3525 = vand.u32 %v2150, 2147483648
        %v3526 = vor.u32 1.1754944e-38, %v3525
        %v3527 = vsel %vm3524, %v3526, %v3522
        %v3528 = vmul.f32 1.0, %v3527
        %v3529 = vrcp.pop %v2151
        %v3530 = vmul.f32 %v2151, %v3529
        %v3531 = vsub.f32 1.0, %v3530
        %v3532 = vmul.f32 %v3529, %v3531
        %v3533 = vadd.f32 %v3529, %v3532
        %vm3534 = vweird.f32 %v2151
        %vm3535 = vweird.f32 %v3529
        %vm3536 = vmor %vm3534, %vm3535
        %v3537 = vsel %vm3536, %v3529, %v3533
        %v3538 = vand.u32 2147483647, %v2151
        %vm3539 = vcmp.eq.f32.partialorder %v3538, 8.507059e+37
        %v3540 = vand.u32 %v2151, 2147483648
        %v3541 = vor.u32 1.1754944e-38, %v3540
        %v3542 = vsel %vm3539, %v3541, %v3537
        %v3543 = vmul.f32 1.0, %v3542
        %v3544 = vrcp.pop %v2152
        %v3545 = vmul.f32 %v2152, %v3544
        %v3546 = vsub.f32 1.0, %v3545
        %v3547 = vmul.f32 %v3544, %v3546
        %v3548 = vadd.f32 %v3544, %v3547
        %vm3549 = vweird.f32 %v2152
        %vm3550 = vweird.f32 %v3544
        %vm3551 = vmor %vm3549, %vm3550
        %v3552 = vsel %vm3551, %v3544, %v3548
        %v3553 = vand.u32 2147483647, %v2152
        %vm3554 = vcmp.eq.f32.partialorder %v3553, 8.507059e+37
        %v3555 = vand.u32 %v2152, 2147483648
        %v3556 = vor.u32 1.1754944e-38, %v3555
        %v3557 = vsel %vm3554, %v3556, %v3552
        %v3558 = vmul.f32 1.0, %v3557
        %v3559 = vrcp.pop %v2153
        %v3560 = vmul.f32 %v2153, %v3559
        %v3561 = vsub.f32 1.0, %v3560
        %v3562 = vmul.f32 %v3559, %v3561
        %v3563 = vadd.f32 %v3559, %v3562
        %vm3564 = vweird.f32 %v2153
        %vm3565 = vweird.f32 %v3559
        %vm3566 = vmor %vm3564, %vm3565
        %v3567 = vsel %vm3566, %v3559, %v3563
        %v3568 = vand.u32 2147483647, %v2153
        %vm3569 = vcmp.eq.f32.partialorder %v3568, 8.507059e+37
        %v3570 = vand.u32 %v2153, 2147483648
        %v3571 = vor.u32 1.1754944e-38, %v3570
        %v3572 = vsel %vm3569, %v3571, %v3567
        %v3573 = vmul.f32 1.0, %v3572
        %v3574 = vrcp.pop %v2154
        %v3575 = vmul.f32 %v2154, %v3574
        %v3576 = vsub.f32 1.0, %v3575
        %v3577 = vmul.f32 %v3574, %v3576
        %v3578 = vadd.f32 %v3574, %v3577
        %vm3579 = vweird.f32 %v2154
        %vm3580 = vweird.f32 %v3574
        %vm3581 = vmor %vm3579, %vm3580
        %v3582 = vsel %vm3581, %v3574, %v3578
        %v3583 = vand.u32 2147483647, %v2154
        %vm3584 = vcmp.eq.f32.partialorder %v3583, 8.507059e+37
        %v3585 = vand.u32 %v2154, 2147483648
        %v3586 = vor.u32 1.1754944e-38, %v3585
        %v3587 = vsel %vm3584, %v3586, %v3582
        %v3588 = vmul.f32 1.0, %v3587
        %v3589 = vrcp.pop %v2155
        %v3590 = vmul.f32 %v2155, %v3589
        %v3591 = vsub.f32 1.0, %v3590
        %v3592 = vmul.f32 %v3589, %v3591
        %v3593 = vadd.f32 %v3589, %v3592
        %vm3594 = vweird.f32 %v2155
        %vm3595 = vweird.f32 %v3589
        %vm3596 = vmor %vm3594, %vm3595
        %v3597 = vsel %vm3596, %v3589, %v3593
        %v3598 = vand.u32 2147483647, %v2155
        %vm3599 = vcmp.eq.f32.partialorder %v3598, 8.507059e+37
        %v3600 = vand.u32 %v2155, 2147483648
        %v3601 = vor.u32 1.1754944e-38, %v3600
        %v3602 = vsel %vm3599, %v3601, %v3597
        %v3603 = vmul.f32 1.0, %v3602
        %v3604 = vrcp.pop %v2156
        %v3605 = vmul.f32 %v2156, %v3604
        %v3606 = vsub.f32 1.0, %v3605
        %v3607 = vmul.f32 %v3604, %v3606
        %v3608 = vadd.f32 %v3604, %v3607
        %vm3609 = vweird.f32 %v2156
        %vm3610 = vweird.f32 %v3604
        %vm3611 = vmor %vm3609, %vm3610
        %v3612 = vsel %vm3611, %v3604, %v3608
        %v3613 = vand.u32 2147483647, %v2156
        %vm3614 = vcmp.eq.f32.partialorder %v3613, 8.507059e+37
        %v3615 = vand.u32 %v2156, 2147483648
        %v3616 = vor.u32 1.1754944e-38, %v3615
        %v3617 = vsel %vm3614, %v3616, %v3612
        %v3618 = vmul.f32 1.0, %v3617
        %v3619 = vrcp.pop %v2157
        %v3620 = vmul.f32 %v2157, %v3619
        %v3621 = vsub.f32 1.0, %v3620
        %v3622 = vmul.f32 %v3619, %v3621
        %v3623 = vadd.f32 %v3619, %v3622
        %vm3624 = vweird.f32 %v2157
        %vm3625 = vweird.f32 %v3619
        %vm3626 = vmor %vm3624, %vm3625
        %v3627 = vsel %vm3626, %v3619, %v3623
        %v3628 = vand.u32 2147483647, %v2157
        %vm3629 = vcmp.eq.f32.partialorder %v3628, 8.507059e+37
        %v3630 = vand.u32 %v2157, 2147483648
        %v3631 = vor.u32 1.1754944e-38, %v3630
        %v3632 = vsel %vm3629, %v3631, %v3627
        %v3633 = vmul.f32 1.0, %v3632
        %v3634 = vrcp.pop %v2158
        %v3635 = vmul.f32 %v2158, %v3634
        %v3636 = vsub.f32 1.0, %v3635
        %v3637 = vmul.f32 %v3634, %v3636
        %v3638 = vadd.f32 %v3634, %v3637
        %vm3639 = vweird.f32 %v2158
        %vm3640 = vweird.f32 %v3634
        %vm3641 = vmor %vm3639, %vm3640
        %v3642 = vsel %vm3641, %v3634, %v3638
        %v3643 = vand.u32 2147483647, %v2158
        %vm3644 = vcmp.eq.f32.partialorder %v3643, 8.507059e+37
        %v3645 = vand.u32 %v2158, 2147483648
        %v3646 = vor.u32 1.1754944e-38, %v3645
        %v3647 = vsel %vm3644, %v3646, %v3642
        %v3648 = vmul.f32 1.0, %v3647
        %v3649 = vrcp.pop %v2159
        %v3650 = vmul.f32 %v2159, %v3649
        %v3651 = vsub.f32 1.0, %v3650
        %v3652 = vmul.f32 %v3649, %v3651
        %v3653 = vadd.f32 %v3649, %v3652
        %vm3654 = vweird.f32 %v2159
        %vm3655 = vweird.f32 %v3649
        %vm3656 = vmor %vm3654, %vm3655
        %v3657 = vsel %vm3656, %v3649, %v3653
        %v3658 = vand.u32 2147483647, %v2159
        %vm3659 = vcmp.eq.f32.partialorder %v3658, 8.507059e+37
        %v3660 = vand.u32 %v2159, 2147483648
        %v3661 = vor.u32 1.1754944e-38, %v3660
        %v3662 = vsel %vm3659, %v3661, %v3657
        %v3663 = vmul.f32 1.0, %v3662
        %v3664 = vrcp.pop %v2160
        %v3665 = vmul.f32 %v2160, %v3664
        %v3666 = vsub.f32 1.0, %v3665
        %v3667 = vmul.f32 %v3664, %v3666
        %v3668 = vadd.f32 %v3664, %v3667
        %vm3669 = vweird.f32 %v2160
        %vm3670 = vweird.f32 %v3664
        %vm3671 = vmor %vm3669, %vm3670
        %v3672 = vsel %vm3671, %v3664, %v3668
        %v3673 = vand.u32 2147483647, %v2160
        %vm3674 = vcmp.eq.f32.partialorder %v3673, 8.507059e+37
        %v3675 = vand.u32 %v2160, 2147483648
        %v3676 = vor.u32 1.1754944e-38, %v3675
        %v3677 = vsel %vm3674, %v3676, %v3672
        %v3678 = vmul.f32 1.0, %v3677
        %v3679 = vrcp.pop %v2161
        %v3680 = vmul.f32 %v2161, %v3679
        %v3681 = vsub.f32 1.0, %v3680
        %v3682 = vmul.f32 %v3679, %v3681
        %v3683 = vadd.f32 %v3679, %v3682
        %vm3684 = vweird.f32 %v2161
        %vm3685 = vweird.f32 %v3679
        %vm3686 = vmor %vm3684, %vm3685
        %v3687 = vsel %vm3686, %v3679, %v3683
        %v3688 = vand.u32 2147483647, %v2161
        %vm3689 = vcmp.eq.f32.partialorder %v3688, 8.507059e+37
        %v3690 = vand.u32 %v2161, 2147483648
        %v3691 = vor.u32 1.1754944e-38, %v3690
        %v3692 = vsel %vm3689, %v3691, %v3687
        %v3693 = vmul.f32 1.0, %v3692
        %v3694 = vrcp.pop %v2162
        %v3695 = vmul.f32 %v2162, %v3694
        %v3696 = vsub.f32 1.0, %v3695
        %v3697 = vmul.f32 %v3694, %v3696
        %v3698 = vadd.f32 %v3694, %v3697
        %vm3699 = vweird.f32 %v2162
        %vm3700 = vweird.f32 %v3694
        %vm3701 = vmor %vm3699, %vm3700
        %v3702 = vsel %vm3701, %v3694, %v3698
        %v3703 = vand.u32 2147483647, %v2162
        %vm3704 = vcmp.eq.f32.partialorder %v3703, 8.507059e+37
        %v3705 = vand.u32 %v2162, 2147483648
        %v3706 = vor.u32 1.1754944e-38, %v3705
        %v3707 = vsel %vm3704, %v3706, %v3702
        %v3708 = vmul.f32 1.0, %v3707
        %v3709 = vrcp.pop %v2163
        %v3710 = vmul.f32 %v2163, %v3709
        %v3711 = vsub.f32 1.0, %v3710
        %v3712 = vmul.f32 %v3709, %v3711
        %v3713 = vadd.f32 %v3709, %v3712
        %vm3714 = vweird.f32 %v2163
        %vm3715 = vweird.f32 %v3709
        %vm3716 = vmor %vm3714, %vm3715
        %v3717 = vsel %vm3716, %v3709, %v3713
        %v3718 = vand.u32 2147483647, %v2163
        %vm3719 = vcmp.eq.f32.partialorder %v3718, 8.507059e+37
        %v3720 = vand.u32 %v2163, 2147483648
        %v3721 = vor.u32 1.1754944e-38, %v3720
        %v3722 = vsel %vm3719, %v3721, %v3717
        %v3723 = vmul.f32 1.0, %v3722
        %v3724 = vrcp.pop %v2164
        %v3725 = vmul.f32 %v2164, %v3724
        %v3726 = vsub.f32 1.0, %v3725
        %v3727 = vmul.f32 %v3724, %v3726
        %v3728 = vadd.f32 %v3724, %v3727
        %vm3729 = vweird.f32 %v2164
        %vm3730 = vweird.f32 %v3724
        %vm3731 = vmor %vm3729, %vm3730
        %v3732 = vsel %vm3731, %v3724, %v3728
        %v3733 = vand.u32 2147483647, %v2164
        %vm3734 = vcmp.eq.f32.partialorder %v3733, 8.507059e+37
        %v3735 = vand.u32 %v2164, 2147483648
        %v3736 = vor.u32 1.1754944e-38, %v3735
        %v3737 = vsel %vm3734, %v3736, %v3732
        %v3738 = vmul.f32 1.0, %v3737
        %v3739 = vrcp.pop %v2165
        %v3740 = vmul.f32 %v2165, %v3739
        %v3741 = vsub.f32 1.0, %v3740
        %v3742 = vmul.f32 %v3739, %v3741
        %v3743 = vadd.f32 %v3739, %v3742
        %vm3744 = vweird.f32 %v2165
        %vm3745 = vweird.f32 %v3739
        %vm3746 = vmor %vm3744, %vm3745
        %v3747 = vsel %vm3746, %v3739, %v3743
        %v3748 = vand.u32 2147483647, %v2165
        %vm3749 = vcmp.eq.f32.partialorder %v3748, 8.507059e+37
        %v3750 = vand.u32 %v2165, 2147483648
        %v3751 = vor.u32 1.1754944e-38, %v3750
        %v3752 = vsel %vm3749, %v3751, %v3747
        %v3753 = vmul.f32 1.0, %v3752
        %v3754 = vrcp.pop %v2166
        %v3755 = vmul.f32 %v2166, %v3754
        %v3756 = vsub.f32 1.0, %v3755
        %v3757 = vmul.f32 %v3754, %v3756
        %v3758 = vadd.f32 %v3754, %v3757
        %vm3759 = vweird.f32 %v2166
        %vm3760 = vweird.f32 %v3754
        %vm3761 = vmor %vm3759, %vm3760
        %v3762 = vsel %vm3761, %v3754, %v3758
        %v3763 = vand.u32 2147483647, %v2166
        %vm3764 = vcmp.eq.f32.partialorder %v3763, 8.507059e+37
        %v3765 = vand.u32 %v2166, 2147483648
        %v3766 = vor.u32 1.1754944e-38, %v3765
        %v3767 = vsel %vm3764, %v3766, %v3762
        %v3768 = vmul.f32 1.0, %v3767
        %v3769 = vrcp.pop %v2167
        %v3770 = vmul.f32 %v2167, %v3769
        %v3771 = vsub.f32 1.0, %v3770
        %v3772 = vmul.f32 %v3769, %v3771
        %v3773 = vadd.f32 %v3769, %v3772
        %vm3774 = vweird.f32 %v2167
        %vm3775 = vweird.f32 %v3769
        %vm3776 = vmor %vm3774, %vm3775
        %v3777 = vsel %vm3776, %v3769, %v3773
        %v3778 = vand.u32 2147483647, %v2167
        %vm3779 = vcmp.eq.f32.partialorder %v3778, 8.507059e+37
        %v3780 = vand.u32 %v2167, 2147483648
        %v3781 = vor.u32 1.1754944e-38, %v3780
        %v3782 = vsel %vm3779, %v3781, %v3777
        %v3783 = vmul.f32 1.0, %v3782
        %v3784 = vrcp.pop %v2168
        %v3785 = vmul.f32 %v2168, %v3784
        %v3786 = vsub.f32 1.0, %v3785
        %v3787 = vmul.f32 %v3784, %v3786
        %v3788 = vadd.f32 %v3784, %v3787
        %vm3789 = vweird.f32 %v2168
        %vm3790 = vweird.f32 %v3784
        %vm3791 = vmor %vm3789, %vm3790
        %v3792 = vsel %vm3791, %v3784, %v3788
        %v3793 = vand.u32 2147483647, %v2168
        %vm3794 = vcmp.eq.f32.partialorder %v3793, 8.507059e+37
        %v3795 = vand.u32 %v2168, 2147483648
        %v3796 = vor.u32 1.1754944e-38, %v3795
        %v3797 = vsel %vm3794, %v3796, %v3792
        %v3798 = vmul.f32 1.0, %v3797
        %v3799 = vrcp.pop %v2169
        %v3800 = vmul.f32 %v2169, %v3799
        %v3801 = vsub.f32 1.0, %v3800
        %v3802 = vmul.f32 %v3799, %v3801
        %v3803 = vadd.f32 %v3799, %v3802
        %vm3804 = vweird.f32 %v2169
        %vm3805 = vweird.f32 %v3799
        %vm3806 = vmor %vm3804, %vm3805
        %v3807 = vsel %vm3806, %v3799, %v3803
        %v3808 = vand.u32 2147483647, %v2169
        %vm3809 = vcmp.eq.f32.partialorder %v3808, 8.507059e+37
        %v3810 = vand.u32 %v2169, 2147483648
        %v3811 = vor.u32 1.1754944e-38, %v3810
        %v3812 = vsel %vm3809, %v3811, %v3807
        %v3813 = vmul.f32 1.0, %v3812
        %v3814 = vrcp.pop %v2170
        %v3815 = vmul.f32 %v2170, %v3814
        %v3816 = vsub.f32 1.0, %v3815
        %v3817 = vmul.f32 %v3814, %v3816
        %v3818 = vadd.f32 %v3814, %v3817
        %vm3819 = vweird.f32 %v2170
        %vm3820 = vweird.f32 %v3814
        %vm3821 = vmor %vm3819, %vm3820
        %v3822 = vsel %vm3821, %v3814, %v3818
        %v3823 = vand.u32 2147483647, %v2170
        %vm3824 = vcmp.eq.f32.partialorder %v3823, 8.507059e+37
        %v3825 = vand.u32 %v2170, 2147483648
        %v3826 = vor.u32 1.1754944e-38, %v3825
        %v3827 = vsel %vm3824, %v3826, %v3822
        %v3828 = vmul.f32 1.0, %v3827
        %v3829 = vrcp.pop %v2171
        %v3830 = vmul.f32 %v2171, %v3829
        %v3831 = vsub.f32 1.0, %v3830
        %v3832 = vmul.f32 %v3829, %v3831
        %v3833 = vadd.f32 %v3829, %v3832
        %vm3834 = vweird.f32 %v2171
        %vm3835 = vweird.f32 %v3829
        %vm3836 = vmor %vm3834, %vm3835
        %v3837 = vsel %vm3836, %v3829, %v3833
        %v3838 = vand.u32 2147483647, %v2171
        %vm3839 = vcmp.eq.f32.partialorder %v3838, 8.507059e+37
        %v3840 = vand.u32 %v2171, 2147483648
        %v3841 = vor.u32 1.1754944e-38, %v3840
        %v3842 = vsel %vm3839, %v3841, %v3837
        %v3843 = vmul.f32 1.0, %v3842
        %v3844 = vrcp.pop %v2172
        %v3845 = vmul.f32 %v2172, %v3844
        %v3846 = vsub.f32 1.0, %v3845
        %v3847 = vmul.f32 %v3844, %v3846
        %v3848 = vadd.f32 %v3844, %v3847
        %vm3849 = vweird.f32 %v2172
        %vm3850 = vweird.f32 %v3844
        %vm3851 = vmor %vm3849, %vm3850
        %v3852 = vsel %vm3851, %v3844, %v3848
        %v3853 = vand.u32 2147483647, %v2172
        %vm3854 = vcmp.eq.f32.partialorder %v3853, 8.507059e+37
        %v3855 = vand.u32 %v2172, 2147483648
        %v3856 = vor.u32 1.1754944e-38, %v3855
        %v3857 = vsel %vm3854, %v3856, %v3852
        %v3858 = vmul.f32 1.0, %v3857
        %v3859 = vrcp.pop %v2173
        %v3860 = vmul.f32 %v2173, %v3859
        %v3861 = vsub.f32 1.0, %v3860
        %v3862 = vmul.f32 %v3859, %v3861
        %v3863 = vadd.f32 %v3859, %v3862
        %vm3864 = vweird.f32 %v2173
        %vm3865 = vweird.f32 %v3859
        %vm3866 = vmor %vm3864, %vm3865
        %v3867 = vsel %vm3866, %v3859, %v3863
        %v3868 = vand.u32 2147483647, %v2173
        %vm3869 = vcmp.eq.f32.partialorder %v3868, 8.507059e+37
        %v3870 = vand.u32 %v2173, 2147483648
        %v3871 = vor.u32 1.1754944e-38, %v3870
        %v3872 = vsel %vm3869, %v3871, %v3867
        %v3873 = vmul.f32 1.0, %v3872
        %v3874 = vrcp.pop %v2174
        %v3875 = vmul.f32 %v2174, %v3874
        %v3876 = vsub.f32 1.0, %v3875
        %v3877 = vmul.f32 %v3874, %v3876
        %v3878 = vadd.f32 %v3874, %v3877
        %vm3879 = vweird.f32 %v2174
        %vm3880 = vweird.f32 %v3874
        %vm3881 = vmor %vm3879, %vm3880
        %v3882 = vsel %vm3881, %v3874, %v3878
        %v3883 = vand.u32 2147483647, %v2174
        %vm3884 = vcmp.eq.f32.partialorder %v3883, 8.507059e+37
        %v3885 = vand.u32 %v2174, 2147483648
        %v3886 = vor.u32 1.1754944e-38, %v3885
        %v3887 = vsel %vm3884, %v3886, %v3882
        %v3888 = vmul.f32 1.0, %v3887
        %v3889 = vrcp.pop %v2175
        %v3890 = vmul.f32 %v2175, %v3889
        %v3891 = vsub.f32 1.0, %v3890
        %v3892 = vmul.f32 %v3889, %v3891
        %v3893 = vadd.f32 %v3889, %v3892
        %vm3894 = vweird.f32 %v2175
        %vm3895 = vweird.f32 %v3889
        %vm3896 = vmor %vm3894, %vm3895
        %v3897 = vsel %vm3896, %v3889, %v3893
        %v3898 = vand.u32 2147483647, %v2175
        %vm3899 = vcmp.eq.f32.partialorder %v3898, 8.507059e+37
        %v3900 = vand.u32 %v2175, 2147483648
        %v3901 = vor.u32 1.1754944e-38, %v3900
        %v3902 = vsel %vm3899, %v3901, %v3897
        %v3903 = vmul.f32 1.0, %v3902
        %v3904 = vrcp.pop %v2176
        %v3905 = vmul.f32 %v2176, %v3904
        %v3906 = vsub.f32 1.0, %v3905
        %v3907 = vmul.f32 %v3904, %v3906
        %v3908 = vadd.f32 %v3904, %v3907
        %vm3909 = vweird.f32 %v2176
        %vm3910 = vweird.f32 %v3904
        %vm3911 = vmor %vm3909, %vm3910
        %v3912 = vsel %vm3911, %v3904, %v3908
        %v3913 = vand.u32 2147483647, %v2176
        %vm3914 = vcmp.eq.f32.partialorder %v3913, 8.507059e+37
        %v3915 = vand.u32 %v2176, 2147483648
        %v3916 = vor.u32 1.1754944e-38, %v3915
        %v3917 = vsel %vm3914, %v3916, %v3912
        %v3918 = vmul.f32 1.0, %v3917
        %v3919 = vrcp.pop %v2177
        %v3920 = vmul.f32 %v2177, %v3919
        %v3921 = vsub.f32 1.0, %v3920
        %v3922 = vmul.f32 %v3919, %v3921
        %v3923 = vadd.f32 %v3919, %v3922
        %vm3924 = vweird.f32 %v2177
        %vm3925 = vweird.f32 %v3919
        %vm3926 = vmor %vm3924, %vm3925
        %v3927 = vsel %vm3926, %v3919, %v3923
        %v3928 = vand.u32 2147483647, %v2177
        %vm3929 = vcmp.eq.f32.partialorder %v3928, 8.507059e+37
        %v3930 = vand.u32 %v2177, 2147483648
        %v3931 = vor.u32 1.1754944e-38, %v3930
        %v3932 = vsel %vm3929, %v3931, %v3927
        %v3933 = vmul.f32 1.0, %v3932
        %v3934 = vrcp.pop %v2178
        %v3935 = vmul.f32 %v2178, %v3934
        %v3936 = vsub.f32 1.0, %v3935
        %v3937 = vmul.f32 %v3934, %v3936
        %v3938 = vadd.f32 %v3934, %v3937
        %vm3939 = vweird.f32 %v2178
        %vm3940 = vweird.f32 %v3934
        %vm3941 = vmor %vm3939, %vm3940
        %v3942 = vsel %vm3941, %v3934, %v3938
        %v3943 = vand.u32 2147483647, %v2178
        %vm3944 = vcmp.eq.f32.partialorder %v3943, 8.507059e+37
        %v3945 = vand.u32 %v2178, 2147483648
        %v3946 = vor.u32 1.1754944e-38, %v3945
        %v3947 = vsel %vm3944, %v3946, %v3942
        %v3948 = vmul.f32 1.0, %v3947
        %v3949 = vrcp.pop %v2179
        %v3950 = vmul.f32 %v2179, %v3949
        %v3951 = vsub.f32 1.0, %v3950
        %v3952 = vmul.f32 %v3949, %v3951
        %v3953 = vadd.f32 %v3949, %v3952
        %vm3954 = vweird.f32 %v2179
        %vm3955 = vweird.f32 %v3949
        %vm3956 = vmor %vm3954, %vm3955
        %v3957 = vsel %vm3956, %v3949, %v3953
        %v3958 = vand.u32 2147483647, %v2179
        %vm3959 = vcmp.eq.f32.partialorder %v3958, 8.507059e+37
        %v3960 = vand.u32 %v2179, 2147483648
        %v3961 = vor.u32 1.1754944e-38, %v3960
        %v3962 = vsel %vm3959, %v3961, %v3957
        %v3963 = vmul.f32 1.0, %v3962
        %v3964 = vrcp.pop %v2180
        %v3965 = vmul.f32 %v2180, %v3964
        %v3966 = vsub.f32 1.0, %v3965
        %v3967 = vmul.f32 %v3964, %v3966
        %v3968 = vadd.f32 %v3964, %v3967
        %vm3969 = vweird.f32 %v2180
        %vm3970 = vweird.f32 %v3964
        %vm3971 = vmor %vm3969, %vm3970
        %v3972 = vsel %vm3971, %v3964, %v3968
        %v3973 = vand.u32 2147483647, %v2180
        %vm3974 = vcmp.eq.f32.partialorder %v3973, 8.507059e+37
        %v3975 = vand.u32 %v2180, 2147483648
        %v3976 = vor.u32 1.1754944e-38, %v3975
        %v3977 = vsel %vm3974, %v3976, %v3972
        %v3978 = vmul.f32 1.0, %v3977
        %v3979 = vrcp.pop %v2181
        %v3980 = vmul.f32 %v2181, %v3979
        %v3981 = vsub.f32 1.0, %v3980
        %v3982 = vmul.f32 %v3979, %v3981
        %v3983 = vadd.f32 %v3979, %v3982
        %vm3984 = vweird.f32 %v2181
        %vm3985 = vweird.f32 %v3979
        %vm3986 = vmor %vm3984, %vm3985
        %v3987 = vsel %vm3986, %v3979, %v3983
        %v3988 = vand.u32 2147483647, %v2181
        %vm3989 = vcmp.eq.f32.partialorder %v3988, 8.507059e+37
        %v3990 = vand.u32 %v2181, 2147483648
        %v3991 = vor.u32 1.1754944e-38, %v3990
        %v3992 = vsel %vm3989, %v3991, %v3987
        %v3993 = vmul.f32 1.0, %v3992
        %v3994 = vrcp.pop %v2182
        %v3995 = vmul.f32 %v2182, %v3994
        %v3996 = vsub.f32 1.0, %v3995
        %v3997 = vmul.f32 %v3994, %v3996
        %v3998 = vadd.f32 %v3994, %v3997
        %vm3999 = vweird.f32 %v2182
        %vm4000 = vweird.f32 %v3994
        %vm4001 = vmor %vm3999, %vm4000
        %v4002 = vsel %vm4001, %v3994, %v3998
        %v4003 = vand.u32 2147483647, %v2182
        %vm4004 = vcmp.eq.f32.partialorder %v4003, 8.507059e+37
        %v4005 = vand.u32 %v2182, 2147483648
        %v4006 = vor.u32 1.1754944e-38, %v4005
        %v4007 = vsel %vm4004, %v4006, %v4002
        %v4008 = vmul.f32 1.0, %v4007
        %v4009 = vrcp.pop %v2183
        %v4010 = vmul.f32 %v2183, %v4009
        %v4011 = vsub.f32 1.0, %v4010
        %v4012 = vmul.f32 %v4009, %v4011
        %v4013 = vadd.f32 %v4009, %v4012
        %vm4014 = vweird.f32 %v2183
        %vm4015 = vweird.f32 %v4009
        %vm4016 = vmor %vm4014, %vm4015
        %v4017 = vsel %vm4016, %v4009, %v4013
        %v4018 = vand.u32 2147483647, %v2183
        %vm4019 = vcmp.eq.f32.partialorder %v4018, 8.507059e+37
        %v4020 = vand.u32 %v2183, 2147483648
        %v4021 = vor.u32 1.1754944e-38, %v4020
        %v4022 = vsel %vm4019, %v4021, %v4017
        %v4023 = vmul.f32 1.0, %v4022
        %v4024 = vrcp.pop %v2184
        %v4025 = vmul.f32 %v2184, %v4024
        %v4026 = vsub.f32 1.0, %v4025
        %v4027 = vmul.f32 %v4024, %v4026
        %v4028 = vadd.f32 %v4024, %v4027
        %vm4029 = vweird.f32 %v2184
        %vm4030 = vweird.f32 %v4024
        %vm4031 = vmor %vm4029, %vm4030
        %v4032 = vsel %vm4031, %v4024, %v4028
        %v4033 = vand.u32 2147483647, %v2184
        %vm4034 = vcmp.eq.f32.partialorder %v4033, 8.507059e+37
        %v4035 = vand.u32 %v2184, 2147483648
        %v4036 = vor.u32 1.1754944e-38, %v4035
        %v4037 = vsel %vm4034, %v4036, %v4032
        %v4038 = vmul.f32 1.0, %v4037
        %v4039 = vrcp.pop %v2185
        %v4040 = vmul.f32 %v2185, %v4039
        %v4041 = vsub.f32 1.0, %v4040
        %v4042 = vmul.f32 %v4039, %v4041
        %v4043 = vadd.f32 %v4039, %v4042
        %vm4044 = vweird.f32 %v2185
        %vm4045 = vweird.f32 %v4039
        %vm4046 = vmor %vm4044, %vm4045
        %v4047 = vsel %vm4046, %v4039, %v4043
        %v4048 = vand.u32 2147483647, %v2185
        %vm4049 = vcmp.eq.f32.partialorder %v4048, 8.507059e+37
        %v4050 = vand.u32 %v2185, 2147483648
        %v4051 = vor.u32 1.1754944e-38, %v4050
        %v4052 = vsel %vm4049, %v4051, %v4047
        %v4053 = vmul.f32 1.0, %v4052
        %v4054 = vrcp.pop %v2186
        %v4055 = vmul.f32 %v2186, %v4054
        %v4056 = vsub.f32 1.0, %v4055
        %v4057 = vmul.f32 %v4054, %v4056
        %v4058 = vadd.f32 %v4054, %v4057
        %vm4059 = vweird.f32 %v2186
        %vm4060 = vweird.f32 %v4054
        %vm4061 = vmor %vm4059, %vm4060
        %v4062 = vsel %vm4061, %v4054, %v4058
        %v4063 = vand.u32 2147483647, %v2186
        %vm4064 = vcmp.eq.f32.partialorder %v4063, 8.507059e+37
        %v4065 = vand.u32 %v2186, 2147483648
        %v4066 = vor.u32 1.1754944e-38, %v4065
        %v4067 = vsel %vm4064, %v4066, %v4062
        %v4068 = vmul.f32 1.0, %v4067
        %v4069 = vrcp.pop %v2187
        %v4070 = vmul.f32 %v2187, %v4069
        %v4071 = vsub.f32 1.0, %v4070
        %v4072 = vmul.f32 %v4069, %v4071
        %v4073 = vadd.f32 %v4069, %v4072
        %vm4074 = vweird.f32 %v2187
        %vm4075 = vweird.f32 %v4069
        %vm4076 = vmor %vm4074, %vm4075
        %v4077 = vsel %vm4076, %v4069, %v4073
        %v4078 = vand.u32 2147483647, %v2187
        %vm4079 = vcmp.eq.f32.partialorder %v4078, 8.507059e+37
        %v4080 = vand.u32 %v2187, 2147483648
        %v4081 = vor.u32 1.1754944e-38, %v4080
        %v4082 = vsel %vm4079, %v4081, %v4077
        %v4083 = vmul.f32 1.0, %v4082
        %v4084 = vrcp.pop %v2188
        %v4085 = vmul.f32 %v2188, %v4084
        %v4086 = vsub.f32 1.0, %v4085
        %v4087 = vmul.f32 %v4084, %v4086
        %v4088 = vadd.f32 %v4084, %v4087
        %vm4089 = vweird.f32 %v2188
        %vm4090 = vweird.f32 %v4084
        %vm4091 = vmor %vm4089, %vm4090
        %v4092 = vsel %vm4091, %v4084, %v4088
        %v4093 = vand.u32 2147483647, %v2188
        %vm4094 = vcmp.eq.f32.partialorder %v4093, 8.507059e+37
        %v4095 = vand.u32 %v2188, 2147483648
        %v4096 = vor.u32 1.1754944e-38, %v4095
        %v4097 = vsel %vm4094, %v4096, %v4092
        %v4098 = vmul.f32 1.0, %v4097
        %v4099 = vrcp.pop %v2189
        %v4100 = vmul.f32 %v2189, %v4099
        %v4101 = vsub.f32 1.0, %v4100
        %v4102 = vmul.f32 %v4099, %v4101
        %v4103 = vadd.f32 %v4099, %v4102
        %vm4104 = vweird.f32 %v2189
        %vm4105 = vweird.f32 %v4099
        %vm4106 = vmor %vm4104, %vm4105
        %v4107 = vsel %vm4106, %v4099, %v4103
        %v4108 = vand.u32 2147483647, %v2189
        %vm4109 = vcmp.eq.f32.partialorder %v4108, 8.507059e+37
        %v4110 = vand.u32 %v2189, 2147483648
        %v4111 = vor.u32 1.1754944e-38, %v4110
        %v4112 = vsel %vm4109, %v4111, %v4107
        %v4113 = vmul.f32 1.0, %v4112
        %v4114 = vrcp.pop %v2190
        %v4115 = vmul.f32 %v2190, %v4114
        %v4116 = vsub.f32 1.0, %v4115
        %v4117 = vmul.f32 %v4114, %v4116
        %v4118 = vadd.f32 %v4114, %v4117
        %vm4119 = vweird.f32 %v2190
        %vm4120 = vweird.f32 %v4114
        %vm4121 = vmor %vm4119, %vm4120
        %v4122 = vsel %vm4121, %v4114, %v4118
        %v4123 = vand.u32 2147483647, %v2190
        %vm4124 = vcmp.eq.f32.partialorder %v4123, 8.507059e+37
        %v4125 = vand.u32 %v2190, 2147483648
        %v4126 = vor.u32 1.1754944e-38, %v4125
        %v4127 = vsel %vm4124, %v4126, %v4122
        %v4128 = vmul.f32 1.0, %v4127
        %v4129 = vrcp.pop %v2191
        %v4130 = vmul.f32 %v2191, %v4129
        %v4131 = vsub.f32 1.0, %v4130
        %v4132 = vmul.f32 %v4129, %v4131
        %v4133 = vadd.f32 %v4129, %v4132
        %vm4134 = vweird.f32 %v2191
        %vm4135 = vweird.f32 %v4129
        %vm4136 = vmor %vm4134, %vm4135
        %v4137 = vsel %vm4136, %v4129, %v4133
        %v4138 = vand.u32 2147483647, %v2191
        %vm4139 = vcmp.eq.f32.partialorder %v4138, 8.507059e+37
        %v4140 = vand.u32 %v2191, 2147483648
        %v4141 = vor.u32 1.1754944e-38, %v4140
        %v4142 = vsel %vm4139, %v4141, %v4137
        %v4143 = vmul.f32 1.0, %v4142
        %v4144 = vrcp.pop %v2192
        %v4145 = vmul.f32 %v2192, %v4144
        %v4146 = vsub.f32 1.0, %v4145
        %v4147 = vmul.f32 %v4144, %v4146
        %v4148 = vadd.f32 %v4144, %v4147
        %vm4149 = vweird.f32 %v2192
        %vm4150 = vweird.f32 %v4144
        %vm4151 = vmor %vm4149, %vm4150
        %v4152 = vsel %vm4151, %v4144, %v4148
        %v4153 = vand.u32 2147483647, %v2192
        %vm4154 = vcmp.eq.f32.partialorder %v4153, 8.507059e+37
        %v4155 = vand.u32 %v2192, 2147483648
        %v4156 = vor.u32 1.1754944e-38, %v4155
        %v4157 = vsel %vm4154, %v4156, %v4152
        %v4158 = vmul.f32 1.0, %v4157
        %v4159 = vrcp.pop %v2193
        %v4160 = vmul.f32 %v2193, %v4159
        %v4161 = vsub.f32 1.0, %v4160
        %v4162 = vmul.f32 %v4159, %v4161
        %v4163 = vadd.f32 %v4159, %v4162
        %vm4164 = vweird.f32 %v2193
        %vm4165 = vweird.f32 %v4159
        %vm4166 = vmor %vm4164, %vm4165
        %v4167 = vsel %vm4166, %v4159, %v4163
        %v4168 = vand.u32 2147483647, %v2193
        %vm4169 = vcmp.eq.f32.partialorder %v4168, 8.507059e+37
        %v4170 = vand.u32 %v2193, 2147483648
        %v4171 = vor.u32 1.1754944e-38, %v4170
        %v4172 = vsel %vm4169, %v4171, %v4167
        %v4173 = vmul.f32 1.0, %v4172
        %v4174 = vrcp.pop %v2194
        %v4175 = vmul.f32 %v2194, %v4174
        %v4176 = vsub.f32 1.0, %v4175
        %v4177 = vmul.f32 %v4174, %v4176
        %v4178 = vadd.f32 %v4174, %v4177
        %vm4179 = vweird.f32 %v2194
        %vm4180 = vweird.f32 %v4174
        %vm4181 = vmor %vm4179, %vm4180
        %v4182 = vsel %vm4181, %v4174, %v4178
        %v4183 = vand.u32 2147483647, %v2194
        %vm4184 = vcmp.eq.f32.partialorder %v4183, 8.507059e+37
        %v4185 = vand.u32 %v2194, 2147483648
        %v4186 = vor.u32 1.1754944e-38, %v4185
        %v4187 = vsel %vm4184, %v4186, %v4182
        %v4188 = vmul.f32 1.0, %v4187
        %v4189 = vrcp.pop %v2195
        %v4190 = vmul.f32 %v2195, %v4189
        %v4191 = vsub.f32 1.0, %v4190
        %v4192 = vmul.f32 %v4189, %v4191
        %v4193 = vadd.f32 %v4189, %v4192
        %vm4194 = vweird.f32 %v2195
        %vm4195 = vweird.f32 %v4189
        %vm4196 = vmor %vm4194, %vm4195
        %v4197 = vsel %vm4196, %v4189, %v4193
        %v4198 = vand.u32 2147483647, %v2195
        %vm4199 = vcmp.eq.f32.partialorder %v4198, 8.507059e+37
        %v4200 = vand.u32 %v2195, 2147483648
        %v4201 = vor.u32 1.1754944e-38, %v4200
        %v4202 = vsel %vm4199, %v4201, %v4197
        %v4203 = vmul.f32 1.0, %v4202
        %v4204 = vrcp.pop %v2196
        %v4205 = vmul.f32 %v2196, %v4204
        %v4206 = vsub.f32 1.0, %v4205
        %v4207 = vmul.f32 %v4204, %v4206
        %v4208 = vadd.f32 %v4204, %v4207
        %vm4209 = vweird.f32 %v2196
        %vm4210 = vweird.f32 %v4204
        %vm4211 = vmor %vm4209, %vm4210
        %v4212 = vsel %vm4211, %v4204, %v4208
        %v4213 = vand.u32 2147483647, %v2196
        %vm4214 = vcmp.eq.f32.partialorder %v4213, 8.507059e+37
        %v4215 = vand.u32 %v2196, 2147483648
        %v4216 = vor.u32 1.1754944e-38, %v4215
        %v4217 = vsel %vm4214, %v4216, %v4212
        %v4218 = vmul.f32 1.0, %v4217
        %v4219 = vrcp.pop %v2197
        %v4220 = vmul.f32 %v2197, %v4219
        %v4221 = vsub.f32 1.0, %v4220
        %v4222 = vmul.f32 %v4219, %v4221
        %v4223 = vadd.f32 %v4219, %v4222
        %vm4224 = vweird.f32 %v2197
        %vm4225 = vweird.f32 %v4219
        %vm4226 = vmor %vm4224, %vm4225
        %v4227 = vsel %vm4226, %v4219, %v4223
        %v4228 = vand.u32 2147483647, %v2197
        %vm4229 = vcmp.eq.f32.partialorder %v4228, 8.507059e+37
        %v4230 = vand.u32 %v2197, 2147483648
        %v4231 = vor.u32 1.1754944e-38, %v4230
        %v4232 = vsel %vm4229, %v4231, %v4227
        %v4233 = vmul.f32 1.0, %v4232
        %v4234 = vrcp.pop %v2198
        %v4235 = vmul.f32 %v2198, %v4234
        %v4236 = vsub.f32 1.0, %v4235
        %v4237 = vmul.f32 %v4234, %v4236
        %v4238 = vadd.f32 %v4234, %v4237
        %vm4239 = vweird.f32 %v2198
        %vm4240 = vweird.f32 %v4234
        %vm4241 = vmor %vm4239, %vm4240
        %v4242 = vsel %vm4241, %v4234, %v4238
        %v4243 = vand.u32 2147483647, %v2198
        %vm4244 = vcmp.eq.f32.partialorder %v4243, 8.507059e+37
        %v4245 = vand.u32 %v2198, 2147483648
        %v4246 = vor.u32 1.1754944e-38, %v4245
        %v4247 = vsel %vm4244, %v4246, %v4242
        %v4248 = vmul.f32 1.0, %v4247
        %v4249 = vrcp.pop %v2199
        %v4250 = vmul.f32 %v2199, %v4249
        %v4251 = vsub.f32 1.0, %v4250
        %v4252 = vmul.f32 %v4249, %v4251
        %v4253 = vadd.f32 %v4249, %v4252
        %vm4254 = vweird.f32 %v2199
        %vm4255 = vweird.f32 %v4249
        %vm4256 = vmor %vm4254, %vm4255
        %v4257 = vsel %vm4256, %v4249, %v4253
        %v4258 = vand.u32 2147483647, %v2199
        %vm4259 = vcmp.eq.f32.partialorder %v4258, 8.507059e+37
        %v4260 = vand.u32 %v2199, 2147483648
        %v4261 = vor.u32 1.1754944e-38, %v4260
        %v4262 = vsel %vm4259, %v4261, %v4257
        %v4263 = vmul.f32 1.0, %v4262
        %v4264 = vrcp.pop %v2200
        %v4265 = vmul.f32 %v2200, %v4264
        %v4266 = vsub.f32 1.0, %v4265
        %v4267 = vmul.f32 %v4264, %v4266
        %v4268 = vadd.f32 %v4264, %v4267
        %vm4269 = vweird.f32 %v2200
        %vm4270 = vweird.f32 %v4264
        %vm4271 = vmor %vm4269, %vm4270
        %v4272 = vsel %vm4271, %v4264, %v4268
        %v4273 = vand.u32 2147483647, %v2200
        %vm4274 = vcmp.eq.f32.partialorder %v4273, 8.507059e+37
        %v4275 = vand.u32 %v2200, 2147483648
        %v4276 = vor.u32 1.1754944e-38, %v4275
        %v4277 = vsel %vm4274, %v4276, %v4272
        %v4278 = vmul.f32 1.0, %v4277
        %v4279 = vrcp.pop %v2201
        %v4280 = vmul.f32 %v2201, %v4279
        %v4281 = vsub.f32 1.0, %v4280
        %v4282 = vmul.f32 %v4279, %v4281
        %v4283 = vadd.f32 %v4279, %v4282
        %vm4284 = vweird.f32 %v2201
        %vm4285 = vweird.f32 %v4279
        %vm4286 = vmor %vm4284, %vm4285
        %v4287 = vsel %vm4286, %v4279, %v4283
        %v4288 = vand.u32 2147483647, %v2201
        %vm4289 = vcmp.eq.f32.partialorder %v4288, 8.507059e+37
        %v4290 = vand.u32 %v2201, 2147483648
        %v4291 = vor.u32 1.1754944e-38, %v4290
        %v4292 = vsel %vm4289, %v4291, %v4287
        %v4293 = vmul.f32 1.0, %v4292
        %v4294 = vrcp.pop %v2202
        %v4295 = vmul.f32 %v2202, %v4294
        %v4296 = vsub.f32 1.0, %v4295
        %v4297 = vmul.f32 %v4294, %v4296
        %v4298 = vadd.f32 %v4294, %v4297
        %vm4299 = vweird.f32 %v2202
        %vm4300 = vweird.f32 %v4294
        %vm4301 = vmor %vm4299, %vm4300
        %v4302 = vsel %vm4301, %v4294, %v4298
        %v4303 = vand.u32 2147483647, %v2202
        %vm4304 = vcmp.eq.f32.partialorder %v4303, 8.507059e+37
        %v4305 = vand.u32 %v2202, 2147483648
        %v4306 = vor.u32 1.1754944e-38, %v4305
        %v4307 = vsel %vm4304, %v4306, %v4302
        %v4308 = vmul.f32 1.0, %v4307
        %v4309 = vrcp.pop %v2203
        %v4310 = vmul.f32 %v2203, %v4309
        %v4311 = vsub.f32 1.0, %v4310
        %v4312 = vmul.f32 %v4309, %v4311
        %v4313 = vadd.f32 %v4309, %v4312
        %vm4314 = vweird.f32 %v2203
        %vm4315 = vweird.f32 %v4309
        %vm4316 = vmor %vm4314, %vm4315
        %v4317 = vsel %vm4316, %v4309, %v4313
        %v4318 = vand.u32 2147483647, %v2203
        %vm4319 = vcmp.eq.f32.partialorder %v4318, 8.507059e+37
        %v4320 = vand.u32 %v2203, 2147483648
        %v4321 = vor.u32 1.1754944e-38, %v4320
        %v4322 = vsel %vm4319, %v4321, %v4317
        %v4323 = vmul.f32 1.0, %v4322
        %v4324 = vrcp.pop %v2204
        %v4325 = vmul.f32 %v2204, %v4324
        %v4326 = vsub.f32 1.0, %v4325
        %v4327 = vmul.f32 %v4324, %v4326
        %v4328 = vadd.f32 %v4324, %v4327
        %vm4329 = vweird.f32 %v2204
        %vm4330 = vweird.f32 %v4324
        %vm4331 = vmor %vm4329, %vm4330
        %v4332 = vsel %vm4331, %v4324, %v4328
        %v4333 = vand.u32 2147483647, %v2204
        %vm4334 = vcmp.eq.f32.partialorder %v4333, 8.507059e+37
        %v4335 = vand.u32 %v2204, 2147483648
        %v4336 = vor.u32 1.1754944e-38, %v4335
        %v4337 = vsel %vm4334, %v4336, %v4332
        %v4338 = vmul.f32 1.0, %v4337
        %v4339 = vrcp.pop %v2205
        %v4340 = vmul.f32 %v2205, %v4339
        %v4341 = vsub.f32 1.0, %v4340
        %v4342 = vmul.f32 %v4339, %v4341
        %v4343 = vadd.f32 %v4339, %v4342
        %vm4344 = vweird.f32 %v2205
        %vm4345 = vweird.f32 %v4339
        %vm4346 = vmor %vm4344, %vm4345
        %v4347 = vsel %vm4346, %v4339, %v4343
        %v4348 = vand.u32 2147483647, %v2205
        %vm4349 = vcmp.eq.f32.partialorder %v4348, 8.507059e+37
        %v4350 = vand.u32 %v2205, 2147483648
        %v4351 = vor.u32 1.1754944e-38, %v4350
        %v4352 = vsel %vm4349, %v4351, %v4347
        %v4353 = vmul.f32 1.0, %v4352
        %v4354 = vrcp.pop %v2206
        %v4355 = vmul.f32 %v2206, %v4354
        %v4356 = vsub.f32 1.0, %v4355
        %v4357 = vmul.f32 %v4354, %v4356
        %v4358 = vadd.f32 %v4354, %v4357
        %vm4359 = vweird.f32 %v2206
        %vm4360 = vweird.f32 %v4354
        %vm4361 = vmor %vm4359, %vm4360
        %v4362 = vsel %vm4361, %v4354, %v4358
        %v4363 = vand.u32 2147483647, %v2206
        %vm4364 = vcmp.eq.f32.partialorder %v4363, 8.507059e+37
        %v4365 = vand.u32 %v2206, 2147483648
        %v4366 = vor.u32 1.1754944e-38, %v4365
        %v4367 = vsel %vm4364, %v4366, %v4362
        %v4368 = vmul.f32 1.0, %v4367
        %v4369 = vrcp.pop %v2207
        %v4370 = vmul.f32 %v2207, %v4369
        %v4371 = vsub.f32 1.0, %v4370
        %v4372 = vmul.f32 %v4369, %v4371
        %v4373 = vadd.f32 %v4369, %v4372
        %vm4374 = vweird.f32 %v2207
        %vm4375 = vweird.f32 %v4369
        %vm4376 = vmor %vm4374, %vm4375
        %v4377 = vsel %vm4376, %v4369, %v4373
        %v4378 = vand.u32 2147483647, %v2207
        %vm4379 = vcmp.eq.f32.partialorder %v4378, 8.507059e+37
        %v4380 = vand.u32 %v2207, 2147483648
        %v4381 = vor.u32 1.1754944e-38, %v4380
        %v4382 = vsel %vm4379, %v4381, %v4377
        %v4383 = vmul.f32 1.0, %v4382
        %v4384 = vrcp.pop %v2208
        %v4385 = vmul.f32 %v2208, %v4384
        %v4386 = vsub.f32 1.0, %v4385
        %v4387 = vmul.f32 %v4384, %v4386
        %v4388 = vadd.f32 %v4384, %v4387
        %vm4389 = vweird.f32 %v2208
        %vm4390 = vweird.f32 %v4384
        %vm4391 = vmor %vm4389, %vm4390
        %v4392 = vsel %vm4391, %v4384, %v4388
        %v4393 = vand.u32 2147483647, %v2208
        %vm4394 = vcmp.eq.f32.partialorder %v4393, 8.507059e+37
        %v4395 = vand.u32 %v2208, 2147483648
        %v4396 = vor.u32 1.1754944e-38, %v4395
        %v4397 = vsel %vm4394, %v4396, %v4392
        %v4398 = vmul.f32 1.0, %v4397
        %v4399 = vrcp.pop %v2209
        %v4400 = vmul.f32 %v2209, %v4399
        %v4401 = vsub.f32 1.0, %v4400
        %v4402 = vmul.f32 %v4399, %v4401
        %v4403 = vadd.f32 %v4399, %v4402
        %vm4404 = vweird.f32 %v2209
        %vm4405 = vweird.f32 %v4399
        %vm4406 = vmor %vm4404, %vm4405
        %v4407 = vsel %vm4406, %v4399, %v4403
        %v4408 = vand.u32 2147483647, %v2209
        %vm4409 = vcmp.eq.f32.partialorder %v4408, 8.507059e+37
        %v4410 = vand.u32 %v2209, 2147483648
        %v4411 = vor.u32 1.1754944e-38, %v4410
        %v4412 = vsel %vm4409, %v4411, %v4407
        %v4413 = vmul.f32 1.0, %v4412
        %v4414 = vrcp.pop %v2210
        %v4415 = vmul.f32 %v2210, %v4414
        %v4416 = vsub.f32 1.0, %v4415
        %v4417 = vmul.f32 %v4414, %v4416
        %v4418 = vadd.f32 %v4414, %v4417
        %vm4419 = vweird.f32 %v2210
        %vm4420 = vweird.f32 %v4414
        %vm4421 = vmor %vm4419, %vm4420
        %v4422 = vsel %vm4421, %v4414, %v4418
        %v4423 = vand.u32 2147483647, %v2210
        %vm4424 = vcmp.eq.f32.partialorder %v4423, 8.507059e+37
        %v4425 = vand.u32 %v2210, 2147483648
        %v4426 = vor.u32 1.1754944e-38, %v4425
        %v4427 = vsel %vm4424, %v4426, %v4422
        %v4428 = vmul.f32 1.0, %v4427
        %v4429 = vrcp.pop %v2211
        %v4430 = vmul.f32 %v2211, %v4429
        %v4431 = vsub.f32 1.0, %v4430
        %v4432 = vmul.f32 %v4429, %v4431
        %v4433 = vadd.f32 %v4429, %v4432
        %vm4434 = vweird.f32 %v2211
        %vm4435 = vweird.f32 %v4429
        %vm4436 = vmor %vm4434, %vm4435
        %v4437 = vsel %vm4436, %v4429, %v4433
        %v4438 = vand.u32 2147483647, %v2211
        %vm4439 = vcmp.eq.f32.partialorder %v4438, 8.507059e+37
        %v4440 = vand.u32 %v2211, 2147483648
        %v4441 = vor.u32 1.1754944e-38, %v4440
        %v4442 = vsel %vm4439, %v4441, %v4437
        %v4443 = vmul.f32 1.0, %v4442
        %v4444 = vrcp.pop %v2212
        %v4445 = vmul.f32 %v2212, %v4444
        %v4446 = vsub.f32 1.0, %v4445
        %v4447 = vmul.f32 %v4444, %v4446
        %v4448 = vadd.f32 %v4444, %v4447
        %vm4449 = vweird.f32 %v2212
        %vm4450 = vweird.f32 %v4444
        %vm4451 = vmor %vm4449, %vm4450
        %v4452 = vsel %vm4451, %v4444, %v4448
        %v4453 = vand.u32 2147483647, %v2212
        %vm4454 = vcmp.eq.f32.partialorder %v4453, 8.507059e+37
        %v4455 = vand.u32 %v2212, 2147483648
        %v4456 = vor.u32 1.1754944e-38, %v4455
        %v4457 = vsel %vm4454, %v4456, %v4452
        %v4458 = vmul.f32 1.0, %v4457
        %v4459 = vrcp.pop %v2213
        %v4460 = vmul.f32 %v2213, %v4459
        %v4461 = vsub.f32 1.0, %v4460
        %v4462 = vmul.f32 %v4459, %v4461
        %v4463 = vadd.f32 %v4459, %v4462
        %vm4464 = vweird.f32 %v2213
        %vm4465 = vweird.f32 %v4459
        %vm4466 = vmor %vm4464, %vm4465
        %v4467 = vsel %vm4466, %v4459, %v4463
        %v4468 = vand.u32 2147483647, %v2213
        %vm4469 = vcmp.eq.f32.partialorder %v4468, 8.507059e+37
        %v4470 = vand.u32 %v2213, 2147483648
        %v4471 = vor.u32 1.1754944e-38, %v4470
        %v4472 = vsel %vm4469, %v4471, %v4467
        %v4473 = vmul.f32 1.0, %v4472
        %v4474 = vrcp.pop %v2214
        %v4475 = vmul.f32 %v2214, %v4474
        %v4476 = vsub.f32 1.0, %v4475
        %v4477 = vmul.f32 %v4474, %v4476
        %v4478 = vadd.f32 %v4474, %v4477
        %vm4479 = vweird.f32 %v2214
        %vm4480 = vweird.f32 %v4474
        %vm4481 = vmor %vm4479, %vm4480
        %v4482 = vsel %vm4481, %v4474, %v4478
        %v4483 = vand.u32 2147483647, %v2214
        %vm4484 = vcmp.eq.f32.partialorder %v4483, 8.507059e+37
        %v4485 = vand.u32 %v2214, 2147483648
        %v4486 = vor.u32 1.1754944e-38, %v4485
        %v4487 = vsel %vm4484, %v4486, %v4482
        %v4488 = vmul.f32 1.0, %v4487
        %v4489 = vrcp.pop %v2215
        %v4490 = vmul.f32 %v2215, %v4489
        %v4491 = vsub.f32 1.0, %v4490
        %v4492 = vmul.f32 %v4489, %v4491
        %v4493 = vadd.f32 %v4489, %v4492
        %vm4494 = vweird.f32 %v2215
        %vm4495 = vweird.f32 %v4489
        %vm4496 = vmor %vm4494, %vm4495
        %v4497 = vsel %vm4496, %v4489, %v4493
        %v4498 = vand.u32 2147483647, %v2215
        %vm4499 = vcmp.eq.f32.partialorder %v4498, 8.507059e+37
        %v4500 = vand.u32 %v2215, 2147483648
        %v4501 = vor.u32 1.1754944e-38, %v4500
        %v4502 = vsel %vm4499, %v4501, %v4497
        %v4503 = vmul.f32 1.0, %v4502
        %v4504 = vrcp.pop %v2216
        %v4505 = vmul.f32 %v2216, %v4504
        %v4506 = vsub.f32 1.0, %v4505
        %v4507 = vmul.f32 %v4504, %v4506
        %v4508 = vadd.f32 %v4504, %v4507
        %vm4509 = vweird.f32 %v2216
        %vm4510 = vweird.f32 %v4504
        %vm4511 = vmor %vm4509, %vm4510
        %v4512 = vsel %vm4511, %v4504, %v4508
        %v4513 = vand.u32 2147483647, %v2216
        %vm4514 = vcmp.eq.f32.partialorder %v4513, 8.507059e+37
        %v4515 = vand.u32 %v2216, 2147483648
        %v4516 = vor.u32 1.1754944e-38, %v4515
        %v4517 = vsel %vm4514, %v4516, %v4512
        %v4518 = vmul.f32 1.0, %v4517
        %v4519 = vrcp.pop %v2217
        %v4520 = vmul.f32 %v2217, %v4519
        %v4521 = vsub.f32 1.0, %v4520
        %v4522 = vmul.f32 %v4519, %v4521
        %v4523 = vadd.f32 %v4519, %v4522
        %vm4524 = vweird.f32 %v2217
        %vm4525 = vweird.f32 %v4519
        %vm4526 = vmor %vm4524, %vm4525
        %v4527 = vsel %vm4526, %v4519, %v4523
        %v4528 = vand.u32 2147483647, %v2217
        %vm4529 = vcmp.eq.f32.partialorder %v4528, 8.507059e+37
        %v4530 = vand.u32 %v2217, 2147483648
        %v4531 = vor.u32 1.1754944e-38, %v4530
        %v4532 = vsel %vm4529, %v4531, %v4527
        %v4533 = vmul.f32 1.0, %v4532
        %v4534 = vrcp.pop %v2218
        %v4535 = vmul.f32 %v2218, %v4534
        %v4536 = vsub.f32 1.0, %v4535
        %v4537 = vmul.f32 %v4534, %v4536
        %v4538 = vadd.f32 %v4534, %v4537
        %vm4539 = vweird.f32 %v2218
        %vm4540 = vweird.f32 %v4534
        %vm4541 = vmor %vm4539, %vm4540
        %v4542 = vsel %vm4541, %v4534, %v4538
        %v4543 = vand.u32 2147483647, %v2218
        %vm4544 = vcmp.eq.f32.partialorder %v4543, 8.507059e+37
        %v4545 = vand.u32 %v2218, 2147483648
        %v4546 = vor.u32 1.1754944e-38, %v4545
        %v4547 = vsel %vm4544, %v4546, %v4542
        %v4548 = vmul.f32 1.0, %v4547
        %v4549 = vrcp.pop %v2219
        %v4550 = vmul.f32 %v2219, %v4549
        %v4551 = vsub.f32 1.0, %v4550
        %v4552 = vmul.f32 %v4549, %v4551
        %v4553 = vadd.f32 %v4549, %v4552
        %vm4554 = vweird.f32 %v2219
        %vm4555 = vweird.f32 %v4549
        %vm4556 = vmor %vm4554, %vm4555
        %v4557 = vsel %vm4556, %v4549, %v4553
        %v4558 = vand.u32 2147483647, %v2219
        %vm4559 = vcmp.eq.f32.partialorder %v4558, 8.507059e+37
        %v4560 = vand.u32 %v2219, 2147483648
        %v4561 = vor.u32 1.1754944e-38, %v4560
        %v4562 = vsel %vm4559, %v4561, %v4557
        %v4563 = vmul.f32 1.0, %v4562
        %v4564 = vrcp.pop %v2220
        %v4565 = vmul.f32 %v2220, %v4564
        %v4566 = vsub.f32 1.0, %v4565
        %v4567 = vmul.f32 %v4564, %v4566
        %v4568 = vadd.f32 %v4564, %v4567
        %vm4569 = vweird.f32 %v2220
        %vm4570 = vweird.f32 %v4564
        %vm4571 = vmor %vm4569, %vm4570
        %v4572 = vsel %vm4571, %v4564, %v4568
        %v4573 = vand.u32 2147483647, %v2220
        %vm4574 = vcmp.eq.f32.partialorder %v4573, 8.507059e+37
        %v4575 = vand.u32 %v2220, 2147483648
        %v4576 = vor.u32 1.1754944e-38, %v4575
        %v4577 = vsel %vm4574, %v4576, %v4572
        %v4578 = vmul.f32 1.0, %v4577
        %v4579 = vrcp.pop %v2221
        %v4580 = vmul.f32 %v2221, %v4579
        %v4581 = vsub.f32 1.0, %v4580
        %v4582 = vmul.f32 %v4579, %v4581
        %v4583 = vadd.f32 %v4579, %v4582
        %vm4584 = vweird.f32 %v2221
        %vm4585 = vweird.f32 %v4579
        %vm4586 = vmor %vm4584, %vm4585
        %v4587 = vsel %vm4586, %v4579, %v4583
        %v4588 = vand.u32 2147483647, %v2221
        %vm4589 = vcmp.eq.f32.partialorder %v4588, 8.507059e+37
        %v4590 = vand.u32 %v2221, 2147483648
        %v4591 = vor.u32 1.1754944e-38, %v4590
        %v4592 = vsel %vm4589, %v4591, %v4587
        %v4593 = vmul.f32 1.0, %v4592
        %v4594 = vrcp.pop %v2222
        %v4595 = vmul.f32 %v2222, %v4594
        %v4596 = vsub.f32 1.0, %v4595
        %v4597 = vmul.f32 %v4594, %v4596
        %v4598 = vadd.f32 %v4594, %v4597
        %vm4599 = vweird.f32 %v2222
        %vm4600 = vweird.f32 %v4594
        %vm4601 = vmor %vm4599, %vm4600
        %v4602 = vsel %vm4601, %v4594, %v4598
        %v4603 = vand.u32 2147483647, %v2222
        %vm4604 = vcmp.eq.f32.partialorder %v4603, 8.507059e+37
        %v4605 = vand.u32 %v2222, 2147483648
        %v4606 = vor.u32 1.1754944e-38, %v4605
        %v4607 = vsel %vm4604, %v4606, %v4602
        %v4608 = vmul.f32 1.0, %v4607
        %v4609 = vrcp.pop %v2223
        %v4610 = vmul.f32 %v2223, %v4609
        %v4611 = vsub.f32 1.0, %v4610
        %v4612 = vmul.f32 %v4609, %v4611
        %v4613 = vadd.f32 %v4609, %v4612
        %vm4614 = vweird.f32 %v2223
        %vm4615 = vweird.f32 %v4609
        %vm4616 = vmor %vm4614, %vm4615
        %v4617 = vsel %vm4616, %v4609, %v4613
        %v4618 = vand.u32 2147483647, %v2223
        %vm4619 = vcmp.eq.f32.partialorder %v4618, 8.507059e+37
        %v4620 = vand.u32 %v2223, 2147483648
        %v4621 = vor.u32 1.1754944e-38, %v4620
        %v4622 = vsel %vm4619, %v4621, %v4617
        %v4623 = vmul.f32 1.0, %v4622
        %v4624 = vmul.f32 %v1424, %v2238
        %v4625 = vmul.f32 %v1425, %v2253
        %v4626 = vmul.f32 %v1426, %v2268
        %v4627 = vmul.f32 %v1427, %v2283
        %v4628 = vmul.f32 %v1428, %v2298
        %v4629 = vmul.f32 %v1429, %v2313
        %v4630 = vmul.f32 %v1430, %v2328
        %v4631 = vmul.f32 %v1431, %v2343
        %v4632 = vmul.f32 %v1432, %v2358
        %v4633 = vmul.f32 %v1433, %v2373
        %v4634 = vmul.f32 %v1434, %v2388
        %v4635 = vmul.f32 %v1435, %v2403
        %v4636 = vmul.f32 %v1436, %v2418
        %v4637 = vmul.f32 %v1437, %v2433
        %v4638 = vmul.f32 %v1438, %v2448
        %v4639 = vmul.f32 %v1439, %v2463
        %v4640 = vmul.f32 %v1440, %v2478
        %v4641 = vmul.f32 %v1441, %v2493
        %v4642 = vmul.f32 %v1442, %v2508
        %v4643 = vmul.f32 %v1443, %v2523
        %v4644 = vmul.f32 %v1444, %v2538
        %v4645 = vmul.f32 %v1445, %v2553
        %v4646 = vmul.f32 %v1446, %v2568
        %v4647 = vmul.f32 %v1447, %v2583
        %v4648 = vmul.f32 %v1448, %v2598
        %v4649 = vmul.f32 %v1449, %v2613
        %v4650 = vmul.f32 %v1450, %v2628
        %v4651 = vmul.f32 %v1451, %v2643
        %v4652 = vmul.f32 %v1452, %v2658
        %v4653 = vmul.f32 %v1453, %v2673
        %v4654 = vmul.f32 %v1454, %v2688
        %v4655 = vmul.f32 %v1455, %v2703
        %v4656 = vmul.f32 %v1456, %v2718
        %v4657 = vmul.f32 %v1457, %v2733
        %v4658 = vmul.f32 %v1458, %v2748
        %v4659 = vmul.f32 %v1459, %v2763
        %v4660 = vmul.f32 %v1460, %v2778
        %v4661 = vmul.f32 %v1461, %v2793
        %v4662 = vmul.f32 %v1462, %v2808
        %v4663 = vmul.f32 %v1463, %v2823
        %v4664 = vmul.f32 %v1464, %v2838
        %v4665 = vmul.f32 %v1465, %v2853
        %v4666 = vmul.f32 %v1466, %v2868
        %v4667 = vmul.f32 %v1467, %v2883
        %v4668 = vmul.f32 %v1468, %v2898
        %v4669 = vmul.f32 %v1469, %v2913
        %v4670 = vmul.f32 %v1470, %v2928
        %v4671 = vmul.f32 %v1471, %v2943
        %v4672 = vmul.f32 %v1472, %v2958
        %v4673 = vmul.f32 %v1473, %v2973
        %v4674 = vmul.f32 %v1474, %v2988
        %v4675 = vmul.f32 %v1475, %v3003
        %v4676 = vmul.f32 %v1476, %v3018
        %v4677 = vmul.f32 %v1477, %v3033
        %v4678 = vmul.f32 %v1478, %v3048
        %v4679 = vmul.f32 %v1479, %v3063
        %v4680 = vmul.f32 %v1480, %v3078
        %v4681 = vmul.f32 %v1481, %v3093
        %v4682 = vmul.f32 %v1482, %v3108
        %v4683 = vmul.f32 %v1483, %v3123
        %v4684 = vmul.f32 %v1484, %v3138
        %v4685 = vmul.f32 %v1485, %v3153
        %v4686 = vmul.f32 %v1486, %v3168
        %v4687 = vmul.f32 %v1487, %v3183
        %v4688 = vmul.f32 %v1488, %v3198
        %v4689 = vmul.f32 %v1489, %v3213
        %v4690 = vmul.f32 %v1490, %v3228
        %v4691 = vmul.f32 %v1491, %v3243
        %v4692 = vmul.f32 %v1492, %v3258
        %v4693 = vmul.f32 %v1493, %v3273
        %v4694 = vmul.f32 %v1494, %v3288
        %v4695 = vmul.f32 %v1495, %v3303
        %v4696 = vmul.f32 %v1496, %v3318
        %v4697 = vmul.f32 %v1497, %v3333
        %v4698 = vmul.f32 %v1498, %v3348
        %v4699 = vmul.f32 %v1499, %v3363
        %v4700 = vmul.f32 %v1500, %v3378
        %v4701 = vmul.f32 %v1501, %v3393
        %v4702 = vmul.f32 %v1502, %v3408
        %v4703 = vmul.f32 %v1503, %v3423
        %v4704 = vmul.f32 %v1504, %v3438
        %v4705 = vmul.f32 %v1505, %v3453
        %v4706 = vmul.f32 %v1506, %v3468
        %v4707 = vmul.f32 %v1507, %v3483
        %v4708 = vmul.f32 %v1508, %v3498
        %v4709 = vmul.f32 %v1509, %v3513
        %v4710 = vmul.f32 %v1510, %v3528
        %v4711 = vmul.f32 %v1511, %v3543
        %v4712 = vmul.f32 %v1512, %v3558
        %v4713 = vmul.f32 %v1513, %v3573
        %v4714 = vmul.f32 %v1514, %v3588
        %v4715 = vmul.f32 %v1515, %v3603
        %v4716 = vmul.f32 %v1516, %v3618
        %v4717 = vmul.f32 %v1517, %v3633
        %v4718 = vmul.f32 %v1518, %v3648
        %v4719 = vmul.f32 %v1519, %v3663
        %v4720 = vmul.f32 %v1520, %v3678
        %v4721 = vmul.f32 %v1521, %v3693
        %v4722 = vmul.f32 %v1522, %v3708
        %v4723 = vmul.f32 %v1523, %v3723
        %v4724 = vmul.f32 %v1524, %v3738
        %v4725 = vmul.f32 %v1525, %v3753
        %v4726 = vmul.f32 %v1526, %v3768
        %v4727 = vmul.f32 %v1527, %v3783
        %v4728 = vmul.f32 %v1528, %v3798
        %v4729 = vmul.f32 %v1529, %v3813
        %v4730 = vmul.f32 %v1530, %v3828
        %v4731 = vmul.f32 %v1531, %v3843
        %v4732 = vmul.f32 %v1532, %v3858
        %v4733 = vmul.f32 %v1533, %v3873
        %v4734 = vmul.f32 %v1534, %v3888
        %v4735 = vmul.f32 %v1535, %v3903
        %v4736 = vmul.f32 %v1536, %v3918
        %v4737 = vmul.f32 %v1537, %v3933
        %v4738 = vmul.f32 %v1538, %v3948
        %v4739 = vmul.f32 %v1539, %v3963
        %v4740 = vmul.f32 %v1540, %v3978
        %v4741 = vmul.f32 %v1541, %v3993
        %v4742 = vmul.f32 %v1542, %v4008
        %v4743 = vmul.f32 %v1543, %v4023
        %v4744 = vmul.f32 %v1544, %v4038
        %v4745 = vmul.f32 %v1545, %v4053
        %v4746 = vmul.f32 %v1546, %v4068
        %v4747 = vmul.f32 %v1547, %v4083
        %v4748 = vmul.f32 %v1548, %v4098
        %v4749 = vmul.f32 %v1549, %v4113
        %v4750 = vmul.f32 %v1550, %v4128
        %v4751 = vmul.f32 %v1551, %v4143
        %v4752 = vmul.f32 %v1552, %v4158
        %v4753 = vmul.f32 %v1553, %v4173
        %v4754 = vmul.f32 %v1554, %v4188
        %v4755 = vmul.f32 %v1555, %v4203
        %v4756 = vmul.f32 %v1556, %v4218
        %v4757 = vmul.f32 %v1557, %v4233
        %v4758 = vmul.f32 %v1558, %v4248
        %v4759 = vmul.f32 %v1559, %v4263
        %v4760 = vmul.f32 %v1560, %v4278
        %v4761 = vmul.f32 %v1561, %v4293
        %v4762 = vmul.f32 %v1562, %v4308
        %v4763 = vmul.f32 %v1563, %v4323
        %v4764 = vmul.f32 %v1564, %v4338
        %v4765 = vmul.f32 %v1565, %v4353
        %v4766 = vmul.f32 %v1566, %v4368
        %v4767 = vmul.f32 %v1567, %v4383
        %v4768 = vmul.f32 %v1568, %v4398
        %v4769 = vmul.f32 %v1569, %v4413
        %v4770 = vmul.f32 %v1570, %v4428
        %v4771 = vmul.f32 %v1571, %v4443
        %v4772 = vmul.f32 %v1572, %v4458
        %v4773 = vmul.f32 %v1573, %v4473
        %v4774 = vmul.f32 %v1574, %v4488
        %v4775 = vmul.f32 %v1575, %v4503
        %v4776 = vmul.f32 %v1576, %v4518
        %v4777 = vmul.f32 %v1577, %v4533
        %v4778 = vmul.f32 %v1578, %v4548
        %v4779 = vmul.f32 %v1579, %v4563
        %v4780 = vmul.f32 %v1580, %v4578
        %v4781 = vmul.f32 %v1581, %v4593
        %v4782 = vmul.f32 %v1582, %v4608
        %v4783 = vmul.f32 %v1583, %v4623
        %v4784 = vld [vmem:[#allocation2] sm:$0xff]
        %v4785 = vld [vmem:[#allocation2 + $0x8] sm:$0x3]
        %v4786 = vadd.f32 %v4624, %v4634
        %v4787 = vadd.f32 %v4786, %v4644
        %v4788 = vadd.f32 %v4787, %v4654
        %v4789 = vadd.f32 %v4788, %v4664
        %v4790 = vadd.f32 %v4789, %v4674
        %v4791 = vadd.f32 %v4790, %v4684
        %v4792 = vadd.f32 %v4791, %v4694
        %v4793 = vadd.f32 %v4792, %v4704
        %v4794 = vadd.f32 %v4793, %v4714
        %v4795 = vadd.f32 %v4794, %v4724
        %v4796 = vadd.f32 %v4795, %v4734
        %v4797 = vadd.f32 %v4796, %v4744
        %v4798 = vadd.f32 %v4797, %v4754
        %v4799 = vadd.f32 %v4798, %v4764
        %v4800 = vadd.f32 %v4799, %v4774
        %v4801 = vrot.slane %v4800, 4
        %v4802 = vadd.f32 %v4800, %v4801
        %v4803 = vrot.slane %v4802, 2
        %v4804 = vadd.f32 %v4802, %v4803
        %v4805 = vrot.slane %v4804, 1
        %v4806 = vadd.f32 %v4804, %v4805
        %v4807 = vadd.f32 %v4625, %v4635
        %v4808 = vadd.f32 %v4807, %v4645
        %v4809 = vadd.f32 %v4808, %v4655
        %v4810 = vadd.f32 %v4809, %v4665
        %v4811 = vadd.f32 %v4810, %v4675
        %v4812 = vadd.f32 %v4811, %v4685
        %v4813 = vadd.f32 %v4812, %v4695
        %v4814 = vadd.f32 %v4813, %v4705
        %v4815 = vadd.f32 %v4814, %v4715
        %v4816 = vadd.f32 %v4815, %v4725
        %v4817 = vadd.f32 %v4816, %v4735
        %v4818 = vadd.f32 %v4817, %v4745
        %v4819 = vadd.f32 %v4818, %v4755
        %v4820 = vadd.f32 %v4819, %v4765
        %v4821 = vadd.f32 %v4820, %v4775
        %v4822 = vrot.slane %v4821, 4
        %v4823 = vadd.f32 %v4821, %v4822
        %v4824 = vrot.slane %v4823, 2
        %v4825 = vadd.f32 %v4823, %v4824
        %v4826 = vrot.slane %v4825, 1
        %v4827 = vadd.f32 %v4825, %v4826
        %v4828 = vadd.f32 %v4626, %v4636
        %v4829 = vadd.f32 %v4828, %v4646
        %v4830 = vadd.f32 %v4829, %v4656
        %v4831 = vadd.f32 %v4830, %v4666
        %v4832 = vadd.f32 %v4831, %v4676
        %v4833 = vadd.f32 %v4832, %v4686
        %v4834 = vadd.f32 %v4833, %v4696
        %v4835 = vadd.f32 %v4834, %v4706
        %v4836 = vadd.f32 %v4835, %v4716
        %v4837 = vadd.f32 %v4836, %v4726
        %v4838 = vadd.f32 %v4837, %v4736
        %v4839 = vadd.f32 %v4838, %v4746
        %v4840 = vadd.f32 %v4839, %v4756
        %v4841 = vadd.f32 %v4840, %v4766
        %v4842 = vadd.f32 %v4841, %v4776
        %v4843 = vrot.slane %v4842, 4
        %v4844 = vadd.f32 %v4842, %v4843
        %v4845 = vrot.slane %v4844, 2
        %v4846 = vadd.f32 %v4844, %v4845
        %v4847 = vrot.slane %v4846, 1
        %v4848 = vadd.f32 %v4846, %v4847
        %v4849 = vadd.f32 %v4627, %v4637
        %v4850 = vadd.f32 %v4849, %v4647
        %v4851 = vadd.f32 %v4850, %v4657
        %v4852 = vadd.f32 %v4851, %v4667
        %v4853 = vadd.f32 %v4852, %v4677
        %v4854 = vadd.f32 %v4853, %v4687
        %v4855 = vadd.f32 %v4854, %v4697
        %v4856 = vadd.f32 %v4855, %v4707
        %v4857 = vadd.f32 %v4856, %v4717
        %v4858 = vadd.f32 %v4857, %v4727
        %v4859 = vadd.f32 %v4858, %v4737
        %v4860 = vadd.f32 %v4859, %v4747
        %v4861 = vadd.f32 %v4860, %v4757
        %v4862 = vadd.f32 %v4861, %v4767
        %v4863 = vadd.f32 %v4862, %v4777
        %v4864 = vrot.slane %v4863, 4
        %v4865 = vadd.f32 %v4863, %v4864
        %v4866 = vrot.slane %v4865, 2
        %v4867 = vadd.f32 %v4865, %v4866
        %v4868 = vrot.slane %v4867, 1
        %v4869 = vadd.f32 %v4867, %v4868
        %v4870 = vadd.f32 %v4628, %v4638
        %v4871 = vadd.f32 %v4870, %v4648
        %v4872 = vadd.f32 %v4871, %v4658
        %v4873 = vadd.f32 %v4872, %v4668
        %v4874 = vadd.f32 %v4873, %v4678
        %v4875 = vadd.f32 %v4874, %v4688
        %v4876 = vadd.f32 %v4875, %v4698
        %v4877 = vadd.f32 %v4876, %v4708
        %v4878 = vadd.f32 %v4877, %v4718
        %v4879 = vadd.f32 %v4878, %v4728
        %v4880 = vadd.f32 %v4879, %v4738
        %v4881 = vadd.f32 %v4880, %v4748
        %v4882 = vadd.f32 %v4881, %v4758
        %v4883 = vadd.f32 %v4882, %v4768
        %v4884 = vadd.f32 %v4883, %v4778
        %v4885 = vrot.slane %v4884, 4
        %v4886 = vadd.f32 %v4884, %v4885
        %v4887 = vrot.slane %v4886, 2
        %v4888 = vadd.f32 %v4886, %v4887
        %v4889 = vrot.slane %v4888, 1
        %v4890 = vadd.f32 %v4888, %v4889
        %v4891 = vadd.f32 %v4629, %v4639
        %v4892 = vadd.f32 %v4891, %v4649
        %v4893 = vadd.f32 %v4892, %v4659
        %v4894 = vadd.f32 %v4893, %v4669
        %v4895 = vadd.f32 %v4894, %v4679
        %v4896 = vadd.f32 %v4895, %v4689
        %v4897 = vadd.f32 %v4896, %v4699
        %v4898 = vadd.f32 %v4897, %v4709
        %v4899 = vadd.f32 %v4898, %v4719
        %v4900 = vadd.f32 %v4899, %v4729
        %v4901 = vadd.f32 %v4900, %v4739
        %v4902 = vadd.f32 %v4901, %v4749
        %v4903 = vadd.f32 %v4902, %v4759
        %v4904 = vadd.f32 %v4903, %v4769
        %v4905 = vadd.f32 %v4904, %v4779
        %v4906 = vrot.slane %v4905, 4
        %v4907 = vadd.f32 %v4905, %v4906
        %v4908 = vrot.slane %v4907, 2
        %v4909 = vadd.f32 %v4907, %v4908
        %v4910 = vrot.slane %v4909, 1
        %v4911 = vadd.f32 %v4909, %v4910
        %v4912 = vadd.f32 %v4630, %v4640
        %v4913 = vadd.f32 %v4912, %v4650
        %v4914 = vadd.f32 %v4913, %v4660
        %v4915 = vadd.f32 %v4914, %v4670
        %v4916 = vadd.f32 %v4915, %v4680
        %v4917 = vadd.f32 %v4916, %v4690
        %v4918 = vadd.f32 %v4917, %v4700
        %v4919 = vadd.f32 %v4918, %v4710
        %v4920 = vadd.f32 %v4919, %v4720
        %v4921 = vadd.f32 %v4920, %v4730
        %v4922 = vadd.f32 %v4921, %v4740
        %v4923 = vadd.f32 %v4922, %v4750
        %v4924 = vadd.f32 %v4923, %v4760
        %v4925 = vadd.f32 %v4924, %v4770
        %v4926 = vadd.f32 %v4925, %v4780
        %v4927 = vrot.slane %v4926, 4
        %v4928 = vadd.f32 %v4926, %v4927
        %v4929 = vrot.slane %v4928, 2
        %v4930 = vadd.f32 %v4928, %v4929
        %v4931 = vrot.slane %v4930, 1
        %v4932 = vadd.f32 %v4930, %v4931
        %v4933 = vadd.f32 %v4631, %v4641
        %v4934 = vadd.f32 %v4933, %v4651
        %v4935 = vadd.f32 %v4934, %v4661
        %v4936 = vadd.f32 %v4935, %v4671
        %v4937 = vadd.f32 %v4936, %v4681
        %v4938 = vadd.f32 %v4937, %v4691
        %v4939 = vadd.f32 %v4938, %v4701
        %v4940 = vadd.f32 %v4939, %v4711
        %v4941 = vadd.f32 %v4940, %v4721
        %v4942 = vadd.f32 %v4941, %v4731
        %v4943 = vadd.f32 %v4942, %v4741
        %v4944 = vadd.f32 %v4943, %v4751
        %v4945 = vadd.f32 %v4944, %v4761
        %v4946 = vadd.f32 %v4945, %v4771
        %v4947 = vadd.f32 %v4946, %v4781
        %v4948 = vrot.slane %v4947, 4
        %v4949 = vadd.f32 %v4947, %v4948
        %v4950 = vrot.slane %v4949, 2
        %v4951 = vadd.f32 %v4949, %v4950
        %v4952 = vrot.slane %v4951, 1
        %v4953 = vadd.f32 %v4951, %v4952
        %v4954 = vadd.f32 %v4632, %v4642
        %v4955 = vadd.f32 %v4954, %v4652
        %v4956 = vadd.f32 %v4955, %v4662
        %v4957 = vadd.f32 %v4956, %v4672
        %v4958 = vadd.f32 %v4957, %v4682
        %v4959 = vadd.f32 %v4958, %v4692
        %v4960 = vadd.f32 %v4959, %v4702
        %v4961 = vadd.f32 %v4960, %v4712
        %v4962 = vadd.f32 %v4961, %v4722
        %v4963 = vadd.f32 %v4962, %v4732
        %v4964 = vadd.f32 %v4963, %v4742
        %v4965 = vadd.f32 %v4964, %v4752
        %v4966 = vadd.f32 %v4965, %v4762
        %v4967 = vadd.f32 %v4966, %v4772
        %v4968 = vadd.f32 %v4967, %v4782
        %v4969 = vrot.slane %v4968, 4
        %v4970 = vadd.f32 %v4968, %v4969
        %v4971 = vrot.slane %v4970, 2
        %v4972 = vadd.f32 %v4970, %v4971
        %v4973 = vrot.slane %v4972, 1
        %v4974 = vadd.f32 %v4972, %v4973
        %v4975 = vadd.f32 %v4633, %v4643
        %v4976 = vadd.f32 %v4975, %v4653
        %v4977 = vadd.f32 %v4976, %v4663
        %v4978 = vadd.f32 %v4977, %v4673
        %v4979 = vadd.f32 %v4978, %v4683
        %v4980 = vadd.f32 %v4979, %v4693
        %v4981 = vadd.f32 %v4980, %v4703
        %v4982 = vadd.f32 %v4981, %v4713
        %v4983 = vadd.f32 %v4982, %v4723
        %v4984 = vadd.f32 %v4983, %v4733
        %v4985 = vadd.f32 %v4984, %v4743
        %v4986 = vadd.f32 %v4985, %v4753
        %v4987 = vadd.f32 %v4986, %v4763
        %v4988 = vadd.f32 %v4987, %v4773
        %v4989 = vadd.f32 %v4988, %v4783
        %v4990 = vrot.slane %v4989, 4
        %v4991 = vadd.f32 %v4989, %v4990
        %v4992 = vrot.slane %v4991, 2
        %v4993 = vadd.f32 %v4991, %v4992
        %v4994 = vrot.slane %v4993, 1
        %v4995 = vadd.f32 %v4993, %v4994
        %v5006 = vrot.slane %v4827, 7
        %v5007 = vrot.slane %v4848, 6
        %v5008 = vrot.slane %v4869, 5
        %v5009 = vrot.slane %v4890, 4
        %v5010 = vrot.slane %v4911, 3
        %v5011 = vrot.slane %v4932, 2
        %v5012 = vrot.slane %v4953, 1
        %v5013 = vrot.slane %v4995, 7
        %vm5014 = vcmask 1040384
        %v5015 = vsel %vm5014, %v4806, %v5006
        %vm5016 = vcmask 1042434
        %v5017 = vsel %vm5016, %v5007, %v5008
        %vm5018 = vcmask 1041408
        %v5019 = vsel %vm5018, %v5015, %v5017
        %vm5020 = vcmask 1044484
        %v5021 = vsel %vm5020, %v5009, %v5010
        %vm5022 = vcmask 1046534
        %v5023 = vsel %vm5022, %v5011, %v5012
        %vm5024 = vcmask 1045508
        %v5025 = vsel %vm5024, %v5021, %v5023
        %vm5026 = vcmask 1043456
        %v5027 = vsel %vm5026, %v5019, %v5025
        %v5028 = vsel %vm5014, %v4974, %v5013
        %v5031 = vadd.f32 %v4784, %v5027
        %v5032 = vadd.f32 %v4785, %v5028
        %5033 = vst [vmem:[#allocation2] sm:$0xff] %v5031
        %v5034 = vlaneseq
        %vm5035 = vcmp.ge.s32.totalorder %v5034, 0
        %vm5036 = vcmp.lt.s32.totalorder %v5034, 256
        %vm5037 = vmand %vm5035, %vm5036
        %5038 = vst.msk [vmem:[#allocation2 + $0x8] sm:$0x3] %vm5037, %v5032
        %v5039 = vld [vmem:[%s6] sm:$0xff]
        %v5040 = vld [vmem:[%s6 + $0x8] sm:$0xff]
        %v5041 = vld [vmem:[%s6 + $0x10] sm:$0xff]
        %v5042 = vld [vmem:[%s6 + $0x18] sm:$0xff]
        %v5043 = vld [vmem:[%s6 + $0x20] sm:$0xff]
        %v5044 = vld [vmem:[%s6 + $0x28] sm:$0xff]
        %v5045 = vld [vmem:[%s6 + $0x30] sm:$0xff]
        %v5046 = vld [vmem:[%s6 + $0x38] sm:$0xff]
        %v5047 = vld [vmem:[%s6 + $0x40] sm:$0xff]
        %v5048 = vld [vmem:[%s6 + $0x48] sm:$0xff]
        %v5049 = vld [vmem:[%s6 + $0x50] sm:$0xff]
        %v5050 = vld [vmem:[%s6 + $0x58] sm:$0xff]
        %v5051 = vld [vmem:[%s6 + $0x60] sm:$0xff]
        %v5052 = vld [vmem:[%s6 + $0x68] sm:$0xff]
        %v5053 = vld [vmem:[%s6 + $0x70] sm:$0xff]
        %v5054 = vld [vmem:[%s6 + $0x78] sm:$0xff]
        %v5055 = vld [vmem:[%s6 + $0x80] sm:$0xff]
        %v5056 = vld [vmem:[%s6 + $0x88] sm:$0xff]
        %v5057 = vld [vmem:[%s6 + $0x90] sm:$0xff]
        %v5058 = vld [vmem:[%s6 + $0x98] sm:$0xff]
        %v5059 = vld [vmem:[%s6 + $0xa0] sm:$0xff]
        %v5060 = vld [vmem:[%s6 + $0xa8] sm:$0xff]
        %v5061 = vld [vmem:[%s6 + $0xb0] sm:$0xff]
        %v5062 = vld [vmem:[%s6 + $0xb8] sm:$0xff]
        %v5063 = vld [vmem:[%s6 + $0xc0] sm:$0xff]
        %v5064 = vld [vmem:[%s6 + $0xc8] sm:$0xff]
        %v5065 = vld [vmem:[%s6 + $0xd0] sm:$0xff]
        %v5066 = vld [vmem:[%s6 + $0xd8] sm:$0xff]
        %v5067 = vld [vmem:[%s6 + $0xe0] sm:$0xff]
        %v5068 = vld [vmem:[%s6 + $0xe8] sm:$0xff]
        %v5069 = vld [vmem:[%s6 + $0xf0] sm:$0xff]
        %v5070 = vld [vmem:[%s6 + $0xf8] sm:$0xff]
        %v5071 = vld [vmem:[%s6 + $0x100] sm:$0xff]
        %v5072 = vld [vmem:[%s6 + $0x108] sm:$0xff]
        %v5073 = vld [vmem:[%s6 + $0x110] sm:$0xff]
        %v5074 = vld [vmem:[%s6 + $0x118] sm:$0xff]
        %v5075 = vld [vmem:[%s6 + $0x120] sm:$0xff]
        %v5076 = vld [vmem:[%s6 + $0x128] sm:$0xff]
        %v5077 = vld [vmem:[%s6 + $0x130] sm:$0xff]
        %v5078 = vld [vmem:[%s6 + $0x138] sm:$0xff]
        %5079 = vmatpush.msra.mxu0 0.0
        %5080 = vmatpush.msra.mxu0 0.0
        %5081 = vmatpush.msra.mxu0 0.0
        %5082 = vmatpush.msra.mxu0 0.0
        %5083 = vmatpush.msra.mxu0 0.0
        %5084 = vmatpush.msra.mxu0 0.0
        %5085 = vmatpush.msra.mxu0 0.0
        %5086 = vmatpush.msra.mxu0 0.0
        %5087 = vmatpush.msra.mxu0 0.0
        %5088 = vmatpush.msra.mxu0 0.0
        %5089 = vmatpush.msra.mxu0 0.0
        %5090 = vmatpush.msra.mxu0 0.0
        %5091 = vmatpush.msra.mxu0 %v5069
        %5092 = vmatpush.msra.mxu0 %v5059
        %5093 = vmatpush.msra.mxu0 %v5049
        %5094 = vmatpush.msra.mxu0 %v5039
        %5095 = vmatmul.f32.gmra.mxu0 %v519
        %v5096 = vpop.f32.mrf.mxu0
        %v5097 = vadd.f32 0.0, %v5096
        %5098 = vmatmul.f32.gmra.mxu0 %v522
        %v5099 = vpop.f32.mrf.mxu0
        %v5100 = vadd.f32 0.0, %v5099
        %5101 = vmatmul.f32.gmra.mxu0 %v525
        %v5102 = vpop.f32.mrf.mxu0
        %v5103 = vadd.f32 0.0, %v5102
        %5104 = vmatmul.f32.gmra.mxu0 %v528
        %v5105 = vpop.f32.mrf.mxu0
        %v5106 = vadd.f32 0.0, %v5105
        %5107 = vmatmul.f32.gmra.mxu0 %v531
        %v5108 = vpop.f32.mrf.mxu0
        %v5109 = vadd.f32 0.0, %v5108
        %5110 = vmatmul.f32.gmra.mxu0 %v534
        %v5111 = vpop.f32.mrf.mxu0
        %v5112 = vadd.f32 0.0, %v5111
        %5113 = vmatmul.f32.gmra.mxu0 %v537
        %v5114 = vpop.f32.mrf.mxu0
        %v5115 = vadd.f32 0.0, %v5114
        %5116 = vmatmul.f32.gmra.mxu0 %v540
        %v5117 = vpop.f32.mrf.mxu0
        %v5118 = vadd.f32 0.0, %v5117
        %5119 = vmatmul.f32.gmra.mxu0 %v543
        %v5120 = vpop.f32.mrf.mxu0
        %v5121 = vadd.f32 0.0, %v5120
        %5122 = vmatmul.f32.gmra.mxu0 %v546
        %v5123 = vpop.f32.mrf.mxu0
        %v5124 = vadd.f32 0.0, %v5123
        %5125 = vmatmul.f32.gmra.mxu0 %v549
        %v5126 = vpop.f32.mrf.mxu0
        %v5127 = vadd.f32 0.0, %v5126
        %5128 = vmatmul.f32.gmra.mxu0 %v552
        %v5129 = vpop.f32.mrf.mxu0
        %v5130 = vadd.f32 0.0, %v5129
        %5131 = vmatmul.f32.gmra.mxu0 %v555
        %v5132 = vpop.f32.mrf.mxu0
        %v5133 = vadd.f32 0.0, %v5132
        %5134 = vmatmul.f32.gmra.mxu0 %v558
        %v5135 = vpop.f32.mrf.mxu0
        %v5136 = vadd.f32 0.0, %v5135
        %5137 = vmatmul.f32.gmra.mxu0 %v561
        %v5138 = vpop.f32.mrf.mxu0
        %v5139 = vadd.f32 0.0, %v5138
        %5140 = vmatmul.f32.gmra.mxu0 %v564
        %v5141 = vpop.f32.mrf.mxu0
        %v5142 = vadd.f32 0.0, %v5141
        %5143 = vdwg.mxu0
        %5144 = vmatpush.msra.mxu0 0.0
        %5145 = vmatpush.msra.mxu0 0.0
        %5146 = vmatpush.msra.mxu0 0.0
        %5147 = vmatpush.msra.mxu0 0.0
        %5148 = vmatpush.msra.mxu0 0.0
        %5149 = vmatpush.msra.mxu0 0.0
        %5150 = vmatpush.msra.mxu0 0.0
        %5151 = vmatpush.msra.mxu0 0.0
        %5152 = vmatpush.msra.mxu0 0.0
        %5153 = vmatpush.msra.mxu0 0.0
        %5154 = vmatpush.msra.mxu0 0.0
        %5155 = vmatpush.msra.mxu0 0.0
        %5156 = vmatpush.msra.mxu0 %v5070
        %5157 = vmatpush.msra.mxu0 %v5060
        %5158 = vmatpush.msra.mxu0 %v5050
        %5159 = vmatpush.msra.mxu0 %v5040
        %5160 = vmatmul.f32.gmra.mxu0 %v519
        %v5161 = vpop.f32.mrf.mxu0
        %v5162 = vadd.f32 0.0, %v5161
        %5163 = vmatmul.f32.gmra.mxu0 %v522
        %v5164 = vpop.f32.mrf.mxu0
        %v5165 = vadd.f32 0.0, %v5164
        %5166 = vmatmul.f32.gmra.mxu0 %v525
        %v5167 = vpop.f32.mrf.mxu0
        %v5168 = vadd.f32 0.0, %v5167
        %5169 = vmatmul.f32.gmra.mxu0 %v528
        %v5170 = vpop.f32.mrf.mxu0
        %v5171 = vadd.f32 0.0, %v5170
        %5172 = vmatmul.f32.gmra.mxu0 %v531
        %v5173 = vpop.f32.mrf.mxu0
        %v5174 = vadd.f32 0.0, %v5173
        %5175 = vmatmul.f32.gmra.mxu0 %v534
        %v5176 = vpop.f32.mrf.mxu0
        %v5177 = vadd.f32 0.0, %v5176
        %5178 = vmatmul.f32.gmra.mxu0 %v537
        %v5179 = vpop.f32.mrf.mxu0
        %v5180 = vadd.f32 0.0, %v5179
        %5181 = vmatmul.f32.gmra.mxu0 %v540
        %v5182 = vpop.f32.mrf.mxu0
        %v5183 = vadd.f32 0.0, %v5182
        %5184 = vmatmul.f32.gmra.mxu0 %v543
        %v5185 = vpop.f32.mrf.mxu0
        %v5186 = vadd.f32 0.0, %v5185
        %5187 = vmatmul.f32.gmra.mxu0 %v546
        %v5188 = vpop.f32.mrf.mxu0
        %v5189 = vadd.f32 0.0, %v5188
        %5190 = vmatmul.f32.gmra.mxu0 %v549
        %v5191 = vpop.f32.mrf.mxu0
        %v5192 = vadd.f32 0.0, %v5191
        %5193 = vmatmul.f32.gmra.mxu0 %v552
        %v5194 = vpop.f32.mrf.mxu0
        %v5195 = vadd.f32 0.0, %v5194
        %5196 = vmatmul.f32.gmra.mxu0 %v555
        %v5197 = vpop.f32.mrf.mxu0
        %v5198 = vadd.f32 0.0, %v5197
        %5199 = vmatmul.f32.gmra.mxu0 %v558
        %v5200 = vpop.f32.mrf.mxu0
        %v5201 = vadd.f32 0.0, %v5200
        %5202 = vmatmul.f32.gmra.mxu0 %v561
        %v5203 = vpop.f32.mrf.mxu0
        %v5204 = vadd.f32 0.0, %v5203
        %5205 = vmatmul.f32.gmra.mxu0 %v564
        %v5206 = vpop.f32.mrf.mxu0
        %v5207 = vadd.f32 0.0, %v5206
        %5208 = vdwg.mxu0
        %5209 = vmatpush.msra.mxu0 0.0
        %5210 = vmatpush.msra.mxu0 0.0
        %5211 = vmatpush.msra.mxu0 0.0
        %5212 = vmatpush.msra.mxu0 0.0
        %5213 = vmatpush.msra.mxu0 0.0
        %5214 = vmatpush.msra.mxu0 0.0
        %5215 = vmatpush.msra.mxu0 0.0
        %5216 = vmatpush.msra.mxu0 0.0
        %5217 = vmatpush.msra.mxu0 0.0
        %5218 = vmatpush.msra.mxu0 0.0
        %5219 = vmatpush.msra.mxu0 0.0
        %5220 = vmatpush.msra.mxu0 0.0
        %5221 = vmatpush.msra.mxu0 %v5071
        %5222 = vmatpush.msra.mxu0 %v5061
        %5223 = vmatpush.msra.mxu0 %v5051
        %5224 = vmatpush.msra.mxu0 %v5041
        %5225 = vmatmul.f32.gmra.mxu0 %v519
        %v5226 = vpop.f32.mrf.mxu0
        %v5227 = vadd.f32 0.0, %v5226
        %5228 = vmatmul.f32.gmra.mxu0 %v522
        %v5229 = vpop.f32.mrf.mxu0
        %v5230 = vadd.f32 0.0, %v5229
        %5231 = vmatmul.f32.gmra.mxu0 %v525
        %v5232 = vpop.f32.mrf.mxu0
        %v5233 = vadd.f32 0.0, %v5232
        %5234 = vmatmul.f32.gmra.mxu0 %v528
        %v5235 = vpop.f32.mrf.mxu0
        %v5236 = vadd.f32 0.0, %v5235
        %5237 = vmatmul.f32.gmra.mxu0 %v531
        %v5238 = vpop.f32.mrf.mxu0
        %v5239 = vadd.f32 0.0, %v5238
        %5240 = vmatmul.f32.gmra.mxu0 %v534
        %v5241 = vpop.f32.mrf.mxu0
        %v5242 = vadd.f32 0.0, %v5241
        %5243 = vmatmul.f32.gmra.mxu0 %v537
        %v5244 = vpop.f32.mrf.mxu0
        %v5245 = vadd.f32 0.0, %v5244
        %5246 = vmatmul.f32.gmra.mxu0 %v540
        %v5247 = vpop.f32.mrf.mxu0
        %v5248 = vadd.f32 0.0, %v5247
        %5249 = vmatmul.f32.gmra.mxu0 %v543
        %v5250 = vpop.f32.mrf.mxu0
        %v5251 = vadd.f32 0.0, %v5250
        %5252 = vmatmul.f32.gmra.mxu0 %v546
        %v5253 = vpop.f32.mrf.mxu0
        %v5254 = vadd.f32 0.0, %v5253
        %5255 = vmatmul.f32.gmra.mxu0 %v549
        %v5256 = vpop.f32.mrf.mxu0
        %v5257 = vadd.f32 0.0, %v5256
        %5258 = vmatmul.f32.gmra.mxu0 %v552
        %v5259 = vpop.f32.mrf.mxu0
        %v5260 = vadd.f32 0.0, %v5259
        %5261 = vmatmul.f32.gmra.mxu0 %v555
        %v5262 = vpop.f32.mrf.mxu0
        %v5263 = vadd.f32 0.0, %v5262
        %5264 = vmatmul.f32.gmra.mxu0 %v558
        %v5265 = vpop.f32.mrf.mxu0
        %v5266 = vadd.f32 0.0, %v5265
        %5267 = vmatmul.f32.gmra.mxu0 %v561
        %v5268 = vpop.f32.mrf.mxu0
        %v5269 = vadd.f32 0.0, %v5268
        %5270 = vmatmul.f32.gmra.mxu0 %v564
        %v5271 = vpop.f32.mrf.mxu0
        %v5272 = vadd.f32 0.0, %v5271
        %5273 = vdwg.mxu0
        %5274 = vmatpush.msra.mxu0 0.0
        %5275 = vmatpush.msra.mxu0 0.0
        %5276 = vmatpush.msra.mxu0 0.0
        %5277 = vmatpush.msra.mxu0 0.0
        %5278 = vmatpush.msra.mxu0 0.0
        %5279 = vmatpush.msra.mxu0 0.0
        %5280 = vmatpush.msra.mxu0 0.0
        %5281 = vmatpush.msra.mxu0 0.0
        %5282 = vmatpush.msra.mxu0 0.0
        %5283 = vmatpush.msra.mxu0 0.0
        %5284 = vmatpush.msra.mxu0 0.0
        %5285 = vmatpush.msra.mxu0 0.0
        %5286 = vmatpush.msra.mxu0 %v5072
        %5287 = vmatpush.msra.mxu0 %v5062
        %5288 = vmatpush.msra.mxu0 %v5052
        %5289 = vmatpush.msra.mxu0 %v5042
        %5290 = vmatmul.f32.gmra.mxu0 %v519
        %v5291 = vpop.f32.mrf.mxu0
        %v5292 = vadd.f32 0.0, %v5291
        %5293 = vmatmul.f32.gmra.mxu0 %v522
        %v5294 = vpop.f32.mrf.mxu0
        %v5295 = vadd.f32 0.0, %v5294
        %5296 = vmatmul.f32.gmra.mxu0 %v525
        %v5297 = vpop.f32.mrf.mxu0
        %v5298 = vadd.f32 0.0, %v5297
        %5299 = vmatmul.f32.gmra.mxu0 %v528
        %v5300 = vpop.f32.mrf.mxu0
        %v5301 = vadd.f32 0.0, %v5300
        %5302 = vmatmul.f32.gmra.mxu0 %v531
        %v5303 = vpop.f32.mrf.mxu0
        %v5304 = vadd.f32 0.0, %v5303
        %5305 = vmatmul.f32.gmra.mxu0 %v534
        %v5306 = vpop.f32.mrf.mxu0
        %v5307 = vadd.f32 0.0, %v5306
        %5308 = vmatmul.f32.gmra.mxu0 %v537
        %v5309 = vpop.f32.mrf.mxu0
        %v5310 = vadd.f32 0.0, %v5309
        %5311 = vmatmul.f32.gmra.mxu0 %v540
        %v5312 = vpop.f32.mrf.mxu0
        %v5313 = vadd.f32 0.0, %v5312
        %5314 = vmatmul.f32.gmra.mxu0 %v543
        %v5315 = vpop.f32.mrf.mxu0
        %v5316 = vadd.f32 0.0, %v5315
        %5317 = vmatmul.f32.gmra.mxu0 %v546
        %v5318 = vpop.f32.mrf.mxu0
        %v5319 = vadd.f32 0.0, %v5318
        %5320 = vmatmul.f32.gmra.mxu0 %v549
        %v5321 = vpop.f32.mrf.mxu0
        %v5322 = vadd.f32 0.0, %v5321
        %5323 = vmatmul.f32.gmra.mxu0 %v552
        %v5324 = vpop.f32.mrf.mxu0
        %v5325 = vadd.f32 0.0, %v5324
        %5326 = vmatmul.f32.gmra.mxu0 %v555
        %v5327 = vpop.f32.mrf.mxu0
        %v5328 = vadd.f32 0.0, %v5327
        %5329 = vmatmul.f32.gmra.mxu0 %v558
        %v5330 = vpop.f32.mrf.mxu0
        %v5331 = vadd.f32 0.0, %v5330
        %5332 = vmatmul.f32.gmra.mxu0 %v561
        %v5333 = vpop.f32.mrf.mxu0
        %v5334 = vadd.f32 0.0, %v5333
        %5335 = vmatmul.f32.gmra.mxu0 %v564
        %v5336 = vpop.f32.mrf.mxu0
        %v5337 = vadd.f32 0.0, %v5336
        %5338 = vdwg.mxu0
        %5339 = vmatpush.msra.mxu0 0.0
        %5340 = vmatpush.msra.mxu0 0.0
        %5341 = vmatpush.msra.mxu0 0.0
        %5342 = vmatpush.msra.mxu0 0.0
        %5343 = vmatpush.msra.mxu0 0.0
        %5344 = vmatpush.msra.mxu0 0.0
        %5345 = vmatpush.msra.mxu0 0.0
        %5346 = vmatpush.msra.mxu0 0.0
        %5347 = vmatpush.msra.mxu0 0.0
        %5348 = vmatpush.msra.mxu0 0.0
        %5349 = vmatpush.msra.mxu0 0.0
        %5350 = vmatpush.msra.mxu0 0.0
        %5351 = vmatpush.msra.mxu0 %v5073
        %5352 = vmatpush.msra.mxu0 %v5063
        %5353 = vmatpush.msra.mxu0 %v5053
        %5354 = vmatpush.msra.mxu0 %v5043
        %5355 = vmatmul.f32.gmra.mxu0 %v519
        %v5356 = vpop.f32.mrf.mxu0
        %v5357 = vadd.f32 0.0, %v5356
        %5358 = vmatmul.f32.gmra.mxu0 %v522
        %v5359 = vpop.f32.mrf.mxu0
        %v5360 = vadd.f32 0.0, %v5359
        %5361 = vmatmul.f32.gmra.mxu0 %v525
        %v5362 = vpop.f32.mrf.mxu0
        %v5363 = vadd.f32 0.0, %v5362
        %5364 = vmatmul.f32.gmra.mxu0 %v528
        %v5365 = vpop.f32.mrf.mxu0
        %v5366 = vadd.f32 0.0, %v5365
        %5367 = vmatmul.f32.gmra.mxu0 %v531
        %v5368 = vpop.f32.mrf.mxu0
        %v5369 = vadd.f32 0.0, %v5368
        %5370 = vmatmul.f32.gmra.mxu0 %v534
        %v5371 = vpop.f32.mrf.mxu0
        %v5372 = vadd.f32 0.0, %v5371
        %5373 = vmatmul.f32.gmra.mxu0 %v537
        %v5374 = vpop.f32.mrf.mxu0
        %v5375 = vadd.f32 0.0, %v5374
        %5376 = vmatmul.f32.gmra.mxu0 %v540
        %v5377 = vpop.f32.mrf.mxu0
        %v5378 = vadd.f32 0.0, %v5377
        %5379 = vmatmul.f32.gmra.mxu0 %v543
        %v5380 = vpop.f32.mrf.mxu0
        %v5381 = vadd.f32 0.0, %v5380
        %5382 = vmatmul.f32.gmra.mxu0 %v546
        %v5383 = vpop.f32.mrf.mxu0
        %v5384 = vadd.f32 0.0, %v5383
        %5385 = vmatmul.f32.gmra.mxu0 %v549
        %v5386 = vpop.f32.mrf.mxu0
        %v5387 = vadd.f32 0.0, %v5386
        %5388 = vmatmul.f32.gmra.mxu0 %v552
        %v5389 = vpop.f32.mrf.mxu0
        %v5390 = vadd.f32 0.0, %v5389
        %5391 = vmatmul.f32.gmra.mxu0 %v555
        %v5392 = vpop.f32.mrf.mxu0
        %v5393 = vadd.f32 0.0, %v5392
        %5394 = vmatmul.f32.gmra.mxu0 %v558
        %v5395 = vpop.f32.mrf.mxu0
        %v5396 = vadd.f32 0.0, %v5395
        %5397 = vmatmul.f32.gmra.mxu0 %v561
        %v5398 = vpop.f32.mrf.mxu0
        %v5399 = vadd.f32 0.0, %v5398
        %5400 = vmatmul.f32.gmra.mxu0 %v564
        %v5401 = vpop.f32.mrf.mxu0
        %v5402 = vadd.f32 0.0, %v5401
        %5403 = vdwg.mxu0
        %5404 = vmatpush.msra.mxu0 0.0
        %5405 = vmatpush.msra.mxu0 0.0
        %5406 = vmatpush.msra.mxu0 0.0
        %5407 = vmatpush.msra.mxu0 0.0
        %5408 = vmatpush.msra.mxu0 0.0
        %5409 = vmatpush.msra.mxu0 0.0
        %5410 = vmatpush.msra.mxu0 0.0
        %5411 = vmatpush.msra.mxu0 0.0
        %5412 = vmatpush.msra.mxu0 0.0
        %5413 = vmatpush.msra.mxu0 0.0
        %5414 = vmatpush.msra.mxu0 0.0
        %5415 = vmatpush.msra.mxu0 0.0
        %5416 = vmatpush.msra.mxu0 %v5074
        %5417 = vmatpush.msra.mxu0 %v5064
        %5418 = vmatpush.msra.mxu0 %v5054
        %5419 = vmatpush.msra.mxu0 %v5044
        %5420 = vmatmul.f32.gmra.mxu0 %v519
        %v5421 = vpop.f32.mrf.mxu0
        %v5422 = vadd.f32 0.0, %v5421
        %5423 = vmatmul.f32.gmra.mxu0 %v522
        %v5424 = vpop.f32.mrf.mxu0
        %v5425 = vadd.f32 0.0, %v5424
        %5426 = vmatmul.f32.gmra.mxu0 %v525
        %v5427 = vpop.f32.mrf.mxu0
        %v5428 = vadd.f32 0.0, %v5427
        %5429 = vmatmul.f32.gmra.mxu0 %v528
        %v5430 = vpop.f32.mrf.mxu0
        %v5431 = vadd.f32 0.0, %v5430
        %5432 = vmatmul.f32.gmra.mxu0 %v531
        %v5433 = vpop.f32.mrf.mxu0
        %v5434 = vadd.f32 0.0, %v5433
        %5435 = vmatmul.f32.gmra.mxu0 %v534
        %v5436 = vpop.f32.mrf.mxu0
        %v5437 = vadd.f32 0.0, %v5436
        %5438 = vmatmul.f32.gmra.mxu0 %v537
        %v5439 = vpop.f32.mrf.mxu0
        %v5440 = vadd.f32 0.0, %v5439
        %5441 = vmatmul.f32.gmra.mxu0 %v540
        %v5442 = vpop.f32.mrf.mxu0
        %v5443 = vadd.f32 0.0, %v5442
        %5444 = vmatmul.f32.gmra.mxu0 %v543
        %v5445 = vpop.f32.mrf.mxu0
        %v5446 = vadd.f32 0.0, %v5445
        %5447 = vmatmul.f32.gmra.mxu0 %v546
        %v5448 = vpop.f32.mrf.mxu0
        %v5449 = vadd.f32 0.0, %v5448
        %5450 = vmatmul.f32.gmra.mxu0 %v549
        %v5451 = vpop.f32.mrf.mxu0
        %v5452 = vadd.f32 0.0, %v5451
        %5453 = vmatmul.f32.gmra.mxu0 %v552
        %v5454 = vpop.f32.mrf.mxu0
        %v5455 = vadd.f32 0.0, %v5454
        %5456 = vmatmul.f32.gmra.mxu0 %v555
        %v5457 = vpop.f32.mrf.mxu0
        %v5458 = vadd.f32 0.0, %v5457
        %5459 = vmatmul.f32.gmra.mxu0 %v558
        %v5460 = vpop.f32.mrf.mxu0
        %v5461 = vadd.f32 0.0, %v5460
        %5462 = vmatmul.f32.gmra.mxu0 %v561
        %v5463 = vpop.f32.mrf.mxu0
        %v5464 = vadd.f32 0.0, %v5463
        %5465 = vmatmul.f32.gmra.mxu0 %v564
        %v5466 = vpop.f32.mrf.mxu0
        %v5467 = vadd.f32 0.0, %v5466
        %5468 = vdwg.mxu0
        %5469 = vmatpush.msra.mxu0 0.0
        %5470 = vmatpush.msra.mxu0 0.0
        %5471 = vmatpush.msra.mxu0 0.0
        %5472 = vmatpush.msra.mxu0 0.0
        %5473 = vmatpush.msra.mxu0 0.0
        %5474 = vmatpush.msra.mxu0 0.0
        %5475 = vmatpush.msra.mxu0 0.0
        %5476 = vmatpush.msra.mxu0 0.0
        %5477 = vmatpush.msra.mxu0 0.0
        %5478 = vmatpush.msra.mxu0 0.0
        %5479 = vmatpush.msra.mxu0 0.0
        %5480 = vmatpush.msra.mxu0 0.0
        %5481 = vmatpush.msra.mxu0 %v5075
        %5482 = vmatpush.msra.mxu0 %v5065
        %5483 = vmatpush.msra.mxu0 %v5055
        %5484 = vmatpush.msra.mxu0 %v5045
        %5485 = vmatmul.f32.gmra.mxu0 %v519
        %v5486 = vpop.f32.mrf.mxu0
        %v5487 = vadd.f32 0.0, %v5486
        %5488 = vmatmul.f32.gmra.mxu0 %v522
        %v5489 = vpop.f32.mrf.mxu0
        %v5490 = vadd.f32 0.0, %v5489
        %5491 = vmatmul.f32.gmra.mxu0 %v525
        %v5492 = vpop.f32.mrf.mxu0
        %v5493 = vadd.f32 0.0, %v5492
        %5494 = vmatmul.f32.gmra.mxu0 %v528
        %v5495 = vpop.f32.mrf.mxu0
        %v5496 = vadd.f32 0.0, %v5495
        %5497 = vmatmul.f32.gmra.mxu0 %v531
        %v5498 = vpop.f32.mrf.mxu0
        %v5499 = vadd.f32 0.0, %v5498
        %5500 = vmatmul.f32.gmra.mxu0 %v534
        %v5501 = vpop.f32.mrf.mxu0
        %v5502 = vadd.f32 0.0, %v5501
        %5503 = vmatmul.f32.gmra.mxu0 %v537
        %v5504 = vpop.f32.mrf.mxu0
        %v5505 = vadd.f32 0.0, %v5504
        %5506 = vmatmul.f32.gmra.mxu0 %v540
        %v5507 = vpop.f32.mrf.mxu0
        %v5508 = vadd.f32 0.0, %v5507
        %5509 = vmatmul.f32.gmra.mxu0 %v543
        %v5510 = vpop.f32.mrf.mxu0
        %v5511 = vadd.f32 0.0, %v5510
        %5512 = vmatmul.f32.gmra.mxu0 %v546
        %v5513 = vpop.f32.mrf.mxu0
        %v5514 = vadd.f32 0.0, %v5513
        %5515 = vmatmul.f32.gmra.mxu0 %v549
        %v5516 = vpop.f32.mrf.mxu0
        %v5517 = vadd.f32 0.0, %v5516
        %5518 = vmatmul.f32.gmra.mxu0 %v552
        %v5519 = vpop.f32.mrf.mxu0
        %v5520 = vadd.f32 0.0, %v5519
        %5521 = vmatmul.f32.gmra.mxu0 %v555
        %v5522 = vpop.f32.mrf.mxu0
        %v5523 = vadd.f32 0.0, %v5522
        %5524 = vmatmul.f32.gmra.mxu0 %v558
        %v5525 = vpop.f32.mrf.mxu0
        %v5526 = vadd.f32 0.0, %v5525
        %5527 = vmatmul.f32.gmra.mxu0 %v561
        %v5528 = vpop.f32.mrf.mxu0
        %v5529 = vadd.f32 0.0, %v5528
        %5530 = vmatmul.f32.gmra.mxu0 %v564
        %v5531 = vpop.f32.mrf.mxu0
        %v5532 = vadd.f32 0.0, %v5531
        %5533 = vdwg.mxu0
        %5534 = vmatpush.msra.mxu0 0.0
        %5535 = vmatpush.msra.mxu0 0.0
        %5536 = vmatpush.msra.mxu0 0.0
        %5537 = vmatpush.msra.mxu0 0.0
        %5538 = vmatpush.msra.mxu0 0.0
        %5539 = vmatpush.msra.mxu0 0.0
        %5540 = vmatpush.msra.mxu0 0.0
        %5541 = vmatpush.msra.mxu0 0.0
        %5542 = vmatpush.msra.mxu0 0.0
        %5543 = vmatpush.msra.mxu0 0.0
        %5544 = vmatpush.msra.mxu0 0.0
        %5545 = vmatpush.msra.mxu0 0.0
        %5546 = vmatpush.msra.mxu0 %v5076
        %5547 = vmatpush.msra.mxu0 %v5066
        %5548 = vmatpush.msra.mxu0 %v5056
        %5549 = vmatpush.msra.mxu0 %v5046
        %5550 = vmatmul.f32.gmra.mxu0 %v519
        %v5551 = vpop.f32.mrf.mxu0
        %v5552 = vadd.f32 0.0, %v5551
        %5553 = vmatmul.f32.gmra.mxu0 %v522
        %v5554 = vpop.f32.mrf.mxu0
        %v5555 = vadd.f32 0.0, %v5554
        %5556 = vmatmul.f32.gmra.mxu0 %v525
        %v5557 = vpop.f32.mrf.mxu0
        %v5558 = vadd.f32 0.0, %v5557
        %5559 = vmatmul.f32.gmra.mxu0 %v528
        %v5560 = vpop.f32.mrf.mxu0
        %v5561 = vadd.f32 0.0, %v5560
        %5562 = vmatmul.f32.gmra.mxu0 %v531
        %v5563 = vpop.f32.mrf.mxu0
        %v5564 = vadd.f32 0.0, %v5563
        %5565 = vmatmul.f32.gmra.mxu0 %v534
        %v5566 = vpop.f32.mrf.mxu0
        %v5567 = vadd.f32 0.0, %v5566
        %5568 = vmatmul.f32.gmra.mxu0 %v537
        %v5569 = vpop.f32.mrf.mxu0
        %v5570 = vadd.f32 0.0, %v5569
        %5571 = vmatmul.f32.gmra.mxu0 %v540
        %v5572 = vpop.f32.mrf.mxu0
        %v5573 = vadd.f32 0.0, %v5572
        %5574 = vmatmul.f32.gmra.mxu0 %v543
        %v5575 = vpop.f32.mrf.mxu0
        %v5576 = vadd.f32 0.0, %v5575
        %5577 = vmatmul.f32.gmra.mxu0 %v546
        %v5578 = vpop.f32.mrf.mxu0
        %v5579 = vadd.f32 0.0, %v5578
        %5580 = vmatmul.f32.gmra.mxu0 %v549
        %v5581 = vpop.f32.mrf.mxu0
        %v5582 = vadd.f32 0.0, %v5581
        %5583 = vmatmul.f32.gmra.mxu0 %v552
        %v5584 = vpop.f32.mrf.mxu0
        %v5585 = vadd.f32 0.0, %v5584
        %5586 = vmatmul.f32.gmra.mxu0 %v555
        %v5587 = vpop.f32.mrf.mxu0
        %v5588 = vadd.f32 0.0, %v5587
        %5589 = vmatmul.f32.gmra.mxu0 %v558
        %v5590 = vpop.f32.mrf.mxu0
        %v5591 = vadd.f32 0.0, %v5590
        %5592 = vmatmul.f32.gmra.mxu0 %v561
        %v5593 = vpop.f32.mrf.mxu0
        %v5594 = vadd.f32 0.0, %v5593
        %5595 = vmatmul.f32.gmra.mxu0 %v564
        %v5596 = vpop.f32.mrf.mxu0
        %v5597 = vadd.f32 0.0, %v5596
        %5598 = vdwg.mxu0
        %5599 = vmatpush.msra.mxu0 0.0
        %5600 = vmatpush.msra.mxu0 0.0
        %5601 = vmatpush.msra.mxu0 0.0
        %5602 = vmatpush.msra.mxu0 0.0
        %5603 = vmatpush.msra.mxu0 0.0
        %5604 = vmatpush.msra.mxu0 0.0
        %5605 = vmatpush.msra.mxu0 0.0
        %5606 = vmatpush.msra.mxu0 0.0
        %5607 = vmatpush.msra.mxu0 0.0
        %5608 = vmatpush.msra.mxu0 0.0
        %5609 = vmatpush.msra.mxu0 0.0
        %5610 = vmatpush.msra.mxu0 0.0
        %5611 = vmatpush.msra.mxu0 %v5077
        %5612 = vmatpush.msra.mxu0 %v5067
        %5613 = vmatpush.msra.mxu0 %v5057
        %5614 = vmatpush.msra.mxu0 %v5047
        %5615 = vmatmul.f32.gmra.mxu0 %v519
        %v5616 = vpop.f32.mrf.mxu0
        %v5617 = vadd.f32 0.0, %v5616
        %5618 = vmatmul.f32.gmra.mxu0 %v522
        %v5619 = vpop.f32.mrf.mxu0
        %v5620 = vadd.f32 0.0, %v5619
        %5621 = vmatmul.f32.gmra.mxu0 %v525
        %v5622 = vpop.f32.mrf.mxu0
        %v5623 = vadd.f32 0.0, %v5622
        %5624 = vmatmul.f32.gmra.mxu0 %v528
        %v5625 = vpop.f32.mrf.mxu0
        %v5626 = vadd.f32 0.0, %v5625
        %5627 = vmatmul.f32.gmra.mxu0 %v531
        %v5628 = vpop.f32.mrf.mxu0
        %v5629 = vadd.f32 0.0, %v5628
        %5630 = vmatmul.f32.gmra.mxu0 %v534
        %v5631 = vpop.f32.mrf.mxu0
        %v5632 = vadd.f32 0.0, %v5631
        %5633 = vmatmul.f32.gmra.mxu0 %v537
        %v5634 = vpop.f32.mrf.mxu0
        %v5635 = vadd.f32 0.0, %v5634
        %5636 = vmatmul.f32.gmra.mxu0 %v540
        %v5637 = vpop.f32.mrf.mxu0
        %v5638 = vadd.f32 0.0, %v5637
        %5639 = vmatmul.f32.gmra.mxu0 %v543
        %v5640 = vpop.f32.mrf.mxu0
        %v5641 = vadd.f32 0.0, %v5640
        %5642 = vmatmul.f32.gmra.mxu0 %v546
        %v5643 = vpop.f32.mrf.mxu0
        %v5644 = vadd.f32 0.0, %v5643
        %5645 = vmatmul.f32.gmra.mxu0 %v549
        %v5646 = vpop.f32.mrf.mxu0
        %v5647 = vadd.f32 0.0, %v5646
        %5648 = vmatmul.f32.gmra.mxu0 %v552
        %v5649 = vpop.f32.mrf.mxu0
        %v5650 = vadd.f32 0.0, %v5649
        %5651 = vmatmul.f32.gmra.mxu0 %v555
        %v5652 = vpop.f32.mrf.mxu0
        %v5653 = vadd.f32 0.0, %v5652
        %5654 = vmatmul.f32.gmra.mxu0 %v558
        %v5655 = vpop.f32.mrf.mxu0
        %v5656 = vadd.f32 0.0, %v5655
        %5657 = vmatmul.f32.gmra.mxu0 %v561
        %v5658 = vpop.f32.mrf.mxu0
        %v5659 = vadd.f32 0.0, %v5658
        %5660 = vmatmul.f32.gmra.mxu0 %v564
        %v5661 = vpop.f32.mrf.mxu0
        %v5662 = vadd.f32 0.0, %v5661
        %5663 = vdwg.mxu0
        %5664 = vmatpush.msra.mxu0 0.0
        %5665 = vmatpush.msra.mxu0 0.0
        %5666 = vmatpush.msra.mxu0 0.0
        %5667 = vmatpush.msra.mxu0 0.0
        %5668 = vmatpush.msra.mxu0 0.0
        %5669 = vmatpush.msra.mxu0 0.0
        %5670 = vmatpush.msra.mxu0 0.0
        %5671 = vmatpush.msra.mxu0 0.0
        %5672 = vmatpush.msra.mxu0 0.0
        %5673 = vmatpush.msra.mxu0 0.0
        %5674 = vmatpush.msra.mxu0 0.0
        %5675 = vmatpush.msra.mxu0 0.0
        %5676 = vmatpush.msra.mxu0 %v5078
        %5677 = vmatpush.msra.mxu0 %v5068
        %5678 = vmatpush.msra.mxu0 %v5058
        %5679 = vmatpush.msra.mxu0 %v5048
        %5680 = vmatmul.f32.gmra.mxu0 %v519
        %v5681 = vpop.f32.mrf.mxu0
        %v5682 = vadd.f32 0.0, %v5681
        %5683 = vmatmul.f32.gmra.mxu0 %v522
        %v5684 = vpop.f32.mrf.mxu0
        %v5685 = vadd.f32 0.0, %v5684
        %5686 = vmatmul.f32.gmra.mxu0 %v525
        %v5687 = vpop.f32.mrf.mxu0
        %v5688 = vadd.f32 0.0, %v5687
        %5689 = vmatmul.f32.gmra.mxu0 %v528
        %v5690 = vpop.f32.mrf.mxu0
        %v5691 = vadd.f32 0.0, %v5690
        %5692 = vmatmul.f32.gmra.mxu0 %v531
        %v5693 = vpop.f32.mrf.mxu0
        %v5694 = vadd.f32 0.0, %v5693
        %5695 = vmatmul.f32.gmra.mxu0 %v534
        %v5696 = vpop.f32.mrf.mxu0
        %v5697 = vadd.f32 0.0, %v5696
        %5698 = vmatmul.f32.gmra.mxu0 %v537
        %v5699 = vpop.f32.mrf.mxu0
        %v5700 = vadd.f32 0.0, %v5699
        %5701 = vmatmul.f32.gmra.mxu0 %v540
        %v5702 = vpop.f32.mrf.mxu0
        %v5703 = vadd.f32 0.0, %v5702
        %5704 = vmatmul.f32.gmra.mxu0 %v543
        %v5705 = vpop.f32.mrf.mxu0
        %v5706 = vadd.f32 0.0, %v5705
        %5707 = vmatmul.f32.gmra.mxu0 %v546
        %v5708 = vpop.f32.mrf.mxu0
        %v5709 = vadd.f32 0.0, %v5708
        %5710 = vmatmul.f32.gmra.mxu0 %v549
        %v5711 = vpop.f32.mrf.mxu0
        %v5712 = vadd.f32 0.0, %v5711
        %5713 = vmatmul.f32.gmra.mxu0 %v552
        %v5714 = vpop.f32.mrf.mxu0
        %v5715 = vadd.f32 0.0, %v5714
        %5716 = vmatmul.f32.gmra.mxu0 %v555
        %v5717 = vpop.f32.mrf.mxu0
        %v5718 = vadd.f32 0.0, %v5717
        %5719 = vmatmul.f32.gmra.mxu0 %v558
        %v5720 = vpop.f32.mrf.mxu0
        %v5721 = vadd.f32 0.0, %v5720
        %5722 = vmatmul.f32.gmra.mxu0 %v561
        %v5723 = vpop.f32.mrf.mxu0
        %v5724 = vadd.f32 0.0, %v5723
        %5725 = vmatmul.f32.gmra.mxu0 %v564
        %v5726 = vpop.f32.mrf.mxu0
        %v5727 = vadd.f32 0.0, %v5726
        %5728 = vdwg.mxu0
        %v5729 = vld [vmem:[%s7] sm:$0xff]
        %v5730 = vld [vmem:[%s7 + $0x8] sm:$0x3]
        %v5733 = vperm.slane %v5729, 0
        %v5734 = vperm.slane %v5729, 1
        %v5735 = vperm.slane %v5729, 2
        %v5736 = vperm.slane %v5729, 3
        %v5737 = vperm.slane %v5729, 4
        %v5738 = vperm.slane %v5729, 5
        %v5739 = vperm.slane %v5729, 6
        %v5740 = vperm.slane %v5729, 7
        %v5741 = vperm.slane %v5730, 0
        %v5742 = vperm.slane %v5730, 1
        %v5753 = vmul.f32 %v5097, %v5733
        %v5754 = vmul.f32 %v5162, %v5734
        %v5755 = vmul.f32 %v5227, %v5735
        %v5756 = vmul.f32 %v5292, %v5736
        %v5757 = vmul.f32 %v5357, %v5737
        %v5758 = vmul.f32 %v5422, %v5738
        %v5759 = vmul.f32 %v5487, %v5739
        %v5760 = vmul.f32 %v5552, %v5740
        %v5761 = vmul.f32 %v5617, %v5741
        %v5762 = vmul.f32 %v5682, %v5742
        %v5763 = vmul.f32 %v5100, %v5733
        %v5764 = vmul.f32 %v5165, %v5734
        %v5765 = vmul.f32 %v5230, %v5735
        %v5766 = vmul.f32 %v5295, %v5736
        %v5767 = vmul.f32 %v5360, %v5737
        %v5768 = vmul.f32 %v5425, %v5738
        %v5769 = vmul.f32 %v5490, %v5739
        %v5770 = vmul.f32 %v5555, %v5740
        %v5771 = vmul.f32 %v5620, %v5741
        %v5772 = vmul.f32 %v5685, %v5742
        %v5773 = vmul.f32 %v5103, %v5733
        %v5774 = vmul.f32 %v5168, %v5734
        %v5775 = vmul.f32 %v5233, %v5735
        %v5776 = vmul.f32 %v5298, %v5736
        %v5777 = vmul.f32 %v5363, %v5737
        %v5778 = vmul.f32 %v5428, %v5738
        %v5779 = vmul.f32 %v5493, %v5739
        %v5780 = vmul.f32 %v5558, %v5740
        %v5781 = vmul.f32 %v5623, %v5741
        %v5782 = vmul.f32 %v5688, %v5742
        %v5783 = vmul.f32 %v5106, %v5733
        %v5784 = vmul.f32 %v5171, %v5734
        %v5785 = vmul.f32 %v5236, %v5735
        %v5786 = vmul.f32 %v5301, %v5736
        %v5787 = vmul.f32 %v5366, %v5737
        %v5788 = vmul.f32 %v5431, %v5738
        %v5789 = vmul.f32 %v5496, %v5739
        %v5790 = vmul.f32 %v5561, %v5740
        %v5791 = vmul.f32 %v5626, %v5741
        %v5792 = vmul.f32 %v5691, %v5742
        %v5793 = vmul.f32 %v5109, %v5733
        %v5794 = vmul.f32 %v5174, %v5734
        %v5795 = vmul.f32 %v5239, %v5735
        %v5796 = vmul.f32 %v5304, %v5736
        %v5797 = vmul.f32 %v5369, %v5737
        %v5798 = vmul.f32 %v5434, %v5738
        %v5799 = vmul.f32 %v5499, %v5739
        %v5800 = vmul.f32 %v5564, %v5740
        %v5801 = vmul.f32 %v5629, %v5741
        %v5802 = vmul.f32 %v5694, %v5742
        %v5803 = vmul.f32 %v5112, %v5733
        %v5804 = vmul.f32 %v5177, %v5734
        %v5805 = vmul.f32 %v5242, %v5735
        %v5806 = vmul.f32 %v5307, %v5736
        %v5807 = vmul.f32 %v5372, %v5737
        %v5808 = vmul.f32 %v5437, %v5738
        %v5809 = vmul.f32 %v5502, %v5739
        %v5810 = vmul.f32 %v5567, %v5740
        %v5811 = vmul.f32 %v5632, %v5741
        %v5812 = vmul.f32 %v5697, %v5742
        %v5813 = vmul.f32 %v5115, %v5733
        %v5814 = vmul.f32 %v5180, %v5734
        %v5815 = vmul.f32 %v5245, %v5735
        %v5816 = vmul.f32 %v5310, %v5736
        %v5817 = vmul.f32 %v5375, %v5737
        %v5818 = vmul.f32 %v5440, %v5738
        %v5819 = vmul.f32 %v5505, %v5739
        %v5820 = vmul.f32 %v5570, %v5740
        %v5821 = vmul.f32 %v5635, %v5741
        %v5822 = vmul.f32 %v5700, %v5742
        %v5823 = vmul.f32 %v5118, %v5733
        %v5824 = vmul.f32 %v5183, %v5734
        %v5825 = vmul.f32 %v5248, %v5735
        %v5826 = vmul.f32 %v5313, %v5736
        %v5827 = vmul.f32 %v5378, %v5737
        %v5828 = vmul.f32 %v5443, %v5738
        %v5829 = vmul.f32 %v5508, %v5739
        %v5830 = vmul.f32 %v5573, %v5740
        %v5831 = vmul.f32 %v5638, %v5741
        %v5832 = vmul.f32 %v5703, %v5742
        %v5833 = vmul.f32 %v5121, %v5733
        %v5834 = vmul.f32 %v5186, %v5734
        %v5835 = vmul.f32 %v5251, %v5735
        %v5836 = vmul.f32 %v5316, %v5736
        %v5837 = vmul.f32 %v5381, %v5737
        %v5838 = vmul.f32 %v5446, %v5738
        %v5839 = vmul.f32 %v5511, %v5739
        %v5840 = vmul.f32 %v5576, %v5740
        %v5841 = vmul.f32 %v5641, %v5741
        %v5842 = vmul.f32 %v5706, %v5742
        %v5843 = vmul.f32 %v5124, %v5733
        %v5844 = vmul.f32 %v5189, %v5734
        %v5845 = vmul.f32 %v5254, %v5735
        %v5846 = vmul.f32 %v5319, %v5736
        %v5847 = vmul.f32 %v5384, %v5737
        %v5848 = vmul.f32 %v5449, %v5738
        %v5849 = vmul.f32 %v5514, %v5739
        %v5850 = vmul.f32 %v5579, %v5740
        %v5851 = vmul.f32 %v5644, %v5741
        %v5852 = vmul.f32 %v5709, %v5742
        %v5853 = vmul.f32 %v5127, %v5733
        %v5854 = vmul.f32 %v5192, %v5734
        %v5855 = vmul.f32 %v5257, %v5735
        %v5856 = vmul.f32 %v5322, %v5736
        %v5857 = vmul.f32 %v5387, %v5737
        %v5858 = vmul.f32 %v5452, %v5738
        %v5859 = vmul.f32 %v5517, %v5739
        %v5860 = vmul.f32 %v5582, %v5740
        %v5861 = vmul.f32 %v5647, %v5741
        %v5862 = vmul.f32 %v5712, %v5742
        %v5863 = vmul.f32 %v5130, %v5733
        %v5864 = vmul.f32 %v5195, %v5734
        %v5865 = vmul.f32 %v5260, %v5735
        %v5866 = vmul.f32 %v5325, %v5736
        %v5867 = vmul.f32 %v5390, %v5737
        %v5868 = vmul.f32 %v5455, %v5738
        %v5869 = vmul.f32 %v5520, %v5739
        %v5870 = vmul.f32 %v5585, %v5740
        %v5871 = vmul.f32 %v5650, %v5741
        %v5872 = vmul.f32 %v5715, %v5742
        %v5873 = vmul.f32 %v5133, %v5733
        %v5874 = vmul.f32 %v5198, %v5734
        %v5875 = vmul.f32 %v5263, %v5735
        %v5876 = vmul.f32 %v5328, %v5736
        %v5877 = vmul.f32 %v5393, %v5737
        %v5878 = vmul.f32 %v5458, %v5738
        %v5879 = vmul.f32 %v5523, %v5739
        %v5880 = vmul.f32 %v5588, %v5740
        %v5881 = vmul.f32 %v5653, %v5741
        %v5882 = vmul.f32 %v5718, %v5742
        %v5883 = vmul.f32 %v5136, %v5733
        %v5884 = vmul.f32 %v5201, %v5734
        %v5885 = vmul.f32 %v5266, %v5735
        %v5886 = vmul.f32 %v5331, %v5736
        %v5887 = vmul.f32 %v5396, %v5737
        %v5888 = vmul.f32 %v5461, %v5738
        %v5889 = vmul.f32 %v5526, %v5739
        %v5890 = vmul.f32 %v5591, %v5740
        %v5891 = vmul.f32 %v5656, %v5741
        %v5892 = vmul.f32 %v5721, %v5742
        %v5893 = vmul.f32 %v5139, %v5733
        %v5894 = vmul.f32 %v5204, %v5734
        %v5895 = vmul.f32 %v5269, %v5735
        %v5896 = vmul.f32 %v5334, %v5736
        %v5897 = vmul.f32 %v5399, %v5737
        %v5898 = vmul.f32 %v5464, %v5738
        %v5899 = vmul.f32 %v5529, %v5739
        %v5900 = vmul.f32 %v5594, %v5740
        %v5901 = vmul.f32 %v5659, %v5741
        %v5902 = vmul.f32 %v5724, %v5742
        %v5903 = vmul.f32 %v5142, %v5733
        %v5904 = vmul.f32 %v5207, %v5734
        %v5905 = vmul.f32 %v5272, %v5735
        %v5906 = vmul.f32 %v5337, %v5736
        %v5907 = vmul.f32 %v5402, %v5737
        %v5908 = vmul.f32 %v5467, %v5738
        %v5909 = vmul.f32 %v5532, %v5739
        %v5910 = vmul.f32 %v5597, %v5740
        %v5911 = vmul.f32 %v5662, %v5741
        %v5912 = vmul.f32 %v5727, %v5742
        %v5913 = vld [vmem:[%s8] sm:$0xff]
        %v5914 = vld [vmem:[%s8 + $0x8] sm:$0x3]
        %v5917 = vperm.slane %v5913, 0
        %v5918 = vperm.slane %v5913, 1
        %v5919 = vperm.slane %v5913, 2
        %v5920 = vperm.slane %v5913, 3
        %v5921 = vperm.slane %v5913, 4
        %v5922 = vperm.slane %v5913, 5
        %v5923 = vperm.slane %v5913, 6
        %v5924 = vperm.slane %v5913, 7
        %v5925 = vperm.slane %v5914, 0
        %v5926 = vperm.slane %v5914, 1
        %v5937 = vadd.f32 %v5753, %v5917
        %v5938 = vadd.f32 %v5754, %v5918
        %v5939 = vadd.f32 %v5755, %v5919
        %v5940 = vadd.f32 %v5756, %v5920
        %v5941 = vadd.f32 %v5757, %v5921
        %v5942 = vadd.f32 %v5758, %v5922
        %v5943 = vadd.f32 %v5759, %v5923
        %v5944 = vadd.f32 %v5760, %v5924
        %v5945 = vadd.f32 %v5761, %v5925
        %v5946 = vadd.f32 %v5762, %v5926
        %v5947 = vadd.f32 %v5763, %v5917
        %v5948 = vadd.f32 %v5764, %v5918
        %v5949 = vadd.f32 %v5765, %v5919
        %v5950 = vadd.f32 %v5766, %v5920
        %v5951 = vadd.f32 %v5767, %v5921
        %v5952 = vadd.f32 %v5768, %v5922
        %v5953 = vadd.f32 %v5769, %v5923
        %v5954 = vadd.f32 %v5770, %v5924
        %v5955 = vadd.f32 %v5771, %v5925
        %v5956 = vadd.f32 %v5772, %v5926
        %v5957 = vadd.f32 %v5773, %v5917
        %v5958 = vadd.f32 %v5774, %v5918
        %v5959 = vadd.f32 %v5775, %v5919
        %v5960 = vadd.f32 %v5776, %v5920
        %v5961 = vadd.f32 %v5777, %v5921
        %v5962 = vadd.f32 %v5778, %v5922
        %v5963 = vadd.f32 %v5779, %v5923
        %v5964 = vadd.f32 %v5780, %v5924
        %v5965 = vadd.f32 %v5781, %v5925
        %v5966 = vadd.f32 %v5782, %v5926
        %v5967 = vadd.f32 %v5783, %v5917
        %v5968 = vadd.f32 %v5784, %v5918
        %v5969 = vadd.f32 %v5785, %v5919
        %v5970 = vadd.f32 %v5786, %v5920
        %v5971 = vadd.f32 %v5787, %v5921
        %v5972 = vadd.f32 %v5788, %v5922
        %v5973 = vadd.f32 %v5789, %v5923
        %v5974 = vadd.f32 %v5790, %v5924
        %v5975 = vadd.f32 %v5791, %v5925
        %v5976 = vadd.f32 %v5792, %v5926
        %v5977 = vadd.f32 %v5793, %v5917
        %v5978 = vadd.f32 %v5794, %v5918
        %v5979 = vadd.f32 %v5795, %v5919
        %v5980 = vadd.f32 %v5796, %v5920
        %v5981 = vadd.f32 %v5797, %v5921
        %v5982 = vadd.f32 %v5798, %v5922
        %v5983 = vadd.f32 %v5799, %v5923
        %v5984 = vadd.f32 %v5800, %v5924
        %v5985 = vadd.f32 %v5801, %v5925
        %v5986 = vadd.f32 %v5802, %v5926
        %v5987 = vadd.f32 %v5803, %v5917
        %v5988 = vadd.f32 %v5804, %v5918
        %v5989 = vadd.f32 %v5805, %v5919
        %v5990 = vadd.f32 %v5806, %v5920
        %v5991 = vadd.f32 %v5807, %v5921
        %v5992 = vadd.f32 %v5808, %v5922
        %v5993 = vadd.f32 %v5809, %v5923
        %v5994 = vadd.f32 %v5810, %v5924
        %v5995 = vadd.f32 %v5811, %v5925
        %v5996 = vadd.f32 %v5812, %v5926
        %v5997 = vadd.f32 %v5813, %v5917
        %v5998 = vadd.f32 %v5814, %v5918
        %v5999 = vadd.f32 %v5815, %v5919
        %v6000 = vadd.f32 %v5816, %v5920
        %v6001 = vadd.f32 %v5817, %v5921
        %v6002 = vadd.f32 %v5818, %v5922
        %v6003 = vadd.f32 %v5819, %v5923
        %v6004 = vadd.f32 %v5820, %v5924
        %v6005 = vadd.f32 %v5821, %v5925
        %v6006 = vadd.f32 %v5822, %v5926
        %v6007 = vadd.f32 %v5823, %v5917
        %v6008 = vadd.f32 %v5824, %v5918
        %v6009 = vadd.f32 %v5825, %v5919
        %v6010 = vadd.f32 %v5826, %v5920
        %v6011 = vadd.f32 %v5827, %v5921
        %v6012 = vadd.f32 %v5828, %v5922
        %v6013 = vadd.f32 %v5829, %v5923
        %v6014 = vadd.f32 %v5830, %v5924
        %v6015 = vadd.f32 %v5831, %v5925
        %v6016 = vadd.f32 %v5832, %v5926
        %v6017 = vadd.f32 %v5833, %v5917
        %v6018 = vadd.f32 %v5834, %v5918
        %v6019 = vadd.f32 %v5835, %v5919
        %v6020 = vadd.f32 %v5836, %v5920
        %v6021 = vadd.f32 %v5837, %v5921
        %v6022 = vadd.f32 %v5838, %v5922
        %v6023 = vadd.f32 %v5839, %v5923
        %v6024 = vadd.f32 %v5840, %v5924
        %v6025 = vadd.f32 %v5841, %v5925
        %v6026 = vadd.f32 %v5842, %v5926
        %v6027 = vadd.f32 %v5843, %v5917
        %v6028 = vadd.f32 %v5844, %v5918
        %v6029 = vadd.f32 %v5845, %v5919
        %v6030 = vadd.f32 %v5846, %v5920
        %v6031 = vadd.f32 %v5847, %v5921
        %v6032 = vadd.f32 %v5848, %v5922
        %v6033 = vadd.f32 %v5849, %v5923
        %v6034 = vadd.f32 %v5850, %v5924
        %v6035 = vadd.f32 %v5851, %v5925
        %v6036 = vadd.f32 %v5852, %v5926
        %v6037 = vadd.f32 %v5853, %v5917
        %v6038 = vadd.f32 %v5854, %v5918
        %v6039 = vadd.f32 %v5855, %v5919
        %v6040 = vadd.f32 %v5856, %v5920
        %v6041 = vadd.f32 %v5857, %v5921
        %v6042 = vadd.f32 %v5858, %v5922
        %v6043 = vadd.f32 %v5859, %v5923
        %v6044 = vadd.f32 %v5860, %v5924
        %v6045 = vadd.f32 %v5861, %v5925
        %v6046 = vadd.f32 %v5862, %v5926
        %v6047 = vadd.f32 %v5863, %v5917
        %v6048 = vadd.f32 %v5864, %v5918
        %v6049 = vadd.f32 %v5865, %v5919
        %v6050 = vadd.f32 %v5866, %v5920
        %v6051 = vadd.f32 %v5867, %v5921
        %v6052 = vadd.f32 %v5868, %v5922
        %v6053 = vadd.f32 %v5869, %v5923
        %v6054 = vadd.f32 %v5870, %v5924
        %v6055 = vadd.f32 %v5871, %v5925
        %v6056 = vadd.f32 %v5872, %v5926
        %v6057 = vadd.f32 %v5873, %v5917
        %v6058 = vadd.f32 %v5874, %v5918
        %v6059 = vadd.f32 %v5875, %v5919
        %v6060 = vadd.f32 %v5876, %v5920
        %v6061 = vadd.f32 %v5877, %v5921
        %v6062 = vadd.f32 %v5878, %v5922
        %v6063 = vadd.f32 %v5879, %v5923
        %v6064 = vadd.f32 %v5880, %v5924
        %v6065 = vadd.f32 %v5881, %v5925
        %v6066 = vadd.f32 %v5882, %v5926
        %v6067 = vadd.f32 %v5883, %v5917
        %v6068 = vadd.f32 %v5884, %v5918
        %v6069 = vadd.f32 %v5885, %v5919
        %v6070 = vadd.f32 %v5886, %v5920
        %v6071 = vadd.f32 %v5887, %v5921
        %v6072 = vadd.f32 %v5888, %v5922
        %v6073 = vadd.f32 %v5889, %v5923
        %v6074 = vadd.f32 %v5890, %v5924
        %v6075 = vadd.f32 %v5891, %v5925
        %v6076 = vadd.f32 %v5892, %v5926
        %v6077 = vadd.f32 %v5893, %v5917
        %v6078 = vadd.f32 %v5894, %v5918
        %v6079 = vadd.f32 %v5895, %v5919
        %v6080 = vadd.f32 %v5896, %v5920
        %v6081 = vadd.f32 %v5897, %v5921
        %v6082 = vadd.f32 %v5898, %v5922
        %v6083 = vadd.f32 %v5899, %v5923
        %v6084 = vadd.f32 %v5900, %v5924
        %v6085 = vadd.f32 %v5901, %v5925
        %v6086 = vadd.f32 %v5902, %v5926
        %v6087 = vadd.f32 %v5903, %v5917
        %v6088 = vadd.f32 %v5904, %v5918
        %v6089 = vadd.f32 %v5905, %v5919
        %v6090 = vadd.f32 %v5906, %v5920
        %v6091 = vadd.f32 %v5907, %v5921
        %v6092 = vadd.f32 %v5908, %v5922
        %v6093 = vadd.f32 %v5909, %v5923
        %v6094 = vadd.f32 %v5910, %v5924
        %v6095 = vadd.f32 %v5911, %v5925
        %v6096 = vadd.f32 %v5912, %v5926
        %v6097 = vxor.u32 %v5937, 2147483648
        %v6098 = vxor.u32 %v5938, 2147483648
        %v6099 = vxor.u32 %v5939, 2147483648
        %v6100 = vxor.u32 %v5940, 2147483648
        %v6101 = vxor.u32 %v5941, 2147483648
        %v6102 = vxor.u32 %v5942, 2147483648
        %v6103 = vxor.u32 %v5943, 2147483648
        %v6104 = vxor.u32 %v5944, 2147483648
        %v6105 = vxor.u32 %v5945, 2147483648
        %v6106 = vxor.u32 %v5946, 2147483648
        %v6107 = vxor.u32 %v5947, 2147483648
        %v6108 = vxor.u32 %v5948, 2147483648
        %v6109 = vxor.u32 %v5949, 2147483648
        %v6110 = vxor.u32 %v5950, 2147483648
        %v6111 = vxor.u32 %v5951, 2147483648
        %v6112 = vxor.u32 %v5952, 2147483648
        %v6113 = vxor.u32 %v5953, 2147483648
        %v6114 = vxor.u32 %v5954, 2147483648
        %v6115 = vxor.u32 %v5955, 2147483648
        %v6116 = vxor.u32 %v5956, 2147483648
        %v6117 = vxor.u32 %v5957, 2147483648
        %v6118 = vxor.u32 %v5958, 2147483648
        %v6119 = vxor.u32 %v5959, 2147483648
        %v6120 = vxor.u32 %v5960, 2147483648
        %v6121 = vxor.u32 %v5961, 2147483648
        %v6122 = vxor.u32 %v5962, 2147483648
        %v6123 = vxor.u32 %v5963, 2147483648
        %v6124 = vxor.u32 %v5964, 2147483648
        %v6125 = vxor.u32 %v5965, 2147483648
        %v6126 = vxor.u32 %v5966, 2147483648
        %v6127 = vxor.u32 %v5967, 2147483648
        %v6128 = vxor.u32 %v5968, 2147483648
        %v6129 = vxor.u32 %v5969, 2147483648
        %v6130 = vxor.u32 %v5970, 2147483648
        %v6131 = vxor.u32 %v5971, 2147483648
        %v6132 = vxor.u32 %v5972, 2147483648
        %v6133 = vxor.u32 %v5973, 2147483648
        %v6134 = vxor.u32 %v5974, 2147483648
        %v6135 = vxor.u32 %v5975, 2147483648
        %v6136 = vxor.u32 %v5976, 2147483648
        %v6137 = vxor.u32 %v5977, 2147483648
        %v6138 = vxor.u32 %v5978, 2147483648
        %v6139 = vxor.u32 %v5979, 2147483648
        %v6140 = vxor.u32 %v5980, 2147483648
        %v6141 = vxor.u32 %v5981, 2147483648
        %v6142 = vxor.u32 %v5982, 2147483648
        %v6143 = vxor.u32 %v5983, 2147483648
        %v6144 = vxor.u32 %v5984, 2147483648
        %v6145 = vxor.u32 %v5985, 2147483648
        %v6146 = vxor.u32 %v5986, 2147483648
        %v6147 = vxor.u32 %v5987, 2147483648
        %v6148 = vxor.u32 %v5988, 2147483648
        %v6149 = vxor.u32 %v5989, 2147483648
        %v6150 = vxor.u32 %v5990, 2147483648
        %v6151 = vxor.u32 %v5991, 2147483648
        %v6152 = vxor.u32 %v5992, 2147483648
        %v6153 = vxor.u32 %v5993, 2147483648
        %v6154 = vxor.u32 %v5994, 2147483648
        %v6155 = vxor.u32 %v5995, 2147483648
        %v6156 = vxor.u32 %v5996, 2147483648
        %v6157 = vxor.u32 %v5997, 2147483648
        %v6158 = vxor.u32 %v5998, 2147483648
        %v6159 = vxor.u32 %v5999, 2147483648
        %v6160 = vxor.u32 %v6000, 2147483648
        %v6161 = vxor.u32 %v6001, 2147483648
        %v6162 = vxor.u32 %v6002, 2147483648
        %v6163 = vxor.u32 %v6003, 2147483648
        %v6164 = vxor.u32 %v6004, 2147483648
        %v6165 = vxor.u32 %v6005, 2147483648
        %v6166 = vxor.u32 %v6006, 2147483648
        %v6167 = vxor.u32 %v6007, 2147483648
        %v6168 = vxor.u32 %v6008, 2147483648
        %v6169 = vxor.u32 %v6009, 2147483648
        %v6170 = vxor.u32 %v6010, 2147483648
        %v6171 = vxor.u32 %v6011, 2147483648
        %v6172 = vxor.u32 %v6012, 2147483648
        %v6173 = vxor.u32 %v6013, 2147483648
        %v6174 = vxor.u32 %v6014, 2147483648
        %v6175 = vxor.u32 %v6015, 2147483648
        %v6176 = vxor.u32 %v6016, 2147483648
        %v6177 = vxor.u32 %v6017, 2147483648
        %v6178 = vxor.u32 %v6018, 2147483648
        %v6179 = vxor.u32 %v6019, 2147483648
        %v6180 = vxor.u32 %v6020, 2147483648
        %v6181 = vxor.u32 %v6021, 2147483648
        %v6182 = vxor.u32 %v6022, 2147483648
        %v6183 = vxor.u32 %v6023, 2147483648
        %v6184 = vxor.u32 %v6024, 2147483648
        %v6185 = vxor.u32 %v6025, 2147483648
        %v6186 = vxor.u32 %v6026, 2147483648
        %v6187 = vxor.u32 %v6027, 2147483648
        %v6188 = vxor.u32 %v6028, 2147483648
        %v6189 = vxor.u32 %v6029, 2147483648
        %v6190 = vxor.u32 %v6030, 2147483648
        %v6191 = vxor.u32 %v6031, 2147483648
        %v6192 = vxor.u32 %v6032, 2147483648
        %v6193 = vxor.u32 %v6033, 2147483648
        %v6194 = vxor.u32 %v6034, 2147483648
        %v6195 = vxor.u32 %v6035, 2147483648
        %v6196 = vxor.u32 %v6036, 2147483648
        %v6197 = vxor.u32 %v6037, 2147483648
        %v6198 = vxor.u32 %v6038, 2147483648
        %v6199 = vxor.u32 %v6039, 2147483648
        %v6200 = vxor.u32 %v6040, 2147483648
        %v6201 = vxor.u32 %v6041, 2147483648
        %v6202 = vxor.u32 %v6042, 2147483648
        %v6203 = vxor.u32 %v6043, 2147483648
        %v6204 = vxor.u32 %v6044, 2147483648
        %v6205 = vxor.u32 %v6045, 2147483648
        %v6206 = vxor.u32 %v6046, 2147483648
        %v6207 = vxor.u32 %v6047, 2147483648
        %v6208 = vxor.u32 %v6048, 2147483648
        %v6209 = vxor.u32 %v6049, 2147483648
        %v6210 = vxor.u32 %v6050, 2147483648
        %v6211 = vxor.u32 %v6051, 2147483648
        %v6212 = vxor.u32 %v6052, 2147483648
        %v6213 = vxor.u32 %v6053, 2147483648
        %v6214 = vxor.u32 %v6054, 2147483648
        %v6215 = vxor.u32 %v6055, 2147483648
        %v6216 = vxor.u32 %v6056, 2147483648
        %v6217 = vxor.u32 %v6057, 2147483648
        %v6218 = vxor.u32 %v6058, 2147483648
        %v6219 = vxor.u32 %v6059, 2147483648
        %v6220 = vxor.u32 %v6060, 2147483648
        %v6221 = vxor.u32 %v6061, 2147483648
        %v6222 = vxor.u32 %v6062, 2147483648
        %v6223 = vxor.u32 %v6063, 2147483648
        %v6224 = vxor.u32 %v6064, 2147483648
        %v6225 = vxor.u32 %v6065, 2147483648
        %v6226 = vxor.u32 %v6066, 2147483648
        %v6227 = vxor.u32 %v6067, 2147483648
        %v6228 = vxor.u32 %v6068, 2147483648
        %v6229 = vxor.u32 %v6069, 2147483648
        %v6230 = vxor.u32 %v6070, 2147483648
        %v6231 = vxor.u32 %v6071, 2147483648
        %v6232 = vxor.u32 %v6072, 2147483648
        %v6233 = vxor.u32 %v6073, 2147483648
        %v6234 = vxor.u32 %v6074, 2147483648
        %v6235 = vxor.u32 %v6075, 2147483648
        %v6236 = vxor.u32 %v6076, 2147483648
        %v6237 = vxor.u32 %v6077, 2147483648
        %v6238 = vxor.u32 %v6078, 2147483648
        %v6239 = vxor.u32 %v6079, 2147483648
        %v6240 = vxor.u32 %v6080, 2147483648
        %v6241 = vxor.u32 %v6081, 2147483648
        %v6242 = vxor.u32 %v6082, 2147483648
        %v6243 = vxor.u32 %v6083, 2147483648
        %v6244 = vxor.u32 %v6084, 2147483648
        %v6245 = vxor.u32 %v6085, 2147483648
        %v6246 = vxor.u32 %v6086, 2147483648
        %v6247 = vxor.u32 %v6087, 2147483648
        %v6248 = vxor.u32 %v6088, 2147483648
        %v6249 = vxor.u32 %v6089, 2147483648
        %v6250 = vxor.u32 %v6090, 2147483648
        %v6251 = vxor.u32 %v6091, 2147483648
        %v6252 = vxor.u32 %v6092, 2147483648
        %v6253 = vxor.u32 %v6093, 2147483648
        %v6254 = vxor.u32 %v6094, 2147483648
        %v6255 = vxor.u32 %v6095, 2147483648
        %v6256 = vxor.u32 %v6096, 2147483648
        %v6257 = vmul.f32 %v6097, 1.442695
        %v6258 = vpow.pop %v6257
        %v6259 = vmul.f32 %v6098, 1.442695
        %v6260 = vpow.pop %v6259
        %v6261 = vmul.f32 %v6099, 1.442695
        %v6262 = vpow.pop %v6261
        %v6263 = vmul.f32 %v6100, 1.442695
        %v6264 = vpow.pop %v6263
        %v6265 = vmul.f32 %v6101, 1.442695
        %v6266 = vpow.pop %v6265
        %v6267 = vmul.f32 %v6102, 1.442695
        %v6268 = vpow.pop %v6267
        %v6269 = vmul.f32 %v6103, 1.442695
        %v6270 = vpow.pop %v6269
        %v6271 = vmul.f32 %v6104, 1.442695
        %v6272 = vpow.pop %v6271
        %v6273 = vmul.f32 %v6105, 1.442695
        %v6274 = vpow.pop %v6273
        %v6275 = vmul.f32 %v6106, 1.442695
        %v6276 = vpow.pop %v6275
        %v6277 = vmul.f32 %v6107, 1.442695
        %v6278 = vpow.pop %v6277
        %v6279 = vmul.f32 %v6108, 1.442695
        %v6280 = vpow.pop %v6279
        %v6281 = vmul.f32 %v6109, 1.442695
        %v6282 = vpow.pop %v6281
        %v6283 = vmul.f32 %v6110, 1.442695
        %v6284 = vpow.pop %v6283
        %v6285 = vmul.f32 %v6111, 1.442695
        %v6286 = vpow.pop %v6285
        %v6287 = vmul.f32 %v6112, 1.442695
        %v6288 = vpow.pop %v6287
        %v6289 = vmul.f32 %v6113, 1.442695
        %v6290 = vpow.pop %v6289
        %v6291 = vmul.f32 %v6114, 1.442695
        %v6292 = vpow.pop %v6291
        %v6293 = vmul.f32 %v6115, 1.442695
        %v6294 = vpow.pop %v6293
        %v6295 = vmul.f32 %v6116, 1.442695
        %v6296 = vpow.pop %v6295
        %v6297 = vmul.f32 %v6117, 1.442695
        %v6298 = vpow.pop %v6297
        %v6299 = vmul.f32 %v6118, 1.442695
        %v6300 = vpow.pop %v6299
        %v6301 = vmul.f32 %v6119, 1.442695
        %v6302 = vpow.pop %v6301
        %v6303 = vmul.f32 %v6120, 1.442695
        %v6304 = vpow.pop %v6303
        %v6305 = vmul.f32 %v6121, 1.442695
        %v6306 = vpow.pop %v6305
        %v6307 = vmul.f32 %v6122, 1.442695
        %v6308 = vpow.pop %v6307
        %v6309 = vmul.f32 %v6123, 1.442695
        %v6310 = vpow.pop %v6309
        %v6311 = vmul.f32 %v6124, 1.442695
        %v6312 = vpow.pop %v6311
        %v6313 = vmul.f32 %v6125, 1.442695
        %v6314 = vpow.pop %v6313
        %v6315 = vmul.f32 %v6126, 1.442695
        %v6316 = vpow.pop %v6315
        %v6317 = vmul.f32 %v6127, 1.442695
        %v6318 = vpow.pop %v6317
        %v6319 = vmul.f32 %v6128, 1.442695
        %v6320 = vpow.pop %v6319
        %v6321 = vmul.f32 %v6129, 1.442695
        %v6322 = vpow.pop %v6321
        %v6323 = vmul.f32 %v6130, 1.442695
        %v6324 = vpow.pop %v6323
        %v6325 = vmul.f32 %v6131, 1.442695
        %v6326 = vpow.pop %v6325
        %v6327 = vmul.f32 %v6132, 1.442695
        %v6328 = vpow.pop %v6327
        %v6329 = vmul.f32 %v6133, 1.442695
        %v6330 = vpow.pop %v6329
        %v6331 = vmul.f32 %v6134, 1.442695
        %v6332 = vpow.pop %v6331
        %v6333 = vmul.f32 %v6135, 1.442695
        %v6334 = vpow.pop %v6333
        %v6335 = vmul.f32 %v6136, 1.442695
        %v6336 = vpow.pop %v6335
        %v6337 = vmul.f32 %v6137, 1.442695
        %v6338 = vpow.pop %v6337
        %v6339 = vmul.f32 %v6138, 1.442695
        %v6340 = vpow.pop %v6339
        %v6341 = vmul.f32 %v6139, 1.442695
        %v6342 = vpow.pop %v6341
        %v6343 = vmul.f32 %v6140, 1.442695
        %v6344 = vpow.pop %v6343
        %v6345 = vmul.f32 %v6141, 1.442695
        %v6346 = vpow.pop %v6345
        %v6347 = vmul.f32 %v6142, 1.442695
        %v6348 = vpow.pop %v6347
        %v6349 = vmul.f32 %v6143, 1.442695
        %v6350 = vpow.pop %v6349
        %v6351 = vmul.f32 %v6144, 1.442695
        %v6352 = vpow.pop %v6351
        %v6353 = vmul.f32 %v6145, 1.442695
        %v6354 = vpow.pop %v6353
        %v6355 = vmul.f32 %v6146, 1.442695
        %v6356 = vpow.pop %v6355
        %v6357 = vmul.f32 %v6147, 1.442695
        %v6358 = vpow.pop %v6357
        %v6359 = vmul.f32 %v6148, 1.442695
        %v6360 = vpow.pop %v6359
        %v6361 = vmul.f32 %v6149, 1.442695
        %v6362 = vpow.pop %v6361
        %v6363 = vmul.f32 %v6150, 1.442695
        %v6364 = vpow.pop %v6363
        %v6365 = vmul.f32 %v6151, 1.442695
        %v6366 = vpow.pop %v6365
        %v6367 = vmul.f32 %v6152, 1.442695
        %v6368 = vpow.pop %v6367
        %v6369 = vmul.f32 %v6153, 1.442695
        %v6370 = vpow.pop %v6369
        %v6371 = vmul.f32 %v6154, 1.442695
        %v6372 = vpow.pop %v6371
        %v6373 = vmul.f32 %v6155, 1.442695
        %v6374 = vpow.pop %v6373
        %v6375 = vmul.f32 %v6156, 1.442695
        %v6376 = vpow.pop %v6375
        %v6377 = vmul.f32 %v6157, 1.442695
        %v6378 = vpow.pop %v6377
        %v6379 = vmul.f32 %v6158, 1.442695
        %v6380 = vpow.pop %v6379
        %v6381 = vmul.f32 %v6159, 1.442695
        %v6382 = vpow.pop %v6381
        %v6383 = vmul.f32 %v6160, 1.442695
        %v6384 = vpow.pop %v6383
        %v6385 = vmul.f32 %v6161, 1.442695
        %v6386 = vpow.pop %v6385
        %v6387 = vmul.f32 %v6162, 1.442695
        %v6388 = vpow.pop %v6387
        %v6389 = vmul.f32 %v6163, 1.442695
        %v6390 = vpow.pop %v6389
        %v6391 = vmul.f32 %v6164, 1.442695
        %v6392 = vpow.pop %v6391
        %v6393 = vmul.f32 %v6165, 1.442695
        %v6394 = vpow.pop %v6393
        %v6395 = vmul.f32 %v6166, 1.442695
        %v6396 = vpow.pop %v6395
        %v6397 = vmul.f32 %v6167, 1.442695
        %v6398 = vpow.pop %v6397
        %v6399 = vmul.f32 %v6168, 1.442695
        %v6400 = vpow.pop %v6399
        %v6401 = vmul.f32 %v6169, 1.442695
        %v6402 = vpow.pop %v6401
        %v6403 = vmul.f32 %v6170, 1.442695
        %v6404 = vpow.pop %v6403
        %v6405 = vmul.f32 %v6171, 1.442695
        %v6406 = vpow.pop %v6405
        %v6407 = vmul.f32 %v6172, 1.442695
        %v6408 = vpow.pop %v6407
        %v6409 = vmul.f32 %v6173, 1.442695
        %v6410 = vpow.pop %v6409
        %v6411 = vmul.f32 %v6174, 1.442695
        %v6412 = vpow.pop %v6411
        %v6413 = vmul.f32 %v6175, 1.442695
        %v6414 = vpow.pop %v6413
        %v6415 = vmul.f32 %v6176, 1.442695
        %v6416 = vpow.pop %v6415
        %v6417 = vmul.f32 %v6177, 1.442695
        %v6418 = vpow.pop %v6417
        %v6419 = vmul.f32 %v6178, 1.442695
        %v6420 = vpow.pop %v6419
        %v6421 = vmul.f32 %v6179, 1.442695
        %v6422 = vpow.pop %v6421
        %v6423 = vmul.f32 %v6180, 1.442695
        %v6424 = vpow.pop %v6423
        %v6425 = vmul.f32 %v6181, 1.442695
        %v6426 = vpow.pop %v6425
        %v6427 = vmul.f32 %v6182, 1.442695
        %v6428 = vpow.pop %v6427
        %v6429 = vmul.f32 %v6183, 1.442695
        %v6430 = vpow.pop %v6429
        %v6431 = vmul.f32 %v6184, 1.442695
        %v6432 = vpow.pop %v6431
        %v6433 = vmul.f32 %v6185, 1.442695
        %v6434 = vpow.pop %v6433
        %v6435 = vmul.f32 %v6186, 1.442695
        %v6436 = vpow.pop %v6435
        %v6437 = vmul.f32 %v6187, 1.442695
        %v6438 = vpow.pop %v6437
        %v6439 = vmul.f32 %v6188, 1.442695
        %v6440 = vpow.pop %v6439
        %v6441 = vmul.f32 %v6189, 1.442695
        %v6442 = vpow.pop %v6441
        %v6443 = vmul.f32 %v6190, 1.442695
        %v6444 = vpow.pop %v6443
        %v6445 = vmul.f32 %v6191, 1.442695
        %v6446 = vpow.pop %v6445
        %v6447 = vmul.f32 %v6192, 1.442695
        %v6448 = vpow.pop %v6447
        %v6449 = vmul.f32 %v6193, 1.442695
        %v6450 = vpow.pop %v6449
        %v6451 = vmul.f32 %v6194, 1.442695
        %v6452 = vpow.pop %v6451
        %v6453 = vmul.f32 %v6195, 1.442695
        %v6454 = vpow.pop %v6453
        %v6455 = vmul.f32 %v6196, 1.442695
        %v6456 = vpow.pop %v6455
        %v6457 = vmul.f32 %v6197, 1.442695
        %v6458 = vpow.pop %v6457
        %v6459 = vmul.f32 %v6198, 1.442695
        %v6460 = vpow.pop %v6459
        %v6461 = vmul.f32 %v6199, 1.442695
        %v6462 = vpow.pop %v6461
        %v6463 = vmul.f32 %v6200, 1.442695
        %v6464 = vpow.pop %v6463
        %v6465 = vmul.f32 %v6201, 1.442695
        %v6466 = vpow.pop %v6465
        %v6467 = vmul.f32 %v6202, 1.442695
        %v6468 = vpow.pop %v6467
        %v6469 = vmul.f32 %v6203, 1.442695
        %v6470 = vpow.pop %v6469
        %v6471 = vmul.f32 %v6204, 1.442695
        %v6472 = vpow.pop %v6471
        %v6473 = vmul.f32 %v6205, 1.442695
        %v6474 = vpow.pop %v6473
        %v6475 = vmul.f32 %v6206, 1.442695
        %v6476 = vpow.pop %v6475
        %v6477 = vmul.f32 %v6207, 1.442695
        %v6478 = vpow.pop %v6477
        %v6479 = vmul.f32 %v6208, 1.442695
        %v6480 = vpow.pop %v6479
        %v6481 = vmul.f32 %v6209, 1.442695
        %v6482 = vpow.pop %v6481
        %v6483 = vmul.f32 %v6210, 1.442695
        %v6484 = vpow.pop %v6483
        %v6485 = vmul.f32 %v6211, 1.442695
        %v6486 = vpow.pop %v6485
        %v6487 = vmul.f32 %v6212, 1.442695
        %v6488 = vpow.pop %v6487
        %v6489 = vmul.f32 %v6213, 1.442695
        %v6490 = vpow.pop %v6489
        %v6491 = vmul.f32 %v6214, 1.442695
        %v6492 = vpow.pop %v6491
        %v6493 = vmul.f32 %v6215, 1.442695
        %v6494 = vpow.pop %v6493
        %v6495 = vmul.f32 %v6216, 1.442695
        %v6496 = vpow.pop %v6495
        %v6497 = vmul.f32 %v6217, 1.442695
        %v6498 = vpow.pop %v6497
        %v6499 = vmul.f32 %v6218, 1.442695
        %v6500 = vpow.pop %v6499
        %v6501 = vmul.f32 %v6219, 1.442695
        %v6502 = vpow.pop %v6501
        %v6503 = vmul.f32 %v6220, 1.442695
        %v6504 = vpow.pop %v6503
        %v6505 = vmul.f32 %v6221, 1.442695
        %v6506 = vpow.pop %v6505
        %v6507 = vmul.f32 %v6222, 1.442695
        %v6508 = vpow.pop %v6507
        %v6509 = vmul.f32 %v6223, 1.442695
        %v6510 = vpow.pop %v6509
        %v6511 = vmul.f32 %v6224, 1.442695
        %v6512 = vpow.pop %v6511
        %v6513 = vmul.f32 %v6225, 1.442695
        %v6514 = vpow.pop %v6513
        %v6515 = vmul.f32 %v6226, 1.442695
        %v6516 = vpow.pop %v6515
        %v6517 = vmul.f32 %v6227, 1.442695
        %v6518 = vpow.pop %v6517
        %v6519 = vmul.f32 %v6228, 1.442695
        %v6520 = vpow.pop %v6519
        %v6521 = vmul.f32 %v6229, 1.442695
        %v6522 = vpow.pop %v6521
        %v6523 = vmul.f32 %v6230, 1.442695
        %v6524 = vpow.pop %v6523
        %v6525 = vmul.f32 %v6231, 1.442695
        %v6526 = vpow.pop %v6525
        %v6527 = vmul.f32 %v6232, 1.442695
        %v6528 = vpow.pop %v6527
        %v6529 = vmul.f32 %v6233, 1.442695
        %v6530 = vpow.pop %v6529
        %v6531 = vmul.f32 %v6234, 1.442695
        %v6532 = vpow.pop %v6531
        %v6533 = vmul.f32 %v6235, 1.442695
        %v6534 = vpow.pop %v6533
        %v6535 = vmul.f32 %v6236, 1.442695
        %v6536 = vpow.pop %v6535
        %v6537 = vmul.f32 %v6237, 1.442695
        %v6538 = vpow.pop %v6537
        %v6539 = vmul.f32 %v6238, 1.442695
        %v6540 = vpow.pop %v6539
        %v6541 = vmul.f32 %v6239, 1.442695
        %v6542 = vpow.pop %v6541
        %v6543 = vmul.f32 %v6240, 1.442695
        %v6544 = vpow.pop %v6543
        %v6545 = vmul.f32 %v6241, 1.442695
        %v6546 = vpow.pop %v6545
        %v6547 = vmul.f32 %v6242, 1.442695
        %v6548 = vpow.pop %v6547
        %v6549 = vmul.f32 %v6243, 1.442695
        %v6550 = vpow.pop %v6549
        %v6551 = vmul.f32 %v6244, 1.442695
        %v6552 = vpow.pop %v6551
        %v6553 = vmul.f32 %v6245, 1.442695
        %v6554 = vpow.pop %v6553
        %v6555 = vmul.f32 %v6246, 1.442695
        %v6556 = vpow.pop %v6555
        %v6557 = vmul.f32 %v6247, 1.442695
        %v6558 = vpow.pop %v6557
        %v6559 = vmul.f32 %v6248, 1.442695
        %v6560 = vpow.pop %v6559
        %v6561 = vmul.f32 %v6249, 1.442695
        %v6562 = vpow.pop %v6561
        %v6563 = vmul.f32 %v6250, 1.442695
        %v6564 = vpow.pop %v6563
        %v6565 = vmul.f32 %v6251, 1.442695
        %v6566 = vpow.pop %v6565
        %v6567 = vmul.f32 %v6252, 1.442695
        %v6568 = vpow.pop %v6567
        %v6569 = vmul.f32 %v6253, 1.442695
        %v6570 = vpow.pop %v6569
        %v6571 = vmul.f32 %v6254, 1.442695
        %v6572 = vpow.pop %v6571
        %v6573 = vmul.f32 %v6255, 1.442695
        %v6574 = vpow.pop %v6573
        %v6575 = vmul.f32 %v6256, 1.442695
        %v6576 = vpow.pop %v6575
        %v6577 = vadd.f32 %v6258, 1.0
        %v6578 = vadd.f32 %v6260, 1.0
        %v6579 = vadd.f32 %v6262, 1.0
        %v6580 = vadd.f32 %v6264, 1.0
        %v6581 = vadd.f32 %v6266, 1.0
        %v6582 = vadd.f32 %v6268, 1.0
        %v6583 = vadd.f32 %v6270, 1.0
        %v6584 = vadd.f32 %v6272, 1.0
        %v6585 = vadd.f32 %v6274, 1.0
        %v6586 = vadd.f32 %v6276, 1.0
        %v6587 = vadd.f32 %v6278, 1.0
        %v6588 = vadd.f32 %v6280, 1.0
        %v6589 = vadd.f32 %v6282, 1.0
        %v6590 = vadd.f32 %v6284, 1.0
        %v6591 = vadd.f32 %v6286, 1.0
        %v6592 = vadd.f32 %v6288, 1.0
        %v6593 = vadd.f32 %v6290, 1.0
        %v6594 = vadd.f32 %v6292, 1.0
        %v6595 = vadd.f32 %v6294, 1.0
        %v6596 = vadd.f32 %v6296, 1.0
        %v6597 = vadd.f32 %v6298, 1.0
        %v6598 = vadd.f32 %v6300, 1.0
        %v6599 = vadd.f32 %v6302, 1.0
        %v6600 = vadd.f32 %v6304, 1.0
        %v6601 = vadd.f32 %v6306, 1.0
        %v6602 = vadd.f32 %v6308, 1.0
        %v6603 = vadd.f32 %v6310, 1.0
        %v6604 = vadd.f32 %v6312, 1.0
        %v6605 = vadd.f32 %v6314, 1.0
        %v6606 = vadd.f32 %v6316, 1.0
        %v6607 = vadd.f32 %v6318, 1.0
        %v6608 = vadd.f32 %v6320, 1.0
        %v6609 = vadd.f32 %v6322, 1.0
        %v6610 = vadd.f32 %v6324, 1.0
        %v6611 = vadd.f32 %v6326, 1.0
        %v6612 = vadd.f32 %v6328, 1.0
        %v6613 = vadd.f32 %v6330, 1.0
        %v6614 = vadd.f32 %v6332, 1.0
        %v6615 = vadd.f32 %v6334, 1.0
        %v6616 = vadd.f32 %v6336, 1.0
        %v6617 = vadd.f32 %v6338, 1.0
        %v6618 = vadd.f32 %v6340, 1.0
        %v6619 = vadd.f32 %v6342, 1.0
        %v6620 = vadd.f32 %v6344, 1.0
        %v6621 = vadd.f32 %v6346, 1.0
        %v6622 = vadd.f32 %v6348, 1.0
        %v6623 = vadd.f32 %v6350, 1.0
        %v6624 = vadd.f32 %v6352, 1.0
        %v6625 = vadd.f32 %v6354, 1.0
        %v6626 = vadd.f32 %v6356, 1.0
        %v6627 = vadd.f32 %v6358, 1.0
        %v6628 = vadd.f32 %v6360, 1.0
        %v6629 = vadd.f32 %v6362, 1.0
        %v6630 = vadd.f32 %v6364, 1.0
        %v6631 = vadd.f32 %v6366, 1.0
        %v6632 = vadd.f32 %v6368, 1.0
        %v6633 = vadd.f32 %v6370, 1.0
        %v6634 = vadd.f32 %v6372, 1.0
        %v6635 = vadd.f32 %v6374, 1.0
        %v6636 = vadd.f32 %v6376, 1.0
        %v6637 = vadd.f32 %v6378, 1.0
        %v6638 = vadd.f32 %v6380, 1.0
        %v6639 = vadd.f32 %v6382, 1.0
        %v6640 = vadd.f32 %v6384, 1.0
        %v6641 = vadd.f32 %v6386, 1.0
        %v6642 = vadd.f32 %v6388, 1.0
        %v6643 = vadd.f32 %v6390, 1.0
        %v6644 = vadd.f32 %v6392, 1.0
        %v6645 = vadd.f32 %v6394, 1.0
        %v6646 = vadd.f32 %v6396, 1.0
        %v6647 = vadd.f32 %v6398, 1.0
        %v6648 = vadd.f32 %v6400, 1.0
        %v6649 = vadd.f32 %v6402, 1.0
        %v6650 = vadd.f32 %v6404, 1.0
        %v6651 = vadd.f32 %v6406, 1.0
        %v6652 = vadd.f32 %v6408, 1.0
        %v6653 = vadd.f32 %v6410, 1.0
        %v6654 = vadd.f32 %v6412, 1.0
        %v6655 = vadd.f32 %v6414, 1.0
        %v6656 = vadd.f32 %v6416, 1.0
        %v6657 = vadd.f32 %v6418, 1.0
        %v6658 = vadd.f32 %v6420, 1.0
        %v6659 = vadd.f32 %v6422, 1.0
        %v6660 = vadd.f32 %v6424, 1.0
        %v6661 = vadd.f32 %v6426, 1.0
        %v6662 = vadd.f32 %v6428, 1.0
        %v6663 = vadd.f32 %v6430, 1.0
        %v6664 = vadd.f32 %v6432, 1.0
        %v6665 = vadd.f32 %v6434, 1.0
        %v6666 = vadd.f32 %v6436, 1.0
        %v6667 = vadd.f32 %v6438, 1.0
        %v6668 = vadd.f32 %v6440, 1.0
        %v6669 = vadd.f32 %v6442, 1.0
        %v6670 = vadd.f32 %v6444, 1.0
        %v6671 = vadd.f32 %v6446, 1.0
        %v6672 = vadd.f32 %v6448, 1.0
        %v6673 = vadd.f32 %v6450, 1.0
        %v6674 = vadd.f32 %v6452, 1.0
        %v6675 = vadd.f32 %v6454, 1.0
        %v6676 = vadd.f32 %v6456, 1.0
        %v6677 = vadd.f32 %v6458, 1.0
        %v6678 = vadd.f32 %v6460, 1.0
        %v6679 = vadd.f32 %v6462, 1.0
        %v6680 = vadd.f32 %v6464, 1.0
        %v6681 = vadd.f32 %v6466, 1.0
        %v6682 = vadd.f32 %v6468, 1.0
        %v6683 = vadd.f32 %v6470, 1.0
        %v6684 = vadd.f32 %v6472, 1.0
        %v6685 = vadd.f32 %v6474, 1.0
        %v6686 = vadd.f32 %v6476, 1.0
        %v6687 = vadd.f32 %v6478, 1.0
        %v6688 = vadd.f32 %v6480, 1.0
        %v6689 = vadd.f32 %v6482, 1.0
        %v6690 = vadd.f32 %v6484, 1.0
        %v6691 = vadd.f32 %v6486, 1.0
        %v6692 = vadd.f32 %v6488, 1.0
        %v6693 = vadd.f32 %v6490, 1.0
        %v6694 = vadd.f32 %v6492, 1.0
        %v6695 = vadd.f32 %v6494, 1.0
        %v6696 = vadd.f32 %v6496, 1.0
        %v6697 = vadd.f32 %v6498, 1.0
        %v6698 = vadd.f32 %v6500, 1.0
        %v6699 = vadd.f32 %v6502, 1.0
        %v6700 = vadd.f32 %v6504, 1.0
        %v6701 = vadd.f32 %v6506, 1.0
        %v6702 = vadd.f32 %v6508, 1.0
        %v6703 = vadd.f32 %v6510, 1.0
        %v6704 = vadd.f32 %v6512, 1.0
        %v6705 = vadd.f32 %v6514, 1.0
        %v6706 = vadd.f32 %v6516, 1.0
        %v6707 = vadd.f32 %v6518, 1.0
        %v6708 = vadd.f32 %v6520, 1.0
        %v6709 = vadd.f32 %v6522, 1.0
        %v6710 = vadd.f32 %v6524, 1.0
        %v6711 = vadd.f32 %v6526, 1.0
        %v6712 = vadd.f32 %v6528, 1.0
        %v6713 = vadd.f32 %v6530, 1.0
        %v6714 = vadd.f32 %v6532, 1.0
        %v6715 = vadd.f32 %v6534, 1.0
        %v6716 = vadd.f32 %v6536, 1.0
        %v6717 = vadd.f32 %v6538, 1.0
        %v6718 = vadd.f32 %v6540, 1.0
        %v6719 = vadd.f32 %v6542, 1.0
        %v6720 = vadd.f32 %v6544, 1.0
        %v6721 = vadd.f32 %v6546, 1.0
        %v6722 = vadd.f32 %v6548, 1.0
        %v6723 = vadd.f32 %v6550, 1.0
        %v6724 = vadd.f32 %v6552, 1.0
        %v6725 = vadd.f32 %v6554, 1.0
        %v6726 = vadd.f32 %v6556, 1.0
        %v6727 = vadd.f32 %v6558, 1.0
        %v6728 = vadd.f32 %v6560, 1.0
        %v6729 = vadd.f32 %v6562, 1.0
        %v6730 = vadd.f32 %v6564, 1.0
        %v6731 = vadd.f32 %v6566, 1.0
        %v6732 = vadd.f32 %v6568, 1.0
        %v6733 = vadd.f32 %v6570, 1.0
        %v6734 = vadd.f32 %v6572, 1.0
        %v6735 = vadd.f32 %v6574, 1.0
        %v6736 = vadd.f32 %v6576, 1.0
        %v6737 = vrcp.pop %v6577
        %v6738 = vmul.f32 %v6577, %v6737
        %v6739 = vsub.f32 1.0, %v6738
        %v6740 = vmul.f32 %v6737, %v6739
        %v6741 = vadd.f32 %v6737, %v6740
        %vm6742 = vweird.f32 %v6577
        %vm6743 = vweird.f32 %v6737
        %vm6744 = vmor %vm6742, %vm6743
        %v6745 = vsel %vm6744, %v6737, %v6741
        %v6746 = vand.u32 2147483647, %v6577
        %vm6747 = vcmp.eq.f32.partialorder %v6746, 8.507059e+37
        %v6748 = vand.u32 %v6577, 2147483648
        %v6749 = vor.u32 1.1754944e-38, %v6748
        %v6750 = vsel %vm6747, %v6749, %v6745
        %v6751 = vmul.f32 1.0, %v6750
        %v6752 = vrcp.pop %v6578
        %v6753 = vmul.f32 %v6578, %v6752
        %v6754 = vsub.f32 1.0, %v6753
        %v6755 = vmul.f32 %v6752, %v6754
        %v6756 = vadd.f32 %v6752, %v6755
        %vm6757 = vweird.f32 %v6578
        %vm6758 = vweird.f32 %v6752
        %vm6759 = vmor %vm6757, %vm6758
        %v6760 = vsel %vm6759, %v6752, %v6756
        %v6761 = vand.u32 2147483647, %v6578
        %vm6762 = vcmp.eq.f32.partialorder %v6761, 8.507059e+37
        %v6763 = vand.u32 %v6578, 2147483648
        %v6764 = vor.u32 1.1754944e-38, %v6763
        %v6765 = vsel %vm6762, %v6764, %v6760
        %v6766 = vmul.f32 1.0, %v6765
        %v6767 = vrcp.pop %v6579
        %v6768 = vmul.f32 %v6579, %v6767
        %v6769 = vsub.f32 1.0, %v6768
        %v6770 = vmul.f32 %v6767, %v6769
        %v6771 = vadd.f32 %v6767, %v6770
        %vm6772 = vweird.f32 %v6579
        %vm6773 = vweird.f32 %v6767
        %vm6774 = vmor %vm6772, %vm6773
        %v6775 = vsel %vm6774, %v6767, %v6771
        %v6776 = vand.u32 2147483647, %v6579
        %vm6777 = vcmp.eq.f32.partialorder %v6776, 8.507059e+37
        %v6778 = vand.u32 %v6579, 2147483648
        %v6779 = vor.u32 1.1754944e-38, %v6778
        %v6780 = vsel %vm6777, %v6779, %v6775
        %v6781 = vmul.f32 1.0, %v6780
        %v6782 = vrcp.pop %v6580
        %v6783 = vmul.f32 %v6580, %v6782
        %v6784 = vsub.f32 1.0, %v6783
        %v6785 = vmul.f32 %v6782, %v6784
        %v6786 = vadd.f32 %v6782, %v6785
        %vm6787 = vweird.f32 %v6580
        %vm6788 = vweird.f32 %v6782
        %vm6789 = vmor %vm6787, %vm6788
        %v6790 = vsel %vm6789, %v6782, %v6786
        %v6791 = vand.u32 2147483647, %v6580
        %vm6792 = vcmp.eq.f32.partialorder %v6791, 8.507059e+37
        %v6793 = vand.u32 %v6580, 2147483648
        %v6794 = vor.u32 1.1754944e-38, %v6793
        %v6795 = vsel %vm6792, %v6794, %v6790
        %v6796 = vmul.f32 1.0, %v6795
        %v6797 = vrcp.pop %v6581
        %v6798 = vmul.f32 %v6581, %v6797
        %v6799 = vsub.f32 1.0, %v6798
        %v6800 = vmul.f32 %v6797, %v6799
        %v6801 = vadd.f32 %v6797, %v6800
        %vm6802 = vweird.f32 %v6581
        %vm6803 = vweird.f32 %v6797
        %vm6804 = vmor %vm6802, %vm6803
        %v6805 = vsel %vm6804, %v6797, %v6801
        %v6806 = vand.u32 2147483647, %v6581
        %vm6807 = vcmp.eq.f32.partialorder %v6806, 8.507059e+37
        %v6808 = vand.u32 %v6581, 2147483648
        %v6809 = vor.u32 1.1754944e-38, %v6808
        %v6810 = vsel %vm6807, %v6809, %v6805
        %v6811 = vmul.f32 1.0, %v6810
        %v6812 = vrcp.pop %v6582
        %v6813 = vmul.f32 %v6582, %v6812
        %v6814 = vsub.f32 1.0, %v6813
        %v6815 = vmul.f32 %v6812, %v6814
        %v6816 = vadd.f32 %v6812, %v6815
        %vm6817 = vweird.f32 %v6582
        %vm6818 = vweird.f32 %v6812
        %vm6819 = vmor %vm6817, %vm6818
        %v6820 = vsel %vm6819, %v6812, %v6816
        %v6821 = vand.u32 2147483647, %v6582
        %vm6822 = vcmp.eq.f32.partialorder %v6821, 8.507059e+37
        %v6823 = vand.u32 %v6582, 2147483648
        %v6824 = vor.u32 1.1754944e-38, %v6823
        %v6825 = vsel %vm6822, %v6824, %v6820
        %v6826 = vmul.f32 1.0, %v6825
        %v6827 = vrcp.pop %v6583
        %v6828 = vmul.f32 %v6583, %v6827
        %v6829 = vsub.f32 1.0, %v6828
        %v6830 = vmul.f32 %v6827, %v6829
        %v6831 = vadd.f32 %v6827, %v6830
        %vm6832 = vweird.f32 %v6583
        %vm6833 = vweird.f32 %v6827
        %vm6834 = vmor %vm6832, %vm6833
        %v6835 = vsel %vm6834, %v6827, %v6831
        %v6836 = vand.u32 2147483647, %v6583
        %vm6837 = vcmp.eq.f32.partialorder %v6836, 8.507059e+37
        %v6838 = vand.u32 %v6583, 2147483648
        %v6839 = vor.u32 1.1754944e-38, %v6838
        %v6840 = vsel %vm6837, %v6839, %v6835
        %v6841 = vmul.f32 1.0, %v6840
        %v6842 = vrcp.pop %v6584
        %v6843 = vmul.f32 %v6584, %v6842
        %v6844 = vsub.f32 1.0, %v6843
        %v6845 = vmul.f32 %v6842, %v6844
        %v6846 = vadd.f32 %v6842, %v6845
        %vm6847 = vweird.f32 %v6584
        %vm6848 = vweird.f32 %v6842
        %vm6849 = vmor %vm6847, %vm6848
        %v6850 = vsel %vm6849, %v6842, %v6846
        %v6851 = vand.u32 2147483647, %v6584
        %vm6852 = vcmp.eq.f32.partialorder %v6851, 8.507059e+37
        %v6853 = vand.u32 %v6584, 2147483648
        %v6854 = vor.u32 1.1754944e-38, %v6853
        %v6855 = vsel %vm6852, %v6854, %v6850
        %v6856 = vmul.f32 1.0, %v6855
        %v6857 = vrcp.pop %v6585
        %v6858 = vmul.f32 %v6585, %v6857
        %v6859 = vsub.f32 1.0, %v6858
        %v6860 = vmul.f32 %v6857, %v6859
        %v6861 = vadd.f32 %v6857, %v6860
        %vm6862 = vweird.f32 %v6585
        %vm6863 = vweird.f32 %v6857
        %vm6864 = vmor %vm6862, %vm6863
        %v6865 = vsel %vm6864, %v6857, %v6861
        %v6866 = vand.u32 2147483647, %v6585
        %vm6867 = vcmp.eq.f32.partialorder %v6866, 8.507059e+37
        %v6868 = vand.u32 %v6585, 2147483648
        %v6869 = vor.u32 1.1754944e-38, %v6868
        %v6870 = vsel %vm6867, %v6869, %v6865
        %v6871 = vmul.f32 1.0, %v6870
        %v6872 = vrcp.pop %v6586
        %v6873 = vmul.f32 %v6586, %v6872
        %v6874 = vsub.f32 1.0, %v6873
        %v6875 = vmul.f32 %v6872, %v6874
        %v6876 = vadd.f32 %v6872, %v6875
        %vm6877 = vweird.f32 %v6586
        %vm6878 = vweird.f32 %v6872
        %vm6879 = vmor %vm6877, %vm6878
        %v6880 = vsel %vm6879, %v6872, %v6876
        %v6881 = vand.u32 2147483647, %v6586
        %vm6882 = vcmp.eq.f32.partialorder %v6881, 8.507059e+37
        %v6883 = vand.u32 %v6586, 2147483648
        %v6884 = vor.u32 1.1754944e-38, %v6883
        %v6885 = vsel %vm6882, %v6884, %v6880
        %v6886 = vmul.f32 1.0, %v6885
        %v6887 = vrcp.pop %v6587
        %v6888 = vmul.f32 %v6587, %v6887
        %v6889 = vsub.f32 1.0, %v6888
        %v6890 = vmul.f32 %v6887, %v6889
        %v6891 = vadd.f32 %v6887, %v6890
        %vm6892 = vweird.f32 %v6587
        %vm6893 = vweird.f32 %v6887
        %vm6894 = vmor %vm6892, %vm6893
        %v6895 = vsel %vm6894, %v6887, %v6891
        %v6896 = vand.u32 2147483647, %v6587
        %vm6897 = vcmp.eq.f32.partialorder %v6896, 8.507059e+37
        %v6898 = vand.u32 %v6587, 2147483648
        %v6899 = vor.u32 1.1754944e-38, %v6898
        %v6900 = vsel %vm6897, %v6899, %v6895
        %v6901 = vmul.f32 1.0, %v6900
        %v6902 = vrcp.pop %v6588
        %v6903 = vmul.f32 %v6588, %v6902
        %v6904 = vsub.f32 1.0, %v6903
        %v6905 = vmul.f32 %v6902, %v6904
        %v6906 = vadd.f32 %v6902, %v6905
        %vm6907 = vweird.f32 %v6588
        %vm6908 = vweird.f32 %v6902
        %vm6909 = vmor %vm6907, %vm6908
        %v6910 = vsel %vm6909, %v6902, %v6906
        %v6911 = vand.u32 2147483647, %v6588
        %vm6912 = vcmp.eq.f32.partialorder %v6911, 8.507059e+37
        %v6913 = vand.u32 %v6588, 2147483648
        %v6914 = vor.u32 1.1754944e-38, %v6913
        %v6915 = vsel %vm6912, %v6914, %v6910
        %v6916 = vmul.f32 1.0, %v6915
        %v6917 = vrcp.pop %v6589
        %v6918 = vmul.f32 %v6589, %v6917
        %v6919 = vsub.f32 1.0, %v6918
        %v6920 = vmul.f32 %v6917, %v6919
        %v6921 = vadd.f32 %v6917, %v6920
        %vm6922 = vweird.f32 %v6589
        %vm6923 = vweird.f32 %v6917
        %vm6924 = vmor %vm6922, %vm6923
        %v6925 = vsel %vm6924, %v6917, %v6921
        %v6926 = vand.u32 2147483647, %v6589
        %vm6927 = vcmp.eq.f32.partialorder %v6926, 8.507059e+37
        %v6928 = vand.u32 %v6589, 2147483648
        %v6929 = vor.u32 1.1754944e-38, %v6928
        %v6930 = vsel %vm6927, %v6929, %v6925
        %v6931 = vmul.f32 1.0, %v6930
        %v6932 = vrcp.pop %v6590
        %v6933 = vmul.f32 %v6590, %v6932
        %v6934 = vsub.f32 1.0, %v6933
        %v6935 = vmul.f32 %v6932, %v6934
        %v6936 = vadd.f32 %v6932, %v6935
        %vm6937 = vweird.f32 %v6590
        %vm6938 = vweird.f32 %v6932
        %vm6939 = vmor %vm6937, %vm6938
        %v6940 = vsel %vm6939, %v6932, %v6936
        %v6941 = vand.u32 2147483647, %v6590
        %vm6942 = vcmp.eq.f32.partialorder %v6941, 8.507059e+37
        %v6943 = vand.u32 %v6590, 2147483648
        %v6944 = vor.u32 1.1754944e-38, %v6943
        %v6945 = vsel %vm6942, %v6944, %v6940
        %v6946 = vmul.f32 1.0, %v6945
        %v6947 = vrcp.pop %v6591
        %v6948 = vmul.f32 %v6591, %v6947
        %v6949 = vsub.f32 1.0, %v6948
        %v6950 = vmul.f32 %v6947, %v6949
        %v6951 = vadd.f32 %v6947, %v6950
        %vm6952 = vweird.f32 %v6591
        %vm6953 = vweird.f32 %v6947
        %vm6954 = vmor %vm6952, %vm6953
        %v6955 = vsel %vm6954, %v6947, %v6951
        %v6956 = vand.u32 2147483647, %v6591
        %vm6957 = vcmp.eq.f32.partialorder %v6956, 8.507059e+37
        %v6958 = vand.u32 %v6591, 2147483648
        %v6959 = vor.u32 1.1754944e-38, %v6958
        %v6960 = vsel %vm6957, %v6959, %v6955
        %v6961 = vmul.f32 1.0, %v6960
        %v6962 = vrcp.pop %v6592
        %v6963 = vmul.f32 %v6592, %v6962
        %v6964 = vsub.f32 1.0, %v6963
        %v6965 = vmul.f32 %v6962, %v6964
        %v6966 = vadd.f32 %v6962, %v6965
        %vm6967 = vweird.f32 %v6592
        %vm6968 = vweird.f32 %v6962
        %vm6969 = vmor %vm6967, %vm6968
        %v6970 = vsel %vm6969, %v6962, %v6966
        %v6971 = vand.u32 2147483647, %v6592
        %vm6972 = vcmp.eq.f32.partialorder %v6971, 8.507059e+37
        %v6973 = vand.u32 %v6592, 2147483648
        %v6974 = vor.u32 1.1754944e-38, %v6973
        %v6975 = vsel %vm6972, %v6974, %v6970
        %v6976 = vmul.f32 1.0, %v6975
        %v6977 = vrcp.pop %v6593
        %v6978 = vmul.f32 %v6593, %v6977
        %v6979 = vsub.f32 1.0, %v6978
        %v6980 = vmul.f32 %v6977, %v6979
        %v6981 = vadd.f32 %v6977, %v6980
        %vm6982 = vweird.f32 %v6593
        %vm6983 = vweird.f32 %v6977
        %vm6984 = vmor %vm6982, %vm6983
        %v6985 = vsel %vm6984, %v6977, %v6981
        %v6986 = vand.u32 2147483647, %v6593
        %vm6987 = vcmp.eq.f32.partialorder %v6986, 8.507059e+37
        %v6988 = vand.u32 %v6593, 2147483648
        %v6989 = vor.u32 1.1754944e-38, %v6988
        %v6990 = vsel %vm6987, %v6989, %v6985
        %v6991 = vmul.f32 1.0, %v6990
        %v6992 = vrcp.pop %v6594
        %v6993 = vmul.f32 %v6594, %v6992
        %v6994 = vsub.f32 1.0, %v6993
        %v6995 = vmul.f32 %v6992, %v6994
        %v6996 = vadd.f32 %v6992, %v6995
        %vm6997 = vweird.f32 %v6594
        %vm6998 = vweird.f32 %v6992
        %vm6999 = vmor %vm6997, %vm6998
        %v7000 = vsel %vm6999, %v6992, %v6996
        %v7001 = vand.u32 2147483647, %v6594
        %vm7002 = vcmp.eq.f32.partialorder %v7001, 8.507059e+37
        %v7003 = vand.u32 %v6594, 2147483648
        %v7004 = vor.u32 1.1754944e-38, %v7003
        %v7005 = vsel %vm7002, %v7004, %v7000
        %v7006 = vmul.f32 1.0, %v7005
        %v7007 = vrcp.pop %v6595
        %v7008 = vmul.f32 %v6595, %v7007
        %v7009 = vsub.f32 1.0, %v7008
        %v7010 = vmul.f32 %v7007, %v7009
        %v7011 = vadd.f32 %v7007, %v7010
        %vm7012 = vweird.f32 %v6595
        %vm7013 = vweird.f32 %v7007
        %vm7014 = vmor %vm7012, %vm7013
        %v7015 = vsel %vm7014, %v7007, %v7011
        %v7016 = vand.u32 2147483647, %v6595
        %vm7017 = vcmp.eq.f32.partialorder %v7016, 8.507059e+37
        %v7018 = vand.u32 %v6595, 2147483648
        %v7019 = vor.u32 1.1754944e-38, %v7018
        %v7020 = vsel %vm7017, %v7019, %v7015
        %v7021 = vmul.f32 1.0, %v7020
        %v7022 = vrcp.pop %v6596
        %v7023 = vmul.f32 %v6596, %v7022
        %v7024 = vsub.f32 1.0, %v7023
        %v7025 = vmul.f32 %v7022, %v7024
        %v7026 = vadd.f32 %v7022, %v7025
        %vm7027 = vweird.f32 %v6596
        %vm7028 = vweird.f32 %v7022
        %vm7029 = vmor %vm7027, %vm7028
        %v7030 = vsel %vm7029, %v7022, %v7026
        %v7031 = vand.u32 2147483647, %v6596
        %vm7032 = vcmp.eq.f32.partialorder %v7031, 8.507059e+37
        %v7033 = vand.u32 %v6596, 2147483648
        %v7034 = vor.u32 1.1754944e-38, %v7033
        %v7035 = vsel %vm7032, %v7034, %v7030
        %v7036 = vmul.f32 1.0, %v7035
        %v7037 = vrcp.pop %v6597
        %v7038 = vmul.f32 %v6597, %v7037
        %v7039 = vsub.f32 1.0, %v7038
        %v7040 = vmul.f32 %v7037, %v7039
        %v7041 = vadd.f32 %v7037, %v7040
        %vm7042 = vweird.f32 %v6597
        %vm7043 = vweird.f32 %v7037
        %vm7044 = vmor %vm7042, %vm7043
        %v7045 = vsel %vm7044, %v7037, %v7041
        %v7046 = vand.u32 2147483647, %v6597
        %vm7047 = vcmp.eq.f32.partialorder %v7046, 8.507059e+37
        %v7048 = vand.u32 %v6597, 2147483648
        %v7049 = vor.u32 1.1754944e-38, %v7048
        %v7050 = vsel %vm7047, %v7049, %v7045
        %v7051 = vmul.f32 1.0, %v7050
        %v7052 = vrcp.pop %v6598
        %v7053 = vmul.f32 %v6598, %v7052
        %v7054 = vsub.f32 1.0, %v7053
        %v7055 = vmul.f32 %v7052, %v7054
        %v7056 = vadd.f32 %v7052, %v7055
        %vm7057 = vweird.f32 %v6598
        %vm7058 = vweird.f32 %v7052
        %vm7059 = vmor %vm7057, %vm7058
        %v7060 = vsel %vm7059, %v7052, %v7056
        %v7061 = vand.u32 2147483647, %v6598
        %vm7062 = vcmp.eq.f32.partialorder %v7061, 8.507059e+37
        %v7063 = vand.u32 %v6598, 2147483648
        %v7064 = vor.u32 1.1754944e-38, %v7063
        %v7065 = vsel %vm7062, %v7064, %v7060
        %v7066 = vmul.f32 1.0, %v7065
        %v7067 = vrcp.pop %v6599
        %v7068 = vmul.f32 %v6599, %v7067
        %v7069 = vsub.f32 1.0, %v7068
        %v7070 = vmul.f32 %v7067, %v7069
        %v7071 = vadd.f32 %v7067, %v7070
        %vm7072 = vweird.f32 %v6599
        %vm7073 = vweird.f32 %v7067
        %vm7074 = vmor %vm7072, %vm7073
        %v7075 = vsel %vm7074, %v7067, %v7071
        %v7076 = vand.u32 2147483647, %v6599
        %vm7077 = vcmp.eq.f32.partialorder %v7076, 8.507059e+37
        %v7078 = vand.u32 %v6599, 2147483648
        %v7079 = vor.u32 1.1754944e-38, %v7078
        %v7080 = vsel %vm7077, %v7079, %v7075
        %v7081 = vmul.f32 1.0, %v7080
        %v7082 = vrcp.pop %v6600
        %v7083 = vmul.f32 %v6600, %v7082
        %v7084 = vsub.f32 1.0, %v7083
        %v7085 = vmul.f32 %v7082, %v7084
        %v7086 = vadd.f32 %v7082, %v7085
        %vm7087 = vweird.f32 %v6600
        %vm7088 = vweird.f32 %v7082
        %vm7089 = vmor %vm7087, %vm7088
        %v7090 = vsel %vm7089, %v7082, %v7086
        %v7091 = vand.u32 2147483647, %v6600
        %vm7092 = vcmp.eq.f32.partialorder %v7091, 8.507059e+37
        %v7093 = vand.u32 %v6600, 2147483648
        %v7094 = vor.u32 1.1754944e-38, %v7093
        %v7095 = vsel %vm7092, %v7094, %v7090
        %v7096 = vmul.f32 1.0, %v7095
        %v7097 = vrcp.pop %v6601
        %v7098 = vmul.f32 %v6601, %v7097
        %v7099 = vsub.f32 1.0, %v7098
        %v7100 = vmul.f32 %v7097, %v7099
        %v7101 = vadd.f32 %v7097, %v7100
        %vm7102 = vweird.f32 %v6601
        %vm7103 = vweird.f32 %v7097
        %vm7104 = vmor %vm7102, %vm7103
        %v7105 = vsel %vm7104, %v7097, %v7101
        %v7106 = vand.u32 2147483647, %v6601
        %vm7107 = vcmp.eq.f32.partialorder %v7106, 8.507059e+37
        %v7108 = vand.u32 %v6601, 2147483648
        %v7109 = vor.u32 1.1754944e-38, %v7108
        %v7110 = vsel %vm7107, %v7109, %v7105
        %v7111 = vmul.f32 1.0, %v7110
        %v7112 = vrcp.pop %v6602
        %v7113 = vmul.f32 %v6602, %v7112
        %v7114 = vsub.f32 1.0, %v7113
        %v7115 = vmul.f32 %v7112, %v7114
        %v7116 = vadd.f32 %v7112, %v7115
        %vm7117 = vweird.f32 %v6602
        %vm7118 = vweird.f32 %v7112
        %vm7119 = vmor %vm7117, %vm7118
        %v7120 = vsel %vm7119, %v7112, %v7116
        %v7121 = vand.u32 2147483647, %v6602
        %vm7122 = vcmp.eq.f32.partialorder %v7121, 8.507059e+37
        %v7123 = vand.u32 %v6602, 2147483648
        %v7124 = vor.u32 1.1754944e-38, %v7123
        %v7125 = vsel %vm7122, %v7124, %v7120
        %v7126 = vmul.f32 1.0, %v7125
        %v7127 = vrcp.pop %v6603
        %v7128 = vmul.f32 %v6603, %v7127
        %v7129 = vsub.f32 1.0, %v7128
        %v7130 = vmul.f32 %v7127, %v7129
        %v7131 = vadd.f32 %v7127, %v7130
        %vm7132 = vweird.f32 %v6603
        %vm7133 = vweird.f32 %v7127
        %vm7134 = vmor %vm7132, %vm7133
        %v7135 = vsel %vm7134, %v7127, %v7131
        %v7136 = vand.u32 2147483647, %v6603
        %vm7137 = vcmp.eq.f32.partialorder %v7136, 8.507059e+37
        %v7138 = vand.u32 %v6603, 2147483648
        %v7139 = vor.u32 1.1754944e-38, %v7138
        %v7140 = vsel %vm7137, %v7139, %v7135
        %v7141 = vmul.f32 1.0, %v7140
        %v7142 = vrcp.pop %v6604
        %v7143 = vmul.f32 %v6604, %v7142
        %v7144 = vsub.f32 1.0, %v7143
        %v7145 = vmul.f32 %v7142, %v7144
        %v7146 = vadd.f32 %v7142, %v7145
        %vm7147 = vweird.f32 %v6604
        %vm7148 = vweird.f32 %v7142
        %vm7149 = vmor %vm7147, %vm7148
        %v7150 = vsel %vm7149, %v7142, %v7146
        %v7151 = vand.u32 2147483647, %v6604
        %vm7152 = vcmp.eq.f32.partialorder %v7151, 8.507059e+37
        %v7153 = vand.u32 %v6604, 2147483648
        %v7154 = vor.u32 1.1754944e-38, %v7153
        %v7155 = vsel %vm7152, %v7154, %v7150
        %v7156 = vmul.f32 1.0, %v7155
        %v7157 = vrcp.pop %v6605
        %v7158 = vmul.f32 %v6605, %v7157
        %v7159 = vsub.f32 1.0, %v7158
        %v7160 = vmul.f32 %v7157, %v7159
        %v7161 = vadd.f32 %v7157, %v7160
        %vm7162 = vweird.f32 %v6605
        %vm7163 = vweird.f32 %v7157
        %vm7164 = vmor %vm7162, %vm7163
        %v7165 = vsel %vm7164, %v7157, %v7161
        %v7166 = vand.u32 2147483647, %v6605
        %vm7167 = vcmp.eq.f32.partialorder %v7166, 8.507059e+37
        %v7168 = vand.u32 %v6605, 2147483648
        %v7169 = vor.u32 1.1754944e-38, %v7168
        %v7170 = vsel %vm7167, %v7169, %v7165
        %v7171 = vmul.f32 1.0, %v7170
        %v7172 = vrcp.pop %v6606
        %v7173 = vmul.f32 %v6606, %v7172
        %v7174 = vsub.f32 1.0, %v7173
        %v7175 = vmul.f32 %v7172, %v7174
        %v7176 = vadd.f32 %v7172, %v7175
        %vm7177 = vweird.f32 %v6606
        %vm7178 = vweird.f32 %v7172
        %vm7179 = vmor %vm7177, %vm7178
        %v7180 = vsel %vm7179, %v7172, %v7176
        %v7181 = vand.u32 2147483647, %v6606
        %vm7182 = vcmp.eq.f32.partialorder %v7181, 8.507059e+37
        %v7183 = vand.u32 %v6606, 2147483648
        %v7184 = vor.u32 1.1754944e-38, %v7183
        %v7185 = vsel %vm7182, %v7184, %v7180
        %v7186 = vmul.f32 1.0, %v7185
        %v7187 = vrcp.pop %v6607
        %v7188 = vmul.f32 %v6607, %v7187
        %v7189 = vsub.f32 1.0, %v7188
        %v7190 = vmul.f32 %v7187, %v7189
        %v7191 = vadd.f32 %v7187, %v7190
        %vm7192 = vweird.f32 %v6607
        %vm7193 = vweird.f32 %v7187
        %vm7194 = vmor %vm7192, %vm7193
        %v7195 = vsel %vm7194, %v7187, %v7191
        %v7196 = vand.u32 2147483647, %v6607
        %vm7197 = vcmp.eq.f32.partialorder %v7196, 8.507059e+37
        %v7198 = vand.u32 %v6607, 2147483648
        %v7199 = vor.u32 1.1754944e-38, %v7198
        %v7200 = vsel %vm7197, %v7199, %v7195
        %v7201 = vmul.f32 1.0, %v7200
        %v7202 = vrcp.pop %v6608
        %v7203 = vmul.f32 %v6608, %v7202
        %v7204 = vsub.f32 1.0, %v7203
        %v7205 = vmul.f32 %v7202, %v7204
        %v7206 = vadd.f32 %v7202, %v7205
        %vm7207 = vweird.f32 %v6608
        %vm7208 = vweird.f32 %v7202
        %vm7209 = vmor %vm7207, %vm7208
        %v7210 = vsel %vm7209, %v7202, %v7206
        %v7211 = vand.u32 2147483647, %v6608
        %vm7212 = vcmp.eq.f32.partialorder %v7211, 8.507059e+37
        %v7213 = vand.u32 %v6608, 2147483648
        %v7214 = vor.u32 1.1754944e-38, %v7213
        %v7215 = vsel %vm7212, %v7214, %v7210
        %v7216 = vmul.f32 1.0, %v7215
        %v7217 = vrcp.pop %v6609
        %v7218 = vmul.f32 %v6609, %v7217
        %v7219 = vsub.f32 1.0, %v7218
        %v7220 = vmul.f32 %v7217, %v7219
        %v7221 = vadd.f32 %v7217, %v7220
        %vm7222 = vweird.f32 %v6609
        %vm7223 = vweird.f32 %v7217
        %vm7224 = vmor %vm7222, %vm7223
        %v7225 = vsel %vm7224, %v7217, %v7221
        %v7226 = vand.u32 2147483647, %v6609
        %vm7227 = vcmp.eq.f32.partialorder %v7226, 8.507059e+37
        %v7228 = vand.u32 %v6609, 2147483648
        %v7229 = vor.u32 1.1754944e-38, %v7228
        %v7230 = vsel %vm7227, %v7229, %v7225
        %v7231 = vmul.f32 1.0, %v7230
        %v7232 = vrcp.pop %v6610
        %v7233 = vmul.f32 %v6610, %v7232
        %v7234 = vsub.f32 1.0, %v7233
        %v7235 = vmul.f32 %v7232, %v7234
        %v7236 = vadd.f32 %v7232, %v7235
        %vm7237 = vweird.f32 %v6610
        %vm7238 = vweird.f32 %v7232
        %vm7239 = vmor %vm7237, %vm7238
        %v7240 = vsel %vm7239, %v7232, %v7236
        %v7241 = vand.u32 2147483647, %v6610
        %vm7242 = vcmp.eq.f32.partialorder %v7241, 8.507059e+37
        %v7243 = vand.u32 %v6610, 2147483648
        %v7244 = vor.u32 1.1754944e-38, %v7243
        %v7245 = vsel %vm7242, %v7244, %v7240
        %v7246 = vmul.f32 1.0, %v7245
        %v7247 = vrcp.pop %v6611
        %v7248 = vmul.f32 %v6611, %v7247
        %v7249 = vsub.f32 1.0, %v7248
        %v7250 = vmul.f32 %v7247, %v7249
        %v7251 = vadd.f32 %v7247, %v7250
        %vm7252 = vweird.f32 %v6611
        %vm7253 = vweird.f32 %v7247
        %vm7254 = vmor %vm7252, %vm7253
        %v7255 = vsel %vm7254, %v7247, %v7251
        %v7256 = vand.u32 2147483647, %v6611
        %vm7257 = vcmp.eq.f32.partialorder %v7256, 8.507059e+37
        %v7258 = vand.u32 %v6611, 2147483648
        %v7259 = vor.u32 1.1754944e-38, %v7258
        %v7260 = vsel %vm7257, %v7259, %v7255
        %v7261 = vmul.f32 1.0, %v7260
        %v7262 = vrcp.pop %v6612
        %v7263 = vmul.f32 %v6612, %v7262
        %v7264 = vsub.f32 1.0, %v7263
        %v7265 = vmul.f32 %v7262, %v7264
        %v7266 = vadd.f32 %v7262, %v7265
        %vm7267 = vweird.f32 %v6612
        %vm7268 = vweird.f32 %v7262
        %vm7269 = vmor %vm7267, %vm7268
        %v7270 = vsel %vm7269, %v7262, %v7266
        %v7271 = vand.u32 2147483647, %v6612
        %vm7272 = vcmp.eq.f32.partialorder %v7271, 8.507059e+37
        %v7273 = vand.u32 %v6612, 2147483648
        %v7274 = vor.u32 1.1754944e-38, %v7273
        %v7275 = vsel %vm7272, %v7274, %v7270
        %v7276 = vmul.f32 1.0, %v7275
        %v7277 = vrcp.pop %v6613
        %v7278 = vmul.f32 %v6613, %v7277
        %v7279 = vsub.f32 1.0, %v7278
        %v7280 = vmul.f32 %v7277, %v7279
        %v7281 = vadd.f32 %v7277, %v7280
        %vm7282 = vweird.f32 %v6613
        %vm7283 = vweird.f32 %v7277
        %vm7284 = vmor %vm7282, %vm7283
        %v7285 = vsel %vm7284, %v7277, %v7281
        %v7286 = vand.u32 2147483647, %v6613
        %vm7287 = vcmp.eq.f32.partialorder %v7286, 8.507059e+37
        %v7288 = vand.u32 %v6613, 2147483648
        %v7289 = vor.u32 1.1754944e-38, %v7288
        %v7290 = vsel %vm7287, %v7289, %v7285
        %v7291 = vmul.f32 1.0, %v7290
        %v7292 = vrcp.pop %v6614
        %v7293 = vmul.f32 %v6614, %v7292
        %v7294 = vsub.f32 1.0, %v7293
        %v7295 = vmul.f32 %v7292, %v7294
        %v7296 = vadd.f32 %v7292, %v7295
        %vm7297 = vweird.f32 %v6614
        %vm7298 = vweird.f32 %v7292
        %vm7299 = vmor %vm7297, %vm7298
        %v7300 = vsel %vm7299, %v7292, %v7296
        %v7301 = vand.u32 2147483647, %v6614
        %vm7302 = vcmp.eq.f32.partialorder %v7301, 8.507059e+37
        %v7303 = vand.u32 %v6614, 2147483648
        %v7304 = vor.u32 1.1754944e-38, %v7303
        %v7305 = vsel %vm7302, %v7304, %v7300
        %v7306 = vmul.f32 1.0, %v7305
        %v7307 = vrcp.pop %v6615
        %v7308 = vmul.f32 %v6615, %v7307
        %v7309 = vsub.f32 1.0, %v7308
        %v7310 = vmul.f32 %v7307, %v7309
        %v7311 = vadd.f32 %v7307, %v7310
        %vm7312 = vweird.f32 %v6615
        %vm7313 = vweird.f32 %v7307
        %vm7314 = vmor %vm7312, %vm7313
        %v7315 = vsel %vm7314, %v7307, %v7311
        %v7316 = vand.u32 2147483647, %v6615
        %vm7317 = vcmp.eq.f32.partialorder %v7316, 8.507059e+37
        %v7318 = vand.u32 %v6615, 2147483648
        %v7319 = vor.u32 1.1754944e-38, %v7318
        %v7320 = vsel %vm7317, %v7319, %v7315
        %v7321 = vmul.f32 1.0, %v7320
        %v7322 = vrcp.pop %v6616
        %v7323 = vmul.f32 %v6616, %v7322
        %v7324 = vsub.f32 1.0, %v7323
        %v7325 = vmul.f32 %v7322, %v7324
        %v7326 = vadd.f32 %v7322, %v7325
        %vm7327 = vweird.f32 %v6616
        %vm7328 = vweird.f32 %v7322
        %vm7329 = vmor %vm7327, %vm7328
        %v7330 = vsel %vm7329, %v7322, %v7326
        %v7331 = vand.u32 2147483647, %v6616
        %vm7332 = vcmp.eq.f32.partialorder %v7331, 8.507059e+37
        %v7333 = vand.u32 %v6616, 2147483648
        %v7334 = vor.u32 1.1754944e-38, %v7333
        %v7335 = vsel %vm7332, %v7334, %v7330
        %v7336 = vmul.f32 1.0, %v7335
        %v7337 = vrcp.pop %v6617
        %v7338 = vmul.f32 %v6617, %v7337
        %v7339 = vsub.f32 1.0, %v7338
        %v7340 = vmul.f32 %v7337, %v7339
        %v7341 = vadd.f32 %v7337, %v7340
        %vm7342 = vweird.f32 %v6617
        %vm7343 = vweird.f32 %v7337
        %vm7344 = vmor %vm7342, %vm7343
        %v7345 = vsel %vm7344, %v7337, %v7341
        %v7346 = vand.u32 2147483647, %v6617
        %vm7347 = vcmp.eq.f32.partialorder %v7346, 8.507059e+37
        %v7348 = vand.u32 %v6617, 2147483648
        %v7349 = vor.u32 1.1754944e-38, %v7348
        %v7350 = vsel %vm7347, %v7349, %v7345
        %v7351 = vmul.f32 1.0, %v7350
        %v7352 = vrcp.pop %v6618
        %v7353 = vmul.f32 %v6618, %v7352
        %v7354 = vsub.f32 1.0, %v7353
        %v7355 = vmul.f32 %v7352, %v7354
        %v7356 = vadd.f32 %v7352, %v7355
        %vm7357 = vweird.f32 %v6618
        %vm7358 = vweird.f32 %v7352
        %vm7359 = vmor %vm7357, %vm7358
        %v7360 = vsel %vm7359, %v7352, %v7356
        %v7361 = vand.u32 2147483647, %v6618
        %vm7362 = vcmp.eq.f32.partialorder %v7361, 8.507059e+37
        %v7363 = vand.u32 %v6618, 2147483648
        %v7364 = vor.u32 1.1754944e-38, %v7363
        %v7365 = vsel %vm7362, %v7364, %v7360
        %v7366 = vmul.f32 1.0, %v7365
        %v7367 = vrcp.pop %v6619
        %v7368 = vmul.f32 %v6619, %v7367
        %v7369 = vsub.f32 1.0, %v7368
        %v7370 = vmul.f32 %v7367, %v7369
        %v7371 = vadd.f32 %v7367, %v7370
        %vm7372 = vweird.f32 %v6619
        %vm7373 = vweird.f32 %v7367
        %vm7374 = vmor %vm7372, %vm7373
        %v7375 = vsel %vm7374, %v7367, %v7371
        %v7376 = vand.u32 2147483647, %v6619
        %vm7377 = vcmp.eq.f32.partialorder %v7376, 8.507059e+37
        %v7378 = vand.u32 %v6619, 2147483648
        %v7379 = vor.u32 1.1754944e-38, %v7378
        %v7380 = vsel %vm7377, %v7379, %v7375
        %v7381 = vmul.f32 1.0, %v7380
        %v7382 = vrcp.pop %v6620
        %v7383 = vmul.f32 %v6620, %v7382
        %v7384 = vsub.f32 1.0, %v7383
        %v7385 = vmul.f32 %v7382, %v7384
        %v7386 = vadd.f32 %v7382, %v7385
        %vm7387 = vweird.f32 %v6620
        %vm7388 = vweird.f32 %v7382
        %vm7389 = vmor %vm7387, %vm7388
        %v7390 = vsel %vm7389, %v7382, %v7386
        %v7391 = vand.u32 2147483647, %v6620
        %vm7392 = vcmp.eq.f32.partialorder %v7391, 8.507059e+37
        %v7393 = vand.u32 %v6620, 2147483648
        %v7394 = vor.u32 1.1754944e-38, %v7393
        %v7395 = vsel %vm7392, %v7394, %v7390
        %v7396 = vmul.f32 1.0, %v7395
        %v7397 = vrcp.pop %v6621
        %v7398 = vmul.f32 %v6621, %v7397
        %v7399 = vsub.f32 1.0, %v7398
        %v7400 = vmul.f32 %v7397, %v7399
        %v7401 = vadd.f32 %v7397, %v7400
        %vm7402 = vweird.f32 %v6621
        %vm7403 = vweird.f32 %v7397
        %vm7404 = vmor %vm7402, %vm7403
        %v7405 = vsel %vm7404, %v7397, %v7401
        %v7406 = vand.u32 2147483647, %v6621
        %vm7407 = vcmp.eq.f32.partialorder %v7406, 8.507059e+37
        %v7408 = vand.u32 %v6621, 2147483648
        %v7409 = vor.u32 1.1754944e-38, %v7408
        %v7410 = vsel %vm7407, %v7409, %v7405
        %v7411 = vmul.f32 1.0, %v7410
        %v7412 = vrcp.pop %v6622
        %v7413 = vmul.f32 %v6622, %v7412
        %v7414 = vsub.f32 1.0, %v7413
        %v7415 = vmul.f32 %v7412, %v7414
        %v7416 = vadd.f32 %v7412, %v7415
        %vm7417 = vweird.f32 %v6622
        %vm7418 = vweird.f32 %v7412
        %vm7419 = vmor %vm7417, %vm7418
        %v7420 = vsel %vm7419, %v7412, %v7416
        %v7421 = vand.u32 2147483647, %v6622
        %vm7422 = vcmp.eq.f32.partialorder %v7421, 8.507059e+37
        %v7423 = vand.u32 %v6622, 2147483648
        %v7424 = vor.u32 1.1754944e-38, %v7423
        %v7425 = vsel %vm7422, %v7424, %v7420
        %v7426 = vmul.f32 1.0, %v7425
        %v7427 = vrcp.pop %v6623
        %v7428 = vmul.f32 %v6623, %v7427
        %v7429 = vsub.f32 1.0, %v7428
        %v7430 = vmul.f32 %v7427, %v7429
        %v7431 = vadd.f32 %v7427, %v7430
        %vm7432 = vweird.f32 %v6623
        %vm7433 = vweird.f32 %v7427
        %vm7434 = vmor %vm7432, %vm7433
        %v7435 = vsel %vm7434, %v7427, %v7431
        %v7436 = vand.u32 2147483647, %v6623
        %vm7437 = vcmp.eq.f32.partialorder %v7436, 8.507059e+37
        %v7438 = vand.u32 %v6623, 2147483648
        %v7439 = vor.u32 1.1754944e-38, %v7438
        %v7440 = vsel %vm7437, %v7439, %v7435
        %v7441 = vmul.f32 1.0, %v7440
        %v7442 = vrcp.pop %v6624
        %v7443 = vmul.f32 %v6624, %v7442
        %v7444 = vsub.f32 1.0, %v7443
        %v7445 = vmul.f32 %v7442, %v7444
        %v7446 = vadd.f32 %v7442, %v7445
        %vm7447 = vweird.f32 %v6624
        %vm7448 = vweird.f32 %v7442
        %vm7449 = vmor %vm7447, %vm7448
        %v7450 = vsel %vm7449, %v7442, %v7446
        %v7451 = vand.u32 2147483647, %v6624
        %vm7452 = vcmp.eq.f32.partialorder %v7451, 8.507059e+37
        %v7453 = vand.u32 %v6624, 2147483648
        %v7454 = vor.u32 1.1754944e-38, %v7453
        %v7455 = vsel %vm7452, %v7454, %v7450
        %v7456 = vmul.f32 1.0, %v7455
        %v7457 = vrcp.pop %v6625
        %v7458 = vmul.f32 %v6625, %v7457
        %v7459 = vsub.f32 1.0, %v7458
        %v7460 = vmul.f32 %v7457, %v7459
        %v7461 = vadd.f32 %v7457, %v7460
        %vm7462 = vweird.f32 %v6625
        %vm7463 = vweird.f32 %v7457
        %vm7464 = vmor %vm7462, %vm7463
        %v7465 = vsel %vm7464, %v7457, %v7461
        %v7466 = vand.u32 2147483647, %v6625
        %vm7467 = vcmp.eq.f32.partialorder %v7466, 8.507059e+37
        %v7468 = vand.u32 %v6625, 2147483648
        %v7469 = vor.u32 1.1754944e-38, %v7468
        %v7470 = vsel %vm7467, %v7469, %v7465
        %v7471 = vmul.f32 1.0, %v7470
        %v7472 = vrcp.pop %v6626
        %v7473 = vmul.f32 %v6626, %v7472
        %v7474 = vsub.f32 1.0, %v7473
        %v7475 = vmul.f32 %v7472, %v7474
        %v7476 = vadd.f32 %v7472, %v7475
        %vm7477 = vweird.f32 %v6626
        %vm7478 = vweird.f32 %v7472
        %vm7479 = vmor %vm7477, %vm7478
        %v7480 = vsel %vm7479, %v7472, %v7476
        %v7481 = vand.u32 2147483647, %v6626
        %vm7482 = vcmp.eq.f32.partialorder %v7481, 8.507059e+37
        %v7483 = vand.u32 %v6626, 2147483648
        %v7484 = vor.u32 1.1754944e-38, %v7483
        %v7485 = vsel %vm7482, %v7484, %v7480
        %v7486 = vmul.f32 1.0, %v7485
        %v7487 = vrcp.pop %v6627
        %v7488 = vmul.f32 %v6627, %v7487
        %v7489 = vsub.f32 1.0, %v7488
        %v7490 = vmul.f32 %v7487, %v7489
        %v7491 = vadd.f32 %v7487, %v7490
        %vm7492 = vweird.f32 %v6627
        %vm7493 = vweird.f32 %v7487
        %vm7494 = vmor %vm7492, %vm7493
        %v7495 = vsel %vm7494, %v7487, %v7491
        %v7496 = vand.u32 2147483647, %v6627
        %vm7497 = vcmp.eq.f32.partialorder %v7496, 8.507059e+37
        %v7498 = vand.u32 %v6627, 2147483648
        %v7499 = vor.u32 1.1754944e-38, %v7498
        %v7500 = vsel %vm7497, %v7499, %v7495
        %v7501 = vmul.f32 1.0, %v7500
        %v7502 = vrcp.pop %v6628
        %v7503 = vmul.f32 %v6628, %v7502
        %v7504 = vsub.f32 1.0, %v7503
        %v7505 = vmul.f32 %v7502, %v7504
        %v7506 = vadd.f32 %v7502, %v7505
        %vm7507 = vweird.f32 %v6628
        %vm7508 = vweird.f32 %v7502
        %vm7509 = vmor %vm7507, %vm7508
        %v7510 = vsel %vm7509, %v7502, %v7506
        %v7511 = vand.u32 2147483647, %v6628
        %vm7512 = vcmp.eq.f32.partialorder %v7511, 8.507059e+37
        %v7513 = vand.u32 %v6628, 2147483648
        %v7514 = vor.u32 1.1754944e-38, %v7513
        %v7515 = vsel %vm7512, %v7514, %v7510
        %v7516 = vmul.f32 1.0, %v7515
        %v7517 = vrcp.pop %v6629
        %v7518 = vmul.f32 %v6629, %v7517
        %v7519 = vsub.f32 1.0, %v7518
        %v7520 = vmul.f32 %v7517, %v7519
        %v7521 = vadd.f32 %v7517, %v7520
        %vm7522 = vweird.f32 %v6629
        %vm7523 = vweird.f32 %v7517
        %vm7524 = vmor %vm7522, %vm7523
        %v7525 = vsel %vm7524, %v7517, %v7521
        %v7526 = vand.u32 2147483647, %v6629
        %vm7527 = vcmp.eq.f32.partialorder %v7526, 8.507059e+37
        %v7528 = vand.u32 %v6629, 2147483648
        %v7529 = vor.u32 1.1754944e-38, %v7528
        %v7530 = vsel %vm7527, %v7529, %v7525
        %v7531 = vmul.f32 1.0, %v7530
        %v7532 = vrcp.pop %v6630
        %v7533 = vmul.f32 %v6630, %v7532
        %v7534 = vsub.f32 1.0, %v7533
        %v7535 = vmul.f32 %v7532, %v7534
        %v7536 = vadd.f32 %v7532, %v7535
        %vm7537 = vweird.f32 %v6630
        %vm7538 = vweird.f32 %v7532
        %vm7539 = vmor %vm7537, %vm7538
        %v7540 = vsel %vm7539, %v7532, %v7536
        %v7541 = vand.u32 2147483647, %v6630
        %vm7542 = vcmp.eq.f32.partialorder %v7541, 8.507059e+37
        %v7543 = vand.u32 %v6630, 2147483648
        %v7544 = vor.u32 1.1754944e-38, %v7543
        %v7545 = vsel %vm7542, %v7544, %v7540
        %v7546 = vmul.f32 1.0, %v7545
        %v7547 = vrcp.pop %v6631
        %v7548 = vmul.f32 %v6631, %v7547
        %v7549 = vsub.f32 1.0, %v7548
        %v7550 = vmul.f32 %v7547, %v7549
        %v7551 = vadd.f32 %v7547, %v7550
        %vm7552 = vweird.f32 %v6631
        %vm7553 = vweird.f32 %v7547
        %vm7554 = vmor %vm7552, %vm7553
        %v7555 = vsel %vm7554, %v7547, %v7551
        %v7556 = vand.u32 2147483647, %v6631
        %vm7557 = vcmp.eq.f32.partialorder %v7556, 8.507059e+37
        %v7558 = vand.u32 %v6631, 2147483648
        %v7559 = vor.u32 1.1754944e-38, %v7558
        %v7560 = vsel %vm7557, %v7559, %v7555
        %v7561 = vmul.f32 1.0, %v7560
        %v7562 = vrcp.pop %v6632
        %v7563 = vmul.f32 %v6632, %v7562
        %v7564 = vsub.f32 1.0, %v7563
        %v7565 = vmul.f32 %v7562, %v7564
        %v7566 = vadd.f32 %v7562, %v7565
        %vm7567 = vweird.f32 %v6632
        %vm7568 = vweird.f32 %v7562
        %vm7569 = vmor %vm7567, %vm7568
        %v7570 = vsel %vm7569, %v7562, %v7566
        %v7571 = vand.u32 2147483647, %v6632
        %vm7572 = vcmp.eq.f32.partialorder %v7571, 8.507059e+37
        %v7573 = vand.u32 %v6632, 2147483648
        %v7574 = vor.u32 1.1754944e-38, %v7573
        %v7575 = vsel %vm7572, %v7574, %v7570
        %v7576 = vmul.f32 1.0, %v7575
        %v7577 = vrcp.pop %v6633
        %v7578 = vmul.f32 %v6633, %v7577
        %v7579 = vsub.f32 1.0, %v7578
        %v7580 = vmul.f32 %v7577, %v7579
        %v7581 = vadd.f32 %v7577, %v7580
        %vm7582 = vweird.f32 %v6633
        %vm7583 = vweird.f32 %v7577
        %vm7584 = vmor %vm7582, %vm7583
        %v7585 = vsel %vm7584, %v7577, %v7581
        %v7586 = vand.u32 2147483647, %v6633
        %vm7587 = vcmp.eq.f32.partialorder %v7586, 8.507059e+37
        %v7588 = vand.u32 %v6633, 2147483648
        %v7589 = vor.u32 1.1754944e-38, %v7588
        %v7590 = vsel %vm7587, %v7589, %v7585
        %v7591 = vmul.f32 1.0, %v7590
        %v7592 = vrcp.pop %v6634
        %v7593 = vmul.f32 %v6634, %v7592
        %v7594 = vsub.f32 1.0, %v7593
        %v7595 = vmul.f32 %v7592, %v7594
        %v7596 = vadd.f32 %v7592, %v7595
        %vm7597 = vweird.f32 %v6634
        %vm7598 = vweird.f32 %v7592
        %vm7599 = vmor %vm7597, %vm7598
        %v7600 = vsel %vm7599, %v7592, %v7596
        %v7601 = vand.u32 2147483647, %v6634
        %vm7602 = vcmp.eq.f32.partialorder %v7601, 8.507059e+37
        %v7603 = vand.u32 %v6634, 2147483648
        %v7604 = vor.u32 1.1754944e-38, %v7603
        %v7605 = vsel %vm7602, %v7604, %v7600
        %v7606 = vmul.f32 1.0, %v7605
        %v7607 = vrcp.pop %v6635
        %v7608 = vmul.f32 %v6635, %v7607
        %v7609 = vsub.f32 1.0, %v7608
        %v7610 = vmul.f32 %v7607, %v7609
        %v7611 = vadd.f32 %v7607, %v7610
        %vm7612 = vweird.f32 %v6635
        %vm7613 = vweird.f32 %v7607
        %vm7614 = vmor %vm7612, %vm7613
        %v7615 = vsel %vm7614, %v7607, %v7611
        %v7616 = vand.u32 2147483647, %v6635
        %vm7617 = vcmp.eq.f32.partialorder %v7616, 8.507059e+37
        %v7618 = vand.u32 %v6635, 2147483648
        %v7619 = vor.u32 1.1754944e-38, %v7618
        %v7620 = vsel %vm7617, %v7619, %v7615
        %v7621 = vmul.f32 1.0, %v7620
        %v7622 = vrcp.pop %v6636
        %v7623 = vmul.f32 %v6636, %v7622
        %v7624 = vsub.f32 1.0, %v7623
        %v7625 = vmul.f32 %v7622, %v7624
        %v7626 = vadd.f32 %v7622, %v7625
        %vm7627 = vweird.f32 %v6636
        %vm7628 = vweird.f32 %v7622
        %vm7629 = vmor %vm7627, %vm7628
        %v7630 = vsel %vm7629, %v7622, %v7626
        %v7631 = vand.u32 2147483647, %v6636
        %vm7632 = vcmp.eq.f32.partialorder %v7631, 8.507059e+37
        %v7633 = vand.u32 %v6636, 2147483648
        %v7634 = vor.u32 1.1754944e-38, %v7633
        %v7635 = vsel %vm7632, %v7634, %v7630
        %v7636 = vmul.f32 1.0, %v7635
        %v7637 = vrcp.pop %v6637
        %v7638 = vmul.f32 %v6637, %v7637
        %v7639 = vsub.f32 1.0, %v7638
        %v7640 = vmul.f32 %v7637, %v7639
        %v7641 = vadd.f32 %v7637, %v7640
        %vm7642 = vweird.f32 %v6637
        %vm7643 = vweird.f32 %v7637
        %vm7644 = vmor %vm7642, %vm7643
        %v7645 = vsel %vm7644, %v7637, %v7641
        %v7646 = vand.u32 2147483647, %v6637
        %vm7647 = vcmp.eq.f32.partialorder %v7646, 8.507059e+37
        %v7648 = vand.u32 %v6637, 2147483648
        %v7649 = vor.u32 1.1754944e-38, %v7648
        %v7650 = vsel %vm7647, %v7649, %v7645
        %v7651 = vmul.f32 1.0, %v7650
        %v7652 = vrcp.pop %v6638
        %v7653 = vmul.f32 %v6638, %v7652
        %v7654 = vsub.f32 1.0, %v7653
        %v7655 = vmul.f32 %v7652, %v7654
        %v7656 = vadd.f32 %v7652, %v7655
        %vm7657 = vweird.f32 %v6638
        %vm7658 = vweird.f32 %v7652
        %vm7659 = vmor %vm7657, %vm7658
        %v7660 = vsel %vm7659, %v7652, %v7656
        %v7661 = vand.u32 2147483647, %v6638
        %vm7662 = vcmp.eq.f32.partialorder %v7661, 8.507059e+37
        %v7663 = vand.u32 %v6638, 2147483648
        %v7664 = vor.u32 1.1754944e-38, %v7663
        %v7665 = vsel %vm7662, %v7664, %v7660
        %v7666 = vmul.f32 1.0, %v7665
        %v7667 = vrcp.pop %v6639
        %v7668 = vmul.f32 %v6639, %v7667
        %v7669 = vsub.f32 1.0, %v7668
        %v7670 = vmul.f32 %v7667, %v7669
        %v7671 = vadd.f32 %v7667, %v7670
        %vm7672 = vweird.f32 %v6639
        %vm7673 = vweird.f32 %v7667
        %vm7674 = vmor %vm7672, %vm7673
        %v7675 = vsel %vm7674, %v7667, %v7671
        %v7676 = vand.u32 2147483647, %v6639
        %vm7677 = vcmp.eq.f32.partialorder %v7676, 8.507059e+37
        %v7678 = vand.u32 %v6639, 2147483648
        %v7679 = vor.u32 1.1754944e-38, %v7678
        %v7680 = vsel %vm7677, %v7679, %v7675
        %v7681 = vmul.f32 1.0, %v7680
        %v7682 = vrcp.pop %v6640
        %v7683 = vmul.f32 %v6640, %v7682
        %v7684 = vsub.f32 1.0, %v7683
        %v7685 = vmul.f32 %v7682, %v7684
        %v7686 = vadd.f32 %v7682, %v7685
        %vm7687 = vweird.f32 %v6640
        %vm7688 = vweird.f32 %v7682
        %vm7689 = vmor %vm7687, %vm7688
        %v7690 = vsel %vm7689, %v7682, %v7686
        %v7691 = vand.u32 2147483647, %v6640
        %vm7692 = vcmp.eq.f32.partialorder %v7691, 8.507059e+37
        %v7693 = vand.u32 %v6640, 2147483648
        %v7694 = vor.u32 1.1754944e-38, %v7693
        %v7695 = vsel %vm7692, %v7694, %v7690
        %v7696 = vmul.f32 1.0, %v7695
        %v7697 = vrcp.pop %v6641
        %v7698 = vmul.f32 %v6641, %v7697
        %v7699 = vsub.f32 1.0, %v7698
        %v7700 = vmul.f32 %v7697, %v7699
        %v7701 = vadd.f32 %v7697, %v7700
        %vm7702 = vweird.f32 %v6641
        %vm7703 = vweird.f32 %v7697
        %vm7704 = vmor %vm7702, %vm7703
        %v7705 = vsel %vm7704, %v7697, %v7701
        %v7706 = vand.u32 2147483647, %v6641
        %vm7707 = vcmp.eq.f32.partialorder %v7706, 8.507059e+37
        %v7708 = vand.u32 %v6641, 2147483648
        %v7709 = vor.u32 1.1754944e-38, %v7708
        %v7710 = vsel %vm7707, %v7709, %v7705
        %v7711 = vmul.f32 1.0, %v7710
        %v7712 = vrcp.pop %v6642
        %v7713 = vmul.f32 %v6642, %v7712
        %v7714 = vsub.f32 1.0, %v7713
        %v7715 = vmul.f32 %v7712, %v7714
        %v7716 = vadd.f32 %v7712, %v7715
        %vm7717 = vweird.f32 %v6642
        %vm7718 = vweird.f32 %v7712
        %vm7719 = vmor %vm7717, %vm7718
        %v7720 = vsel %vm7719, %v7712, %v7716
        %v7721 = vand.u32 2147483647, %v6642
        %vm7722 = vcmp.eq.f32.partialorder %v7721, 8.507059e+37
        %v7723 = vand.u32 %v6642, 2147483648
        %v7724 = vor.u32 1.1754944e-38, %v7723
        %v7725 = vsel %vm7722, %v7724, %v7720
        %v7726 = vmul.f32 1.0, %v7725
        %v7727 = vrcp.pop %v6643
        %v7728 = vmul.f32 %v6643, %v7727
        %v7729 = vsub.f32 1.0, %v7728
        %v7730 = vmul.f32 %v7727, %v7729
        %v7731 = vadd.f32 %v7727, %v7730
        %vm7732 = vweird.f32 %v6643
        %vm7733 = vweird.f32 %v7727
        %vm7734 = vmor %vm7732, %vm7733
        %v7735 = vsel %vm7734, %v7727, %v7731
        %v7736 = vand.u32 2147483647, %v6643
        %vm7737 = vcmp.eq.f32.partialorder %v7736, 8.507059e+37
        %v7738 = vand.u32 %v6643, 2147483648
        %v7739 = vor.u32 1.1754944e-38, %v7738
        %v7740 = vsel %vm7737, %v7739, %v7735
        %v7741 = vmul.f32 1.0, %v7740
        %v7742 = vrcp.pop %v6644
        %v7743 = vmul.f32 %v6644, %v7742
        %v7744 = vsub.f32 1.0, %v7743
        %v7745 = vmul.f32 %v7742, %v7744
        %v7746 = vadd.f32 %v7742, %v7745
        %vm7747 = vweird.f32 %v6644
        %vm7748 = vweird.f32 %v7742
        %vm7749 = vmor %vm7747, %vm7748
        %v7750 = vsel %vm7749, %v7742, %v7746
        %v7751 = vand.u32 2147483647, %v6644
        %vm7752 = vcmp.eq.f32.partialorder %v7751, 8.507059e+37
        %v7753 = vand.u32 %v6644, 2147483648
        %v7754 = vor.u32 1.1754944e-38, %v7753
        %v7755 = vsel %vm7752, %v7754, %v7750
        %v7756 = vmul.f32 1.0, %v7755
        %v7757 = vrcp.pop %v6645
        %v7758 = vmul.f32 %v6645, %v7757
        %v7759 = vsub.f32 1.0, %v7758
        %v7760 = vmul.f32 %v7757, %v7759
        %v7761 = vadd.f32 %v7757, %v7760
        %vm7762 = vweird.f32 %v6645
        %vm7763 = vweird.f32 %v7757
        %vm7764 = vmor %vm7762, %vm7763
        %v7765 = vsel %vm7764, %v7757, %v7761
        %v7766 = vand.u32 2147483647, %v6645
        %vm7767 = vcmp.eq.f32.partialorder %v7766, 8.507059e+37
        %v7768 = vand.u32 %v6645, 2147483648
        %v7769 = vor.u32 1.1754944e-38, %v7768
        %v7770 = vsel %vm7767, %v7769, %v7765
        %v7771 = vmul.f32 1.0, %v7770
        %v7772 = vrcp.pop %v6646
        %v7773 = vmul.f32 %v6646, %v7772
        %v7774 = vsub.f32 1.0, %v7773
        %v7775 = vmul.f32 %v7772, %v7774
        %v7776 = vadd.f32 %v7772, %v7775
        %vm7777 = vweird.f32 %v6646
        %vm7778 = vweird.f32 %v7772
        %vm7779 = vmor %vm7777, %vm7778
        %v7780 = vsel %vm7779, %v7772, %v7776
        %v7781 = vand.u32 2147483647, %v6646
        %vm7782 = vcmp.eq.f32.partialorder %v7781, 8.507059e+37
        %v7783 = vand.u32 %v6646, 2147483648
        %v7784 = vor.u32 1.1754944e-38, %v7783
        %v7785 = vsel %vm7782, %v7784, %v7780
        %v7786 = vmul.f32 1.0, %v7785
        %v7787 = vrcp.pop %v6647
        %v7788 = vmul.f32 %v6647, %v7787
        %v7789 = vsub.f32 1.0, %v7788
        %v7790 = vmul.f32 %v7787, %v7789
        %v7791 = vadd.f32 %v7787, %v7790
        %vm7792 = vweird.f32 %v6647
        %vm7793 = vweird.f32 %v7787
        %vm7794 = vmor %vm7792, %vm7793
        %v7795 = vsel %vm7794, %v7787, %v7791
        %v7796 = vand.u32 2147483647, %v6647
        %vm7797 = vcmp.eq.f32.partialorder %v7796, 8.507059e+37
        %v7798 = vand.u32 %v6647, 2147483648
        %v7799 = vor.u32 1.1754944e-38, %v7798
        %v7800 = vsel %vm7797, %v7799, %v7795
        %v7801 = vmul.f32 1.0, %v7800
        %v7802 = vrcp.pop %v6648
        %v7803 = vmul.f32 %v6648, %v7802
        %v7804 = vsub.f32 1.0, %v7803
        %v7805 = vmul.f32 %v7802, %v7804
        %v7806 = vadd.f32 %v7802, %v7805
        %vm7807 = vweird.f32 %v6648
        %vm7808 = vweird.f32 %v7802
        %vm7809 = vmor %vm7807, %vm7808
        %v7810 = vsel %vm7809, %v7802, %v7806
        %v7811 = vand.u32 2147483647, %v6648
        %vm7812 = vcmp.eq.f32.partialorder %v7811, 8.507059e+37
        %v7813 = vand.u32 %v6648, 2147483648
        %v7814 = vor.u32 1.1754944e-38, %v7813
        %v7815 = vsel %vm7812, %v7814, %v7810
        %v7816 = vmul.f32 1.0, %v7815
        %v7817 = vrcp.pop %v6649
        %v7818 = vmul.f32 %v6649, %v7817
        %v7819 = vsub.f32 1.0, %v7818
        %v7820 = vmul.f32 %v7817, %v7819
        %v7821 = vadd.f32 %v7817, %v7820
        %vm7822 = vweird.f32 %v6649
        %vm7823 = vweird.f32 %v7817
        %vm7824 = vmor %vm7822, %vm7823
        %v7825 = vsel %vm7824, %v7817, %v7821
        %v7826 = vand.u32 2147483647, %v6649
        %vm7827 = vcmp.eq.f32.partialorder %v7826, 8.507059e+37
        %v7828 = vand.u32 %v6649, 2147483648
        %v7829 = vor.u32 1.1754944e-38, %v7828
        %v7830 = vsel %vm7827, %v7829, %v7825
        %v7831 = vmul.f32 1.0, %v7830
        %v7832 = vrcp.pop %v6650
        %v7833 = vmul.f32 %v6650, %v7832
        %v7834 = vsub.f32 1.0, %v7833
        %v7835 = vmul.f32 %v7832, %v7834
        %v7836 = vadd.f32 %v7832, %v7835
        %vm7837 = vweird.f32 %v6650
        %vm7838 = vweird.f32 %v7832
        %vm7839 = vmor %vm7837, %vm7838
        %v7840 = vsel %vm7839, %v7832, %v7836
        %v7841 = vand.u32 2147483647, %v6650
        %vm7842 = vcmp.eq.f32.partialorder %v7841, 8.507059e+37
        %v7843 = vand.u32 %v6650, 2147483648
        %v7844 = vor.u32 1.1754944e-38, %v7843
        %v7845 = vsel %vm7842, %v7844, %v7840
        %v7846 = vmul.f32 1.0, %v7845
        %v7847 = vrcp.pop %v6651
        %v7848 = vmul.f32 %v6651, %v7847
        %v7849 = vsub.f32 1.0, %v7848
        %v7850 = vmul.f32 %v7847, %v7849
        %v7851 = vadd.f32 %v7847, %v7850
        %vm7852 = vweird.f32 %v6651
        %vm7853 = vweird.f32 %v7847
        %vm7854 = vmor %vm7852, %vm7853
        %v7855 = vsel %vm7854, %v7847, %v7851
        %v7856 = vand.u32 2147483647, %v6651
        %vm7857 = vcmp.eq.f32.partialorder %v7856, 8.507059e+37
        %v7858 = vand.u32 %v6651, 2147483648
        %v7859 = vor.u32 1.1754944e-38, %v7858
        %v7860 = vsel %vm7857, %v7859, %v7855
        %v7861 = vmul.f32 1.0, %v7860
        %v7862 = vrcp.pop %v6652
        %v7863 = vmul.f32 %v6652, %v7862
        %v7864 = vsub.f32 1.0, %v7863
        %v7865 = vmul.f32 %v7862, %v7864
        %v7866 = vadd.f32 %v7862, %v7865
        %vm7867 = vweird.f32 %v6652
        %vm7868 = vweird.f32 %v7862
        %vm7869 = vmor %vm7867, %vm7868
        %v7870 = vsel %vm7869, %v7862, %v7866
        %v7871 = vand.u32 2147483647, %v6652
        %vm7872 = vcmp.eq.f32.partialorder %v7871, 8.507059e+37
        %v7873 = vand.u32 %v6652, 2147483648
        %v7874 = vor.u32 1.1754944e-38, %v7873
        %v7875 = vsel %vm7872, %v7874, %v7870
        %v7876 = vmul.f32 1.0, %v7875
        %v7877 = vrcp.pop %v6653
        %v7878 = vmul.f32 %v6653, %v7877
        %v7879 = vsub.f32 1.0, %v7878
        %v7880 = vmul.f32 %v7877, %v7879
        %v7881 = vadd.f32 %v7877, %v7880
        %vm7882 = vweird.f32 %v6653
        %vm7883 = vweird.f32 %v7877
        %vm7884 = vmor %vm7882, %vm7883
        %v7885 = vsel %vm7884, %v7877, %v7881
        %v7886 = vand.u32 2147483647, %v6653
        %vm7887 = vcmp.eq.f32.partialorder %v7886, 8.507059e+37
        %v7888 = vand.u32 %v6653, 2147483648
        %v7889 = vor.u32 1.1754944e-38, %v7888
        %v7890 = vsel %vm7887, %v7889, %v7885
        %v7891 = vmul.f32 1.0, %v7890
        %v7892 = vrcp.pop %v6654
        %v7893 = vmul.f32 %v6654, %v7892
        %v7894 = vsub.f32 1.0, %v7893
        %v7895 = vmul.f32 %v7892, %v7894
        %v7896 = vadd.f32 %v7892, %v7895
        %vm7897 = vweird.f32 %v6654
        %vm7898 = vweird.f32 %v7892
        %vm7899 = vmor %vm7897, %vm7898
        %v7900 = vsel %vm7899, %v7892, %v7896
        %v7901 = vand.u32 2147483647, %v6654
        %vm7902 = vcmp.eq.f32.partialorder %v7901, 8.507059e+37
        %v7903 = vand.u32 %v6654, 2147483648
        %v7904 = vor.u32 1.1754944e-38, %v7903
        %v7905 = vsel %vm7902, %v7904, %v7900
        %v7906 = vmul.f32 1.0, %v7905
        %v7907 = vrcp.pop %v6655
        %v7908 = vmul.f32 %v6655, %v7907
        %v7909 = vsub.f32 1.0, %v7908
        %v7910 = vmul.f32 %v7907, %v7909
        %v7911 = vadd.f32 %v7907, %v7910
        %vm7912 = vweird.f32 %v6655
        %vm7913 = vweird.f32 %v7907
        %vm7914 = vmor %vm7912, %vm7913
        %v7915 = vsel %vm7914, %v7907, %v7911
        %v7916 = vand.u32 2147483647, %v6655
        %vm7917 = vcmp.eq.f32.partialorder %v7916, 8.507059e+37
        %v7918 = vand.u32 %v6655, 2147483648
        %v7919 = vor.u32 1.1754944e-38, %v7918
        %v7920 = vsel %vm7917, %v7919, %v7915
        %v7921 = vmul.f32 1.0, %v7920
        %v7922 = vrcp.pop %v6656
        %v7923 = vmul.f32 %v6656, %v7922
        %v7924 = vsub.f32 1.0, %v7923
        %v7925 = vmul.f32 %v7922, %v7924
        %v7926 = vadd.f32 %v7922, %v7925
        %vm7927 = vweird.f32 %v6656
        %vm7928 = vweird.f32 %v7922
        %vm7929 = vmor %vm7927, %vm7928
        %v7930 = vsel %vm7929, %v7922, %v7926
        %v7931 = vand.u32 2147483647, %v6656
        %vm7932 = vcmp.eq.f32.partialorder %v7931, 8.507059e+37
        %v7933 = vand.u32 %v6656, 2147483648
        %v7934 = vor.u32 1.1754944e-38, %v7933
        %v7935 = vsel %vm7932, %v7934, %v7930
        %v7936 = vmul.f32 1.0, %v7935
        %v7937 = vrcp.pop %v6657
        %v7938 = vmul.f32 %v6657, %v7937
        %v7939 = vsub.f32 1.0, %v7938
        %v7940 = vmul.f32 %v7937, %v7939
        %v7941 = vadd.f32 %v7937, %v7940
        %vm7942 = vweird.f32 %v6657
        %vm7943 = vweird.f32 %v7937
        %vm7944 = vmor %vm7942, %vm7943
        %v7945 = vsel %vm7944, %v7937, %v7941
        %v7946 = vand.u32 2147483647, %v6657
        %vm7947 = vcmp.eq.f32.partialorder %v7946, 8.507059e+37
        %v7948 = vand.u32 %v6657, 2147483648
        %v7949 = vor.u32 1.1754944e-38, %v7948
        %v7950 = vsel %vm7947, %v7949, %v7945
        %v7951 = vmul.f32 1.0, %v7950
        %v7952 = vrcp.pop %v6658
        %v7953 = vmul.f32 %v6658, %v7952
        %v7954 = vsub.f32 1.0, %v7953
        %v7955 = vmul.f32 %v7952, %v7954
        %v7956 = vadd.f32 %v7952, %v7955
        %vm7957 = vweird.f32 %v6658
        %vm7958 = vweird.f32 %v7952
        %vm7959 = vmor %vm7957, %vm7958
        %v7960 = vsel %vm7959, %v7952, %v7956
        %v7961 = vand.u32 2147483647, %v6658
        %vm7962 = vcmp.eq.f32.partialorder %v7961, 8.507059e+37
        %v7963 = vand.u32 %v6658, 2147483648
        %v7964 = vor.u32 1.1754944e-38, %v7963
        %v7965 = vsel %vm7962, %v7964, %v7960
        %v7966 = vmul.f32 1.0, %v7965
        %v7967 = vrcp.pop %v6659
        %v7968 = vmul.f32 %v6659, %v7967
        %v7969 = vsub.f32 1.0, %v7968
        %v7970 = vmul.f32 %v7967, %v7969
        %v7971 = vadd.f32 %v7967, %v7970
        %vm7972 = vweird.f32 %v6659
        %vm7973 = vweird.f32 %v7967
        %vm7974 = vmor %vm7972, %vm7973
        %v7975 = vsel %vm7974, %v7967, %v7971
        %v7976 = vand.u32 2147483647, %v6659
        %vm7977 = vcmp.eq.f32.partialorder %v7976, 8.507059e+37
        %v7978 = vand.u32 %v6659, 2147483648
        %v7979 = vor.u32 1.1754944e-38, %v7978
        %v7980 = vsel %vm7977, %v7979, %v7975
        %v7981 = vmul.f32 1.0, %v7980
        %v7982 = vrcp.pop %v6660
        %v7983 = vmul.f32 %v6660, %v7982
        %v7984 = vsub.f32 1.0, %v7983
        %v7985 = vmul.f32 %v7982, %v7984
        %v7986 = vadd.f32 %v7982, %v7985
        %vm7987 = vweird.f32 %v6660
        %vm7988 = vweird.f32 %v7982
        %vm7989 = vmor %vm7987, %vm7988
        %v7990 = vsel %vm7989, %v7982, %v7986
        %v7991 = vand.u32 2147483647, %v6660
        %vm7992 = vcmp.eq.f32.partialorder %v7991, 8.507059e+37
        %v7993 = vand.u32 %v6660, 2147483648
        %v7994 = vor.u32 1.1754944e-38, %v7993
        %v7995 = vsel %vm7992, %v7994, %v7990
        %v7996 = vmul.f32 1.0, %v7995
        %v7997 = vrcp.pop %v6661
        %v7998 = vmul.f32 %v6661, %v7997
        %v7999 = vsub.f32 1.0, %v7998
        %v8000 = vmul.f32 %v7997, %v7999
        %v8001 = vadd.f32 %v7997, %v8000
        %vm8002 = vweird.f32 %v6661
        %vm8003 = vweird.f32 %v7997
        %vm8004 = vmor %vm8002, %vm8003
        %v8005 = vsel %vm8004, %v7997, %v8001
        %v8006 = vand.u32 2147483647, %v6661
        %vm8007 = vcmp.eq.f32.partialorder %v8006, 8.507059e+37
        %v8008 = vand.u32 %v6661, 2147483648
        %v8009 = vor.u32 1.1754944e-38, %v8008
        %v8010 = vsel %vm8007, %v8009, %v8005
        %v8011 = vmul.f32 1.0, %v8010
        %v8012 = vrcp.pop %v6662
        %v8013 = vmul.f32 %v6662, %v8012
        %v8014 = vsub.f32 1.0, %v8013
        %v8015 = vmul.f32 %v8012, %v8014
        %v8016 = vadd.f32 %v8012, %v8015
        %vm8017 = vweird.f32 %v6662
        %vm8018 = vweird.f32 %v8012
        %vm8019 = vmor %vm8017, %vm8018
        %v8020 = vsel %vm8019, %v8012, %v8016
        %v8021 = vand.u32 2147483647, %v6662
        %vm8022 = vcmp.eq.f32.partialorder %v8021, 8.507059e+37
        %v8023 = vand.u32 %v6662, 2147483648
        %v8024 = vor.u32 1.1754944e-38, %v8023
        %v8025 = vsel %vm8022, %v8024, %v8020
        %v8026 = vmul.f32 1.0, %v8025
        %v8027 = vrcp.pop %v6663
        %v8028 = vmul.f32 %v6663, %v8027
        %v8029 = vsub.f32 1.0, %v8028
        %v8030 = vmul.f32 %v8027, %v8029
        %v8031 = vadd.f32 %v8027, %v8030
        %vm8032 = vweird.f32 %v6663
        %vm8033 = vweird.f32 %v8027
        %vm8034 = vmor %vm8032, %vm8033
        %v8035 = vsel %vm8034, %v8027, %v8031
        %v8036 = vand.u32 2147483647, %v6663
        %vm8037 = vcmp.eq.f32.partialorder %v8036, 8.507059e+37
        %v8038 = vand.u32 %v6663, 2147483648
        %v8039 = vor.u32 1.1754944e-38, %v8038
        %v8040 = vsel %vm8037, %v8039, %v8035
        %v8041 = vmul.f32 1.0, %v8040
        %v8042 = vrcp.pop %v6664
        %v8043 = vmul.f32 %v6664, %v8042
        %v8044 = vsub.f32 1.0, %v8043
        %v8045 = vmul.f32 %v8042, %v8044
        %v8046 = vadd.f32 %v8042, %v8045
        %vm8047 = vweird.f32 %v6664
        %vm8048 = vweird.f32 %v8042
        %vm8049 = vmor %vm8047, %vm8048
        %v8050 = vsel %vm8049, %v8042, %v8046
        %v8051 = vand.u32 2147483647, %v6664
        %vm8052 = vcmp.eq.f32.partialorder %v8051, 8.507059e+37
        %v8053 = vand.u32 %v6664, 2147483648
        %v8054 = vor.u32 1.1754944e-38, %v8053
        %v8055 = vsel %vm8052, %v8054, %v8050
        %v8056 = vmul.f32 1.0, %v8055
        %v8057 = vrcp.pop %v6665
        %v8058 = vmul.f32 %v6665, %v8057
        %v8059 = vsub.f32 1.0, %v8058
        %v8060 = vmul.f32 %v8057, %v8059
        %v8061 = vadd.f32 %v8057, %v8060
        %vm8062 = vweird.f32 %v6665
        %vm8063 = vweird.f32 %v8057
        %vm8064 = vmor %vm8062, %vm8063
        %v8065 = vsel %vm8064, %v8057, %v8061
        %v8066 = vand.u32 2147483647, %v6665
        %vm8067 = vcmp.eq.f32.partialorder %v8066, 8.507059e+37
        %v8068 = vand.u32 %v6665, 2147483648
        %v8069 = vor.u32 1.1754944e-38, %v8068
        %v8070 = vsel %vm8067, %v8069, %v8065
        %v8071 = vmul.f32 1.0, %v8070
        %v8072 = vrcp.pop %v6666
        %v8073 = vmul.f32 %v6666, %v8072
        %v8074 = vsub.f32 1.0, %v8073
        %v8075 = vmul.f32 %v8072, %v8074
        %v8076 = vadd.f32 %v8072, %v8075
        %vm8077 = vweird.f32 %v6666
        %vm8078 = vweird.f32 %v8072
        %vm8079 = vmor %vm8077, %vm8078
        %v8080 = vsel %vm8079, %v8072, %v8076
        %v8081 = vand.u32 2147483647, %v6666
        %vm8082 = vcmp.eq.f32.partialorder %v8081, 8.507059e+37
        %v8083 = vand.u32 %v6666, 2147483648
        %v8084 = vor.u32 1.1754944e-38, %v8083
        %v8085 = vsel %vm8082, %v8084, %v8080
        %v8086 = vmul.f32 1.0, %v8085
        %v8087 = vrcp.pop %v6667
        %v8088 = vmul.f32 %v6667, %v8087
        %v8089 = vsub.f32 1.0, %v8088
        %v8090 = vmul.f32 %v8087, %v8089
        %v8091 = vadd.f32 %v8087, %v8090
        %vm8092 = vweird.f32 %v6667
        %vm8093 = vweird.f32 %v8087
        %vm8094 = vmor %vm8092, %vm8093
        %v8095 = vsel %vm8094, %v8087, %v8091
        %v8096 = vand.u32 2147483647, %v6667
        %vm8097 = vcmp.eq.f32.partialorder %v8096, 8.507059e+37
        %v8098 = vand.u32 %v6667, 2147483648
        %v8099 = vor.u32 1.1754944e-38, %v8098
        %v8100 = vsel %vm8097, %v8099, %v8095
        %v8101 = vmul.f32 1.0, %v8100
        %v8102 = vrcp.pop %v6668
        %v8103 = vmul.f32 %v6668, %v8102
        %v8104 = vsub.f32 1.0, %v8103
        %v8105 = vmul.f32 %v8102, %v8104
        %v8106 = vadd.f32 %v8102, %v8105
        %vm8107 = vweird.f32 %v6668
        %vm8108 = vweird.f32 %v8102
        %vm8109 = vmor %vm8107, %vm8108
        %v8110 = vsel %vm8109, %v8102, %v8106
        %v8111 = vand.u32 2147483647, %v6668
        %vm8112 = vcmp.eq.f32.partialorder %v8111, 8.507059e+37
        %v8113 = vand.u32 %v6668, 2147483648
        %v8114 = vor.u32 1.1754944e-38, %v8113
        %v8115 = vsel %vm8112, %v8114, %v8110
        %v8116 = vmul.f32 1.0, %v8115
        %v8117 = vrcp.pop %v6669
        %v8118 = vmul.f32 %v6669, %v8117
        %v8119 = vsub.f32 1.0, %v8118
        %v8120 = vmul.f32 %v8117, %v8119
        %v8121 = vadd.f32 %v8117, %v8120
        %vm8122 = vweird.f32 %v6669
        %vm8123 = vweird.f32 %v8117
        %vm8124 = vmor %vm8122, %vm8123
        %v8125 = vsel %vm8124, %v8117, %v8121
        %v8126 = vand.u32 2147483647, %v6669
        %vm8127 = vcmp.eq.f32.partialorder %v8126, 8.507059e+37
        %v8128 = vand.u32 %v6669, 2147483648
        %v8129 = vor.u32 1.1754944e-38, %v8128
        %v8130 = vsel %vm8127, %v8129, %v8125
        %v8131 = vmul.f32 1.0, %v8130
        %v8132 = vrcp.pop %v6670
        %v8133 = vmul.f32 %v6670, %v8132
        %v8134 = vsub.f32 1.0, %v8133
        %v8135 = vmul.f32 %v8132, %v8134
        %v8136 = vadd.f32 %v8132, %v8135
        %vm8137 = vweird.f32 %v6670
        %vm8138 = vweird.f32 %v8132
        %vm8139 = vmor %vm8137, %vm8138
        %v8140 = vsel %vm8139, %v8132, %v8136
        %v8141 = vand.u32 2147483647, %v6670
        %vm8142 = vcmp.eq.f32.partialorder %v8141, 8.507059e+37
        %v8143 = vand.u32 %v6670, 2147483648
        %v8144 = vor.u32 1.1754944e-38, %v8143
        %v8145 = vsel %vm8142, %v8144, %v8140
        %v8146 = vmul.f32 1.0, %v8145
        %v8147 = vrcp.pop %v6671
        %v8148 = vmul.f32 %v6671, %v8147
        %v8149 = vsub.f32 1.0, %v8148
        %v8150 = vmul.f32 %v8147, %v8149
        %v8151 = vadd.f32 %v8147, %v8150
        %vm8152 = vweird.f32 %v6671
        %vm8153 = vweird.f32 %v8147
        %vm8154 = vmor %vm8152, %vm8153
        %v8155 = vsel %vm8154, %v8147, %v8151
        %v8156 = vand.u32 2147483647, %v6671
        %vm8157 = vcmp.eq.f32.partialorder %v8156, 8.507059e+37
        %v8158 = vand.u32 %v6671, 2147483648
        %v8159 = vor.u32 1.1754944e-38, %v8158
        %v8160 = vsel %vm8157, %v8159, %v8155
        %v8161 = vmul.f32 1.0, %v8160
        %v8162 = vrcp.pop %v6672
        %v8163 = vmul.f32 %v6672, %v8162
        %v8164 = vsub.f32 1.0, %v8163
        %v8165 = vmul.f32 %v8162, %v8164
        %v8166 = vadd.f32 %v8162, %v8165
        %vm8167 = vweird.f32 %v6672
        %vm8168 = vweird.f32 %v8162
        %vm8169 = vmor %vm8167, %vm8168
        %v8170 = vsel %vm8169, %v8162, %v8166
        %v8171 = vand.u32 2147483647, %v6672
        %vm8172 = vcmp.eq.f32.partialorder %v8171, 8.507059e+37
        %v8173 = vand.u32 %v6672, 2147483648
        %v8174 = vor.u32 1.1754944e-38, %v8173
        %v8175 = vsel %vm8172, %v8174, %v8170
        %v8176 = vmul.f32 1.0, %v8175
        %v8177 = vrcp.pop %v6673
        %v8178 = vmul.f32 %v6673, %v8177
        %v8179 = vsub.f32 1.0, %v8178
        %v8180 = vmul.f32 %v8177, %v8179
        %v8181 = vadd.f32 %v8177, %v8180
        %vm8182 = vweird.f32 %v6673
        %vm8183 = vweird.f32 %v8177
        %vm8184 = vmor %vm8182, %vm8183
        %v8185 = vsel %vm8184, %v8177, %v8181
        %v8186 = vand.u32 2147483647, %v6673
        %vm8187 = vcmp.eq.f32.partialorder %v8186, 8.507059e+37
        %v8188 = vand.u32 %v6673, 2147483648
        %v8189 = vor.u32 1.1754944e-38, %v8188
        %v8190 = vsel %vm8187, %v8189, %v8185
        %v8191 = vmul.f32 1.0, %v8190
        %v8192 = vrcp.pop %v6674
        %v8193 = vmul.f32 %v6674, %v8192
        %v8194 = vsub.f32 1.0, %v8193
        %v8195 = vmul.f32 %v8192, %v8194
        %v8196 = vadd.f32 %v8192, %v8195
        %vm8197 = vweird.f32 %v6674
        %vm8198 = vweird.f32 %v8192
        %vm8199 = vmor %vm8197, %vm8198
        %v8200 = vsel %vm8199, %v8192, %v8196
        %v8201 = vand.u32 2147483647, %v6674
        %vm8202 = vcmp.eq.f32.partialorder %v8201, 8.507059e+37
        %v8203 = vand.u32 %v6674, 2147483648
        %v8204 = vor.u32 1.1754944e-38, %v8203
        %v8205 = vsel %vm8202, %v8204, %v8200
        %v8206 = vmul.f32 1.0, %v8205
        %v8207 = vrcp.pop %v6675
        %v8208 = vmul.f32 %v6675, %v8207
        %v8209 = vsub.f32 1.0, %v8208
        %v8210 = vmul.f32 %v8207, %v8209
        %v8211 = vadd.f32 %v8207, %v8210
        %vm8212 = vweird.f32 %v6675
        %vm8213 = vweird.f32 %v8207
        %vm8214 = vmor %vm8212, %vm8213
        %v8215 = vsel %vm8214, %v8207, %v8211
        %v8216 = vand.u32 2147483647, %v6675
        %vm8217 = vcmp.eq.f32.partialorder %v8216, 8.507059e+37
        %v8218 = vand.u32 %v6675, 2147483648
        %v8219 = vor.u32 1.1754944e-38, %v8218
        %v8220 = vsel %vm8217, %v8219, %v8215
        %v8221 = vmul.f32 1.0, %v8220
        %v8222 = vrcp.pop %v6676
        %v8223 = vmul.f32 %v6676, %v8222
        %v8224 = vsub.f32 1.0, %v8223
        %v8225 = vmul.f32 %v8222, %v8224
        %v8226 = vadd.f32 %v8222, %v8225
        %vm8227 = vweird.f32 %v6676
        %vm8228 = vweird.f32 %v8222
        %vm8229 = vmor %vm8227, %vm8228
        %v8230 = vsel %vm8229, %v8222, %v8226
        %v8231 = vand.u32 2147483647, %v6676
        %vm8232 = vcmp.eq.f32.partialorder %v8231, 8.507059e+37
        %v8233 = vand.u32 %v6676, 2147483648
        %v8234 = vor.u32 1.1754944e-38, %v8233
        %v8235 = vsel %vm8232, %v8234, %v8230
        %v8236 = vmul.f32 1.0, %v8235
        %v8237 = vrcp.pop %v6677
        %v8238 = vmul.f32 %v6677, %v8237
        %v8239 = vsub.f32 1.0, %v8238
        %v8240 = vmul.f32 %v8237, %v8239
        %v8241 = vadd.f32 %v8237, %v8240
        %vm8242 = vweird.f32 %v6677
        %vm8243 = vweird.f32 %v8237
        %vm8244 = vmor %vm8242, %vm8243
        %v8245 = vsel %vm8244, %v8237, %v8241
        %v8246 = vand.u32 2147483647, %v6677
        %vm8247 = vcmp.eq.f32.partialorder %v8246, 8.507059e+37
        %v8248 = vand.u32 %v6677, 2147483648
        %v8249 = vor.u32 1.1754944e-38, %v8248
        %v8250 = vsel %vm8247, %v8249, %v8245
        %v8251 = vmul.f32 1.0, %v8250
        %v8252 = vrcp.pop %v6678
        %v8253 = vmul.f32 %v6678, %v8252
        %v8254 = vsub.f32 1.0, %v8253
        %v8255 = vmul.f32 %v8252, %v8254
        %v8256 = vadd.f32 %v8252, %v8255
        %vm8257 = vweird.f32 %v6678
        %vm8258 = vweird.f32 %v8252
        %vm8259 = vmor %vm8257, %vm8258
        %v8260 = vsel %vm8259, %v8252, %v8256
        %v8261 = vand.u32 2147483647, %v6678
        %vm8262 = vcmp.eq.f32.partialorder %v8261, 8.507059e+37
        %v8263 = vand.u32 %v6678, 2147483648
        %v8264 = vor.u32 1.1754944e-38, %v8263
        %v8265 = vsel %vm8262, %v8264, %v8260
        %v8266 = vmul.f32 1.0, %v8265
        %v8267 = vrcp.pop %v6679
        %v8268 = vmul.f32 %v6679, %v8267
        %v8269 = vsub.f32 1.0, %v8268
        %v8270 = vmul.f32 %v8267, %v8269
        %v8271 = vadd.f32 %v8267, %v8270
        %vm8272 = vweird.f32 %v6679
        %vm8273 = vweird.f32 %v8267
        %vm8274 = vmor %vm8272, %vm8273
        %v8275 = vsel %vm8274, %v8267, %v8271
        %v8276 = vand.u32 2147483647, %v6679
        %vm8277 = vcmp.eq.f32.partialorder %v8276, 8.507059e+37
        %v8278 = vand.u32 %v6679, 2147483648
        %v8279 = vor.u32 1.1754944e-38, %v8278
        %v8280 = vsel %vm8277, %v8279, %v8275
        %v8281 = vmul.f32 1.0, %v8280
        %v8282 = vrcp.pop %v6680
        %v8283 = vmul.f32 %v6680, %v8282
        %v8284 = vsub.f32 1.0, %v8283
        %v8285 = vmul.f32 %v8282, %v8284
        %v8286 = vadd.f32 %v8282, %v8285
        %vm8287 = vweird.f32 %v6680
        %vm8288 = vweird.f32 %v8282
        %vm8289 = vmor %vm8287, %vm8288
        %v8290 = vsel %vm8289, %v8282, %v8286
        %v8291 = vand.u32 2147483647, %v6680
        %vm8292 = vcmp.eq.f32.partialorder %v8291, 8.507059e+37
        %v8293 = vand.u32 %v6680, 2147483648
        %v8294 = vor.u32 1.1754944e-38, %v8293
        %v8295 = vsel %vm8292, %v8294, %v8290
        %v8296 = vmul.f32 1.0, %v8295
        %v8297 = vrcp.pop %v6681
        %v8298 = vmul.f32 %v6681, %v8297
        %v8299 = vsub.f32 1.0, %v8298
        %v8300 = vmul.f32 %v8297, %v8299
        %v8301 = vadd.f32 %v8297, %v8300
        %vm8302 = vweird.f32 %v6681
        %vm8303 = vweird.f32 %v8297
        %vm8304 = vmor %vm8302, %vm8303
        %v8305 = vsel %vm8304, %v8297, %v8301
        %v8306 = vand.u32 2147483647, %v6681
        %vm8307 = vcmp.eq.f32.partialorder %v8306, 8.507059e+37
        %v8308 = vand.u32 %v6681, 2147483648
        %v8309 = vor.u32 1.1754944e-38, %v8308
        %v8310 = vsel %vm8307, %v8309, %v8305
        %v8311 = vmul.f32 1.0, %v8310
        %v8312 = vrcp.pop %v6682
        %v8313 = vmul.f32 %v6682, %v8312
        %v8314 = vsub.f32 1.0, %v8313
        %v8315 = vmul.f32 %v8312, %v8314
        %v8316 = vadd.f32 %v8312, %v8315
        %vm8317 = vweird.f32 %v6682
        %vm8318 = vweird.f32 %v8312
        %vm8319 = vmor %vm8317, %vm8318
        %v8320 = vsel %vm8319, %v8312, %v8316
        %v8321 = vand.u32 2147483647, %v6682
        %vm8322 = vcmp.eq.f32.partialorder %v8321, 8.507059e+37
        %v8323 = vand.u32 %v6682, 2147483648
        %v8324 = vor.u32 1.1754944e-38, %v8323
        %v8325 = vsel %vm8322, %v8324, %v8320
        %v8326 = vmul.f32 1.0, %v8325
        %v8327 = vrcp.pop %v6683
        %v8328 = vmul.f32 %v6683, %v8327
        %v8329 = vsub.f32 1.0, %v8328
        %v8330 = vmul.f32 %v8327, %v8329
        %v8331 = vadd.f32 %v8327, %v8330
        %vm8332 = vweird.f32 %v6683
        %vm8333 = vweird.f32 %v8327
        %vm8334 = vmor %vm8332, %vm8333
        %v8335 = vsel %vm8334, %v8327, %v8331
        %v8336 = vand.u32 2147483647, %v6683
        %vm8337 = vcmp.eq.f32.partialorder %v8336, 8.507059e+37
        %v8338 = vand.u32 %v6683, 2147483648
        %v8339 = vor.u32 1.1754944e-38, %v8338
        %v8340 = vsel %vm8337, %v8339, %v8335
        %v8341 = vmul.f32 1.0, %v8340
        %v8342 = vrcp.pop %v6684
        %v8343 = vmul.f32 %v6684, %v8342
        %v8344 = vsub.f32 1.0, %v8343
        %v8345 = vmul.f32 %v8342, %v8344
        %v8346 = vadd.f32 %v8342, %v8345
        %vm8347 = vweird.f32 %v6684
        %vm8348 = vweird.f32 %v8342
        %vm8349 = vmor %vm8347, %vm8348
        %v8350 = vsel %vm8349, %v8342, %v8346
        %v8351 = vand.u32 2147483647, %v6684
        %vm8352 = vcmp.eq.f32.partialorder %v8351, 8.507059e+37
        %v8353 = vand.u32 %v6684, 2147483648
        %v8354 = vor.u32 1.1754944e-38, %v8353
        %v8355 = vsel %vm8352, %v8354, %v8350
        %v8356 = vmul.f32 1.0, %v8355
        %v8357 = vrcp.pop %v6685
        %v8358 = vmul.f32 %v6685, %v8357
        %v8359 = vsub.f32 1.0, %v8358
        %v8360 = vmul.f32 %v8357, %v8359
        %v8361 = vadd.f32 %v8357, %v8360
        %vm8362 = vweird.f32 %v6685
        %vm8363 = vweird.f32 %v8357
        %vm8364 = vmor %vm8362, %vm8363
        %v8365 = vsel %vm8364, %v8357, %v8361
        %v8366 = vand.u32 2147483647, %v6685
        %vm8367 = vcmp.eq.f32.partialorder %v8366, 8.507059e+37
        %v8368 = vand.u32 %v6685, 2147483648
        %v8369 = vor.u32 1.1754944e-38, %v8368
        %v8370 = vsel %vm8367, %v8369, %v8365
        %v8371 = vmul.f32 1.0, %v8370
        %v8372 = vrcp.pop %v6686
        %v8373 = vmul.f32 %v6686, %v8372
        %v8374 = vsub.f32 1.0, %v8373
        %v8375 = vmul.f32 %v8372, %v8374
        %v8376 = vadd.f32 %v8372, %v8375
        %vm8377 = vweird.f32 %v6686
        %vm8378 = vweird.f32 %v8372
        %vm8379 = vmor %vm8377, %vm8378
        %v8380 = vsel %vm8379, %v8372, %v8376
        %v8381 = vand.u32 2147483647, %v6686
        %vm8382 = vcmp.eq.f32.partialorder %v8381, 8.507059e+37
        %v8383 = vand.u32 %v6686, 2147483648
        %v8384 = vor.u32 1.1754944e-38, %v8383
        %v8385 = vsel %vm8382, %v8384, %v8380
        %v8386 = vmul.f32 1.0, %v8385
        %v8387 = vrcp.pop %v6687
        %v8388 = vmul.f32 %v6687, %v8387
        %v8389 = vsub.f32 1.0, %v8388
        %v8390 = vmul.f32 %v8387, %v8389
        %v8391 = vadd.f32 %v8387, %v8390
        %vm8392 = vweird.f32 %v6687
        %vm8393 = vweird.f32 %v8387
        %vm8394 = vmor %vm8392, %vm8393
        %v8395 = vsel %vm8394, %v8387, %v8391
        %v8396 = vand.u32 2147483647, %v6687
        %vm8397 = vcmp.eq.f32.partialorder %v8396, 8.507059e+37
        %v8398 = vand.u32 %v6687, 2147483648
        %v8399 = vor.u32 1.1754944e-38, %v8398
        %v8400 = vsel %vm8397, %v8399, %v8395
        %v8401 = vmul.f32 1.0, %v8400
        %v8402 = vrcp.pop %v6688
        %v8403 = vmul.f32 %v6688, %v8402
        %v8404 = vsub.f32 1.0, %v8403
        %v8405 = vmul.f32 %v8402, %v8404
        %v8406 = vadd.f32 %v8402, %v8405
        %vm8407 = vweird.f32 %v6688
        %vm8408 = vweird.f32 %v8402
        %vm8409 = vmor %vm8407, %vm8408
        %v8410 = vsel %vm8409, %v8402, %v8406
        %v8411 = vand.u32 2147483647, %v6688
        %vm8412 = vcmp.eq.f32.partialorder %v8411, 8.507059e+37
        %v8413 = vand.u32 %v6688, 2147483648
        %v8414 = vor.u32 1.1754944e-38, %v8413
        %v8415 = vsel %vm8412, %v8414, %v8410
        %v8416 = vmul.f32 1.0, %v8415
        %v8417 = vrcp.pop %v6689
        %v8418 = vmul.f32 %v6689, %v8417
        %v8419 = vsub.f32 1.0, %v8418
        %v8420 = vmul.f32 %v8417, %v8419
        %v8421 = vadd.f32 %v8417, %v8420
        %vm8422 = vweird.f32 %v6689
        %vm8423 = vweird.f32 %v8417
        %vm8424 = vmor %vm8422, %vm8423
        %v8425 = vsel %vm8424, %v8417, %v8421
        %v8426 = vand.u32 2147483647, %v6689
        %vm8427 = vcmp.eq.f32.partialorder %v8426, 8.507059e+37
        %v8428 = vand.u32 %v6689, 2147483648
        %v8429 = vor.u32 1.1754944e-38, %v8428
        %v8430 = vsel %vm8427, %v8429, %v8425
        %v8431 = vmul.f32 1.0, %v8430
        %v8432 = vrcp.pop %v6690
        %v8433 = vmul.f32 %v6690, %v8432
        %v8434 = vsub.f32 1.0, %v8433
        %v8435 = vmul.f32 %v8432, %v8434
        %v8436 = vadd.f32 %v8432, %v8435
        %vm8437 = vweird.f32 %v6690
        %vm8438 = vweird.f32 %v8432
        %vm8439 = vmor %vm8437, %vm8438
        %v8440 = vsel %vm8439, %v8432, %v8436
        %v8441 = vand.u32 2147483647, %v6690
        %vm8442 = vcmp.eq.f32.partialorder %v8441, 8.507059e+37
        %v8443 = vand.u32 %v6690, 2147483648
        %v8444 = vor.u32 1.1754944e-38, %v8443
        %v8445 = vsel %vm8442, %v8444, %v8440
        %v8446 = vmul.f32 1.0, %v8445
        %v8447 = vrcp.pop %v6691
        %v8448 = vmul.f32 %v6691, %v8447
        %v8449 = vsub.f32 1.0, %v8448
        %v8450 = vmul.f32 %v8447, %v8449
        %v8451 = vadd.f32 %v8447, %v8450
        %vm8452 = vweird.f32 %v6691
        %vm8453 = vweird.f32 %v8447
        %vm8454 = vmor %vm8452, %vm8453
        %v8455 = vsel %vm8454, %v8447, %v8451
        %v8456 = vand.u32 2147483647, %v6691
        %vm8457 = vcmp.eq.f32.partialorder %v8456, 8.507059e+37
        %v8458 = vand.u32 %v6691, 2147483648
        %v8459 = vor.u32 1.1754944e-38, %v8458
        %v8460 = vsel %vm8457, %v8459, %v8455
        %v8461 = vmul.f32 1.0, %v8460
        %v8462 = vrcp.pop %v6692
        %v8463 = vmul.f32 %v6692, %v8462
        %v8464 = vsub.f32 1.0, %v8463
        %v8465 = vmul.f32 %v8462, %v8464
        %v8466 = vadd.f32 %v8462, %v8465
        %vm8467 = vweird.f32 %v6692
        %vm8468 = vweird.f32 %v8462
        %vm8469 = vmor %vm8467, %vm8468
        %v8470 = vsel %vm8469, %v8462, %v8466
        %v8471 = vand.u32 2147483647, %v6692
        %vm8472 = vcmp.eq.f32.partialorder %v8471, 8.507059e+37
        %v8473 = vand.u32 %v6692, 2147483648
        %v8474 = vor.u32 1.1754944e-38, %v8473
        %v8475 = vsel %vm8472, %v8474, %v8470
        %v8476 = vmul.f32 1.0, %v8475
        %v8477 = vrcp.pop %v6693
        %v8478 = vmul.f32 %v6693, %v8477
        %v8479 = vsub.f32 1.0, %v8478
        %v8480 = vmul.f32 %v8477, %v8479
        %v8481 = vadd.f32 %v8477, %v8480
        %vm8482 = vweird.f32 %v6693
        %vm8483 = vweird.f32 %v8477
        %vm8484 = vmor %vm8482, %vm8483
        %v8485 = vsel %vm8484, %v8477, %v8481
        %v8486 = vand.u32 2147483647, %v6693
        %vm8487 = vcmp.eq.f32.partialorder %v8486, 8.507059e+37
        %v8488 = vand.u32 %v6693, 2147483648
        %v8489 = vor.u32 1.1754944e-38, %v8488
        %v8490 = vsel %vm8487, %v8489, %v8485
        %v8491 = vmul.f32 1.0, %v8490
        %v8492 = vrcp.pop %v6694
        %v8493 = vmul.f32 %v6694, %v8492
        %v8494 = vsub.f32 1.0, %v8493
        %v8495 = vmul.f32 %v8492, %v8494
        %v8496 = vadd.f32 %v8492, %v8495
        %vm8497 = vweird.f32 %v6694
        %vm8498 = vweird.f32 %v8492
        %vm8499 = vmor %vm8497, %vm8498
        %v8500 = vsel %vm8499, %v8492, %v8496
        %v8501 = vand.u32 2147483647, %v6694
        %vm8502 = vcmp.eq.f32.partialorder %v8501, 8.507059e+37
        %v8503 = vand.u32 %v6694, 2147483648
        %v8504 = vor.u32 1.1754944e-38, %v8503
        %v8505 = vsel %vm8502, %v8504, %v8500
        %v8506 = vmul.f32 1.0, %v8505
        %v8507 = vrcp.pop %v6695
        %v8508 = vmul.f32 %v6695, %v8507
        %v8509 = vsub.f32 1.0, %v8508
        %v8510 = vmul.f32 %v8507, %v8509
        %v8511 = vadd.f32 %v8507, %v8510
        %vm8512 = vweird.f32 %v6695
        %vm8513 = vweird.f32 %v8507
        %vm8514 = vmor %vm8512, %vm8513
        %v8515 = vsel %vm8514, %v8507, %v8511
        %v8516 = vand.u32 2147483647, %v6695
        %vm8517 = vcmp.eq.f32.partialorder %v8516, 8.507059e+37
        %v8518 = vand.u32 %v6695, 2147483648
        %v8519 = vor.u32 1.1754944e-38, %v8518
        %v8520 = vsel %vm8517, %v8519, %v8515
        %v8521 = vmul.f32 1.0, %v8520
        %v8522 = vrcp.pop %v6696
        %v8523 = vmul.f32 %v6696, %v8522
        %v8524 = vsub.f32 1.0, %v8523
        %v8525 = vmul.f32 %v8522, %v8524
        %v8526 = vadd.f32 %v8522, %v8525
        %vm8527 = vweird.f32 %v6696
        %vm8528 = vweird.f32 %v8522
        %vm8529 = vmor %vm8527, %vm8528
        %v8530 = vsel %vm8529, %v8522, %v8526
        %v8531 = vand.u32 2147483647, %v6696
        %vm8532 = vcmp.eq.f32.partialorder %v8531, 8.507059e+37
        %v8533 = vand.u32 %v6696, 2147483648
        %v8534 = vor.u32 1.1754944e-38, %v8533
        %v8535 = vsel %vm8532, %v8534, %v8530
        %v8536 = vmul.f32 1.0, %v8535
        %v8537 = vrcp.pop %v6697
        %v8538 = vmul.f32 %v6697, %v8537
        %v8539 = vsub.f32 1.0, %v8538
        %v8540 = vmul.f32 %v8537, %v8539
        %v8541 = vadd.f32 %v8537, %v8540
        %vm8542 = vweird.f32 %v6697
        %vm8543 = vweird.f32 %v8537
        %vm8544 = vmor %vm8542, %vm8543
        %v8545 = vsel %vm8544, %v8537, %v8541
        %v8546 = vand.u32 2147483647, %v6697
        %vm8547 = vcmp.eq.f32.partialorder %v8546, 8.507059e+37
        %v8548 = vand.u32 %v6697, 2147483648
        %v8549 = vor.u32 1.1754944e-38, %v8548
        %v8550 = vsel %vm8547, %v8549, %v8545
        %v8551 = vmul.f32 1.0, %v8550
        %v8552 = vrcp.pop %v6698
        %v8553 = vmul.f32 %v6698, %v8552
        %v8554 = vsub.f32 1.0, %v8553
        %v8555 = vmul.f32 %v8552, %v8554
        %v8556 = vadd.f32 %v8552, %v8555
        %vm8557 = vweird.f32 %v6698
        %vm8558 = vweird.f32 %v8552
        %vm8559 = vmor %vm8557, %vm8558
        %v8560 = vsel %vm8559, %v8552, %v8556
        %v8561 = vand.u32 2147483647, %v6698
        %vm8562 = vcmp.eq.f32.partialorder %v8561, 8.507059e+37
        %v8563 = vand.u32 %v6698, 2147483648
        %v8564 = vor.u32 1.1754944e-38, %v8563
        %v8565 = vsel %vm8562, %v8564, %v8560
        %v8566 = vmul.f32 1.0, %v8565
        %v8567 = vrcp.pop %v6699
        %v8568 = vmul.f32 %v6699, %v8567
        %v8569 = vsub.f32 1.0, %v8568
        %v8570 = vmul.f32 %v8567, %v8569
        %v8571 = vadd.f32 %v8567, %v8570
        %vm8572 = vweird.f32 %v6699
        %vm8573 = vweird.f32 %v8567
        %vm8574 = vmor %vm8572, %vm8573
        %v8575 = vsel %vm8574, %v8567, %v8571
        %v8576 = vand.u32 2147483647, %v6699
        %vm8577 = vcmp.eq.f32.partialorder %v8576, 8.507059e+37
        %v8578 = vand.u32 %v6699, 2147483648
        %v8579 = vor.u32 1.1754944e-38, %v8578
        %v8580 = vsel %vm8577, %v8579, %v8575
        %v8581 = vmul.f32 1.0, %v8580
        %v8582 = vrcp.pop %v6700
        %v8583 = vmul.f32 %v6700, %v8582
        %v8584 = vsub.f32 1.0, %v8583
        %v8585 = vmul.f32 %v8582, %v8584
        %v8586 = vadd.f32 %v8582, %v8585
        %vm8587 = vweird.f32 %v6700
        %vm8588 = vweird.f32 %v8582
        %vm8589 = vmor %vm8587, %vm8588
        %v8590 = vsel %vm8589, %v8582, %v8586
        %v8591 = vand.u32 2147483647, %v6700
        %vm8592 = vcmp.eq.f32.partialorder %v8591, 8.507059e+37
        %v8593 = vand.u32 %v6700, 2147483648
        %v8594 = vor.u32 1.1754944e-38, %v8593
        %v8595 = vsel %vm8592, %v8594, %v8590
        %v8596 = vmul.f32 1.0, %v8595
        %v8597 = vrcp.pop %v6701
        %v8598 = vmul.f32 %v6701, %v8597
        %v8599 = vsub.f32 1.0, %v8598
        %v8600 = vmul.f32 %v8597, %v8599
        %v8601 = vadd.f32 %v8597, %v8600
        %vm8602 = vweird.f32 %v6701
        %vm8603 = vweird.f32 %v8597
        %vm8604 = vmor %vm8602, %vm8603
        %v8605 = vsel %vm8604, %v8597, %v8601
        %v8606 = vand.u32 2147483647, %v6701
        %vm8607 = vcmp.eq.f32.partialorder %v8606, 8.507059e+37
        %v8608 = vand.u32 %v6701, 2147483648
        %v8609 = vor.u32 1.1754944e-38, %v8608
        %v8610 = vsel %vm8607, %v8609, %v8605
        %v8611 = vmul.f32 1.0, %v8610
        %v8612 = vrcp.pop %v6702
        %v8613 = vmul.f32 %v6702, %v8612
        %v8614 = vsub.f32 1.0, %v8613
        %v8615 = vmul.f32 %v8612, %v8614
        %v8616 = vadd.f32 %v8612, %v8615
        %vm8617 = vweird.f32 %v6702
        %vm8618 = vweird.f32 %v8612
        %vm8619 = vmor %vm8617, %vm8618
        %v8620 = vsel %vm8619, %v8612, %v8616
        %v8621 = vand.u32 2147483647, %v6702
        %vm8622 = vcmp.eq.f32.partialorder %v8621, 8.507059e+37
        %v8623 = vand.u32 %v6702, 2147483648
        %v8624 = vor.u32 1.1754944e-38, %v8623
        %v8625 = vsel %vm8622, %v8624, %v8620
        %v8626 = vmul.f32 1.0, %v8625
        %v8627 = vrcp.pop %v6703
        %v8628 = vmul.f32 %v6703, %v8627
        %v8629 = vsub.f32 1.0, %v8628
        %v8630 = vmul.f32 %v8627, %v8629
        %v8631 = vadd.f32 %v8627, %v8630
        %vm8632 = vweird.f32 %v6703
        %vm8633 = vweird.f32 %v8627
        %vm8634 = vmor %vm8632, %vm8633
        %v8635 = vsel %vm8634, %v8627, %v8631
        %v8636 = vand.u32 2147483647, %v6703
        %vm8637 = vcmp.eq.f32.partialorder %v8636, 8.507059e+37
        %v8638 = vand.u32 %v6703, 2147483648
        %v8639 = vor.u32 1.1754944e-38, %v8638
        %v8640 = vsel %vm8637, %v8639, %v8635
        %v8641 = vmul.f32 1.0, %v8640
        %v8642 = vrcp.pop %v6704
        %v8643 = vmul.f32 %v6704, %v8642
        %v8644 = vsub.f32 1.0, %v8643
        %v8645 = vmul.f32 %v8642, %v8644
        %v8646 = vadd.f32 %v8642, %v8645
        %vm8647 = vweird.f32 %v6704
        %vm8648 = vweird.f32 %v8642
        %vm8649 = vmor %vm8647, %vm8648
        %v8650 = vsel %vm8649, %v8642, %v8646
        %v8651 = vand.u32 2147483647, %v6704
        %vm8652 = vcmp.eq.f32.partialorder %v8651, 8.507059e+37
        %v8653 = vand.u32 %v6704, 2147483648
        %v8654 = vor.u32 1.1754944e-38, %v8653
        %v8655 = vsel %vm8652, %v8654, %v8650
        %v8656 = vmul.f32 1.0, %v8655
        %v8657 = vrcp.pop %v6705
        %v8658 = vmul.f32 %v6705, %v8657
        %v8659 = vsub.f32 1.0, %v8658
        %v8660 = vmul.f32 %v8657, %v8659
        %v8661 = vadd.f32 %v8657, %v8660
        %vm8662 = vweird.f32 %v6705
        %vm8663 = vweird.f32 %v8657
        %vm8664 = vmor %vm8662, %vm8663
        %v8665 = vsel %vm8664, %v8657, %v8661
        %v8666 = vand.u32 2147483647, %v6705
        %vm8667 = vcmp.eq.f32.partialorder %v8666, 8.507059e+37
        %v8668 = vand.u32 %v6705, 2147483648
        %v8669 = vor.u32 1.1754944e-38, %v8668
        %v8670 = vsel %vm8667, %v8669, %v8665
        %v8671 = vmul.f32 1.0, %v8670
        %v8672 = vrcp.pop %v6706
        %v8673 = vmul.f32 %v6706, %v8672
        %v8674 = vsub.f32 1.0, %v8673
        %v8675 = vmul.f32 %v8672, %v8674
        %v8676 = vadd.f32 %v8672, %v8675
        %vm8677 = vweird.f32 %v6706
        %vm8678 = vweird.f32 %v8672
        %vm8679 = vmor %vm8677, %vm8678
        %v8680 = vsel %vm8679, %v8672, %v8676
        %v8681 = vand.u32 2147483647, %v6706
        %vm8682 = vcmp.eq.f32.partialorder %v8681, 8.507059e+37
        %v8683 = vand.u32 %v6706, 2147483648
        %v8684 = vor.u32 1.1754944e-38, %v8683
        %v8685 = vsel %vm8682, %v8684, %v8680
        %v8686 = vmul.f32 1.0, %v8685
        %v8687 = vrcp.pop %v6707
        %v8688 = vmul.f32 %v6707, %v8687
        %v8689 = vsub.f32 1.0, %v8688
        %v8690 = vmul.f32 %v8687, %v8689
        %v8691 = vadd.f32 %v8687, %v8690
        %vm8692 = vweird.f32 %v6707
        %vm8693 = vweird.f32 %v8687
        %vm8694 = vmor %vm8692, %vm8693
        %v8695 = vsel %vm8694, %v8687, %v8691
        %v8696 = vand.u32 2147483647, %v6707
        %vm8697 = vcmp.eq.f32.partialorder %v8696, 8.507059e+37
        %v8698 = vand.u32 %v6707, 2147483648
        %v8699 = vor.u32 1.1754944e-38, %v8698
        %v8700 = vsel %vm8697, %v8699, %v8695
        %v8701 = vmul.f32 1.0, %v8700
        %v8702 = vrcp.pop %v6708
        %v8703 = vmul.f32 %v6708, %v8702
        %v8704 = vsub.f32 1.0, %v8703
        %v8705 = vmul.f32 %v8702, %v8704
        %v8706 = vadd.f32 %v8702, %v8705
        %vm8707 = vweird.f32 %v6708
        %vm8708 = vweird.f32 %v8702
        %vm8709 = vmor %vm8707, %vm8708
        %v8710 = vsel %vm8709, %v8702, %v8706
        %v8711 = vand.u32 2147483647, %v6708
        %vm8712 = vcmp.eq.f32.partialorder %v8711, 8.507059e+37
        %v8713 = vand.u32 %v6708, 2147483648
        %v8714 = vor.u32 1.1754944e-38, %v8713
        %v8715 = vsel %vm8712, %v8714, %v8710
        %v8716 = vmul.f32 1.0, %v8715
        %v8717 = vrcp.pop %v6709
        %v8718 = vmul.f32 %v6709, %v8717
        %v8719 = vsub.f32 1.0, %v8718
        %v8720 = vmul.f32 %v8717, %v8719
        %v8721 = vadd.f32 %v8717, %v8720
        %vm8722 = vweird.f32 %v6709
        %vm8723 = vweird.f32 %v8717
        %vm8724 = vmor %vm8722, %vm8723
        %v8725 = vsel %vm8724, %v8717, %v8721
        %v8726 = vand.u32 2147483647, %v6709
        %vm8727 = vcmp.eq.f32.partialorder %v8726, 8.507059e+37
        %v8728 = vand.u32 %v6709, 2147483648
        %v8729 = vor.u32 1.1754944e-38, %v8728
        %v8730 = vsel %vm8727, %v8729, %v8725
        %v8731 = vmul.f32 1.0, %v8730
        %v8732 = vrcp.pop %v6710
        %v8733 = vmul.f32 %v6710, %v8732
        %v8734 = vsub.f32 1.0, %v8733
        %v8735 = vmul.f32 %v8732, %v8734
        %v8736 = vadd.f32 %v8732, %v8735
        %vm8737 = vweird.f32 %v6710
        %vm8738 = vweird.f32 %v8732
        %vm8739 = vmor %vm8737, %vm8738
        %v8740 = vsel %vm8739, %v8732, %v8736
        %v8741 = vand.u32 2147483647, %v6710
        %vm8742 = vcmp.eq.f32.partialorder %v8741, 8.507059e+37
        %v8743 = vand.u32 %v6710, 2147483648
        %v8744 = vor.u32 1.1754944e-38, %v8743
        %v8745 = vsel %vm8742, %v8744, %v8740
        %v8746 = vmul.f32 1.0, %v8745
        %v8747 = vrcp.pop %v6711
        %v8748 = vmul.f32 %v6711, %v8747
        %v8749 = vsub.f32 1.0, %v8748
        %v8750 = vmul.f32 %v8747, %v8749
        %v8751 = vadd.f32 %v8747, %v8750
        %vm8752 = vweird.f32 %v6711
        %vm8753 = vweird.f32 %v8747
        %vm8754 = vmor %vm8752, %vm8753
        %v8755 = vsel %vm8754, %v8747, %v8751
        %v8756 = vand.u32 2147483647, %v6711
        %vm8757 = vcmp.eq.f32.partialorder %v8756, 8.507059e+37
        %v8758 = vand.u32 %v6711, 2147483648
        %v8759 = vor.u32 1.1754944e-38, %v8758
        %v8760 = vsel %vm8757, %v8759, %v8755
        %v8761 = vmul.f32 1.0, %v8760
        %v8762 = vrcp.pop %v6712
        %v8763 = vmul.f32 %v6712, %v8762
        %v8764 = vsub.f32 1.0, %v8763
        %v8765 = vmul.f32 %v8762, %v8764
        %v8766 = vadd.f32 %v8762, %v8765
        %vm8767 = vweird.f32 %v6712
        %vm8768 = vweird.f32 %v8762
        %vm8769 = vmor %vm8767, %vm8768
        %v8770 = vsel %vm8769, %v8762, %v8766
        %v8771 = vand.u32 2147483647, %v6712
        %vm8772 = vcmp.eq.f32.partialorder %v8771, 8.507059e+37
        %v8773 = vand.u32 %v6712, 2147483648
        %v8774 = vor.u32 1.1754944e-38, %v8773
        %v8775 = vsel %vm8772, %v8774, %v8770
        %v8776 = vmul.f32 1.0, %v8775
        %v8777 = vrcp.pop %v6713
        %v8778 = vmul.f32 %v6713, %v8777
        %v8779 = vsub.f32 1.0, %v8778
        %v8780 = vmul.f32 %v8777, %v8779
        %v8781 = vadd.f32 %v8777, %v8780
        %vm8782 = vweird.f32 %v6713
        %vm8783 = vweird.f32 %v8777
        %vm8784 = vmor %vm8782, %vm8783
        %v8785 = vsel %vm8784, %v8777, %v8781
        %v8786 = vand.u32 2147483647, %v6713
        %vm8787 = vcmp.eq.f32.partialorder %v8786, 8.507059e+37
        %v8788 = vand.u32 %v6713, 2147483648
        %v8789 = vor.u32 1.1754944e-38, %v8788
        %v8790 = vsel %vm8787, %v8789, %v8785
        %v8791 = vmul.f32 1.0, %v8790
        %v8792 = vrcp.pop %v6714
        %v8793 = vmul.f32 %v6714, %v8792
        %v8794 = vsub.f32 1.0, %v8793
        %v8795 = vmul.f32 %v8792, %v8794
        %v8796 = vadd.f32 %v8792, %v8795
        %vm8797 = vweird.f32 %v6714
        %vm8798 = vweird.f32 %v8792
        %vm8799 = vmor %vm8797, %vm8798
        %v8800 = vsel %vm8799, %v8792, %v8796
        %v8801 = vand.u32 2147483647, %v6714
        %vm8802 = vcmp.eq.f32.partialorder %v8801, 8.507059e+37
        %v8803 = vand.u32 %v6714, 2147483648
        %v8804 = vor.u32 1.1754944e-38, %v8803
        %v8805 = vsel %vm8802, %v8804, %v8800
        %v8806 = vmul.f32 1.0, %v8805
        %v8807 = vrcp.pop %v6715
        %v8808 = vmul.f32 %v6715, %v8807
        %v8809 = vsub.f32 1.0, %v8808
        %v8810 = vmul.f32 %v8807, %v8809
        %v8811 = vadd.f32 %v8807, %v8810
        %vm8812 = vweird.f32 %v6715
        %vm8813 = vweird.f32 %v8807
        %vm8814 = vmor %vm8812, %vm8813
        %v8815 = vsel %vm8814, %v8807, %v8811
        %v8816 = vand.u32 2147483647, %v6715
        %vm8817 = vcmp.eq.f32.partialorder %v8816, 8.507059e+37
        %v8818 = vand.u32 %v6715, 2147483648
        %v8819 = vor.u32 1.1754944e-38, %v8818
        %v8820 = vsel %vm8817, %v8819, %v8815
        %v8821 = vmul.f32 1.0, %v8820
        %v8822 = vrcp.pop %v6716
        %v8823 = vmul.f32 %v6716, %v8822
        %v8824 = vsub.f32 1.0, %v8823
        %v8825 = vmul.f32 %v8822, %v8824
        %v8826 = vadd.f32 %v8822, %v8825
        %vm8827 = vweird.f32 %v6716
        %vm8828 = vweird.f32 %v8822
        %vm8829 = vmor %vm8827, %vm8828
        %v8830 = vsel %vm8829, %v8822, %v8826
        %v8831 = vand.u32 2147483647, %v6716
        %vm8832 = vcmp.eq.f32.partialorder %v8831, 8.507059e+37
        %v8833 = vand.u32 %v6716, 2147483648
        %v8834 = vor.u32 1.1754944e-38, %v8833
        %v8835 = vsel %vm8832, %v8834, %v8830
        %v8836 = vmul.f32 1.0, %v8835
        %v8837 = vrcp.pop %v6717
        %v8838 = vmul.f32 %v6717, %v8837
        %v8839 = vsub.f32 1.0, %v8838
        %v8840 = vmul.f32 %v8837, %v8839
        %v8841 = vadd.f32 %v8837, %v8840
        %vm8842 = vweird.f32 %v6717
        %vm8843 = vweird.f32 %v8837
        %vm8844 = vmor %vm8842, %vm8843
        %v8845 = vsel %vm8844, %v8837, %v8841
        %v8846 = vand.u32 2147483647, %v6717
        %vm8847 = vcmp.eq.f32.partialorder %v8846, 8.507059e+37
        %v8848 = vand.u32 %v6717, 2147483648
        %v8849 = vor.u32 1.1754944e-38, %v8848
        %v8850 = vsel %vm8847, %v8849, %v8845
        %v8851 = vmul.f32 1.0, %v8850
        %v8852 = vrcp.pop %v6718
        %v8853 = vmul.f32 %v6718, %v8852
        %v8854 = vsub.f32 1.0, %v8853
        %v8855 = vmul.f32 %v8852, %v8854
        %v8856 = vadd.f32 %v8852, %v8855
        %vm8857 = vweird.f32 %v6718
        %vm8858 = vweird.f32 %v8852
        %vm8859 = vmor %vm8857, %vm8858
        %v8860 = vsel %vm8859, %v8852, %v8856
        %v8861 = vand.u32 2147483647, %v6718
        %vm8862 = vcmp.eq.f32.partialorder %v8861, 8.507059e+37
        %v8863 = vand.u32 %v6718, 2147483648
        %v8864 = vor.u32 1.1754944e-38, %v8863
        %v8865 = vsel %vm8862, %v8864, %v8860
        %v8866 = vmul.f32 1.0, %v8865
        %v8867 = vrcp.pop %v6719
        %v8868 = vmul.f32 %v6719, %v8867
        %v8869 = vsub.f32 1.0, %v8868
        %v8870 = vmul.f32 %v8867, %v8869
        %v8871 = vadd.f32 %v8867, %v8870
        %vm8872 = vweird.f32 %v6719
        %vm8873 = vweird.f32 %v8867
        %vm8874 = vmor %vm8872, %vm8873
        %v8875 = vsel %vm8874, %v8867, %v8871
        %v8876 = vand.u32 2147483647, %v6719
        %vm8877 = vcmp.eq.f32.partialorder %v8876, 8.507059e+37
        %v8878 = vand.u32 %v6719, 2147483648
        %v8879 = vor.u32 1.1754944e-38, %v8878
        %v8880 = vsel %vm8877, %v8879, %v8875
        %v8881 = vmul.f32 1.0, %v8880
        %v8882 = vrcp.pop %v6720
        %v8883 = vmul.f32 %v6720, %v8882
        %v8884 = vsub.f32 1.0, %v8883
        %v8885 = vmul.f32 %v8882, %v8884
        %v8886 = vadd.f32 %v8882, %v8885
        %vm8887 = vweird.f32 %v6720
        %vm8888 = vweird.f32 %v8882
        %vm8889 = vmor %vm8887, %vm8888
        %v8890 = vsel %vm8889, %v8882, %v8886
        %v8891 = vand.u32 2147483647, %v6720
        %vm8892 = vcmp.eq.f32.partialorder %v8891, 8.507059e+37
        %v8893 = vand.u32 %v6720, 2147483648
        %v8894 = vor.u32 1.1754944e-38, %v8893
        %v8895 = vsel %vm8892, %v8894, %v8890
        %v8896 = vmul.f32 1.0, %v8895
        %v8897 = vrcp.pop %v6721
        %v8898 = vmul.f32 %v6721, %v8897
        %v8899 = vsub.f32 1.0, %v8898
        %v8900 = vmul.f32 %v8897, %v8899
        %v8901 = vadd.f32 %v8897, %v8900
        %vm8902 = vweird.f32 %v6721
        %vm8903 = vweird.f32 %v8897
        %vm8904 = vmor %vm8902, %vm8903
        %v8905 = vsel %vm8904, %v8897, %v8901
        %v8906 = vand.u32 2147483647, %v6721
        %vm8907 = vcmp.eq.f32.partialorder %v8906, 8.507059e+37
        %v8908 = vand.u32 %v6721, 2147483648
        %v8909 = vor.u32 1.1754944e-38, %v8908
        %v8910 = vsel %vm8907, %v8909, %v8905
        %v8911 = vmul.f32 1.0, %v8910
        %v8912 = vrcp.pop %v6722
        %v8913 = vmul.f32 %v6722, %v8912
        %v8914 = vsub.f32 1.0, %v8913
        %v8915 = vmul.f32 %v8912, %v8914
        %v8916 = vadd.f32 %v8912, %v8915
        %vm8917 = vweird.f32 %v6722
        %vm8918 = vweird.f32 %v8912
        %vm8919 = vmor %vm8917, %vm8918
        %v8920 = vsel %vm8919, %v8912, %v8916
        %v8921 = vand.u32 2147483647, %v6722
        %vm8922 = vcmp.eq.f32.partialorder %v8921, 8.507059e+37
        %v8923 = vand.u32 %v6722, 2147483648
        %v8924 = vor.u32 1.1754944e-38, %v8923
        %v8925 = vsel %vm8922, %v8924, %v8920
        %v8926 = vmul.f32 1.0, %v8925
        %v8927 = vrcp.pop %v6723
        %v8928 = vmul.f32 %v6723, %v8927
        %v8929 = vsub.f32 1.0, %v8928
        %v8930 = vmul.f32 %v8927, %v8929
        %v8931 = vadd.f32 %v8927, %v8930
        %vm8932 = vweird.f32 %v6723
        %vm8933 = vweird.f32 %v8927
        %vm8934 = vmor %vm8932, %vm8933
        %v8935 = vsel %vm8934, %v8927, %v8931
        %v8936 = vand.u32 2147483647, %v6723
        %vm8937 = vcmp.eq.f32.partialorder %v8936, 8.507059e+37
        %v8938 = vand.u32 %v6723, 2147483648
        %v8939 = vor.u32 1.1754944e-38, %v8938
        %v8940 = vsel %vm8937, %v8939, %v8935
        %v8941 = vmul.f32 1.0, %v8940
        %v8942 = vrcp.pop %v6724
        %v8943 = vmul.f32 %v6724, %v8942
        %v8944 = vsub.f32 1.0, %v8943
        %v8945 = vmul.f32 %v8942, %v8944
        %v8946 = vadd.f32 %v8942, %v8945
        %vm8947 = vweird.f32 %v6724
        %vm8948 = vweird.f32 %v8942
        %vm8949 = vmor %vm8947, %vm8948
        %v8950 = vsel %vm8949, %v8942, %v8946
        %v8951 = vand.u32 2147483647, %v6724
        %vm8952 = vcmp.eq.f32.partialorder %v8951, 8.507059e+37
        %v8953 = vand.u32 %v6724, 2147483648
        %v8954 = vor.u32 1.1754944e-38, %v8953
        %v8955 = vsel %vm8952, %v8954, %v8950
        %v8956 = vmul.f32 1.0, %v8955
        %v8957 = vrcp.pop %v6725
        %v8958 = vmul.f32 %v6725, %v8957
        %v8959 = vsub.f32 1.0, %v8958
        %v8960 = vmul.f32 %v8957, %v8959
        %v8961 = vadd.f32 %v8957, %v8960
        %vm8962 = vweird.f32 %v6725
        %vm8963 = vweird.f32 %v8957
        %vm8964 = vmor %vm8962, %vm8963
        %v8965 = vsel %vm8964, %v8957, %v8961
        %v8966 = vand.u32 2147483647, %v6725
        %vm8967 = vcmp.eq.f32.partialorder %v8966, 8.507059e+37
        %v8968 = vand.u32 %v6725, 2147483648
        %v8969 = vor.u32 1.1754944e-38, %v8968
        %v8970 = vsel %vm8967, %v8969, %v8965
        %v8971 = vmul.f32 1.0, %v8970
        %v8972 = vrcp.pop %v6726
        %v8973 = vmul.f32 %v6726, %v8972
        %v8974 = vsub.f32 1.0, %v8973
        %v8975 = vmul.f32 %v8972, %v8974
        %v8976 = vadd.f32 %v8972, %v8975
        %vm8977 = vweird.f32 %v6726
        %vm8978 = vweird.f32 %v8972
        %vm8979 = vmor %vm8977, %vm8978
        %v8980 = vsel %vm8979, %v8972, %v8976
        %v8981 = vand.u32 2147483647, %v6726
        %vm8982 = vcmp.eq.f32.partialorder %v8981, 8.507059e+37
        %v8983 = vand.u32 %v6726, 2147483648
        %v8984 = vor.u32 1.1754944e-38, %v8983
        %v8985 = vsel %vm8982, %v8984, %v8980
        %v8986 = vmul.f32 1.0, %v8985
        %v8987 = vrcp.pop %v6727
        %v8988 = vmul.f32 %v6727, %v8987
        %v8989 = vsub.f32 1.0, %v8988
        %v8990 = vmul.f32 %v8987, %v8989
        %v8991 = vadd.f32 %v8987, %v8990
        %vm8992 = vweird.f32 %v6727
        %vm8993 = vweird.f32 %v8987
        %vm8994 = vmor %vm8992, %vm8993
        %v8995 = vsel %vm8994, %v8987, %v8991
        %v8996 = vand.u32 2147483647, %v6727
        %vm8997 = vcmp.eq.f32.partialorder %v8996, 8.507059e+37
        %v8998 = vand.u32 %v6727, 2147483648
        %v8999 = vor.u32 1.1754944e-38, %v8998
        %v9000 = vsel %vm8997, %v8999, %v8995
        %v9001 = vmul.f32 1.0, %v9000
        %v9002 = vrcp.pop %v6728
        %v9003 = vmul.f32 %v6728, %v9002
        %v9004 = vsub.f32 1.0, %v9003
        %v9005 = vmul.f32 %v9002, %v9004
        %v9006 = vadd.f32 %v9002, %v9005
        %vm9007 = vweird.f32 %v6728
        %vm9008 = vweird.f32 %v9002
        %vm9009 = vmor %vm9007, %vm9008
        %v9010 = vsel %vm9009, %v9002, %v9006
        %v9011 = vand.u32 2147483647, %v6728
        %vm9012 = vcmp.eq.f32.partialorder %v9011, 8.507059e+37
        %v9013 = vand.u32 %v6728, 2147483648
        %v9014 = vor.u32 1.1754944e-38, %v9013
        %v9015 = vsel %vm9012, %v9014, %v9010
        %v9016 = vmul.f32 1.0, %v9015
        %v9017 = vrcp.pop %v6729
        %v9018 = vmul.f32 %v6729, %v9017
        %v9019 = vsub.f32 1.0, %v9018
        %v9020 = vmul.f32 %v9017, %v9019
        %v9021 = vadd.f32 %v9017, %v9020
        %vm9022 = vweird.f32 %v6729
        %vm9023 = vweird.f32 %v9017
        %vm9024 = vmor %vm9022, %vm9023
        %v9025 = vsel %vm9024, %v9017, %v9021
        %v9026 = vand.u32 2147483647, %v6729
        %vm9027 = vcmp.eq.f32.partialorder %v9026, 8.507059e+37
        %v9028 = vand.u32 %v6729, 2147483648
        %v9029 = vor.u32 1.1754944e-38, %v9028
        %v9030 = vsel %vm9027, %v9029, %v9025
        %v9031 = vmul.f32 1.0, %v9030
        %v9032 = vrcp.pop %v6730
        %v9033 = vmul.f32 %v6730, %v9032
        %v9034 = vsub.f32 1.0, %v9033
        %v9035 = vmul.f32 %v9032, %v9034
        %v9036 = vadd.f32 %v9032, %v9035
        %vm9037 = vweird.f32 %v6730
        %vm9038 = vweird.f32 %v9032
        %vm9039 = vmor %vm9037, %vm9038
        %v9040 = vsel %vm9039, %v9032, %v9036
        %v9041 = vand.u32 2147483647, %v6730
        %vm9042 = vcmp.eq.f32.partialorder %v9041, 8.507059e+37
        %v9043 = vand.u32 %v6730, 2147483648
        %v9044 = vor.u32 1.1754944e-38, %v9043
        %v9045 = vsel %vm9042, %v9044, %v9040
        %v9046 = vmul.f32 1.0, %v9045
        %v9047 = vrcp.pop %v6731
        %v9048 = vmul.f32 %v6731, %v9047
        %v9049 = vsub.f32 1.0, %v9048
        %v9050 = vmul.f32 %v9047, %v9049
        %v9051 = vadd.f32 %v9047, %v9050
        %vm9052 = vweird.f32 %v6731
        %vm9053 = vweird.f32 %v9047
        %vm9054 = vmor %vm9052, %vm9053
        %v9055 = vsel %vm9054, %v9047, %v9051
        %v9056 = vand.u32 2147483647, %v6731
        %vm9057 = vcmp.eq.f32.partialorder %v9056, 8.507059e+37
        %v9058 = vand.u32 %v6731, 2147483648
        %v9059 = vor.u32 1.1754944e-38, %v9058
        %v9060 = vsel %vm9057, %v9059, %v9055
        %v9061 = vmul.f32 1.0, %v9060
        %v9062 = vrcp.pop %v6732
        %v9063 = vmul.f32 %v6732, %v9062
        %v9064 = vsub.f32 1.0, %v9063
        %v9065 = vmul.f32 %v9062, %v9064
        %v9066 = vadd.f32 %v9062, %v9065
        %vm9067 = vweird.f32 %v6732
        %vm9068 = vweird.f32 %v9062
        %vm9069 = vmor %vm9067, %vm9068
        %v9070 = vsel %vm9069, %v9062, %v9066
        %v9071 = vand.u32 2147483647, %v6732
        %vm9072 = vcmp.eq.f32.partialorder %v9071, 8.507059e+37
        %v9073 = vand.u32 %v6732, 2147483648
        %v9074 = vor.u32 1.1754944e-38, %v9073
        %v9075 = vsel %vm9072, %v9074, %v9070
        %v9076 = vmul.f32 1.0, %v9075
        %v9077 = vrcp.pop %v6733
        %v9078 = vmul.f32 %v6733, %v9077
        %v9079 = vsub.f32 1.0, %v9078
        %v9080 = vmul.f32 %v9077, %v9079
        %v9081 = vadd.f32 %v9077, %v9080
        %vm9082 = vweird.f32 %v6733
        %vm9083 = vweird.f32 %v9077
        %vm9084 = vmor %vm9082, %vm9083
        %v9085 = vsel %vm9084, %v9077, %v9081
        %v9086 = vand.u32 2147483647, %v6733
        %vm9087 = vcmp.eq.f32.partialorder %v9086, 8.507059e+37
        %v9088 = vand.u32 %v6733, 2147483648
        %v9089 = vor.u32 1.1754944e-38, %v9088
        %v9090 = vsel %vm9087, %v9089, %v9085
        %v9091 = vmul.f32 1.0, %v9090
        %v9092 = vrcp.pop %v6734
        %v9093 = vmul.f32 %v6734, %v9092
        %v9094 = vsub.f32 1.0, %v9093
        %v9095 = vmul.f32 %v9092, %v9094
        %v9096 = vadd.f32 %v9092, %v9095
        %vm9097 = vweird.f32 %v6734
        %vm9098 = vweird.f32 %v9092
        %vm9099 = vmor %vm9097, %vm9098
        %v9100 = vsel %vm9099, %v9092, %v9096
        %v9101 = vand.u32 2147483647, %v6734
        %vm9102 = vcmp.eq.f32.partialorder %v9101, 8.507059e+37
        %v9103 = vand.u32 %v6734, 2147483648
        %v9104 = vor.u32 1.1754944e-38, %v9103
        %v9105 = vsel %vm9102, %v9104, %v9100
        %v9106 = vmul.f32 1.0, %v9105
        %v9107 = vrcp.pop %v6735
        %v9108 = vmul.f32 %v6735, %v9107
        %v9109 = vsub.f32 1.0, %v9108
        %v9110 = vmul.f32 %v9107, %v9109
        %v9111 = vadd.f32 %v9107, %v9110
        %vm9112 = vweird.f32 %v6735
        %vm9113 = vweird.f32 %v9107
        %vm9114 = vmor %vm9112, %vm9113
        %v9115 = vsel %vm9114, %v9107, %v9111
        %v9116 = vand.u32 2147483647, %v6735
        %vm9117 = vcmp.eq.f32.partialorder %v9116, 8.507059e+37
        %v9118 = vand.u32 %v6735, 2147483648
        %v9119 = vor.u32 1.1754944e-38, %v9118
        %v9120 = vsel %vm9117, %v9119, %v9115
        %v9121 = vmul.f32 1.0, %v9120
        %v9122 = vrcp.pop %v6736
        %v9123 = vmul.f32 %v6736, %v9122
        %v9124 = vsub.f32 1.0, %v9123
        %v9125 = vmul.f32 %v9122, %v9124
        %v9126 = vadd.f32 %v9122, %v9125
        %vm9127 = vweird.f32 %v6736
        %vm9128 = vweird.f32 %v9122
        %vm9129 = vmor %vm9127, %vm9128
        %v9130 = vsel %vm9129, %v9122, %v9126
        %v9131 = vand.u32 2147483647, %v6736
        %vm9132 = vcmp.eq.f32.partialorder %v9131, 8.507059e+37
        %v9133 = vand.u32 %v6736, 2147483648
        %v9134 = vor.u32 1.1754944e-38, %v9133
        %v9135 = vsel %vm9132, %v9134, %v9130
        %v9136 = vmul.f32 1.0, %v9135
        %v9137 = vmul.f32 %v5937, %v6751
        %v9138 = vmul.f32 %v5938, %v6766
        %v9139 = vmul.f32 %v5939, %v6781
        %v9140 = vmul.f32 %v5940, %v6796
        %v9141 = vmul.f32 %v5941, %v6811
        %v9142 = vmul.f32 %v5942, %v6826
        %v9143 = vmul.f32 %v5943, %v6841
        %v9144 = vmul.f32 %v5944, %v6856
        %v9145 = vmul.f32 %v5945, %v6871
        %v9146 = vmul.f32 %v5946, %v6886
        %v9147 = vmul.f32 %v5947, %v6901
        %v9148 = vmul.f32 %v5948, %v6916
        %v9149 = vmul.f32 %v5949, %v6931
        %v9150 = vmul.f32 %v5950, %v6946
        %v9151 = vmul.f32 %v5951, %v6961
        %v9152 = vmul.f32 %v5952, %v6976
        %v9153 = vmul.f32 %v5953, %v6991
        %v9154 = vmul.f32 %v5954, %v7006
        %v9155 = vmul.f32 %v5955, %v7021
        %v9156 = vmul.f32 %v5956, %v7036
        %v9157 = vmul.f32 %v5957, %v7051
        %v9158 = vmul.f32 %v5958, %v7066
        %v9159 = vmul.f32 %v5959, %v7081
        %v9160 = vmul.f32 %v5960, %v7096
        %v9161 = vmul.f32 %v5961, %v7111
        %v9162 = vmul.f32 %v5962, %v7126
        %v9163 = vmul.f32 %v5963, %v7141
        %v9164 = vmul.f32 %v5964, %v7156
        %v9165 = vmul.f32 %v5965, %v7171
        %v9166 = vmul.f32 %v5966, %v7186
        %v9167 = vmul.f32 %v5967, %v7201
        %v9168 = vmul.f32 %v5968, %v7216
        %v9169 = vmul.f32 %v5969, %v7231
        %v9170 = vmul.f32 %v5970, %v7246
        %v9171 = vmul.f32 %v5971, %v7261
        %v9172 = vmul.f32 %v5972, %v7276
        %v9173 = vmul.f32 %v5973, %v7291
        %v9174 = vmul.f32 %v5974, %v7306
        %v9175 = vmul.f32 %v5975, %v7321
        %v9176 = vmul.f32 %v5976, %v7336
        %v9177 = vmul.f32 %v5977, %v7351
        %v9178 = vmul.f32 %v5978, %v7366
        %v9179 = vmul.f32 %v5979, %v7381
        %v9180 = vmul.f32 %v5980, %v7396
        %v9181 = vmul.f32 %v5981, %v7411
        %v9182 = vmul.f32 %v5982, %v7426
        %v9183 = vmul.f32 %v5983, %v7441
        %v9184 = vmul.f32 %v5984, %v7456
        %v9185 = vmul.f32 %v5985, %v7471
        %v9186 = vmul.f32 %v5986, %v7486
        %v9187 = vmul.f32 %v5987, %v7501
        %v9188 = vmul.f32 %v5988, %v7516
        %v9189 = vmul.f32 %v5989, %v7531
        %v9190 = vmul.f32 %v5990, %v7546
        %v9191 = vmul.f32 %v5991, %v7561
        %v9192 = vmul.f32 %v5992, %v7576
        %v9193 = vmul.f32 %v5993, %v7591
        %v9194 = vmul.f32 %v5994, %v7606
        %v9195 = vmul.f32 %v5995, %v7621
        %v9196 = vmul.f32 %v5996, %v7636
        %v9197 = vmul.f32 %v5997, %v7651
        %v9198 = vmul.f32 %v5998, %v7666
        %v9199 = vmul.f32 %v5999, %v7681
        %v9200 = vmul.f32 %v6000, %v7696
        %v9201 = vmul.f32 %v6001, %v7711
        %v9202 = vmul.f32 %v6002, %v7726
        %v9203 = vmul.f32 %v6003, %v7741
        %v9204 = vmul.f32 %v6004, %v7756
        %v9205 = vmul.f32 %v6005, %v7771
        %v9206 = vmul.f32 %v6006, %v7786
        %v9207 = vmul.f32 %v6007, %v7801
        %v9208 = vmul.f32 %v6008, %v7816
        %v9209 = vmul.f32 %v6009, %v7831
        %v9210 = vmul.f32 %v6010, %v7846
        %v9211 = vmul.f32 %v6011, %v7861
        %v9212 = vmul.f32 %v6012, %v7876
        %v9213 = vmul.f32 %v6013, %v7891
        %v9214 = vmul.f32 %v6014, %v7906
        %v9215 = vmul.f32 %v6015, %v7921
        %v9216 = vmul.f32 %v6016, %v7936
        %v9217 = vmul.f32 %v6017, %v7951
        %v9218 = vmul.f32 %v6018, %v7966
        %v9219 = vmul.f32 %v6019, %v7981
        %v9220 = vmul.f32 %v6020, %v7996
        %v9221 = vmul.f32 %v6021, %v8011
        %v9222 = vmul.f32 %v6022, %v8026
        %v9223 = vmul.f32 %v6023, %v8041
        %v9224 = vmul.f32 %v6024, %v8056
        %v9225 = vmul.f32 %v6025, %v8071
        %v9226 = vmul.f32 %v6026, %v8086
        %v9227 = vmul.f32 %v6027, %v8101
        %v9228 = vmul.f32 %v6028, %v8116
        %v9229 = vmul.f32 %v6029, %v8131
        %v9230 = vmul.f32 %v6030, %v8146
        %v9231 = vmul.f32 %v6031, %v8161
        %v9232 = vmul.f32 %v6032, %v8176
        %v9233 = vmul.f32 %v6033, %v8191
        %v9234 = vmul.f32 %v6034, %v8206
        %v9235 = vmul.f32 %v6035, %v8221
        %v9236 = vmul.f32 %v6036, %v8236
        %v9237 = vmul.f32 %v6037, %v8251
        %v9238 = vmul.f32 %v6038, %v8266
        %v9239 = vmul.f32 %v6039, %v8281
        %v9240 = vmul.f32 %v6040, %v8296
        %v9241 = vmul.f32 %v6041, %v8311
        %v9242 = vmul.f32 %v6042, %v8326
        %v9243 = vmul.f32 %v6043, %v8341
        %v9244 = vmul.f32 %v6044, %v8356
        %v9245 = vmul.f32 %v6045, %v8371
        %v9246 = vmul.f32 %v6046, %v8386
        %v9247 = vmul.f32 %v6047, %v8401
        %v9248 = vmul.f32 %v6048, %v8416
        %v9249 = vmul.f32 %v6049, %v8431
        %v9250 = vmul.f32 %v6050, %v8446
        %v9251 = vmul.f32 %v6051, %v8461
        %v9252 = vmul.f32 %v6052, %v8476
        %v9253 = vmul.f32 %v6053, %v8491
        %v9254 = vmul.f32 %v6054, %v8506
        %v9255 = vmul.f32 %v6055, %v8521
        %v9256 = vmul.f32 %v6056, %v8536
        %v9257 = vmul.f32 %v6057, %v8551
        %v9258 = vmul.f32 %v6058, %v8566
        %v9259 = vmul.f32 %v6059, %v8581
        %v9260 = vmul.f32 %v6060, %v8596
        %v9261 = vmul.f32 %v6061, %v8611
        %v9262 = vmul.f32 %v6062, %v8626
        %v9263 = vmul.f32 %v6063, %v8641
        %v9264 = vmul.f32 %v6064, %v8656
        %v9265 = vmul.f32 %v6065, %v8671
        %v9266 = vmul.f32 %v6066, %v8686
        %v9267 = vmul.f32 %v6067, %v8701
        %v9268 = vmul.f32 %v6068, %v8716
        %v9269 = vmul.f32 %v6069, %v8731
        %v9270 = vmul.f32 %v6070, %v8746
        %v9271 = vmul.f32 %v6071, %v8761
        %v9272 = vmul.f32 %v6072, %v8776
        %v9273 = vmul.f32 %v6073, %v8791
        %v9274 = vmul.f32 %v6074, %v8806
        %v9275 = vmul.f32 %v6075, %v8821
        %v9276 = vmul.f32 %v6076, %v8836
        %v9277 = vmul.f32 %v6077, %v8851
        %v9278 = vmul.f32 %v6078, %v8866
        %v9279 = vmul.f32 %v6079, %v8881
        %v9280 = vmul.f32 %v6080, %v8896
        %v9281 = vmul.f32 %v6081, %v8911
        %v9282 = vmul.f32 %v6082, %v8926
        %v9283 = vmul.f32 %v6083, %v8941
        %v9284 = vmul.f32 %v6084, %v8956
        %v9285 = vmul.f32 %v6085, %v8971
        %v9286 = vmul.f32 %v6086, %v8986
        %v9287 = vmul.f32 %v6087, %v9001
        %v9288 = vmul.f32 %v6088, %v9016
        %v9289 = vmul.f32 %v6089, %v9031
        %v9290 = vmul.f32 %v6090, %v9046
        %v9291 = vmul.f32 %v6091, %v9061
        %v9292 = vmul.f32 %v6092, %v9076
        %v9293 = vmul.f32 %v6093, %v9091
        %v9294 = vmul.f32 %v6094, %v9106
        %v9295 = vmul.f32 %v6095, %v9121
        %v9296 = vmul.f32 %v6096, %v9136
        %v9297 = vld [vmem:[#allocation3] sm:$0xff]
        %v9298 = vld [vmem:[#allocation3 + $0x8] sm:$0x3]
        %v9299 = vadd.f32 %v9137, %v9147
        %v9300 = vadd.f32 %v9299, %v9157
        %v9301 = vadd.f32 %v9300, %v9167
        %v9302 = vadd.f32 %v9301, %v9177
        %v9303 = vadd.f32 %v9302, %v9187
        %v9304 = vadd.f32 %v9303, %v9197
        %v9305 = vadd.f32 %v9304, %v9207
        %v9306 = vadd.f32 %v9305, %v9217
        %v9307 = vadd.f32 %v9306, %v9227
        %v9308 = vadd.f32 %v9307, %v9237
        %v9309 = vadd.f32 %v9308, %v9247
        %v9310 = vadd.f32 %v9309, %v9257
        %v9311 = vadd.f32 %v9310, %v9267
        %v9312 = vadd.f32 %v9311, %v9277
        %v9313 = vadd.f32 %v9312, %v9287
        %v9314 = vrot.slane %v9313, 4
        %v9315 = vadd.f32 %v9313, %v9314
        %v9316 = vrot.slane %v9315, 2
        %v9317 = vadd.f32 %v9315, %v9316
        %v9318 = vrot.slane %v9317, 1
        %v9319 = vadd.f32 %v9317, %v9318
        %v9320 = vadd.f32 %v9138, %v9148
        %v9321 = vadd.f32 %v9320, %v9158
        %v9322 = vadd.f32 %v9321, %v9168
        %v9323 = vadd.f32 %v9322, %v9178
        %v9324 = vadd.f32 %v9323, %v9188
        %v9325 = vadd.f32 %v9324, %v9198
        %v9326 = vadd.f32 %v9325, %v9208
        %v9327 = vadd.f32 %v9326, %v9218
        %v9328 = vadd.f32 %v9327, %v9228
        %v9329 = vadd.f32 %v9328, %v9238
        %v9330 = vadd.f32 %v9329, %v9248
        %v9331 = vadd.f32 %v9330, %v9258
        %v9332 = vadd.f32 %v9331, %v9268
        %v9333 = vadd.f32 %v9332, %v9278
        %v9334 = vadd.f32 %v9333, %v9288
        %v9335 = vrot.slane %v9334, 4
        %v9336 = vadd.f32 %v9334, %v9335
        %v9337 = vrot.slane %v9336, 2
        %v9338 = vadd.f32 %v9336, %v9337
        %v9339 = vrot.slane %v9338, 1
        %v9340 = vadd.f32 %v9338, %v9339
        %v9341 = vadd.f32 %v9139, %v9149
        %v9342 = vadd.f32 %v9341, %v9159
        %v9343 = vadd.f32 %v9342, %v9169
        %v9344 = vadd.f32 %v9343, %v9179
        %v9345 = vadd.f32 %v9344, %v9189
        %v9346 = vadd.f32 %v9345, %v9199
        %v9347 = vadd.f32 %v9346, %v9209
        %v9348 = vadd.f32 %v9347, %v9219
        %v9349 = vadd.f32 %v9348, %v9229
        %v9350 = vadd.f32 %v9349, %v9239
        %v9351 = vadd.f32 %v9350, %v9249
        %v9352 = vadd.f32 %v9351, %v9259
        %v9353 = vadd.f32 %v9352, %v9269
        %v9354 = vadd.f32 %v9353, %v9279
        %v9355 = vadd.f32 %v9354, %v9289
        %v9356 = vrot.slane %v9355, 4
        %v9357 = vadd.f32 %v9355, %v9356
        %v9358 = vrot.slane %v9357, 2
        %v9359 = vadd.f32 %v9357, %v9358
        %v9360 = vrot.slane %v9359, 1
        %v9361 = vadd.f32 %v9359, %v9360
        %v9362 = vadd.f32 %v9140, %v9150
        %v9363 = vadd.f32 %v9362, %v9160
        %v9364 = vadd.f32 %v9363, %v9170
        %v9365 = vadd.f32 %v9364, %v9180
        %v9366 = vadd.f32 %v9365, %v9190
        %v9367 = vadd.f32 %v9366, %v9200
        %v9368 = vadd.f32 %v9367, %v9210
        %v9369 = vadd.f32 %v9368, %v9220
        %v9370 = vadd.f32 %v9369, %v9230
        %v9371 = vadd.f32 %v9370, %v9240
        %v9372 = vadd.f32 %v9371, %v9250
        %v9373 = vadd.f32 %v9372, %v9260
        %v9374 = vadd.f32 %v9373, %v9270
        %v9375 = vadd.f32 %v9374, %v9280
        %v9376 = vadd.f32 %v9375, %v9290
        %v9377 = vrot.slane %v9376, 4
        %v9378 = vadd.f32 %v9376, %v9377
        %v9379 = vrot.slane %v9378, 2
        %v9380 = vadd.f32 %v9378, %v9379
        %v9381 = vrot.slane %v9380, 1
        %v9382 = vadd.f32 %v9380, %v9381
        %v9383 = vadd.f32 %v9141, %v9151
        %v9384 = vadd.f32 %v9383, %v9161
        %v9385 = vadd.f32 %v9384, %v9171
        %v9386 = vadd.f32 %v9385, %v9181
        %v9387 = vadd.f32 %v9386, %v9191
        %v9388 = vadd.f32 %v9387, %v9201
        %v9389 = vadd.f32 %v9388, %v9211
        %v9390 = vadd.f32 %v9389, %v9221
        %v9391 = vadd.f32 %v9390, %v9231
        %v9392 = vadd.f32 %v9391, %v9241
        %v9393 = vadd.f32 %v9392, %v9251
        %v9394 = vadd.f32 %v9393, %v9261
        %v9395 = vadd.f32 %v9394, %v9271
        %v9396 = vadd.f32 %v9395, %v9281
        %v9397 = vadd.f32 %v9396, %v9291
        %v9398 = vrot.slane %v9397, 4
        %v9399 = vadd.f32 %v9397, %v9398
        %v9400 = vrot.slane %v9399, 2
        %v9401 = vadd.f32 %v9399, %v9400
        %v9402 = vrot.slane %v9401, 1
        %v9403 = vadd.f32 %v9401, %v9402
        %v9404 = vadd.f32 %v9142, %v9152
        %v9405 = vadd.f32 %v9404, %v9162
        %v9406 = vadd.f32 %v9405, %v9172
        %v9407 = vadd.f32 %v9406, %v9182
        %v9408 = vadd.f32 %v9407, %v9192
        %v9409 = vadd.f32 %v9408, %v9202
        %v9410 = vadd.f32 %v9409, %v9212
        %v9411 = vadd.f32 %v9410, %v9222
        %v9412 = vadd.f32 %v9411, %v9232
        %v9413 = vadd.f32 %v9412, %v9242
        %v9414 = vadd.f32 %v9413, %v9252
        %v9415 = vadd.f32 %v9414, %v9262
        %v9416 = vadd.f32 %v9415, %v9272
        %v9417 = vadd.f32 %v9416, %v9282
        %v9418 = vadd.f32 %v9417, %v9292
        %v9419 = vrot.slane %v9418, 4
        %v9420 = vadd.f32 %v9418, %v9419
        %v9421 = vrot.slane %v9420, 2
        %v9422 = vadd.f32 %v9420, %v9421
        %v9423 = vrot.slane %v9422, 1
        %v9424 = vadd.f32 %v9422, %v9423
        %v9425 = vadd.f32 %v9143, %v9153
        %v9426 = vadd.f32 %v9425, %v9163
        %v9427 = vadd.f32 %v9426, %v9173
        %v9428 = vadd.f32 %v9427, %v9183
        %v9429 = vadd.f32 %v9428, %v9193
        %v9430 = vadd.f32 %v9429, %v9203
        %v9431 = vadd.f32 %v9430, %v9213
        %v9432 = vadd.f32 %v9431, %v9223
        %v9433 = vadd.f32 %v9432, %v9233
        %v9434 = vadd.f32 %v9433, %v9243
        %v9435 = vadd.f32 %v9434, %v9253
        %v9436 = vadd.f32 %v9435, %v9263
        %v9437 = vadd.f32 %v9436, %v9273
        %v9438 = vadd.f32 %v9437, %v9283
        %v9439 = vadd.f32 %v9438, %v9293
        %v9440 = vrot.slane %v9439, 4
        %v9441 = vadd.f32 %v9439, %v9440
        %v9442 = vrot.slane %v9441, 2
        %v9443 = vadd.f32 %v9441, %v9442
        %v9444 = vrot.slane %v9443, 1
        %v9445 = vadd.f32 %v9443, %v9444
        %v9446 = vadd.f32 %v9144, %v9154
        %v9447 = vadd.f32 %v9446, %v9164
        %v9448 = vadd.f32 %v9447, %v9174
        %v9449 = vadd.f32 %v9448, %v9184
        %v9450 = vadd.f32 %v9449, %v9194
        %v9451 = vadd.f32 %v9450, %v9204
        %v9452 = vadd.f32 %v9451, %v9214
        %v9453 = vadd.f32 %v9452, %v9224
        %v9454 = vadd.f32 %v9453, %v9234
        %v9455 = vadd.f32 %v9454, %v9244
        %v9456 = vadd.f32 %v9455, %v9254
        %v9457 = vadd.f32 %v9456, %v9264
        %v9458 = vadd.f32 %v9457, %v9274
        %v9459 = vadd.f32 %v9458, %v9284
        %v9460 = vadd.f32 %v9459, %v9294
        %v9461 = vrot.slane %v9460, 4
        %v9462 = vadd.f32 %v9460, %v9461
        %v9463 = vrot.slane %v9462, 2
        %v9464 = vadd.f32 %v9462, %v9463
        %v9465 = vrot.slane %v9464, 1
        %v9466 = vadd.f32 %v9464, %v9465
        %v9467 = vadd.f32 %v9145, %v9155
        %v9468 = vadd.f32 %v9467, %v9165
        %v9469 = vadd.f32 %v9468, %v9175
        %v9470 = vadd.f32 %v9469, %v9185
        %v9471 = vadd.f32 %v9470, %v9195
        %v9472 = vadd.f32 %v9471, %v9205
        %v9473 = vadd.f32 %v9472, %v9215
        %v9474 = vadd.f32 %v9473, %v9225
        %v9475 = vadd.f32 %v9474, %v9235
        %v9476 = vadd.f32 %v9475, %v9245
        %v9477 = vadd.f32 %v9476, %v9255
        %v9478 = vadd.f32 %v9477, %v9265
        %v9479 = vadd.f32 %v9478, %v9275
        %v9480 = vadd.f32 %v9479, %v9285
        %v9481 = vadd.f32 %v9480, %v9295
        %v9482 = vrot.slane %v9481, 4
        %v9483 = vadd.f32 %v9481, %v9482
        %v9484 = vrot.slane %v9483, 2
        %v9485 = vadd.f32 %v9483, %v9484
        %v9486 = vrot.slane %v9485, 1
        %v9487 = vadd.f32 %v9485, %v9486
        %v9488 = vadd.f32 %v9146, %v9156
        %v9489 = vadd.f32 %v9488, %v9166
        %v9490 = vadd.f32 %v9489, %v9176
        %v9491 = vadd.f32 %v9490, %v9186
        %v9492 = vadd.f32 %v9491, %v9196
        %v9493 = vadd.f32 %v9492, %v9206
        %v9494 = vadd.f32 %v9493, %v9216
        %v9495 = vadd.f32 %v9494, %v9226
        %v9496 = vadd.f32 %v9495, %v9236
        %v9497 = vadd.f32 %v9496, %v9246
        %v9498 = vadd.f32 %v9497, %v9256
        %v9499 = vadd.f32 %v9498, %v9266
        %v9500 = vadd.f32 %v9499, %v9276
        %v9501 = vadd.f32 %v9500, %v9286
        %v9502 = vadd.f32 %v9501, %v9296
        %v9503 = vrot.slane %v9502, 4
        %v9504 = vadd.f32 %v9502, %v9503
        %v9505 = vrot.slane %v9504, 2
        %v9506 = vadd.f32 %v9504, %v9505
        %v9507 = vrot.slane %v9506, 1
        %v9508 = vadd.f32 %v9506, %v9507
        %v9519 = vrot.slane %v9340, 7
        %v9520 = vrot.slane %v9361, 6
        %v9521 = vrot.slane %v9382, 5
        %v9522 = vrot.slane %v9403, 4
        %v9523 = vrot.slane %v9424, 3
        %v9524 = vrot.slane %v9445, 2
        %v9525 = vrot.slane %v9466, 1
        %v9526 = vrot.slane %v9508, 7
        %v9527 = vsel %vm5014, %v9319, %v9519
        %v9528 = vsel %vm5016, %v9520, %v9521
        %v9529 = vsel %vm5018, %v9527, %v9528
        %v9530 = vsel %vm5020, %v9522, %v9523
        %v9531 = vsel %vm5022, %v9524, %v9525
        %v9532 = vsel %vm5024, %v9530, %v9531
        %v9533 = vsel %vm5026, %v9529, %v9532
        %v9534 = vsel %vm5014, %v9487, %v9526
        %v9537 = vadd.f32 %v9297, %v9533
        %v9538 = vadd.f32 %v9298, %v9534
        %9539 = vst [vmem:[#allocation3] sm:$0xff] %v9537
        %9540 = vst.msk [vmem:[#allocation3 + $0x8] sm:$0x3] %vm5037, %v9538
        %p9541 = scmp.eq.s32.totalorder %s35, 1
        // Predicated region
        $region69: #{tpu_custom_call.1} parent=63 // pred_check
          %p9542 = pneg %p9541
        $region70: #{tpu_custom_call.1} parent=63 // pred_check_branch
          %9544 = sbr.rel (%p9542) target = $region72
        $region71: #{tpu_custom_call.1} parent=63 // pred_region
          %v9545 = vld [vmem:[#allocation2] sm:$0xff]
          %v9546 = vld [vmem:[#allocation2 + $0x8] sm:$0x3]
          %v9547 = vmul.f32 %v9545, 0.00390625
          %v9548 = vmul.f32 %v9546, 0.00390625
          %v9549 = vld [vmem:[#allocation3] sm:$0xff]
          %v9550 = vld [vmem:[#allocation3 + $0x8] sm:$0x3]
          %v9551 = vmul.f32 %v9549, 0.00390625
          %v9552 = vmul.f32 %v9550, 0.00390625
          %v9553 = vld [vmem:[%s4] sm:$0xff]
          %v9554 = vld [vmem:[%s4 + $0x8] sm:$0xff]
          %v9555 = vld [vmem:[%s4 + $0x10] sm:$0xff]
          %v9556 = vld [vmem:[%s4 + $0x18] sm:$0xff]
          %v9557 = vld [vmem:[%s4 + $0x20] sm:$0xff]
          %v9558 = vld [vmem:[%s4 + $0x28] sm:$0xff]
          %v9559 = vld [vmem:[%s4 + $0x30] sm:$0xff]
          %v9560 = vld [vmem:[%s4 + $0x38] sm:$0xff]
          %v9561 = vld [vmem:[%s4 + $0x40] sm:$0xff]
          %v9562 = vld [vmem:[%s4 + $0x48] sm:$0xff]
          %v9563 = vld [vmem:[%s4 + $0x50] sm:$0xff]
          %v9564 = vld [vmem:[%s4 + $0x58] sm:$0xff]
          %v9565 = vld [vmem:[%s4 + $0x60] sm:$0xff]
          %v9566 = vld [vmem:[%s4 + $0x68] sm:$0xff]
          %v9567 = vld [vmem:[%s4 + $0x70] sm:$0xff]
          %v9568 = vld [vmem:[%s4 + $0x78] sm:$0xff]
          %v9569 = vld [vmem:[%s4 + $0x80] sm:$0xff]
          %v9570 = vld [vmem:[%s4 + $0x88] sm:$0xff]
          %v9571 = vld [vmem:[%s4 + $0x90] sm:$0xff]
          %v9572 = vld [vmem:[%s4 + $0x98] sm:$0xff]
          %v9573 = vld [vmem:[%s4 + $0xa0] sm:$0xff]
          %v9574 = vld [vmem:[%s4 + $0xa8] sm:$0xff]
          %v9575 = vld [vmem:[%s4 + $0xb0] sm:$0xff]
          %v9576 = vld [vmem:[%s4 + $0xb8] sm:$0xff]
          %v9577 = vld [vmem:[%s4 + $0xc0] sm:$0xff]
          %v9578 = vld [vmem:[%s4 + $0xc8] sm:$0xff]
          %v9579 = vld [vmem:[%s4 + $0xd0] sm:$0xff]
          %v9580 = vld [vmem:[%s4 + $0xd8] sm:$0xff]
          %v9581 = vld [vmem:[%s4 + $0xe0] sm:$0xff]
          %v9582 = vld [vmem:[%s4 + $0xe8] sm:$0xff]
          %v9583 = vld [vmem:[%s4 + $0xf0] sm:$0xff]
          %v9584 = vld [vmem:[%s4 + $0xf8] sm:$0xff]
          %v9585 = vld [vmem:[%s4 + $0x100] sm:$0xff]
          %v9586 = vld [vmem:[%s4 + $0x108] sm:$0xff]
          %v9587 = vld [vmem:[%s4 + $0x110] sm:$0xff]
          %v9588 = vld [vmem:[%s4 + $0x118] sm:$0xff]
          %v9589 = vld [vmem:[%s4 + $0x120] sm:$0xff]
          %v9590 = vld [vmem:[%s4 + $0x128] sm:$0xff]
          %v9591 = vld [vmem:[%s4 + $0x130] sm:$0xff]
          %v9592 = vld [vmem:[%s4 + $0x138] sm:$0xff]
          %v9593 = vld [vmem:[%s4 + $0x140] sm:$0xff]
          %v9594 = vld [vmem:[%s4 + $0x148] sm:$0xff]
          %v9595 = vld [vmem:[%s4 + $0x150] sm:$0xff]
          %v9596 = vld [vmem:[%s4 + $0x158] sm:$0xff]
          %v9597 = vld [vmem:[%s4 + $0x160] sm:$0xff]
          %v9598 = vld [vmem:[%s4 + $0x168] sm:$0xff]
          %v9599 = vld [vmem:[%s4 + $0x170] sm:$0xff]
          %v9600 = vld [vmem:[%s4 + $0x178] sm:$0xff]
          %v9601 = vld [vmem:[%s4 + $0x180] sm:$0xff]
          %v9602 = vld [vmem:[%s4 + $0x188] sm:$0xff]
          %v9603 = vld [vmem:[%s4 + $0x190] sm:$0xff]
          %v9604 = vld [vmem:[%s4 + $0x198] sm:$0xff]
          %v9605 = vld [vmem:[%s4 + $0x1a0] sm:$0xff]
          %v9606 = vld [vmem:[%s4 + $0x1a8] sm:$0xff]
          %v9607 = vld [vmem:[%s4 + $0x1b0] sm:$0xff]
          %v9608 = vld [vmem:[%s4 + $0x1b8] sm:$0xff]
          %v9609 = vld [vmem:[%s4 + $0x1c0] sm:$0xff]
          %v9610 = vld [vmem:[%s4 + $0x1c8] sm:$0xff]
          %v9611 = vld [vmem:[%s4 + $0x1d0] sm:$0xff]
          %v9612 = vld [vmem:[%s4 + $0x1d8] sm:$0xff]
          %v9613 = vld [vmem:[%s4 + $0x1e0] sm:$0xff]
          %v9614 = vld [vmem:[%s4 + $0x1e8] sm:$0xff]
          %v9615 = vld [vmem:[%s4 + $0x1f0] sm:$0xff]
          %v9616 = vld [vmem:[%s4 + $0x1f8] sm:$0xff]
          %v9617 = vld [vmem:[%s4 + $0x200] sm:$0xff]
          %v9618 = vld [vmem:[%s4 + $0x208] sm:$0xff]
          %v9619 = vld [vmem:[%s4 + $0x210] sm:$0xff]
          %v9620 = vld [vmem:[%s4 + $0x218] sm:$0xff]
          %v9621 = vld [vmem:[%s4 + $0x220] sm:$0xff]
          %v9622 = vld [vmem:[%s4 + $0x228] sm:$0xff]
          %v9623 = vld [vmem:[%s4 + $0x230] sm:$0xff]
          %v9624 = vld [vmem:[%s4 + $0x238] sm:$0xff]
          %v9625 = vld [vmem:[%s4 + $0x240] sm:$0xff]
          %v9626 = vld [vmem:[%s4 + $0x248] sm:$0xff]
          %v9627 = vld [vmem:[%s4 + $0x250] sm:$0xff]
          %v9628 = vld [vmem:[%s4 + $0x258] sm:$0xff]
          %v9629 = vld [vmem:[%s4 + $0x260] sm:$0xff]
          %v9630 = vld [vmem:[%s4 + $0x268] sm:$0xff]
          %v9631 = vld [vmem:[%s4 + $0x270] sm:$0xff]
          %v9632 = vld [vmem:[%s4 + $0x278] sm:$0xff]
          %v9633 = vld [vmem:[%s4 + $0x280] sm:$0xff]
          %v9634 = vld [vmem:[%s4 + $0x288] sm:$0xff]
          %v9635 = vld [vmem:[%s4 + $0x290] sm:$0xff]
          %v9636 = vld [vmem:[%s4 + $0x298] sm:$0xff]
          %v9637 = vld [vmem:[%s4 + $0x2a0] sm:$0xff]
          %v9638 = vld [vmem:[%s4 + $0x2a8] sm:$0xff]
          %v9639 = vld [vmem:[%s4 + $0x2b0] sm:$0xff]
          %v9640 = vld [vmem:[%s4 + $0x2b8] sm:$0xff]
          %v9641 = vld [vmem:[%s4 + $0x2c0] sm:$0xff]
          %v9642 = vld [vmem:[%s4 + $0x2c8] sm:$0xff]
          %v9643 = vld [vmem:[%s4 + $0x2d0] sm:$0xff]
          %v9644 = vld [vmem:[%s4 + $0x2d8] sm:$0xff]
          %v9645 = vld [vmem:[%s4 + $0x2e0] sm:$0xff]
          %v9646 = vld [vmem:[%s4 + $0x2e8] sm:$0xff]
          %v9647 = vld [vmem:[%s4 + $0x2f0] sm:$0xff]
          %v9648 = vld [vmem:[%s4 + $0x2f8] sm:$0xff]
          %v9649 = vld [vmem:[%s4 + $0x300] sm:$0xff]
          %v9650 = vld [vmem:[%s4 + $0x308] sm:$0xff]
          %v9651 = vld [vmem:[%s4 + $0x310] sm:$0xff]
          %v9652 = vld [vmem:[%s4 + $0x318] sm:$0xff]
          %v9653 = vld [vmem:[%s4 + $0x320] sm:$0xff]
          %v9654 = vld [vmem:[%s4 + $0x328] sm:$0xff]
          %v9655 = vld [vmem:[%s4 + $0x330] sm:$0xff]
          %v9656 = vld [vmem:[%s4 + $0x338] sm:$0xff]
          %v9657 = vld [vmem:[%s4 + $0x340] sm:$0xff]
          %v9658 = vld [vmem:[%s4 + $0x348] sm:$0xff]
          %v9659 = vld [vmem:[%s4 + $0x350] sm:$0xff]
          %v9660 = vld [vmem:[%s4 + $0x358] sm:$0xff]
          %v9661 = vld [vmem:[%s4 + $0x360] sm:$0xff]
          %v9662 = vld [vmem:[%s4 + $0x368] sm:$0xff]
          %v9663 = vld [vmem:[%s4 + $0x370] sm:$0xff]
          %v9664 = vld [vmem:[%s4 + $0x378] sm:$0xff]
          %v9665 = vld [vmem:[%s4 + $0x380] sm:$0xff]
          %v9666 = vld [vmem:[%s4 + $0x388] sm:$0xff]
          %v9667 = vld [vmem:[%s4 + $0x390] sm:$0xff]
          %v9668 = vld [vmem:[%s4 + $0x398] sm:$0xff]
          %v9669 = vld [vmem:[%s4 + $0x3a0] sm:$0xff]
          %v9670 = vld [vmem:[%s4 + $0x3a8] sm:$0xff]
          %v9671 = vld [vmem:[%s4 + $0x3b0] sm:$0xff]
          %v9672 = vld [vmem:[%s4 + $0x3b8] sm:$0xff]
          %v9673 = vld [vmem:[%s4 + $0x3c0] sm:$0xff]
          %v9674 = vld [vmem:[%s4 + $0x3c8] sm:$0xff]
          %v9675 = vld [vmem:[%s4 + $0x3d0] sm:$0xff]
          %v9676 = vld [vmem:[%s4 + $0x3d8] sm:$0xff]
          %v9677 = vld [vmem:[%s4 + $0x3e0] sm:$0xff]
          %v9678 = vld [vmem:[%s4 + $0x3e8] sm:$0xff]
          %v9679 = vld [vmem:[%s4 + $0x3f0] sm:$0xff]
          %v9680 = vld [vmem:[%s4 + $0x3f8] sm:$0xff]
          %v9681 = vld [vmem:[%s4 + $0x400] sm:$0xff]
          %v9682 = vld [vmem:[%s4 + $0x408] sm:$0xff]
          %v9683 = vld [vmem:[%s4 + $0x410] sm:$0xff]
          %v9684 = vld [vmem:[%s4 + $0x418] sm:$0xff]
          %v9685 = vld [vmem:[%s4 + $0x420] sm:$0xff]
          %v9686 = vld [vmem:[%s4 + $0x428] sm:$0xff]
          %v9687 = vld [vmem:[%s4 + $0x430] sm:$0xff]
          %v9688 = vld [vmem:[%s4 + $0x438] sm:$0xff]
          %v9689 = vld [vmem:[%s4 + $0x440] sm:$0xff]
          %v9690 = vld [vmem:[%s4 + $0x448] sm:$0xff]
          %v9691 = vld [vmem:[%s4 + $0x450] sm:$0xff]
          %v9692 = vld [vmem:[%s4 + $0x458] sm:$0xff]
          %v9693 = vld [vmem:[%s4 + $0x460] sm:$0xff]
          %v9694 = vld [vmem:[%s4 + $0x468] sm:$0xff]
          %v9695 = vld [vmem:[%s4 + $0x470] sm:$0xff]
          %v9696 = vld [vmem:[%s4 + $0x478] sm:$0xff]
          %v9697 = vld [vmem:[%s4 + $0x480] sm:$0xff]
          %v9698 = vld [vmem:[%s4 + $0x488] sm:$0xff]
          %v9699 = vld [vmem:[%s4 + $0x490] sm:$0xff]
          %v9700 = vld [vmem:[%s4 + $0x498] sm:$0xff]
          %v9701 = vld [vmem:[%s4 + $0x4a0] sm:$0xff]
          %v9702 = vld [vmem:[%s4 + $0x4a8] sm:$0xff]
          %v9703 = vld [vmem:[%s4 + $0x4b0] sm:$0xff]
          %v9704 = vld [vmem:[%s4 + $0x4b8] sm:$0xff]
          %v9705 = vld [vmem:[%s4 + $0x4c0] sm:$0xff]
          %v9706 = vld [vmem:[%s4 + $0x4c8] sm:$0xff]
          %v9707 = vld [vmem:[%s4 + $0x4d0] sm:$0xff]
          %v9708 = vld [vmem:[%s4 + $0x4d8] sm:$0xff]
          %v9709 = vld [vmem:[%s4 + $0x4e0] sm:$0xff]
          %v9710 = vld [vmem:[%s4 + $0x4e8] sm:$0xff]
          %v9711 = vld [vmem:[%s4 + $0x4f0] sm:$0xff]
          %v9712 = vld [vmem:[%s4 + $0x4f8] sm:$0xff]
          %v9713 = vld [vmem:[%s5] sm:$0x1]
          %v9716 = vperm.slane %v9547, 0
          %v9717 = vperm.slane %v9547, 1
          %v9718 = vperm.slane %v9547, 2
          %v9719 = vperm.slane %v9547, 3
          %v9720 = vperm.slane %v9547, 4
          %v9721 = vperm.slane %v9547, 5
          %v9722 = vperm.slane %v9547, 6
          %v9723 = vperm.slane %v9547, 7
          %v9724 = vperm.slane %v9548, 0
          %v9725 = vperm.slane %v9548, 1
          %9736 = vmatpush.msra.mxu0 %v9568
          %9737 = vmatpush.msra.mxu0 %v9567
          %9738 = vmatpush.msra.mxu0 %v9566
          %9739 = vmatpush.msra.mxu0 %v9565
          %9740 = vmatpush.msra.mxu0 %v9564
          %9741 = vmatpush.msra.mxu0 %v9563
          %9742 = vmatpush.msra.mxu0 %v9562
          %9743 = vmatpush.msra.mxu0 %v9561
          %9744 = vmatpush.msra.mxu0 %v9560
          %9745 = vmatpush.msra.mxu0 %v9559
          %9746 = vmatpush.msra.mxu0 %v9558
          %9747 = vmatpush.msra.mxu0 %v9557
          %9748 = vmatpush.msra.mxu0 %v9556
          %9749 = vmatpush.msra.mxu0 %v9555
          %9750 = vmatpush.msra.mxu0 %v9554
          %9751 = vmatpush.msra.mxu0 %v9553
          %9752 = vmatmul.f32.gmra.mxu0 %v9716
          %v9753 = vpop.f32.mrf.mxu0
          %v9754 = vadd.f32 %v9713, %v9753
          %9755 = vdwg.mxu0
          %9756 = vmatpush.msra.mxu0 %v9584
          %9757 = vmatpush.msra.mxu0 %v9583
          %9758 = vmatpush.msra.mxu0 %v9582
          %9759 = vmatpush.msra.mxu0 %v9581
          %9760 = vmatpush.msra.mxu0 %v9580
          %9761 = vmatpush.msra.mxu0 %v9579
          %9762 = vmatpush.msra.mxu0 %v9578
          %9763 = vmatpush.msra.mxu0 %v9577
          %9764 = vmatpush.msra.mxu0 %v9576
          %9765 = vmatpush.msra.mxu0 %v9575
          %9766 = vmatpush.msra.mxu0 %v9574
          %9767 = vmatpush.msra.mxu0 %v9573
          %9768 = vmatpush.msra.mxu0 %v9572
          %9769 = vmatpush.msra.mxu0 %v9571
          %9770 = vmatpush.msra.mxu0 %v9570
          %9771 = vmatpush.msra.mxu0 %v9569
          %9772 = vmatmul.f32.gmra.mxu0 %v9717
          %v9773 = vpop.f32.mrf.mxu0
          %v9774 = vadd.f32 %v9754, %v9773
          %9775 = vdwg.mxu0
          %9776 = vmatpush.msra.mxu0 %v9600
          %9777 = vmatpush.msra.mxu0 %v9599
          %9778 = vmatpush.msra.mxu0 %v9598
          %9779 = vmatpush.msra.mxu0 %v9597
          %9780 = vmatpush.msra.mxu0 %v9596
          %9781 = vmatpush.msra.mxu0 %v9595
          %9782 = vmatpush.msra.mxu0 %v9594
          %9783 = vmatpush.msra.mxu0 %v9593
          %9784 = vmatpush.msra.mxu0 %v9592
          %9785 = vmatpush.msra.mxu0 %v9591
          %9786 = vmatpush.msra.mxu0 %v9590
          %9787 = vmatpush.msra.mxu0 %v9589
          %9788 = vmatpush.msra.mxu0 %v9588
          %9789 = vmatpush.msra.mxu0 %v9587
          %9790 = vmatpush.msra.mxu0 %v9586
          %9791 = vmatpush.msra.mxu0 %v9585
          %9792 = vmatmul.f32.gmra.mxu0 %v9718
          %v9793 = vpop.f32.mrf.mxu0
          %v9794 = vadd.f32 %v9774, %v9793
          %9795 = vdwg.mxu0
          %9796 = vmatpush.msra.mxu0 %v9616
          %9797 = vmatpush.msra.mxu0 %v9615
          %9798 = vmatpush.msra.mxu0 %v9614
          %9799 = vmatpush.msra.mxu0 %v9613
          %9800 = vmatpush.msra.mxu0 %v9612
          %9801 = vmatpush.msra.mxu0 %v9611
          %9802 = vmatpush.msra.mxu0 %v9610
          %9803 = vmatpush.msra.mxu0 %v9609
          %9804 = vmatpush.msra.mxu0 %v9608
          %9805 = vmatpush.msra.mxu0 %v9607
          %9806 = vmatpush.msra.mxu0 %v9606
          %9807 = vmatpush.msra.mxu0 %v9605
          %9808 = vmatpush.msra.mxu0 %v9604
          %9809 = vmatpush.msra.mxu0 %v9603
          %9810 = vmatpush.msra.mxu0 %v9602
          %9811 = vmatpush.msra.mxu0 %v9601
          %9812 = vmatmul.f32.gmra.mxu0 %v9719
          %v9813 = vpop.f32.mrf.mxu0
          %v9814 = vadd.f32 %v9794, %v9813
          %9815 = vdwg.mxu0
          %9816 = vmatpush.msra.mxu0 %v9632
          %9817 = vmatpush.msra.mxu0 %v9631
          %9818 = vmatpush.msra.mxu0 %v9630
          %9819 = vmatpush.msra.mxu0 %v9629
          %9820 = vmatpush.msra.mxu0 %v9628
          %9821 = vmatpush.msra.mxu0 %v9627
          %9822 = vmatpush.msra.mxu0 %v9626
          %9823 = vmatpush.msra.mxu0 %v9625
          %9824 = vmatpush.msra.mxu0 %v9624
          %9825 = vmatpush.msra.mxu0 %v9623
          %9826 = vmatpush.msra.mxu0 %v9622
          %9827 = vmatpush.msra.mxu0 %v9621
          %9828 = vmatpush.msra.mxu0 %v9620
          %9829 = vmatpush.msra.mxu0 %v9619
          %9830 = vmatpush.msra.mxu0 %v9618
          %9831 = vmatpush.msra.mxu0 %v9617
          %9832 = vmatmul.f32.gmra.mxu0 %v9720
          %v9833 = vpop.f32.mrf.mxu0
          %v9834 = vadd.f32 %v9814, %v9833
          %9835 = vdwg.mxu0
          %9836 = vmatpush.msra.mxu0 %v9648
          %9837 = vmatpush.msra.mxu0 %v9647
          %9838 = vmatpush.msra.mxu0 %v9646
          %9839 = vmatpush.msra.mxu0 %v9645
          %9840 = vmatpush.msra.mxu0 %v9644
          %9841 = vmatpush.msra.mxu0 %v9643
          %9842 = vmatpush.msra.mxu0 %v9642
          %9843 = vmatpush.msra.mxu0 %v9641
          %9844 = vmatpush.msra.mxu0 %v9640
          %9845 = vmatpush.msra.mxu0 %v9639
          %9846 = vmatpush.msra.mxu0 %v9638
          %9847 = vmatpush.msra.mxu0 %v9637
          %9848 = vmatpush.msra.mxu0 %v9636
          %9849 = vmatpush.msra.mxu0 %v9635
          %9850 = vmatpush.msra.mxu0 %v9634
          %9851 = vmatpush.msra.mxu0 %v9633
          %9852 = vmatmul.f32.gmra.mxu0 %v9721
          %v9853 = vpop.f32.mrf.mxu0
          %v9854 = vadd.f32 %v9834, %v9853
          %9855 = vdwg.mxu0
          %9856 = vmatpush.msra.mxu0 %v9664
          %9857 = vmatpush.msra.mxu0 %v9663
          %9858 = vmatpush.msra.mxu0 %v9662
          %9859 = vmatpush.msra.mxu0 %v9661
          %9860 = vmatpush.msra.mxu0 %v9660
          %9861 = vmatpush.msra.mxu0 %v9659
          %9862 = vmatpush.msra.mxu0 %v9658
          %9863 = vmatpush.msra.mxu0 %v9657
          %9864 = vmatpush.msra.mxu0 %v9656
          %9865 = vmatpush.msra.mxu0 %v9655
          %9866 = vmatpush.msra.mxu0 %v9654
          %9867 = vmatpush.msra.mxu0 %v9653
          %9868 = vmatpush.msra.mxu0 %v9652
          %9869 = vmatpush.msra.mxu0 %v9651
          %9870 = vmatpush.msra.mxu0 %v9650
          %9871 = vmatpush.msra.mxu0 %v9649
          %9872 = vmatmul.f32.gmra.mxu0 %v9722
          %v9873 = vpop.f32.mrf.mxu0
          %v9874 = vadd.f32 %v9854, %v9873
          %9875 = vdwg.mxu0
          %9876 = vmatpush.msra.mxu0 %v9680
          %9877 = vmatpush.msra.mxu0 %v9679
          %9878 = vmatpush.msra.mxu0 %v9678
          %9879 = vmatpush.msra.mxu0 %v9677
          %9880 = vmatpush.msra.mxu0 %v9676
          %9881 = vmatpush.msra.mxu0 %v9675
          %9882 = vmatpush.msra.mxu0 %v9674
          %9883 = vmatpush.msra.mxu0 %v9673
          %9884 = vmatpush.msra.mxu0 %v9672
          %9885 = vmatpush.msra.mxu0 %v9671
          %9886 = vmatpush.msra.mxu0 %v9670
          %9887 = vmatpush.msra.mxu0 %v9669
          %9888 = vmatpush.msra.mxu0 %v9668
          %9889 = vmatpush.msra.mxu0 %v9667
          %9890 = vmatpush.msra.mxu0 %v9666
          %9891 = vmatpush.msra.mxu0 %v9665
          %9892 = vmatmul.f32.gmra.mxu0 %v9723
          %v9893 = vpop.f32.mrf.mxu0
          %v9894 = vadd.f32 %v9874, %v9893
          %9895 = vdwg.mxu0
          %9896 = vmatpush.msra.mxu0 %v9696
          %9897 = vmatpush.msra.mxu0 %v9695
          %9898 = vmatpush.msra.mxu0 %v9694
          %9899 = vmatpush.msra.mxu0 %v9693
          %9900 = vmatpush.msra.mxu0 %v9692
          %9901 = vmatpush.msra.mxu0 %v9691
          %9902 = vmatpush.msra.mxu0 %v9690
          %9903 = vmatpush.msra.mxu0 %v9689
          %9904 = vmatpush.msra.mxu0 %v9688
          %9905 = vmatpush.msra.mxu0 %v9687
          %9906 = vmatpush.msra.mxu0 %v9686
          %9907 = vmatpush.msra.mxu0 %v9685
          %9908 = vmatpush.msra.mxu0 %v9684
          %9909 = vmatpush.msra.mxu0 %v9683
          %9910 = vmatpush.msra.mxu0 %v9682
          %9911 = vmatpush.msra.mxu0 %v9681
          %9912 = vmatmul.f32.gmra.mxu0 %v9724
          %v9913 = vpop.f32.mrf.mxu0
          %v9914 = vadd.f32 %v9894, %v9913
          %9915 = vdwg.mxu0
          %9916 = vmatpush.msra.mxu0 %v9712
          %9917 = vmatpush.msra.mxu0 %v9711
          %9918 = vmatpush.msra.mxu0 %v9710
          %9919 = vmatpush.msra.mxu0 %v9709
          %9920 = vmatpush.msra.mxu0 %v9708
          %9921 = vmatpush.msra.mxu0 %v9707
          %9922 = vmatpush.msra.mxu0 %v9706
          %9923 = vmatpush.msra.mxu0 %v9705
          %9924 = vmatpush.msra.mxu0 %v9704
          %9925 = vmatpush.msra.mxu0 %v9703
          %9926 = vmatpush.msra.mxu0 %v9702
          %9927 = vmatpush.msra.mxu0 %v9701
          %9928 = vmatpush.msra.mxu0 %v9700
          %9929 = vmatpush.msra.mxu0 %v9699
          %9930 = vmatpush.msra.mxu0 %v9698
          %9931 = vmatpush.msra.mxu0 %v9697
          %9932 = vmatmul.f32.gmra.mxu0 %v9725
          %v9933 = vpop.f32.mrf.mxu0
          %v9934 = vadd.f32 %v9914, %v9933
          %9935 = vdwg.mxu0
          %v9936 = vld [vmem:[%s9] sm:$0xff]
          %v9937 = vld [vmem:[%s9 + $0x8] sm:$0xff]
          %v9938 = vld [vmem:[%s9 + $0x10] sm:$0xff]
          %v9939 = vld [vmem:[%s9 + $0x18] sm:$0xff]
          %v9940 = vld [vmem:[%s9 + $0x20] sm:$0xff]
          %v9941 = vld [vmem:[%s9 + $0x28] sm:$0xff]
          %v9942 = vld [vmem:[%s9 + $0x30] sm:$0xff]
          %v9943 = vld [vmem:[%s9 + $0x38] sm:$0xff]
          %v9944 = vld [vmem:[%s9 + $0x40] sm:$0xff]
          %v9945 = vld [vmem:[%s9 + $0x48] sm:$0xff]
          %v9946 = vld [vmem:[%s9 + $0x50] sm:$0xff]
          %v9947 = vld [vmem:[%s9 + $0x58] sm:$0xff]
          %v9948 = vld [vmem:[%s9 + $0x60] sm:$0xff]
          %v9949 = vld [vmem:[%s9 + $0x68] sm:$0xff]
          %v9950 = vld [vmem:[%s9 + $0x70] sm:$0xff]
          %v9951 = vld [vmem:[%s9 + $0x78] sm:$0xff]
          %v9952 = vld [vmem:[%s9 + $0x80] sm:$0xff]
          %v9953 = vld [vmem:[%s9 + $0x88] sm:$0xff]
          %v9954 = vld [vmem:[%s9 + $0x90] sm:$0xff]
          %v9955 = vld [vmem:[%s9 + $0x98] sm:$0xff]
          %v9956 = vld [vmem:[%s9 + $0xa0] sm:$0xff]
          %v9957 = vld [vmem:[%s9 + $0xa8] sm:$0xff]
          %v9958 = vld [vmem:[%s9 + $0xb0] sm:$0xff]
          %v9959 = vld [vmem:[%s9 + $0xb8] sm:$0xff]
          %v9960 = vld [vmem:[%s9 + $0xc0] sm:$0xff]
          %v9961 = vld [vmem:[%s9 + $0xc8] sm:$0xff]
          %v9962 = vld [vmem:[%s9 + $0xd0] sm:$0xff]
          %v9963 = vld [vmem:[%s9 + $0xd8] sm:$0xff]
          %v9964 = vld [vmem:[%s9 + $0xe0] sm:$0xff]
          %v9965 = vld [vmem:[%s9 + $0xe8] sm:$0xff]
          %v9966 = vld [vmem:[%s9 + $0xf0] sm:$0xff]
          %v9967 = vld [vmem:[%s9 + $0xf8] sm:$0xff]
          %v9968 = vld [vmem:[%s9 + $0x100] sm:$0xff]
          %v9969 = vld [vmem:[%s9 + $0x108] sm:$0xff]
          %v9970 = vld [vmem:[%s9 + $0x110] sm:$0xff]
          %v9971 = vld [vmem:[%s9 + $0x118] sm:$0xff]
          %v9972 = vld [vmem:[%s9 + $0x120] sm:$0xff]
          %v9973 = vld [vmem:[%s9 + $0x128] sm:$0xff]
          %v9974 = vld [vmem:[%s9 + $0x130] sm:$0xff]
          %v9975 = vld [vmem:[%s9 + $0x138] sm:$0xff]
          %v9976 = vld [vmem:[%s9 + $0x140] sm:$0xff]
          %v9977 = vld [vmem:[%s9 + $0x148] sm:$0xff]
          %v9978 = vld [vmem:[%s9 + $0x150] sm:$0xff]
          %v9979 = vld [vmem:[%s9 + $0x158] sm:$0xff]
          %v9980 = vld [vmem:[%s9 + $0x160] sm:$0xff]
          %v9981 = vld [vmem:[%s9 + $0x168] sm:$0xff]
          %v9982 = vld [vmem:[%s9 + $0x170] sm:$0xff]
          %v9983 = vld [vmem:[%s9 + $0x178] sm:$0xff]
          %v9984 = vld [vmem:[%s9 + $0x180] sm:$0xff]
          %v9985 = vld [vmem:[%s9 + $0x188] sm:$0xff]
          %v9986 = vld [vmem:[%s9 + $0x190] sm:$0xff]
          %v9987 = vld [vmem:[%s9 + $0x198] sm:$0xff]
          %v9988 = vld [vmem:[%s9 + $0x1a0] sm:$0xff]
          %v9989 = vld [vmem:[%s9 + $0x1a8] sm:$0xff]
          %v9990 = vld [vmem:[%s9 + $0x1b0] sm:$0xff]
          %v9991 = vld [vmem:[%s9 + $0x1b8] sm:$0xff]
          %v9992 = vld [vmem:[%s9 + $0x1c0] sm:$0xff]
          %v9993 = vld [vmem:[%s9 + $0x1c8] sm:$0xff]
          %v9994 = vld [vmem:[%s9 + $0x1d0] sm:$0xff]
          %v9995 = vld [vmem:[%s9 + $0x1d8] sm:$0xff]
          %v9996 = vld [vmem:[%s9 + $0x1e0] sm:$0xff]
          %v9997 = vld [vmem:[%s9 + $0x1e8] sm:$0xff]
          %v9998 = vld [vmem:[%s9 + $0x1f0] sm:$0xff]
          %v9999 = vld [vmem:[%s9 + $0x1f8] sm:$0xff]
          %v10000 = vld [vmem:[%s9 + $0x200] sm:$0xff]
          %v10001 = vld [vmem:[%s9 + $0x208] sm:$0xff]
          %v10002 = vld [vmem:[%s9 + $0x210] sm:$0xff]
          %v10003 = vld [vmem:[%s9 + $0x218] sm:$0xff]
          %v10004 = vld [vmem:[%s9 + $0x220] sm:$0xff]
          %v10005 = vld [vmem:[%s9 + $0x228] sm:$0xff]
          %v10006 = vld [vmem:[%s9 + $0x230] sm:$0xff]
          %v10007 = vld [vmem:[%s9 + $0x238] sm:$0xff]
          %v10008 = vld [vmem:[%s9 + $0x240] sm:$0xff]
          %v10009 = vld [vmem:[%s9 + $0x248] sm:$0xff]
          %v10010 = vld [vmem:[%s9 + $0x250] sm:$0xff]
          %v10011 = vld [vmem:[%s9 + $0x258] sm:$0xff]
          %v10012 = vld [vmem:[%s9 + $0x260] sm:$0xff]
          %v10013 = vld [vmem:[%s9 + $0x268] sm:$0xff]
          %v10014 = vld [vmem:[%s9 + $0x270] sm:$0xff]
          %v10015 = vld [vmem:[%s9 + $0x278] sm:$0xff]
          %v10016 = vld [vmem:[%s9 + $0x280] sm:$0xff]
          %v10017 = vld [vmem:[%s9 + $0x288] sm:$0xff]
          %v10018 = vld [vmem:[%s9 + $0x290] sm:$0xff]
          %v10019 = vld [vmem:[%s9 + $0x298] sm:$0xff]
          %v10020 = vld [vmem:[%s9 + $0x2a0] sm:$0xff]
          %v10021 = vld [vmem:[%s9 + $0x2a8] sm:$0xff]
          %v10022 = vld [vmem:[%s9 + $0x2b0] sm:$0xff]
          %v10023 = vld [vmem:[%s9 + $0x2b8] sm:$0xff]
          %v10024 = vld [vmem:[%s9 + $0x2c0] sm:$0xff]
          %v10025 = vld [vmem:[%s9 + $0x2c8] sm:$0xff]
          %v10026 = vld [vmem:[%s9 + $0x2d0] sm:$0xff]
          %v10027 = vld [vmem:[%s9 + $0x2d8] sm:$0xff]
          %v10028 = vld [vmem:[%s9 + $0x2e0] sm:$0xff]
          %v10029 = vld [vmem:[%s9 + $0x2e8] sm:$0xff]
          %v10030 = vld [vmem:[%s9 + $0x2f0] sm:$0xff]
          %v10031 = vld [vmem:[%s9 + $0x2f8] sm:$0xff]
          %v10032 = vld [vmem:[%s9 + $0x300] sm:$0xff]
          %v10033 = vld [vmem:[%s9 + $0x308] sm:$0xff]
          %v10034 = vld [vmem:[%s9 + $0x310] sm:$0xff]
          %v10035 = vld [vmem:[%s9 + $0x318] sm:$0xff]
          %v10036 = vld [vmem:[%s9 + $0x320] sm:$0xff]
          %v10037 = vld [vmem:[%s9 + $0x328] sm:$0xff]
          %v10038 = vld [vmem:[%s9 + $0x330] sm:$0xff]
          %v10039 = vld [vmem:[%s9 + $0x338] sm:$0xff]
          %v10040 = vld [vmem:[%s9 + $0x340] sm:$0xff]
          %v10041 = vld [vmem:[%s9 + $0x348] sm:$0xff]
          %v10042 = vld [vmem:[%s9 + $0x350] sm:$0xff]
          %v10043 = vld [vmem:[%s9 + $0x358] sm:$0xff]
          %v10044 = vld [vmem:[%s9 + $0x360] sm:$0xff]
          %v10045 = vld [vmem:[%s9 + $0x368] sm:$0xff]
          %v10046 = vld [vmem:[%s9 + $0x370] sm:$0xff]
          %v10047 = vld [vmem:[%s9 + $0x378] sm:$0xff]
          %v10048 = vld [vmem:[%s9 + $0x380] sm:$0xff]
          %v10049 = vld [vmem:[%s9 + $0x388] sm:$0xff]
          %v10050 = vld [vmem:[%s9 + $0x390] sm:$0xff]
          %v10051 = vld [vmem:[%s9 + $0x398] sm:$0xff]
          %v10052 = vld [vmem:[%s9 + $0x3a0] sm:$0xff]
          %v10053 = vld [vmem:[%s9 + $0x3a8] sm:$0xff]
          %v10054 = vld [vmem:[%s9 + $0x3b0] sm:$0xff]
          %v10055 = vld [vmem:[%s9 + $0x3b8] sm:$0xff]
          %v10056 = vld [vmem:[%s9 + $0x3c0] sm:$0xff]
          %v10057 = vld [vmem:[%s9 + $0x3c8] sm:$0xff]
          %v10058 = vld [vmem:[%s9 + $0x3d0] sm:$0xff]
          %v10059 = vld [vmem:[%s9 + $0x3d8] sm:$0xff]
          %v10060 = vld [vmem:[%s9 + $0x3e0] sm:$0xff]
          %v10061 = vld [vmem:[%s9 + $0x3e8] sm:$0xff]
          %v10062 = vld [vmem:[%s9 + $0x3f0] sm:$0xff]
          %v10063 = vld [vmem:[%s9 + $0x3f8] sm:$0xff]
          %v10064 = vld [vmem:[%s9 + $0x400] sm:$0xff]
          %v10065 = vld [vmem:[%s9 + $0x408] sm:$0xff]
          %v10066 = vld [vmem:[%s9 + $0x410] sm:$0xff]
          %v10067 = vld [vmem:[%s9 + $0x418] sm:$0xff]
          %v10068 = vld [vmem:[%s9 + $0x420] sm:$0xff]
          %v10069 = vld [vmem:[%s9 + $0x428] sm:$0xff]
          %v10070 = vld [vmem:[%s9 + $0x430] sm:$0xff]
          %v10071 = vld [vmem:[%s9 + $0x438] sm:$0xff]
          %v10072 = vld [vmem:[%s9 + $0x440] sm:$0xff]
          %v10073 = vld [vmem:[%s9 + $0x448] sm:$0xff]
          %v10074 = vld [vmem:[%s9 + $0x450] sm:$0xff]
          %v10075 = vld [vmem:[%s9 + $0x458] sm:$0xff]
          %v10076 = vld [vmem:[%s9 + $0x460] sm:$0xff]
          %v10077 = vld [vmem:[%s9 + $0x468] sm:$0xff]
          %v10078 = vld [vmem:[%s9 + $0x470] sm:$0xff]
          %v10079 = vld [vmem:[%s9 + $0x478] sm:$0xff]
          %v10080 = vld [vmem:[%s9 + $0x480] sm:$0xff]
          %v10081 = vld [vmem:[%s9 + $0x488] sm:$0xff]
          %v10082 = vld [vmem:[%s9 + $0x490] sm:$0xff]
          %v10083 = vld [vmem:[%s9 + $0x498] sm:$0xff]
          %v10084 = vld [vmem:[%s9 + $0x4a0] sm:$0xff]
          %v10085 = vld [vmem:[%s9 + $0x4a8] sm:$0xff]
          %v10086 = vld [vmem:[%s9 + $0x4b0] sm:$0xff]
          %v10087 = vld [vmem:[%s9 + $0x4b8] sm:$0xff]
          %v10088 = vld [vmem:[%s9 + $0x4c0] sm:$0xff]
          %v10089 = vld [vmem:[%s9 + $0x4c8] sm:$0xff]
          %v10090 = vld [vmem:[%s9 + $0x4d0] sm:$0xff]
          %v10091 = vld [vmem:[%s9 + $0x4d8] sm:$0xff]
          %v10092 = vld [vmem:[%s9 + $0x4e0] sm:$0xff]
          %v10093 = vld [vmem:[%s9 + $0x4e8] sm:$0xff]
          %v10094 = vld [vmem:[%s9 + $0x4f0] sm:$0xff]
          %v10095 = vld [vmem:[%s9 + $0x4f8] sm:$0xff]
          %v10096 = vld [vmem:[%s10] sm:$0x1]
          %v10099 = vperm.slane %v9551, 0
          %v10100 = vperm.slane %v9551, 1
          %v10101 = vperm.slane %v9551, 2
          %v10102 = vperm.slane %v9551, 3
          %v10103 = vperm.slane %v9551, 4
          %v10104 = vperm.slane %v9551, 5
          %v10105 = vperm.slane %v9551, 6
          %v10106 = vperm.slane %v9551, 7
          %v10107 = vperm.slane %v9552, 0
          %v10108 = vperm.slane %v9552, 1
          %10119 = vmatpush.msra.mxu0 %v9951
          %10120 = vmatpush.msra.mxu0 %v9950
          %10121 = vmatpush.msra.mxu0 %v9949
          %10122 = vmatpush.msra.mxu0 %v9948
          %10123 = vmatpush.msra.mxu0 %v9947
          %10124 = vmatpush.msra.mxu0 %v9946
          %10125 = vmatpush.msra.mxu0 %v9945
          %10126 = vmatpush.msra.mxu0 %v9944
          %10127 = vmatpush.msra.mxu0 %v9943
          %10128 = vmatpush.msra.mxu0 %v9942
          %10129 = vmatpush.msra.mxu0 %v9941
          %10130 = vmatpush.msra.mxu0 %v9940
          %10131 = vmatpush.msra.mxu0 %v9939
          %10132 = vmatpush.msra.mxu0 %v9938
          %10133 = vmatpush.msra.mxu0 %v9937
          %10134 = vmatpush.msra.mxu0 %v9936
          %10135 = vmatmul.f32.gmra.mxu0 %v10099
          %v10136 = vpop.f32.mrf.mxu0
          %v10137 = vadd.f32 %v10096, %v10136
          %10138 = vdwg.mxu0
          %10139 = vmatpush.msra.mxu0 %v9967
          %10140 = vmatpush.msra.mxu0 %v9966
          %10141 = vmatpush.msra.mxu0 %v9965
          %10142 = vmatpush.msra.mxu0 %v9964
          %10143 = vmatpush.msra.mxu0 %v9963
          %10144 = vmatpush.msra.mxu0 %v9962
          %10145 = vmatpush.msra.mxu0 %v9961
          %10146 = vmatpush.msra.mxu0 %v9960
          %10147 = vmatpush.msra.mxu0 %v9959
          %10148 = vmatpush.msra.mxu0 %v9958
          %10149 = vmatpush.msra.mxu0 %v9957
          %10150 = vmatpush.msra.mxu0 %v9956
          %10151 = vmatpush.msra.mxu0 %v9955
          %10152 = vmatpush.msra.mxu0 %v9954
          %10153 = vmatpush.msra.mxu0 %v9953
          %10154 = vmatpush.msra.mxu0 %v9952
          %10155 = vmatmul.f32.gmra.mxu0 %v10100
          %v10156 = vpop.f32.mrf.mxu0
          %v10157 = vadd.f32 %v10137, %v10156
          %10158 = vdwg.mxu0
          %10159 = vmatpush.msra.mxu0 %v9983
          %10160 = vmatpush.msra.mxu0 %v9982
          %10161 = vmatpush.msra.mxu0 %v9981
          %10162 = vmatpush.msra.mxu0 %v9980
          %10163 = vmatpush.msra.mxu0 %v9979
          %10164 = vmatpush.msra.mxu0 %v9978
          %10165 = vmatpush.msra.mxu0 %v9977
          %10166 = vmatpush.msra.mxu0 %v9976
          %10167 = vmatpush.msra.mxu0 %v9975
          %10168 = vmatpush.msra.mxu0 %v9974
          %10169 = vmatpush.msra.mxu0 %v9973
          %10170 = vmatpush.msra.mxu0 %v9972
          %10171 = vmatpush.msra.mxu0 %v9971
          %10172 = vmatpush.msra.mxu0 %v9970
          %10173 = vmatpush.msra.mxu0 %v9969
          %10174 = vmatpush.msra.mxu0 %v9968
          %10175 = vmatmul.f32.gmra.mxu0 %v10101
          %v10176 = vpop.f32.mrf.mxu0
          %v10177 = vadd.f32 %v10157, %v10176
          %10178 = vdwg.mxu0
          %10179 = vmatpush.msra.mxu0 %v9999
          %10180 = vmatpush.msra.mxu0 %v9998
          %10181 = vmatpush.msra.mxu0 %v9997
          %10182 = vmatpush.msra.mxu0 %v9996
          %10183 = vmatpush.msra.mxu0 %v9995
          %10184 = vmatpush.msra.mxu0 %v9994
          %10185 = vmatpush.msra.mxu0 %v9993
          %10186 = vmatpush.msra.mxu0 %v9992
          %10187 = vmatpush.msra.mxu0 %v9991
          %10188 = vmatpush.msra.mxu0 %v9990
          %10189 = vmatpush.msra.mxu0 %v9989
          %10190 = vmatpush.msra.mxu0 %v9988
          %10191 = vmatpush.msra.mxu0 %v9987
          %10192 = vmatpush.msra.mxu0 %v9986
          %10193 = vmatpush.msra.mxu0 %v9985
          %10194 = vmatpush.msra.mxu0 %v9984
          %10195 = vmatmul.f32.gmra.mxu0 %v10102
          %v10196 = vpop.f32.mrf.mxu0
          %v10197 = vadd.f32 %v10177, %v10196
          %10198 = vdwg.mxu0
          %10199 = vmatpush.msra.mxu0 %v10015
          %10200 = vmatpush.msra.mxu0 %v10014
          %10201 = vmatpush.msra.mxu0 %v10013
          %10202 = vmatpush.msra.mxu0 %v10012
          %10203 = vmatpush.msra.mxu0 %v10011
          %10204 = vmatpush.msra.mxu0 %v10010
          %10205 = vmatpush.msra.mxu0 %v10009
          %10206 = vmatpush.msra.mxu0 %v10008
          %10207 = vmatpush.msra.mxu0 %v10007
          %10208 = vmatpush.msra.mxu0 %v10006
          %10209 = vmatpush.msra.mxu0 %v10005
          %10210 = vmatpush.msra.mxu0 %v10004
          %10211 = vmatpush.msra.mxu0 %v10003
          %10212 = vmatpush.msra.mxu0 %v10002
          %10213 = vmatpush.msra.mxu0 %v10001
          %10214 = vmatpush.msra.mxu0 %v10000
          %10215 = vmatmul.f32.gmra.mxu0 %v10103
          %v10216 = vpop.f32.mrf.mxu0
          %v10217 = vadd.f32 %v10197, %v10216
          %10218 = vdwg.mxu0
          %10219 = vmatpush.msra.mxu0 %v10031
          %10220 = vmatpush.msra.mxu0 %v10030
          %10221 = vmatpush.msra.mxu0 %v10029
          %10222 = vmatpush.msra.mxu0 %v10028
          %10223 = vmatpush.msra.mxu0 %v10027
          %10224 = vmatpush.msra.mxu0 %v10026
          %10225 = vmatpush.msra.mxu0 %v10025
          %10226 = vmatpush.msra.mxu0 %v10024
          %10227 = vmatpush.msra.mxu0 %v10023
          %10228 = vmatpush.msra.mxu0 %v10022
          %10229 = vmatpush.msra.mxu0 %v10021
          %10230 = vmatpush.msra.mxu0 %v10020
          %10231 = vmatpush.msra.mxu0 %v10019
          %10232 = vmatpush.msra.mxu0 %v10018
          %10233 = vmatpush.msra.mxu0 %v10017
          %10234 = vmatpush.msra.mxu0 %v10016
          %10235 = vmatmul.f32.gmra.mxu0 %v10104
          %v10236 = vpop.f32.mrf.mxu0
          %v10237 = vadd.f32 %v10217, %v10236
          %10238 = vdwg.mxu0
          %10239 = vmatpush.msra.mxu0 %v10047
          %10240 = vmatpush.msra.mxu0 %v10046
          %10241 = vmatpush.msra.mxu0 %v10045
          %10242 = vmatpush.msra.mxu0 %v10044
          %10243 = vmatpush.msra.mxu0 %v10043
          %10244 = vmatpush.msra.mxu0 %v10042
          %10245 = vmatpush.msra.mxu0 %v10041
          %10246 = vmatpush.msra.mxu0 %v10040
          %10247 = vmatpush.msra.mxu0 %v10039
          %10248 = vmatpush.msra.mxu0 %v10038
          %10249 = vmatpush.msra.mxu0 %v10037
          %10250 = vmatpush.msra.mxu0 %v10036
          %10251 = vmatpush.msra.mxu0 %v10035
          %10252 = vmatpush.msra.mxu0 %v10034
          %10253 = vmatpush.msra.mxu0 %v10033
          %10254 = vmatpush.msra.mxu0 %v10032
          %10255 = vmatmul.f32.gmra.mxu0 %v10105
          %v10256 = vpop.f32.mrf.mxu0
          %v10257 = vadd.f32 %v10237, %v10256
          %10258 = vdwg.mxu0
          %10259 = vmatpush.msra.mxu0 %v10063
          %10260 = vmatpush.msra.mxu0 %v10062
          %10261 = vmatpush.msra.mxu0 %v10061
          %10262 = vmatpush.msra.mxu0 %v10060
          %10263 = vmatpush.msra.mxu0 %v10059
          %10264 = vmatpush.msra.mxu0 %v10058
          %10265 = vmatpush.msra.mxu0 %v10057
          %10266 = vmatpush.msra.mxu0 %v10056
          %10267 = vmatpush.msra.mxu0 %v10055
          %10268 = vmatpush.msra.mxu0 %v10054
          %10269 = vmatpush.msra.mxu0 %v10053
          %10270 = vmatpush.msra.mxu0 %v10052
          %10271 = vmatpush.msra.mxu0 %v10051
          %10272 = vmatpush.msra.mxu0 %v10050
          %10273 = vmatpush.msra.mxu0 %v10049
          %10274 = vmatpush.msra.mxu0 %v10048
          %10275 = vmatmul.f32.gmra.mxu0 %v10106
          %v10276 = vpop.f32.mrf.mxu0
          %v10277 = vadd.f32 %v10257, %v10276
          %10278 = vdwg.mxu0
          %10279 = vmatpush.msra.mxu0 %v10079
          %10280 = vmatpush.msra.mxu0 %v10078
          %10281 = vmatpush.msra.mxu0 %v10077
          %10282 = vmatpush.msra.mxu0 %v10076
          %10283 = vmatpush.msra.mxu0 %v10075
          %10284 = vmatpush.msra.mxu0 %v10074
          %10285 = vmatpush.msra.mxu0 %v10073
          %10286 = vmatpush.msra.mxu0 %v10072
          %10287 = vmatpush.msra.mxu0 %v10071
          %10288 = vmatpush.msra.mxu0 %v10070
          %10289 = vmatpush.msra.mxu0 %v10069
          %10290 = vmatpush.msra.mxu0 %v10068
          %10291 = vmatpush.msra.mxu0 %v10067
          %10292 = vmatpush.msra.mxu0 %v10066
          %10293 = vmatpush.msra.mxu0 %v10065
          %10294 = vmatpush.msra.mxu0 %v10064
          %10295 = vmatmul.f32.gmra.mxu0 %v10107
          %v10296 = vpop.f32.mrf.mxu0
          %v10297 = vadd.f32 %v10277, %v10296
          %10298 = vdwg.mxu0
          %10299 = vmatpush.msra.mxu0 %v10095
          %10300 = vmatpush.msra.mxu0 %v10094
          %10301 = vmatpush.msra.mxu0 %v10093
          %10302 = vmatpush.msra.mxu0 %v10092
          %10303 = vmatpush.msra.mxu0 %v10091
          %10304 = vmatpush.msra.mxu0 %v10090
          %10305 = vmatpush.msra.mxu0 %v10089
          %10306 = vmatpush.msra.mxu0 %v10088
          %10307 = vmatpush.msra.mxu0 %v10087
          %10308 = vmatpush.msra.mxu0 %v10086
          %10309 = vmatpush.msra.mxu0 %v10085
          %10310 = vmatpush.msra.mxu0 %v10084
          %10311 = vmatpush.msra.mxu0 %v10083
          %10312 = vmatpush.msra.mxu0 %v10082
          %10313 = vmatpush.msra.mxu0 %v10081
          %10314 = vmatpush.msra.mxu0 %v10080
          %10315 = vmatmul.f32.gmra.mxu0 %v10108
          %v10316 = vpop.f32.mrf.mxu0
          %v10317 = vadd.f32 %v10297, %v10316
          %10318 = vdwg.mxu0
          %vm10319 = vcmask 122880
          %v10320 = vsel %vm10319, %v10317, -inf
          %10321 = vmax.xlane.f32.xlu0 %v10320
          %v10322 = vpop.xlane.xlu0 %10321
          %v10323 = vsub.f32 %v10317, %v10322
          %v10324 = vmul.f32 %v10323, 1.442695
          %v10325 = vpow.pop %v10324
          %v10326 = vsel %vm10319, %v10325, 0.0
          %10327 = vadd.xlane.f32.xlu0 %v10326
          %v10328 = vpop.xlane.xlu0 %10327
          %v10329 = vrcp.pop %v10328
          %v10330 = vmul.f32 %v10328, %v10329
          %v10331 = vsub.f32 1.0, %v10330
          %v10332 = vmul.f32 %v10329, %v10331
          %v10333 = vadd.f32 %v10329, %v10332
          %vm10334 = vweird.f32 %v10328
          %vm10335 = vweird.f32 %v10329
          %vm10336 = vmor %vm10334, %vm10335
          %v10337 = vsel %vm10336, %v10329, %v10333
          %v10338 = vand.u32 2147483647, %v10328
          %vm10339 = vcmp.eq.f32.partialorder %v10338, 8.507059e+37
          %v10340 = vand.u32 %v10328, 2147483648
          %v10341 = vor.u32 1.1754944e-38, %v10340
          %v10342 = vsel %vm10339, %v10341, %v10337
          %v10343 = vmul.f32 %v10325, %v10342
          %vm10344 = vcmask 40960
          %10345 = vst.msk [vmem:[%s432] sm:$0x1] %vm10344, %v9934
          %10346 = vst.msk [vmem:[%s438] sm:$0x1] %vm10319, %v10343
        $region72: #{tpu_custom_call.1} parent=63 // pred_fallthru
          _
        %s10347 = sand.u32 %s288, 1
        %s10348 = scalar_lea.sflag [#allocation5], %s10347
        %s10349 = sand.u32 %s288, 1
        %s10350 = scalar_lea.vmem [#allocation4], %s10349
        %s10351 = sand.u32 %s314, 1
        %s10352 = scalar_lea.sflag [#allocation7], %s10351
        %s10353 = sand.u32 %s314, 1
        %s10354 = scalar_lea.vmem [#allocation6], %s10353
        // Predicated region
        $region73: #{tpu_custom_call.1} parent=63 // pred_check
          %p10355 = pneg %p298
        $region74: #{tpu_custom_call.1} parent=63 // pred_check_branch
          %10357 = sbr.rel (%p10355) target = $region76
        $region75: #{tpu_custom_call.1} parent=63 // pred_region
          %10359 = vsyncadd %s10348, 0
          %s10360 = scalar_lea.hbm %s11, %s34
          %s10362 = sshll.u32 %s10350, 4
          %s10363 = int_to_ptr.vmem [resolvable:$true] %s10362
          %s10364 = sshll.u32 %s10360, 4
          %s10365 = int_to_ptr.hbm [resolvable:$true] %s10364
          %10367 = dma.vmem_to_hbm [thread:$0]  %s10363, 16, %s10365, %s10348
        $region76: #{tpu_custom_call.1} parent=63 // pred_fallthru
          _
        // Predicated region
        $region77: #{tpu_custom_call.1} parent=63 // pred_check
          %p10368 = pneg %p324
        $region78: #{tpu_custom_call.1} parent=63 // pred_check_branch
          %10370 = sbr.rel (%p10368) target = $region80
        $region79: #{tpu_custom_call.1} parent=63 // pred_region
          %10372 = vsyncadd %s10352, 0
          %s10373 = scalar_lea.hbm %s12, %s34
          %s10375 = sshll.u32 %s10354, 4
          %s10376 = int_to_ptr.vmem [resolvable:$true] %s10375
          %s10377 = sshll.u32 %s10373, 4
          %s10378 = int_to_ptr.hbm [resolvable:$true] %s10377
          %10380 = dma.vmem_to_hbm [thread:$0]  %s10376, 16, %s10378, %s10352
        $region80: #{tpu_custom_call.1} parent=63 // pred_fallthru
          _
      $region64: #{tpu_custom_call.1} parent=5 // pred_fallthru
        _
      %p10381 = scmp.le.s32.totalorder 2, %s25
      // Predicated region
      $region81: #{tpu_custom_call.1} parent=5 // pred_check
        %p10382 = pneg %p10381
      $region82: #{tpu_custom_call.1} parent=5 // pred_check_branch
        %10384 = sbr.rel (%p10382) target = $region84
      $region83: #{tpu_custom_call.1} parent=5 // pred_region
        %s10385 = ssub.s32 %s25, 2
        // Predicated region
        $region85: #{tpu_custom_call.1} parent=83 // pred_check
          %p10386 = pneg %p304
        $region86: #{tpu_custom_call.1} parent=83 // pred_check_branch
          %10388 = sbr.rel (%p10386) target = $region88
        $region87: #{tpu_custom_call.1} parent=83 // pred_region
          %s10389 = sand.u32 %s289, 1
          %s10390 = scalar_lea.sflag [#allocation5], %s10389
          %s10391 = sand.u32 %s289, 1
          %s10392 = scalar_lea.vmem [#allocation4], %s10391
          %10394 = dma.done %s10390, 16
        $region88: #{tpu_custom_call.1} parent=83 // pred_fallthru
          _
        // Predicated region
        $region89: #{tpu_custom_call.1} parent=83 // pred_check
          %p10395 = pneg %p330
        $region90: #{tpu_custom_call.1} parent=83 // pred_check_branch
          %10397 = sbr.rel (%p10395) target = $region92
        $region91: #{tpu_custom_call.1} parent=83 // pred_region
          %s10398 = sand.u32 %s315, 1
          %s10399 = scalar_lea.sflag [#allocation7], %s10398
          %s10400 = sand.u32 %s315, 1
          %s10401 = scalar_lea.vmem [#allocation6], %s10400
          %10403 = dma.done %s10399, 16
        $region92: #{tpu_custom_call.1} parent=83 // pred_fallthru
          _
      $region84: #{tpu_custom_call.1} parent=5 // pred_fallthru
        _
    $region6: #{tpu_custom_call.1} parent=1 // loop_footer
      %s29 = sadd.s32 1, %s25
    $region7: #{tpu_custom_call.1} parent=1 // loop_footer_branch
      %24 = sbr.rel target = $region3
    $region8: #{tpu_custom_call.1} parent=1 // loop_exit
      _
    %10404 = vsyncpa [#allocation5], 1
    %s10405 = scalar_lea.sflag [#allocation5], 1
    %10406 = vsyncpa %s10405, 1
    %10407 = vsyncpa [#allocation7], 1
    %s10408 = scalar_lea.sflag [#allocation7], 1
    %10409 = vsyncpa %s10408, 1

</llo_original>
